<compile_context>
chip_gen: v6e
topology: v6e:2x2x1
jax: 0.10.0
libtpu: 0.0.40
codegen_flags: <defaults>
</compile_context>

<pallas_src>
import functools
import math

import jax
import jax.numpy as jnp
from jax import lax
from jax.experimental import pallas as pl
from jax.experimental.pallas import tpu as pltpu


def transformer_block_kernel(x_ref, wq_ref, wk_ref, wv_ref, bq_ref, bk_ref, bv_ref,
                             wo_ref, bo_ref, ln1w_ref, ln1b_ref,
                             w1_ref, b1_ref, w2_ref, b2_ref,
                             ln2w_ref, ln2b_ref, out_ref,
                             *, nhead, eps, compute_dtype):
    BB, S, D = x_ref.shape
    M = BB * S
    Dh = D // nhead
    approx_recip = compute_dtype != jnp.float32

    x = x_ref[...].astype(jnp.float32)          # (BB, S, D), residual path in f32
    xf = x.reshape(M, D)
    xm = xf.astype(compute_dtype)               # MXU operand dtype

    # ---------------- multi-head self attention ----------------
    # Full-width projections on the flattened slab; 1/sqrt(Dh) is pre-folded
    # into wq/bq on the host.
    q = jnp.dot(xm, wq_ref[...], preferred_element_type=jnp.float32) + bq_ref[0]
    k = jnp.dot(xm, wk_ref[...], preferred_element_type=jnp.float32) + bk_ref[0]
    v = jnp.dot(xm, wv_ref[...], preferred_element_type=jnp.float32) + bv_ref[0]

    # Per-head attention, batched over the BB batch elements of this block.
    # Contexts are concatenated (head-major lanes) so the output projection is a
    # single full-D-contraction MXU matmul.
    ctx_heads = []
    for h in range(nhead):                      # static, nhead is small
        lo = h * Dh
        qh = q[:, lo:lo + Dh].reshape(BB, S, Dh).astype(compute_dtype)
        kh = k[:, lo:lo + Dh].reshape(BB, S, Dh).astype(compute_dtype)
        vh = v[:, lo:lo + Dh].reshape(BB, S, Dh).astype(compute_dtype)
        s = jnp.einsum('bqd,bkd->bqk', qh, kh, preferred_element_type=jnp.float32)
        s = s - jnp.max(s, axis=-1, keepdims=True)
        p = jnp.exp(s)
        p = p * pl.reciprocal(jnp.sum(p, axis=-1, keepdims=True), approx=approx_recip)
        ctx_h = jnp.einsum('bqk,bkd->bqd', p.astype(compute_dtype), vh,
                           preferred_element_type=jnp.float32)
        ctx_heads.append(ctx_h.reshape(M, Dh))
    ctx = jnp.concatenate(ctx_heads, axis=-1).astype(compute_dtype)      # (M, D)
    attn = jnp.dot(ctx, wo_ref[...], preferred_element_type=jnp.float32) + bo_ref[0]

    # residual + LayerNorm 1  (dropout1 = identity at inference)
    y = xf + attn
    mu = jnp.mean(y, axis=-1, keepdims=True)
    yc = y - mu
    var = jnp.mean(yc * yc, axis=-1, keepdims=True)
    y = yc * lax.rsqrt(var + eps) * ln1w_ref[0] + ln1b_ref[0]

    # ---------------- feed-forward (ReLU) ----------------
    # bias + ReLU + cast fused: only the compute_dtype copy of the (M, 4D)
    # hidden activation stays live into the second matmul.
    h1 = jnp.maximum(
        jnp.dot(y.astype(compute_dtype), w1_ref[...],
                preferred_element_type=jnp.float32) + b1_ref[0],
        0.0).astype(compute_dtype)
    h2 = jnp.dot(h1, w2_ref[...], preferred_element_type=jnp.float32) + b2_ref[0]

    # residual + LayerNorm 2  (dropout2 = identity at inference)
    z = y + h2
    mu2 = jnp.mean(z, axis=-1, keepdims=True)
    zc = z - mu2
    var2 = jnp.mean(zc * zc, axis=-1, keepdims=True)
    z = zc * lax.rsqrt(var2 + eps) * ln2w_ref[0] + ln2b_ref[0]

    out_ref[...] = z.reshape(BB, S, D).astype(out_ref.dtype)


def _hw_defaults():
    """Generation-aware block-sizing defaults."""
    try:
        kind = jax.devices()[0].device_kind.lower()
    except Exception:
        kind = ""
    if "v7" in kind:
        # 2 TensorCores / chip, 64 MiB VMEM per core: keep >=2 (even) grid steps
        # so the parallel batch axis shards across cores; leave VMEM headroom.
        return dict(require_two_steps=True, vmem_cap=56 * 1024 * 1024,
                    target_rows=256)
    # v5e / v6e (and default): single TensorCore, 128 MiB VMEM. The grid is a
    # serial loop, so prefer nb=1 / big blocks (also guarantees the
    # grid-invariant weights are only fetched once).
    return dict(require_two_steps=False, vmem_cap=100 * 1024 * 1024,
                target_rows=512)


def _choose_block_b(B, S, target_rows, require_two_steps):
    """Largest divisor of B with BB*S <= target_rows; on dual-TC chips prefer
    configurations leaving >=2 grid steps so both TensorCores get work."""
    target = max(1, target_rows // max(S, 1))
    divisors = [d for d in range(1, B + 1) if B % d == 0]
    cands = [d for d in divisors if d <= target]
    if require_two_steps:
        two = [d for d in cands if (B // d) >= 2]
        if two:
            cands = two
    if not cands:
        cands = [1]
    return max(cands)


def spiking_transformer_block(x, params, *, nhead, compute_dtype=jnp.bfloat16,
                              block_b=None, eps=1e-5, single_buffer_weights=True):
    B, S, D = x.shape
    assert D % nhead == 0, "d_model must be divisible by nhead"
    Dh = D // nhead
    dff = params["w1"].shape[1]
    hw = _hw_defaults()

    if block_b is None:
        block_b = _choose_block_b(B, S, hw["target_rows"], hw["require_two_steps"])
    assert B % block_b == 0
    nb = B // block_b

    cd = compute_dtype
    scale = 1.0 / math.sqrt(Dh)
    # Matmul weights in compute_dtype (bf16 halves HBM/VMEM bytes, doubles MXU
    # throughput); biases / LayerNorm params stay f32 (VPU / accumulate path).
    # 1/sqrt(Dh) is folded into the Q projection here (one-time transform).
    wq = (params["wq"] * scale).astype(cd)
    bq = params["bq"] * scale
    wk = params["wk"].astype(cd)
    wv = params["wv"].astype(cd)
    wo = params["wo"].astype(cd)
    w1 = params["w1"].astype(cd)
    w2 = params["w2"].astype(cd)

    weights = [wq, wk, wv,
               bq, params["bk"], params["bv"],
               wo, params["bo"],
               params["ln1w"], params["ln1b"],
               w1, params["b1"], w2, params["b2"],
               params["ln2w"], params["ln2b"]]

    # Rough VMEM budget: resident weights + double-buffered in/out blocks +
    # activation working set, capped per-generation (64 MiB/TC on v7x).
    w_bytes = sum(int(w.size) * jnp.dtype(w.dtype).itemsize for w in weights)
    blk_bytes = 2 * 2 * block_b * S * D * jnp.dtype(x.dtype).itemsize
    act_bytes = block_b * S * (12 * D + 2 * dff) * 4
    vmem_limit = int(min(hw["vmem_cap"],
                         max(32 * 1024 * 1024, 2 * w_bytes + blk_bytes + 2 * act_bytes)))

    kernel = functools.partial(transformer_block_kernel, nhead=nhead, eps=eps,
                               compute_dtype=cd)

    def build(single_buf):
        def weight_spec(shape):
            ndim = len(shape)
            idx = lambda b, _n=ndim: (0,) * _n
            if single_buf:
                # Grid-invariant block: single-buffer it (block index never
                # changes across the grid), halving weight VMEM residency.
                return pl.BlockSpec(shape, idx, pipeline_mode=pl.Buffered(1))
            return pl.BlockSpec(shape, idx)

        in_specs = [pl.BlockSpec((block_b, S, D), lambda b: (b, 0, 0))]
        in_specs += [weight_spec(tuple(w.shape)) for w in weights]
        out_spec = pl.BlockSpec((block_b, S, D), lambda b: (b, 0, 0))

        return pl.pallas_call(
            kernel,
            out_shape=jax.ShapeDtypeStruct((B, S, D), x.dtype),
            grid_spec=pltpu.PrefetchScalarGridSpec(
                num_scalar_prefetch=0,
                grid=(nb,),
                in_specs=in_specs,
                out_specs=out_spec,
            ),
            compiler_params=pltpu.CompilerParams(
                dimension_semantics=("parallel",),
                vmem_limit_bytes=vmem_limit,
            ),
        )

    if single_buffer_weights:
        try:
            return build(True)(x, *weights)
        except Exception:
            # pipeline_mode=pl.Buffered(1) not supported by this jax build's
            # pallas_call path -> fall back to default (double-buffered) specs.
            pass
    return build(False)(x, *weights)


def init_params(key, d_model, nhead):
    dff = 4 * d_model
    ks = jax.random.split(key, 12)
    std = 1.0 / math.sqrt(d_model)
    return {
        "wq": jax.random.normal(ks[0], (d_model, d_model), jnp.float32) * std,
        "wk": jax.random.normal(ks[1], (d_model, d_model), jnp.float32) * std,
        "wv": jax.random.normal(ks[2], (d_model, d_model), jnp.float32) * std,
        "bq": jax.random.normal(ks[3], (1, d_model), jnp.float32) * 0.02,
        "bk": jax.random.normal(ks[4], (1, d_model), jnp.float32) * 0.02,
        "bv": jax.random.normal(ks[5], (1, d_model), jnp.float32) * 0.02,
        "wo": jax.random.normal(ks[6], (d_model, d_model), jnp.float32) * std,
        "bo": jax.random.normal(ks[7], (1, d_model), jnp.float32) * 0.02,
        "ln1w": jnp.ones((1, d_model), jnp.float32),
        "ln1b": jnp.zeros((1, d_model), jnp.float32),
        "w1": jax.random.normal(ks[8], (d_model, dff), jnp.float32) * std,
        "b1": jax.random.normal(ks[9], (1, dff), jnp.float32) * 0.02,
        "w2": jax.random.normal(ks[10], (dff, d_model), jnp.float32) * (1.0 / math.sqrt(dff)),
        "b2": jax.random.normal(ks[11], (1, d_model), jnp.float32) * 0.02,
        "ln2w": jnp.ones((1, d_model), jnp.float32),
        "ln2b": jnp.zeros((1, d_model), jnp.float32),
    }


def reference_jax(x, p, nhead, eps=1e-5):
    """Pure-JAX f32 reference replicating PyTorch TransformerEncoderLayer (eval)."""
    B, S, D = x.shape
    Dh = D // nhead
    q = x @ p["wq"] + p["bq"][0]
    k = x @ p["wk"] + p["bk"][0]
    v = x @ p["wv"] + p["bv"][0]
    q = q.reshape(B, S, nhead, Dh).transpose(0, 2, 1, 3)
    k = k.reshape(B, S, nhead, Dh).transpose(0, 2, 1, 3)
    v = v.reshape(B, S, nhead, Dh).transpose(0, 2, 1, 3)
    s = jnp.einsum("bhqd,bhkd->bhqk", q, k) / math.sqrt(Dh)
    a = jax.nn.softmax(s, axis=-1)
    o = jnp.einsum("bhqk,bhkd->bhqd", a, v).transpose(0, 2, 1, 3).reshape(B, S, D)
    o = o @ p["wo"] + p["bo"][0]

    def ln(t, w, b):
        mu = jnp.mean(t, axis=-1, keepdims=True)
        var = jnp.mean((t - mu) ** 2, axis=-1, keepdims=True)
        return (t - mu) * lax.rsqrt(var + eps) * w[0] + b[0]

    y = ln(x + o, p["ln1w"], p["ln1b"])
    h = jnp.maximum(y @ p["w1"] + p["b1"][0], 0.0) @ p["w2"] + p["b2"][0]
    return ln(y + h, p["ln2w"], p["ln2b"])


if __name__ == "__main__":
    # d_model=128 keeps the feature (lane) dim dense; B=4 gives either 1 block of
    # 4 (single-TC chips) or 2 parallel blocks of 2 (dual-TC v7x).
    B, S, d_model, nhead = 4, 8, 128, 4
    key = jax.random.PRNGKey(0)
    kx, kp = jax.random.split(key)
    x = jax.random.normal(kx, (B, S, d_model), jnp.float32)
    params = init_params(kp, d_model, nhead)

    ref = reference_jax(x, params, nhead)

    # 1) exact-semantics path (f32 matmul operands): tight check vs reference.
    out_f32 = spiking_transformer_block(x, params, nhead=nhead,
                                        compute_dtype=jnp.float32)
    out_f32 = jax.block_until_ready(out_f32)
    assert out_f32.shape == (B, S, d_model)
    assert jnp.allclose(out_f32, ref, atol=2e-4, rtol=2e-4), "f32 mismatch vs reference"

    # 2) fast path (bf16 matmul operands, f32 accumulate/LN/softmax): loose sanity check.
    out_bf16 = spiking_transformer_block(x, params, nhead=nhead,
                                         compute_dtype=jnp.bfloat16)
    out_bf16 = jax.block_until_ready(out_bf16)
    assert out_bf16.shape == (B, S, d_model)
    assert jnp.allclose(out_bf16, ref, atol=1e-1, rtol=1e-1), "bf16 mismatch vs reference"

    print("KERNEL_OK")
</pallas_src>

<mosaic_0001>
module attributes {stable_mosaic.version = 11 : i64} {
  func.func @transformer_block_kernel(%arg0: i32, %arg1: memref<4x8x128xf32, #tpu.memory_space<vmem>>, %arg2: memref<128x128xf32, #tpu.memory_space<vmem>>, %arg3: memref<128x128xf32, #tpu.memory_space<vmem>>, %arg4: memref<128x128xf32, #tpu.memory_space<vmem>>, %arg5: memref<1x128xf32, #tpu.memory_space<vmem>>, %arg6: memref<1x128xf32, #tpu.memory_space<vmem>>, %arg7: memref<1x128xf32, #tpu.memory_space<vmem>>, %arg8: memref<128x128xf32, #tpu.memory_space<vmem>>, %arg9: memref<1x128xf32, #tpu.memory_space<vmem>>, %arg10: memref<1x128xf32, #tpu.memory_space<vmem>>, %arg11: memref<1x128xf32, #tpu.memory_space<vmem>>, %arg12: memref<128x512xf32, #tpu.memory_space<vmem>>, %arg13: memref<1x512xf32, #tpu.memory_space<vmem>>, %arg14: memref<512x128xf32, #tpu.memory_space<vmem>>, %arg15: memref<1x128xf32, #tpu.memory_space<vmem>>, %arg16: memref<1x128xf32, #tpu.memory_space<vmem>>, %arg17: memref<1x128xf32, #tpu.memory_space<vmem>>, %arg18: memref<4x8x128xf32, #tpu.memory_space<vmem>>) attributes {dimension_semantics = [#tpu.dimension_semantics<parallel>], iteration_bounds = array<i64: 1>, scalar_prefetch = 0 : i64, scratch_operands = 0 : i64, tpu.core_type = #tpu.core_type<tc>, window_params = [{transform_indices = @transform_0, window_bounds = array<i64: 4, 8, 128>}, {pipeline_mode = #tpu.pipeline_mode<synchronous>, transform_indices = @transform_1, window_bounds = array<i64: 128, 128>}, {pipeline_mode = #tpu.pipeline_mode<synchronous>, transform_indices = @transform_2, window_bounds = array<i64: 128, 128>}, {pipeline_mode = #tpu.pipeline_mode<synchronous>, transform_indices = @transform_3, window_bounds = array<i64: 128, 128>}, {pipeline_mode = #tpu.pipeline_mode<synchronous>, transform_indices = @transform_4, window_bounds = array<i64: 1, 128>}, {pipeline_mode = #tpu.pipeline_mode<synchronous>, transform_indices = @transform_5, window_bounds = array<i64: 1, 128>}, {pipeline_mode = #tpu.pipeline_mode<synchronous>, transform_indices = @transform_6, window_bounds = array<i64: 1, 128>}, {pipeline_mode = #tpu.pipeline_mode<synchronous>, transform_indices = @transform_7, window_bounds = array<i64: 128, 128>}, {pipeline_mode = #tpu.pipeline_mode<synchronous>, transform_indices = @transform_8, window_bounds = array<i64: 1, 128>}, {pipeline_mode = #tpu.pipeline_mode<synchronous>, transform_indices = @transform_9, window_bounds = array<i64: 1, 128>}, {pipeline_mode = #tpu.pipeline_mode<synchronous>, transform_indices = @transform_10, window_bounds = array<i64: 1, 128>}, {pipeline_mode = #tpu.pipeline_mode<synchronous>, transform_indices = @transform_11, window_bounds = array<i64: 128, 512>}, {pipeline_mode = #tpu.pipeline_mode<synchronous>, transform_indices = @transform_12, window_bounds = array<i64: 1, 512>}, {pipeline_mode = #tpu.pipeline_mode<synchronous>, transform_indices = @transform_13, window_bounds = array<i64: 512, 128>}, {pipeline_mode = #tpu.pipeline_mode<synchronous>, transform_indices = @transform_14, window_bounds = array<i64: 1, 128>}, {pipeline_mode = #tpu.pipeline_mode<synchronous>, transform_indices = @transform_15, window_bounds = array<i64: 1, 128>}, {pipeline_mode = #tpu.pipeline_mode<synchronous>, transform_indices = @transform_16, window_bounds = array<i64: 1, 128>}, {transform_indices = @transform_17, window_bounds = array<i64: 4, 8, 128>}]} {
    %c0 = arith.constant 0 : index
    %c0_0 = arith.constant 0 : index
    %c0_1 = arith.constant 0 : index
    %0 = vector.load %arg1[%c0, %c0_0, %c0_1] : memref<4x8x128xf32, #tpu.memory_space<vmem>>, vector<4x8x128xf32>
    %1 = vector.shape_cast %0 : vector<4x8x128xf32> to vector<32x128xf32>
    %c0_2 = arith.constant 0 : index
    %c0_3 = arith.constant 0 : index
    %2 = vector.load %arg2[%c0_2, %c0_3] : memref<128x128xf32, #tpu.memory_space<vmem>>, vector<128x128xf32>
    %cst = arith.constant dense<0.000000e+00> : vector<32x128xf32>
    %3 = tpu.matmul %1, %2, %cst {dimension_numbers = #tpu.dot_dimension_numbers<[1], [0], [0], [1], [0, 0, 1, 1], [], []>} : vector<32x128xf32>, vector<128x128xf32>, vector<32x128xf32> -> vector<32x128xf32>
    %c0_4 = arith.constant 0 : index
    %c0_5 = arith.constant 0 : index
    %4 = vector.load %arg5[%c0_4, %c0_5] : memref<1x128xf32, #tpu.memory_space<vmem>>, vector<1x128xf32>
    %5 = vector.shape_cast %4 : vector<1x128xf32> to vector<128xf32>
    %6 = vector.shape_cast %5 : vector<128xf32> to vector<1x128xf32>
    %7 = vector.broadcast %6 : vector<1x128xf32> to vector<32x128xf32>
    %8 = arith.addf %3, %7 : vector<32x128xf32>
    %c0_6 = arith.constant 0 : index
    %c0_7 = arith.constant 0 : index
    %9 = vector.load %arg3[%c0_6, %c0_7] : memref<128x128xf32, #tpu.memory_space<vmem>>, vector<128x128xf32>
    %cst_8 = arith.constant dense<0.000000e+00> : vector<32x128xf32>
    %10 = tpu.matmul %1, %9, %cst_8 {dimension_numbers = #tpu.dot_dimension_numbers<[1], [0], [0], [1], [0, 0, 1, 1], [], []>} : vector<32x128xf32>, vector<128x128xf32>, vector<32x128xf32> -> vector<32x128xf32>
    %c0_9 = arith.constant 0 : index
    %c0_10 = arith.constant 0 : index
    %11 = vector.load %arg6[%c0_9, %c0_10] : memref<1x128xf32, #tpu.memory_space<vmem>>, vector<1x128xf32>
    %12 = vector.shape_cast %11 : vector<1x128xf32> to vector<128xf32>
    %13 = vector.shape_cast %12 : vector<128xf32> to vector<1x128xf32>
    %14 = vector.broadcast %13 : vector<1x128xf32> to vector<32x128xf32>
    %15 = arith.addf %10, %14 : vector<32x128xf32>
    %c0_11 = arith.constant 0 : index
    %c0_12 = arith.constant 0 : index
    %16 = vector.load %arg4[%c0_11, %c0_12] : memref<128x128xf32, #tpu.memory_space<vmem>>, vector<128x128xf32>
    %cst_13 = arith.constant dense<0.000000e+00> : vector<32x128xf32>
    %17 = tpu.matmul %1, %16, %cst_13 {dimension_numbers = #tpu.dot_dimension_numbers<[1], [0], [0], [1], [0, 0, 1, 1], [], []>} : vector<32x128xf32>, vector<128x128xf32>, vector<32x128xf32> -> vector<32x128xf32>
    %c0_14 = arith.constant 0 : index
    %c0_15 = arith.constant 0 : index
    %18 = vector.load %arg7[%c0_14, %c0_15] : memref<1x128xf32, #tpu.memory_space<vmem>>, vector<1x128xf32>
    %19 = vector.shape_cast %18 : vector<1x128xf32> to vector<128xf32>
    %20 = vector.shape_cast %19 : vector<128xf32> to vector<1x128xf32>
    %21 = vector.broadcast %20 : vector<1x128xf32> to vector<32x128xf32>
    %22 = arith.addf %17, %21 : vector<32x128xf32>
    %23 = vector.extract_strided_slice %8 {offsets = [0, 0], sizes = [32, 32], strides = [1, 1]} : vector<32x128xf32> to vector<32x32xf32>
    %24 = vector.shape_cast %23 : vector<32x32xf32> to vector<4x8x32xf32>
    %25 = vector.extract_strided_slice %15 {offsets = [0, 0], sizes = [32, 32], strides = [1, 1]} : vector<32x128xf32> to vector<32x32xf32>
    %26 = vector.shape_cast %25 : vector<32x32xf32> to vector<4x8x32xf32>
    %27 = vector.extract_strided_slice %22 {offsets = [0, 0], sizes = [32, 32], strides = [1, 1]} : vector<32x128xf32> to vector<32x32xf32>
    %28 = vector.shape_cast %27 : vector<32x32xf32> to vector<4x8x32xf32>
    "tpu.trace_start"() <{level = 10 : i32, message = "bqd,bkd->bqk"}> : () -> ()
    %cst_16 = arith.constant dense<0.000000e+00> : vector<4x8x8xf32>
    %29 = tpu.matmul %24, %26, %cst_16 {dimension_numbers = #tpu.dot_dimension_numbers<[2], [2], [1], [1], [0, 0, 0, 1, 1, 1], [0], [0]>} : vector<4x8x32xf32>, vector<4x8x32xf32>, vector<4x8x8xf32> -> vector<4x8x8xf32>
    "tpu.trace_stop"() : () -> ()
    %cst_17 = arith.constant dense<0xFF800000> : vector<4x8xf32>
    %30 = vector.multi_reduction <maximumf>, %29, %cst_17 [2] : vector<4x8x8xf32> to vector<4x8xf32>
    %31 = vector.shape_cast %30 : vector<4x8xf32> to vector<4x8x1xf32>
    %32 = vector.broadcast %31 : vector<4x8x1xf32> to vector<4x8x8xf32>
    %33 = arith.subf %29, %32 : vector<4x8x8xf32>
    %34 = math.exp %33 : vector<4x8x8xf32>
    %cst_18 = arith.constant dense<0.000000e+00> : vector<4x8xf32>
    %35 = vector.multi_reduction <add>, %34, %cst_18 [2] : vector<4x8x8xf32> to vector<4x8xf32>
    %36 = vector.shape_cast %35 : vector<4x8xf32> to vector<4x8x1xf32>
    %37 = tpu.reciprocal %36 : vector<4x8x1xf32> -> vector<4x8x1xf32>
    %38 = vector.broadcast %37 : vector<4x8x1xf32> to vector<4x8x8xf32>
    %39 = arith.mulf %34, %38 : vector<4x8x8xf32>
    "tpu.trace_start"() <{level = 10 : i32, message = "bqk,bkd->bqd"}> : () -> ()
    %cst_19 = arith.constant dense<0.000000e+00> : vector<4x8x32xf32>
    %40 = tpu.matmul %39, %28, %cst_19 {dimension_numbers = #tpu.dot_dimension_numbers<[2], [1], [1], [2], [0, 0, 0, 1, 1, 2], [0], [0]>} : vector<4x8x8xf32>, vector<4x8x32xf32>, vector<4x8x32xf32> -> vector<4x8x32xf32>
    "tpu.trace_stop"() : () -> ()
    %41 = vector.shape_cast %40 : vector<4x8x32xf32> to vector<32x32xf32>
    %42 = vector.extract_strided_slice %8 {offsets = [0, 32], sizes = [32, 32], strides = [1, 1]} : vector<32x128xf32> to vector<32x32xf32>
    %43 = vector.shape_cast %42 : vector<32x32xf32> to vector<4x8x32xf32>
    %44 = vector.extract_strided_slice %15 {offsets = [0, 32], sizes = [32, 32], strides = [1, 1]} : vector<32x128xf32> to vector<32x32xf32>
    %45 = vector.shape_cast %44 : vector<32x32xf32> to vector<4x8x32xf32>
    %46 = vector.extract_strided_slice %22 {offsets = [0, 32], sizes = [32, 32], strides = [1, 1]} : vector<32x128xf32> to vector<32x32xf32>
    %47 = vector.shape_cast %46 : vector<32x32xf32> to vector<4x8x32xf32>
    "tpu.trace_start"() <{level = 10 : i32, message = "bqd,bkd->bqk"}> : () -> ()
    %cst_20 = arith.constant dense<0.000000e+00> : vector<4x8x8xf32>
    %48 = tpu.matmul %43, %45, %cst_20 {dimension_numbers = #tpu.dot_dimension_numbers<[2], [2], [1], [1], [0, 0, 0, 1, 1, 1], [0], [0]>} : vector<4x8x32xf32>, vector<4x8x32xf32>, vector<4x8x8xf32> -> vector<4x8x8xf32>
    "tpu.trace_stop"() : () -> ()
    %cst_21 = arith.constant dense<0xFF800000> : vector<4x8xf32>
    %49 = vector.multi_reduction <maximumf>, %48, %cst_21 [2] : vector<4x8x8xf32> to vector<4x8xf32>
    %50 = vector.shape_cast %49 : vector<4x8xf32> to vector<4x8x1xf32>
    %51 = vector.broadcast %50 : vector<4x8x1xf32> to vector<4x8x8xf32>
    %52 = arith.subf %48, %51 : vector<4x8x8xf32>
    %53 = math.exp %52 : vector<4x8x8xf32>
    %cst_22 = arith.constant dense<0.000000e+00> : vector<4x8xf32>
    %54 = vector.multi_reduction <add>, %53, %cst_22 [2] : vector<4x8x8xf32> to vector<4x8xf32>
    %55 = vector.shape_cast %54 : vector<4x8xf32> to vector<4x8x1xf32>
    %56 = tpu.reciprocal %55 : vector<4x8x1xf32> -> vector<4x8x1xf32>
    %57 = vector.broadcast %56 : vector<4x8x1xf32> to vector<4x8x8xf32>
    %58 = arith.mulf %53, %57 : vector<4x8x8xf32>
    "tpu.trace_start"() <{level = 10 : i32, message = "bqk,bkd->bqd"}> : () -> ()
    %cst_23 = arith.constant dense<0.000000e+00> : vector<4x8x32xf32>
    %59 = tpu.matmul %58, %47, %cst_23 {dimension_numbers = #tpu.dot_dimension_numbers<[2], [1], [1], [2], [0, 0, 0, 1, 1, 2], [0], [0]>} : vector<4x8x8xf32>, vector<4x8x32xf32>, vector<4x8x32xf32> -> vector<4x8x32xf32>
    "tpu.trace_stop"() : () -> ()
    %60 = vector.shape_cast %59 : vector<4x8x32xf32> to vector<32x32xf32>
    %61 = vector.extract_strided_slice %8 {offsets = [0, 64], sizes = [32, 32], strides = [1, 1]} : vector<32x128xf32> to vector<32x32xf32>
    %62 = vector.shape_cast %61 : vector<32x32xf32> to vector<4x8x32xf32>
    %63 = vector.extract_strided_slice %15 {offsets = [0, 64], sizes = [32, 32], strides = [1, 1]} : vector<32x128xf32> to vector<32x32xf32>
    %64 = vector.shape_cast %63 : vector<32x32xf32> to vector<4x8x32xf32>
    %65 = vector.extract_strided_slice %22 {offsets = [0, 64], sizes = [32, 32], strides = [1, 1]} : vector<32x128xf32> to vector<32x32xf32>
    %66 = vector.shape_cast %65 : vector<32x32xf32> to vector<4x8x32xf32>
    "tpu.trace_start"() <{level = 10 : i32, message = "bqd,bkd->bqk"}> : () -> ()
    %cst_24 = arith.constant dense<0.000000e+00> : vector<4x8x8xf32>
    %67 = tpu.matmul %62, %64, %cst_24 {dimension_numbers = #tpu.dot_dimension_numbers<[2], [2], [1], [1], [0, 0, 0, 1, 1, 1], [0], [0]>} : vector<4x8x32xf32>, vector<4x8x32xf32>, vector<4x8x8xf32> -> vector<4x8x8xf32>
    "tpu.trace_stop"() : () -> ()
    %cst_25 = arith.constant dense<0xFF800000> : vector<4x8xf32>
    %68 = vector.multi_reduction <maximumf>, %67, %cst_25 [2] : vector<4x8x8xf32> to vector<4x8xf32>
    %69 = vector.shape_cast %68 : vector<4x8xf32> to vector<4x8x1xf32>
    %70 = vector.broadcast %69 : vector<4x8x1xf32> to vector<4x8x8xf32>
    %71 = arith.subf %67, %70 : vector<4x8x8xf32>
    %72 = math.exp %71 : vector<4x8x8xf32>
    %cst_26 = arith.constant dense<0.000000e+00> : vector<4x8xf32>
    %73 = vector.multi_reduction <add>, %72, %cst_26 [2] : vector<4x8x8xf32> to vector<4x8xf32>
    %74 = vector.shape_cast %73 : vector<4x8xf32> to vector<4x8x1xf32>
    %75 = tpu.reciprocal %74 : vector<4x8x1xf32> -> vector<4x8x1xf32>
    %76 = vector.broadcast %75 : vector<4x8x1xf32> to vector<4x8x8xf32>
    %77 = arith.mulf %72, %76 : vector<4x8x8xf32>
    "tpu.trace_start"() <{level = 10 : i32, message = "bqk,bkd->bqd"}> : () -> ()
    %cst_27 = arith.constant dense<0.000000e+00> : vector<4x8x32xf32>
    %78 = tpu.matmul %77, %66, %cst_27 {dimension_numbers = #tpu.dot_dimension_numbers<[2], [1], [1], [2], [0, 0, 0, 1, 1, 2], [0], [0]>} : vector<4x8x8xf32>, vector<4x8x32xf32>, vector<4x8x32xf32> -> vector<4x8x32xf32>
    "tpu.trace_stop"() : () -> ()
    %79 = vector.shape_cast %78 : vector<4x8x32xf32> to vector<32x32xf32>
    %80 = vector.extract_strided_slice %8 {offsets = [0, 96], sizes = [32, 32], strides = [1, 1]} : vector<32x128xf32> to vector<32x32xf32>
    %81 = vector.shape_cast %80 : vector<32x32xf32> to vector<4x8x32xf32>
    %82 = vector.extract_strided_slice %15 {offsets = [0, 96], sizes = [32, 32], strides = [1, 1]} : vector<32x128xf32> to vector<32x32xf32>
    %83 = vector.shape_cast %82 : vector<32x32xf32> to vector<4x8x32xf32>
    %84 = vector.extract_strided_slice %22 {offsets = [0, 96], sizes = [32, 32], strides = [1, 1]} : vector<32x128xf32> to vector<32x32xf32>
    %85 = vector.shape_cast %84 : vector<32x32xf32> to vector<4x8x32xf32>
    "tpu.trace_start"() <{level = 10 : i32, message = "bqd,bkd->bqk"}> : () -> ()
    %cst_28 = arith.constant dense<0.000000e+00> : vector<4x8x8xf32>
    %86 = tpu.matmul %81, %83, %cst_28 {dimension_numbers = #tpu.dot_dimension_numbers<[2], [2], [1], [1], [0, 0, 0, 1, 1, 1], [0], [0]>} : vector<4x8x32xf32>, vector<4x8x32xf32>, vector<4x8x8xf32> -> vector<4x8x8xf32>
    "tpu.trace_stop"() : () -> ()
    %cst_29 = arith.constant dense<0xFF800000> : vector<4x8xf32>
    %87 = vector.multi_reduction <maximumf>, %86, %cst_29 [2] : vector<4x8x8xf32> to vector<4x8xf32>
    %88 = vector.shape_cast %87 : vector<4x8xf32> to vector<4x8x1xf32>
    %89 = vector.broadcast %88 : vector<4x8x1xf32> to vector<4x8x8xf32>
    %90 = arith.subf %86, %89 : vector<4x8x8xf32>
    %91 = math.exp %90 : vector<4x8x8xf32>
    %cst_30 = arith.constant dense<0.000000e+00> : vector<4x8xf32>
    %92 = vector.multi_reduction <add>, %91, %cst_30 [2] : vector<4x8x8xf32> to vector<4x8xf32>
    %93 = vector.shape_cast %92 : vector<4x8xf32> to vector<4x8x1xf32>
    %94 = tpu.reciprocal %93 : vector<4x8x1xf32> -> vector<4x8x1xf32>
    %95 = vector.broadcast %94 : vector<4x8x1xf32> to vector<4x8x8xf32>
    %96 = arith.mulf %91, %95 : vector<4x8x8xf32>
    "tpu.trace_start"() <{level = 10 : i32, message = "bqk,bkd->bqd"}> : () -> ()
    %cst_31 = arith.constant dense<0.000000e+00> : vector<4x8x32xf32>
    %97 = tpu.matmul %96, %85, %cst_31 {dimension_numbers = #tpu.dot_dimension_numbers<[2], [1], [1], [2], [0, 0, 0, 1, 1, 2], [0], [0]>} : vector<4x8x8xf32>, vector<4x8x32xf32>, vector<4x8x32xf32> -> vector<4x8x32xf32>
    "tpu.trace_stop"() : () -> ()
    %98 = vector.shape_cast %97 : vector<4x8x32xf32> to vector<32x32xf32>
    %99 = tpu.concatenate %41, %60, %79, %98 in 1 : vector<32x32xf32>, vector<32x32xf32>, vector<32x32xf32>, vector<32x32xf32> -> vector<32x128xf32>
    %c0_32 = arith.constant 0 : index
    %c0_33 = arith.constant 0 : index
    %100 = vector.load %arg8[%c0_32, %c0_33] : memref<128x128xf32, #tpu.memory_space<vmem>>, vector<128x128xf32>
    %cst_34 = arith.constant dense<0.000000e+00> : vector<32x128xf32>
    %101 = tpu.matmul %99, %100, %cst_34 {dimension_numbers = #tpu.dot_dimension_numbers<[1], [0], [0], [1], [0, 0, 1, 1], [], []>} : vector<32x128xf32>, vector<128x128xf32>, vector<32x128xf32> -> vector<32x128xf32>
    %c0_35 = arith.constant 0 : index
    %c0_36 = arith.constant 0 : index
    %102 = vector.load %arg9[%c0_35, %c0_36] : memref<1x128xf32, #tpu.memory_space<vmem>>, vector<1x128xf32>
    %103 = vector.shape_cast %102 : vector<1x128xf32> to vector<128xf32>
    %104 = vector.shape_cast %103 : vector<128xf32> to vector<1x128xf32>
    %105 = vector.broadcast %104 : vector<1x128xf32> to vector<32x128xf32>
    %106 = arith.addf %101, %105 : vector<32x128xf32>
    %107 = arith.addf %1, %106 : vector<32x128xf32>
    %cst_37 = arith.constant dense<0.000000e+00> : vector<32xf32>
    %108 = vector.multi_reduction <add>, %107, %cst_37 [1] : vector<32x128xf32> to vector<32xf32>
    %109 = vector.shape_cast %108 : vector<32xf32> to vector<32x1xf32>
    %cst_38 = arith.constant 1.280000e+02 : f32
    %110 = vector.broadcast %cst_38 : f32 to vector<32x1xf32>
    %111 = arith.divf %109, %110 : vector<32x1xf32>
    %112 = vector.broadcast %111 : vector<32x1xf32> to vector<32x128xf32>
    %113 = arith.subf %107, %112 : vector<32x128xf32>
    %114 = arith.mulf %113, %113 : vector<32x128xf32>
    %cst_39 = arith.constant dense<0.000000e+00> : vector<32xf32>
    %115 = vector.multi_reduction <add>, %114, %cst_39 [1] : vector<32x128xf32> to vector<32xf32>
    %116 = vector.shape_cast %115 : vector<32xf32> to vector<32x1xf32>
    %cst_40 = arith.constant 1.280000e+02 : f32
    %117 = vector.broadcast %cst_40 : f32 to vector<32x1xf32>
    %118 = arith.divf %116, %117 : vector<32x1xf32>
    %cst_41 = arith.constant 9.99999974E-6 : f32
    %119 = vector.broadcast %cst_41 : f32 to vector<32x1xf32>
    %120 = arith.addf %118, %119 : vector<32x1xf32>
    %121 = math.rsqrt %120 : vector<32x1xf32>
    %122 = vector.broadcast %121 : vector<32x1xf32> to vector<32x128xf32>
    %123 = arith.mulf %113, %122 : vector<32x128xf32>
    %c0_42 = arith.constant 0 : index
    %c0_43 = arith.constant 0 : index
    %124 = vector.load %arg10[%c0_42, %c0_43] : memref<1x128xf32, #tpu.memory_space<vmem>>, vector<1x128xf32>
    %125 = vector.shape_cast %124 : vector<1x128xf32> to vector<128xf32>
    %126 = vector.shape_cast %125 : vector<128xf32> to vector<1x128xf32>
    %127 = vector.broadcast %126 : vector<1x128xf32> to vector<32x128xf32>
    %128 = arith.mulf %123, %127 : vector<32x128xf32>
    %c0_44 = arith.constant 0 : index
    %c0_45 = arith.constant 0 : index
    %129 = vector.load %arg11[%c0_44, %c0_45] : memref<1x128xf32, #tpu.memory_space<vmem>>, vector<1x128xf32>
    %130 = vector.shape_cast %129 : vector<1x128xf32> to vector<128xf32>
    %131 = vector.shape_cast %130 : vector<128xf32> to vector<1x128xf32>
    %132 = vector.broadcast %131 : vector<1x128xf32> to vector<32x128xf32>
    %133 = arith.addf %128, %132 : vector<32x128xf32>
    %c0_46 = arith.constant 0 : index
    %c0_47 = arith.constant 0 : index
    %134 = vector.load %arg12[%c0_46, %c0_47] : memref<128x512xf32, #tpu.memory_space<vmem>>, vector<128x512xf32>
    %cst_48 = arith.constant dense<0.000000e+00> : vector<32x512xf32>
    %135 = tpu.matmul %133, %134, %cst_48 {dimension_numbers = #tpu.dot_dimension_numbers<[1], [0], [0], [1], [0, 0, 1, 1], [], []>} : vector<32x128xf32>, vector<128x512xf32>, vector<32x512xf32> -> vector<32x512xf32>
    %c0_49 = arith.constant 0 : index
    %c0_50 = arith.constant 0 : index
    %136 = vector.load %arg13[%c0_49, %c0_50] : memref<1x512xf32, #tpu.memory_space<vmem>>, vector<1x512xf32>
    %137 = vector.shape_cast %136 : vector<1x512xf32> to vector<512xf32>
    %138 = vector.shape_cast %137 : vector<512xf32> to vector<1x512xf32>
    %139 = vector.broadcast %138 : vector<1x512xf32> to vector<32x512xf32>
    %140 = arith.addf %135, %139 : vector<32x512xf32>
    %cst_51 = arith.constant 0.000000e+00 : f32
    %141 = vector.broadcast %cst_51 : f32 to vector<32x512xf32>
    %142 = arith.maximumf %140, %141 : vector<32x512xf32>
    %c0_52 = arith.constant 0 : index
    %c0_53 = arith.constant 0 : index
    %143 = vector.load %arg14[%c0_52, %c0_53] : memref<512x128xf32, #tpu.memory_space<vmem>>, vector<512x128xf32>
    %cst_54 = arith.constant dense<0.000000e+00> : vector<32x128xf32>
    %144 = tpu.matmul %142, %143, %cst_54 {dimension_numbers = #tpu.dot_dimension_numbers<[1], [0], [0], [1], [0, 0, 1, 1], [], []>} : vector<32x512xf32>, vector<512x128xf32>, vector<32x128xf32> -> vector<32x128xf32>
    %c0_55 = arith.constant 0 : index
    %c0_56 = arith.constant 0 : index
    %145 = vector.load %arg15[%c0_55, %c0_56] : memref<1x128xf32, #tpu.memory_space<vmem>>, vector<1x128xf32>
    %146 = vector.shape_cast %145 : vector<1x128xf32> to vector<128xf32>
    %147 = vector.shape_cast %146 : vector<128xf32> to vector<1x128xf32>
    %148 = vector.broadcast %147 : vector<1x128xf32> to vector<32x128xf32>
    %149 = arith.addf %144, %148 : vector<32x128xf32>
    %150 = arith.addf %133, %149 : vector<32x128xf32>
    %cst_57 = arith.constant dense<0.000000e+00> : vector<32xf32>
    %151 = vector.multi_reduction <add>, %150, %cst_57 [1] : vector<32x128xf32> to vector<32xf32>
    %152 = vector.shape_cast %151 : vector<32xf32> to vector<32x1xf32>
    %cst_58 = arith.constant 1.280000e+02 : f32
    %153 = vector.broadcast %cst_58 : f32 to vector<32x1xf32>
    %154 = arith.divf %152, %153 : vector<32x1xf32>
    %155 = vector.broadcast %154 : vector<32x1xf32> to vector<32x128xf32>
    %156 = arith.subf %150, %155 : vector<32x128xf32>
    %157 = arith.mulf %156, %156 : vector<32x128xf32>
    %cst_59 = arith.constant dense<0.000000e+00> : vector<32xf32>
    %158 = vector.multi_reduction <add>, %157, %cst_59 [1] : vector<32x128xf32> to vector<32xf32>
    %159 = vector.shape_cast %158 : vector<32xf32> to vector<32x1xf32>
    %cst_60 = arith.constant 1.280000e+02 : f32
    %160 = vector.broadcast %cst_60 : f32 to vector<32x1xf32>
    %161 = arith.divf %159, %160 : vector<32x1xf32>
    %cst_61 = arith.constant 9.99999974E-6 : f32
    %162 = vector.broadcast %cst_61 : f32 to vector<32x1xf32>
    %163 = arith.addf %161, %162 : vector<32x1xf32>
    %164 = math.rsqrt %163 : vector<32x1xf32>
    %165 = vector.broadcast %164 : vector<32x1xf32> to vector<32x128xf32>
    %166 = arith.mulf %156, %165 : vector<32x128xf32>
    %c0_62 = arith.constant 0 : index
    %c0_63 = arith.constant 0 : index
    %167 = vector.load %arg16[%c0_62, %c0_63] : memref<1x128xf32, #tpu.memory_space<vmem>>, vector<1x128xf32>
    %168 = vector.shape_cast %167 : vector<1x128xf32> to vector<128xf32>
    %169 = vector.shape_cast %168 : vector<128xf32> to vector<1x128xf32>
    %170 = vector.broadcast %169 : vector<1x128xf32> to vector<32x128xf32>
    %171 = arith.mulf %166, %170 : vector<32x128xf32>
    %c0_64 = arith.constant 0 : index
    %c0_65 = arith.constant 0 : index
    %172 = vector.load %arg17[%c0_64, %c0_65] : memref<1x128xf32, #tpu.memory_space<vmem>>, vector<1x128xf32>
    %173 = vector.shape_cast %172 : vector<1x128xf32> to vector<128xf32>
    %174 = vector.shape_cast %173 : vector<128xf32> to vector<1x128xf32>
    %175 = vector.broadcast %174 : vector<1x128xf32> to vector<32x128xf32>
    %176 = arith.addf %171, %175 : vector<32x128xf32>
    %177 = vector.shape_cast %176 : vector<32x128xf32> to vector<4x8x128xf32>
    %c0_66 = arith.constant 0 : index
    %c0_67 = arith.constant 0 : index
    %c0_68 = arith.constant 0 : index
    %178 = vector.load %arg18[%c0_66, %c0_67, %c0_68] : memref<4x8x128xf32, #tpu.memory_space<vmem>>, vector<4x8x128xf32>
    tpu.vector_store %arg18[%c0_66, %c0_67, %c0_68], %177 {strides = array<i32>} : memref<4x8x128xf32, #tpu.memory_space<vmem>>, vector<4x8x128xf32>,
    return
  }
  func.func @transform_0(%arg0: i32) -> (i32, i32, i32) {
    %c0_i32 = arith.constant 0 : i32
    %c0_i32_0 = arith.constant 0 : i32
    %c0_i32_1 = arith.constant 0 : i32
    return %arg0, %c0_i32, %c0_i32_0 : i32, i32, i32
  }
  func.func @transform_1(%arg0: i32) -> (i32, i32) {
    %c0_i32 = arith.constant 0 : i32
    %c0_i32_0 = arith.constant 0 : i32
    %c0_i32_1 = arith.constant 0 : i32
    return %c0_i32, %c0_i32_0 : i32, i32
  }
  func.func @transform_2(%arg0: i32) -> (i32, i32) {
    %c0_i32 = arith.constant 0 : i32
    %c0_i32_0 = arith.constant 0 : i32
    %c0_i32_1 = arith.constant 0 : i32
    return %c0_i32, %c0_i32_0 : i32, i32
  }
  func.func @transform_3(%arg0: i32) -> (i32, i32) {
    %c0_i32 = arith.constant 0 : i32
    %c0_i32_0 = arith.constant 0 : i32
    %c0_i32_1 = arith.constant 0 : i32
    return %c0_i32, %c0_i32_0 : i32, i32
  }
  func.func @transform_4(%arg0: i32) -> (i32, i32) {
    %c0_i32 = arith.constant 0 : i32
    %c0_i32_0 = arith.constant 0 : i32
    %c0_i32_1 = arith.constant 0 : i32
    return %c0_i32, %c0_i32_0 : i32, i32
  }
  func.func @transform_5(%arg0: i32) -> (i32, i32) {
    %c0_i32 = arith.constant 0 : i32
    %c0_i32_0 = arith.constant 0 : i32
    %c0_i32_1 = arith.constant 0 : i32
    return %c0_i32, %c0_i32_0 : i32, i32
  }
  func.func @transform_6(%arg0: i32) -> (i32, i32) {
    %c0_i32 = arith.constant 0 : i32
    %c0_i32_0 = arith.constant 0 : i32
    %c0_i32_1 = arith.constant 0 : i32
    return %c0_i32, %c0_i32_0 : i32, i32
  }
  func.func @transform_7(%arg0: i32) -> (i32, i32) {
    %c0_i32 = arith.constant 0 : i32
    %c0_i32_0 = arith.constant 0 : i32
    %c0_i32_1 = arith.constant 0 : i32
    return %c0_i32, %c0_i32_0 : i32, i32
  }
  func.func @transform_8(%arg0: i32) -> (i32, i32) {
    %c0_i32 = arith.constant 0 : i32
    %c0_i32_0 = arith.constant 0 : i32
    %c0_i32_1 = arith.constant 0 : i32
    return %c0_i32, %c0_i32_0 : i32, i32
  }
  func.func @transform_9(%arg0: i32) -> (i32, i32) {
    %c0_i32 = arith.constant 0 : i32
    %c0_i32_0 = arith.constant 0 : i32
    %c0_i32_1 = arith.constant 0 : i32
    return %c0_i32, %c0_i32_0 : i32, i32
  }
  func.func @transform_10(%arg0: i32) -> (i32, i32) {
    %c0_i32 = arith.constant 0 : i32
    %c0_i32_0 = arith.constant 0 : i32
    %c0_i32_1 = arith.constant 0 : i32
    return %c0_i32, %c0_i32_0 : i32, i32
  }
  func.func @transform_11(%arg0: i32) -> (i32, i32) {
    %c0_i32 = arith.constant 0 : i32
    %c0_i32_0 = arith.constant 0 : i32
    %c0_i32_1 = arith.constant 0 : i32
    return %c0_i32, %c0_i32_0 : i32, i32
  }
  func.func @transform_12(%arg0: i32) -> (i32, i32) {
    %c0_i32 = arith.constant 0 : i32
    %c0_i32_0 = arith.constant 0 : i32
    %c0_i32_1 = arith.constant 0 : i32
    return %c0_i32, %c0_i32_0 : i32, i32
  }
  func.func @transform_13(%arg0: i32) -> (i32, i32) {
    %c0_i32 = arith.constant 0 : i32
    %c0_i32_0 = arith.constant 0 : i32
    %c0_i32_1 = arith.constant 0 : i32
    return %c0_i32, %c0_i32_0 : i32, i32
  }
  func.func @transform_14(%arg0: i32) -> (i32, i32) {
    %c0_i32 = arith.constant 0 : i32
    %c0_i32_0 = arith.constant 0 : i32
    %c0_i32_1 = arith.constant 0 : i32
    return %c0_i32, %c0_i32_0 : i32, i32
  }
  func.func @transform_15(%arg0: i32) -> (i32, i32) {
    %c0_i32 = arith.constant 0 : i32
    %c0_i32_0 = arith.constant 0 : i32
    %c0_i32_1 = arith.constant 0 : i32
    return %c0_i32, %c0_i32_0 : i32, i32
  }
  func.func @transform_16(%arg0: i32) -> (i32, i32) {
    %c0_i32 = arith.constant 0 : i32
    %c0_i32_0 = arith.constant 0 : i32
    %c0_i32_1 = arith.constant 0 : i32
    return %c0_i32, %c0_i32_0 : i32, i32
  }
  func.func @transform_17(%arg0: i32) -> (i32, i32, i32) {
    %c0_i32 = arith.constant 0 : i32
    %c0_i32_0 = arith.constant 0 : i32
    %c0_i32_1 = arith.constant 0 : i32
    return %arg0, %c0_i32, %c0_i32_0 : i32, i32, i32
  }
}

module attributes {stable_mosaic.version = 11 : i64} {
  func.func @transformer_block_kernel(%arg0: i32, %arg1: memref<4x8x128xf32, #tpu.memory_space<vmem>>, %arg2: memref<128x128xf32, #tpu.memory_space<vmem>>, %arg3: memref<128x128xf32, #tpu.memory_space<vmem>>, %arg4: memref<128x128xf32, #tpu.memory_space<vmem>>, %arg5: memref<1x128xf32, #tpu.memory_space<vmem>>, %arg6: memref<1x128xf32, #tpu.memory_space<vmem>>, %arg7: memref<1x128xf32, #tpu.memory_space<vmem>>, %arg8: memref<128x128xf32, #tpu.memory_space<vmem>>, %arg9: memref<1x128xf32, #tpu.memory_space<vmem>>, %arg10: memref<1x128xf32, #tpu.memory_space<vmem>>, %arg11: memref<1x128xf32, #tpu.memory_space<vmem>>, %arg12: memref<128x512xf32, #tpu.memory_space<vmem>>, %arg13: memref<1x512xf32, #tpu.memory_space<vmem>>, %arg14: memref<512x128xf32, #tpu.memory_space<vmem>>, %arg15: memref<1x128xf32, #tpu.memory_space<vmem>>, %arg16: memref<1x128xf32, #tpu.memory_space<vmem>>, %arg17: memref<1x128xf32, #tpu.memory_space<vmem>>, %arg18: memref<4x8x128xf32, #tpu.memory_space<vmem>>) attributes {dimension_semantics = [#tpu.dimension_semantics<parallel>], iteration_bounds = array<i64: 1>, scalar_prefetch = 0 : i64, scratch_operands = 0 : i64, tpu.core_type = #tpu.core_type<tc>, window_params = [{transform_indices = @transform_0, window_bounds = array<i64: 4, 8, 128>}, {pipeline_mode = #tpu.pipeline_mode<synchronous>, transform_indices = @transform_1, window_bounds = array<i64: 128, 128>}, {pipeline_mode = #tpu.pipeline_mode<synchronous>, transform_indices = @transform_2, window_bounds = array<i64: 128, 128>}, {pipeline_mode = #tpu.pipeline_mode<synchronous>, transform_indices = @transform_3, window_bounds = array<i64: 128, 128>}, {pipeline_mode = #tpu.pipeline_mode<synchronous>, transform_indices = @transform_4, window_bounds = array<i64: 1, 128>}, {pipeline_mode = #tpu.pipeline_mode<synchronous>, transform_indices = @transform_5, window_bounds = array<i64: 1, 128>}, {pipeline_mode = #tpu.pipeline_mode<synchronous>, transform_indices = @transform_6, window_bounds = array<i64: 1, 128>}, {pipeline_mode = #tpu.pipeline_mode<synchronous>, transform_indices = @transform_7, window_bounds = array<i64: 128, 128>}, {pipeline_mode = #tpu.pipeline_mode<synchronous>, transform_indices = @transform_8, window_bounds = array<i64: 1, 128>}, {pipeline_mode = #tpu.pipeline_mode<synchronous>, transform_indices = @transform_9, window_bounds = array<i64: 1, 128>}, {pipeline_mode = #tpu.pipeline_mode<synchronous>, transform_indices = @transform_10, window_bounds = array<i64: 1, 128>}, {pipeline_mode = #tpu.pipeline_mode<synchronous>, transform_indices = @transform_11, window_bounds = array<i64: 128, 512>}, {pipeline_mode = #tpu.pipeline_mode<synchronous>, transform_indices = @transform_12, window_bounds = array<i64: 1, 512>}, {pipeline_mode = #tpu.pipeline_mode<synchronous>, transform_indices = @transform_13, window_bounds = array<i64: 512, 128>}, {pipeline_mode = #tpu.pipeline_mode<synchronous>, transform_indices = @transform_14, window_bounds = array<i64: 1, 128>}, {pipeline_mode = #tpu.pipeline_mode<synchronous>, transform_indices = @transform_15, window_bounds = array<i64: 1, 128>}, {pipeline_mode = #tpu.pipeline_mode<synchronous>, transform_indices = @transform_16, window_bounds = array<i64: 1, 128>}, {transform_indices = @transform_17, window_bounds = array<i64: 4, 8, 128>}]} {
    %c0 = arith.constant 0 : index
    %c0_0 = arith.constant 0 : index
    %c0_1 = arith.constant 0 : index
    %0 = vector.load %arg1[%c0, %c0_0, %c0_1] : memref<4x8x128xf32, #tpu.memory_space<vmem>>, vector<4x8x128xf32>
    %1 = vector.shape_cast %0 : vector<4x8x128xf32> to vector<32x128xf32>
    %c0_2 = arith.constant 0 : index
    %c0_3 = arith.constant 0 : index
    %2 = vector.load %arg2[%c0_2, %c0_3] : memref<128x128xf32, #tpu.memory_space<vmem>>, vector<128x128xf32>
    %cst = arith.constant dense<0.000000e+00> : vector<32x128xf32>
    %3 = tpu.matmul %1, %2, %cst {dimension_numbers = #tpu.dot_dimension_numbers<[1], [0], [0], [1], [0, 0, 1, 1], [], []>} : vector<32x128xf32>, vector<128x128xf32>, vector<32x128xf32> -> vector<32x128xf32>
    %c0_4 = arith.constant 0 : index
    %c0_5 = arith.constant 0 : index
    %4 = vector.load %arg5[%c0_4, %c0_5] : memref<1x128xf32, #tpu.memory_space<vmem>>, vector<1x128xf32>
    %5 = vector.shape_cast %4 : vector<1x128xf32> to vector<128xf32>
    %6 = vector.shape_cast %5 : vector<128xf32> to vector<1x128xf32>
    %7 = vector.broadcast %6 : vector<1x128xf32> to vector<32x128xf32>
    %8 = arith.addf %3, %7 : vector<32x128xf32>
    %c0_6 = arith.constant 0 : index
    %c0_7 = arith.constant 0 : index
    %9 = vector.load %arg3[%c0_6, %c0_7] : memref<128x128xf32, #tpu.memory_space<vmem>>, vector<128x128xf32>
    %cst_8 = arith.constant dense<0.000000e+00> : vector<32x128xf32>
    %10 = tpu.matmul %1, %9, %cst_8 {dimension_numbers = #tpu.dot_dimension_numbers<[1], [0], [0], [1], [0, 0, 1, 1], [], []>} : vector<32x128xf32>, vector<128x128xf32>, vector<32x128xf32> -> vector<32x128xf32>
    %c0_9 = arith.constant 0 : index
    %c0_10 = arith.constant 0 : index
    %11 = vector.load %arg6[%c0_9, %c0_10] : memref<1x128xf32, #tpu.memory_space<vmem>>, vector<1x128xf32>
    %12 = vector.shape_cast %11 : vector<1x128xf32> to vector<128xf32>
    %13 = vector.shape_cast %12 : vector<128xf32> to vector<1x128xf32>
    %14 = vector.broadcast %13 : vector<1x128xf32> to vector<32x128xf32>
    %15 = arith.addf %10, %14 : vector<32x128xf32>
    %c0_11 = arith.constant 0 : index
    %c0_12 = arith.constant 0 : index
    %16 = vector.load %arg4[%c0_11, %c0_12] : memref<128x128xf32, #tpu.memory_space<vmem>>, vector<128x128xf32>
    %cst_13 = arith.constant dense<0.000000e+00> : vector<32x128xf32>
    %17 = tpu.matmul %1, %16, %cst_13 {dimension_numbers = #tpu.dot_dimension_numbers<[1], [0], [0], [1], [0, 0, 1, 1], [], []>} : vector<32x128xf32>, vector<128x128xf32>, vector<32x128xf32> -> vector<32x128xf32>
    %c0_14 = arith.constant 0 : index
    %c0_15 = arith.constant 0 : index
    %18 = vector.load %arg7[%c0_14, %c0_15] : memref<1x128xf32, #tpu.memory_space<vmem>>, vector<1x128xf32>
    %19 = vector.shape_cast %18 : vector<1x128xf32> to vector<128xf32>
    %20 = vector.shape_cast %19 : vector<128xf32> to vector<1x128xf32>
    %21 = vector.broadcast %20 : vector<1x128xf32> to vector<32x128xf32>
    %22 = arith.addf %17, %21 : vector<32x128xf32>
    %23 = vector.extract_strided_slice %8 {offsets = [0, 0], sizes = [32, 32], strides = [1, 1]} : vector<32x128xf32> to vector<32x32xf32>
    %24 = vector.shape_cast %23 : vector<32x32xf32> to vector<4x8x32xf32>
    %25 = vector.extract_strided_slice %15 {offsets = [0, 0], sizes = [32, 32], strides = [1, 1]} : vector<32x128xf32> to vector<32x32xf32>
    %26 = vector.shape_cast %25 : vector<32x32xf32> to vector<4x8x32xf32>
    %27 = vector.extract_strided_slice %22 {offsets = [0, 0], sizes = [32, 32], strides = [1, 1]} : vector<32x128xf32> to vector<32x32xf32>
    %28 = vector.shape_cast %27 : vector<32x32xf32> to vector<4x8x32xf32>
    "tpu.trace_start"() <{level = 10 : i32, message = "bqd,bkd->bqk"}> : () -> ()
    %cst_16 = arith.constant dense<0.000000e+00> : vector<4x8x8xf32>
    %29 = tpu.matmul %24, %26, %cst_16 {dimension_numbers = #tpu.dot_dimension_numbers<[2], [2], [1], [1], [0, 0, 0, 1, 1, 1], [0], [0]>} : vector<4x8x32xf32>, vector<4x8x32xf32>, vector<4x8x8xf32> -> vector<4x8x8xf32>
    "tpu.trace_stop"() : () -> ()
    %cst_17 = arith.constant dense<0xFF800000> : vector<4x8xf32>
    %30 = vector.multi_reduction <maximumf>, %29, %cst_17 [2] : vector<4x8x8xf32> to vector<4x8xf32>
    %31 = vector.shape_cast %30 : vector<4x8xf32> to vector<4x8x1xf32>
    %32 = vector.broadcast %31 : vector<4x8x1xf32> to vector<4x8x8xf32>
    %33 = arith.subf %29, %32 : vector<4x8x8xf32>
    %34 = math.exp %33 : vector<4x8x8xf32>
    %cst_18 = arith.constant dense<0.000000e+00> : vector<4x8xf32>
    %35 = vector.multi_reduction <add>, %34, %cst_18 [2] : vector<4x8x8xf32> to vector<4x8xf32>
    %36 = vector.shape_cast %35 : vector<4x8xf32> to vector<4x8x1xf32>
    %37 = tpu.reciprocal %36 : vector<4x8x1xf32> -> vector<4x8x1xf32>
    %38 = vector.broadcast %37 : vector<4x8x1xf32> to vector<4x8x8xf32>
    %39 = arith.mulf %34, %38 : vector<4x8x8xf32>
    "tpu.trace_start"() <{level = 10 : i32, message = "bqk,bkd->bqd"}> : () -> ()
    %cst_19 = arith.constant dense<0.000000e+00> : vector<4x8x32xf32>
    %40 = tpu.matmul %39, %28, %cst_19 {dimension_numbers = #tpu.dot_dimension_numbers<[2], [1], [1], [2], [0, 0, 0, 1, 1, 2], [0], [0]>} : vector<4x8x8xf32>, vector<4x8x32xf32>, vector<4x8x32xf32> -> vector<4x8x32xf32>
    "tpu.trace_stop"() : () -> ()
    %41 = vector.shape_cast %40 : vector<4x8x32xf32> to vector<32x32xf32>
    %42 = vector.extract_strided_slice %8 {offsets = [0, 32], sizes = [32, 32], strides = [1, 1]} : vector<32x128xf32> to vector<32x32xf32>
    %43 = vector.shape_cast %42 : vector<32x32xf32> to vector<4x8x32xf32>
    %44 = vector.extract_strided_slice %15 {offsets = [0, 32], sizes = [32, 32], strides = [1, 1]} : vector<32x128xf32> to vector<32x32xf32>
    %45 = vector.shape_cast %44 : vector<32x32xf32> to vector<4x8x32xf32>
    %46 = vector.extract_strided_slice %22 {offsets = [0, 32], sizes = [32, 32], strides = [1, 1]} : vector<32x128xf32> to vector<32x32xf32>
    %47 = vector.shape_cast %46 : vector<32x32xf32> to vector<4x8x32xf32>
    "tpu.trace_start"() <{level = 10 : i32, message = "bqd,bkd->bqk"}> : () -> ()
    %cst_20 = arith.constant dense<0.000000e+00> : vector<4x8x8xf32>
    %48 = tpu.matmul %43, %45, %cst_20 {dimension_numbers = #tpu.dot_dimension_numbers<[2], [2], [1], [1], [0, 0, 0, 1, 1, 1], [0], [0]>} : vector<4x8x32xf32>, vector<4x8x32xf32>, vector<4x8x8xf32> -> vector<4x8x8xf32>
    "tpu.trace_stop"() : () -> ()
    %cst_21 = arith.constant dense<0xFF800000> : vector<4x8xf32>
    %49 = vector.multi_reduction <maximumf>, %48, %cst_21 [2] : vector<4x8x8xf32> to vector<4x8xf32>
    %50 = vector.shape_cast %49 : vector<4x8xf32> to vector<4x8x1xf32>
    %51 = vector.broadcast %50 : vector<4x8x1xf32> to vector<4x8x8xf32>
    %52 = arith.subf %48, %51 : vector<4x8x8xf32>
    %53 = math.exp %52 : vector<4x8x8xf32>
    %cst_22 = arith.constant dense<0.000000e+00> : vector<4x8xf32>
    %54 = vector.multi_reduction <add>, %53, %cst_22 [2] : vector<4x8x8xf32> to vector<4x8xf32>
    %55 = vector.shape_cast %54 : vector<4x8xf32> to vector<4x8x1xf32>
    %56 = tpu.reciprocal %55 : vector<4x8x1xf32> -> vector<4x8x1xf32>
    %57 = vector.broadcast %56 : vector<4x8x1xf32> to vector<4x8x8xf32>
    %58 = arith.mulf %53, %57 : vector<4x8x8xf32>
    "tpu.trace_start"() <{level = 10 : i32, message = "bqk,bkd->bqd"}> : () -> ()
    %cst_23 = arith.constant dense<0.000000e+00> : vector<4x8x32xf32>
    %59 = tpu.matmul %58, %47, %cst_23 {dimension_numbers = #tpu.dot_dimension_numbers<[2], [1], [1], [2], [0, 0, 0, 1, 1, 2], [0], [0]>} : vector<4x8x8xf32>, vector<4x8x32xf32>, vector<4x8x32xf32> -> vector<4x8x32xf32>
    "tpu.trace_stop"() : () -> ()
    %60 = vector.shape_cast %59 : vector<4x8x32xf32> to vector<32x32xf32>
    %61 = vector.extract_strided_slice %8 {offsets = [0, 64], sizes = [32, 32], strides = [1, 1]} : vector<32x128xf32> to vector<32x32xf32>
    %62 = vector.shape_cast %61 : vector<32x32xf32> to vector<4x8x32xf32>
    %63 = vector.extract_strided_slice %15 {offsets = [0, 64], sizes = [32, 32], strides = [1, 1]} : vector<32x128xf32> to vector<32x32xf32>
    %64 = vector.shape_cast %63 : vector<32x32xf32> to vector<4x8x32xf32>
    %65 = vector.extract_strided_slice %22 {offsets = [0, 64], sizes = [32, 32], strides = [1, 1]} : vector<32x128xf32> to vector<32x32xf32>
    %66 = vector.shape_cast %65 : vector<32x32xf32> to vector<4x8x32xf32>
    "tpu.trace_start"() <{level = 10 : i32, message = "bqd,bkd->bqk"}> : () -> ()
    %cst_24 = arith.constant dense<0.000000e+00> : vector<4x8x8xf32>
    %67 = tpu.matmul %62, %64, %cst_24 {dimension_numbers = #tpu.dot_dimension_numbers<[2], [2], [1], [1], [0, 0, 0, 1, 1, 1], [0], [0]>} : vector<4x8x32xf32>, vector<4x8x32xf32>, vector<4x8x8xf32> -> vector<4x8x8xf32>
    "tpu.trace_stop"() : () -> ()
    %cst_25 = arith.constant dense<0xFF800000> : vector<4x8xf32>
    %68 = vector.multi_reduction <maximumf>, %67, %cst_25 [2] : vector<4x8x8xf32> to vector<4x8xf32>
    %69 = vector.shape_cast %68 : vector<4x8xf32> to vector<4x8x1xf32>
    %70 = vector.broadcast %69 : vector<4x8x1xf32> to vector<4x8x8xf32>
    %71 = arith.subf %67, %70 : vector<4x8x8xf32>
    %72 = math.exp %71 : vector<4x8x8xf32>
    %cst_26 = arith.constant dense<0.000000e+00> : vector<4x8xf32>
    %73 = vector.multi_reduction <add>, %72, %cst_26 [2] : vector<4x8x8xf32> to vector<4x8xf32>
    %74 = vector.shape_cast %73 : vector<4x8xf32> to vector<4x8x1xf32>
    %75 = tpu.reciprocal %74 : vector<4x8x1xf32> -> vector<4x8x1xf32>
    %76 = vector.broadcast %75 : vector<4x8x1xf32> to vector<4x8x8xf32>
    %77 = arith.mulf %72, %76 : vector<4x8x8xf32>
    "tpu.trace_start"() <{level = 10 : i32, message = "bqk,bkd->bqd"}> : () -> ()
    %cst_27 = arith.constant dense<0.000000e+00> : vector<4x8x32xf32>
    %78 = tpu.matmul %77, %66, %cst_27 {dimension_numbers = #tpu.dot_dimension_numbers<[2], [1], [1], [2], [0, 0, 0, 1, 1, 2], [0], [0]>} : vector<4x8x8xf32>, vector<4x8x32xf32>, vector<4x8x32xf32> -> vector<4x8x32xf32>
    "tpu.trace_stop"() : () -> ()
    %79 = vector.shape_cast %78 : vector<4x8x32xf32> to vector<32x32xf32>
    %80 = vector.extract_strided_slice %8 {offsets = [0, 96], sizes = [32, 32], strides = [1, 1]} : vector<32x128xf32> to vector<32x32xf32>
    %81 = vector.shape_cast %80 : vector<32x32xf32> to vector<4x8x32xf32>
    %82 = vector.extract_strided_slice %15 {offsets = [0, 96], sizes = [32, 32], strides = [1, 1]} : vector<32x128xf32> to vector<32x32xf32>
    %83 = vector.shape_cast %82 : vector<32x32xf32> to vector<4x8x32xf32>
    %84 = vector.extract_strided_slice %22 {offsets = [0, 96], sizes = [32, 32], strides = [1, 1]} : vector<32x128xf32> to vector<32x32xf32>
    %85 = vector.shape_cast %84 : vector<32x32xf32> to vector<4x8x32xf32>
    "tpu.trace_start"() <{level = 10 : i32, message = "bqd,bkd->bqk"}> : () -> ()
    %cst_28 = arith.constant dense<0.000000e+00> : vector<4x8x8xf32>
    %86 = tpu.matmul %81, %83, %cst_28 {dimension_numbers = #tpu.dot_dimension_numbers<[2], [2], [1], [1], [0, 0, 0, 1, 1, 1], [0], [0]>} : vector<4x8x32xf32>, vector<4x8x32xf32>, vector<4x8x8xf32> -> vector<4x8x8xf32>
    "tpu.trace_stop"() : () -> ()
    %cst_29 = arith.constant dense<0xFF800000> : vector<4x8xf32>
    %87 = vector.multi_reduction <maximumf>, %86, %cst_29 [2] : vector<4x8x8xf32> to vector<4x8xf32>
    %88 = vector.shape_cast %87 : vector<4x8xf32> to vector<4x8x1xf32>
    %89 = vector.broadcast %88 : vector<4x8x1xf32> to vector<4x8x8xf32>
    %90 = arith.subf %86, %89 : vector<4x8x8xf32>
    %91 = math.exp %90 : vector<4x8x8xf32>
    %cst_30 = arith.constant dense<0.000000e+00> : vector<4x8xf32>
    %92 = vector.multi_reduction <add>, %91, %cst_30 [2] : vector<4x8x8xf32> to vector<4x8xf32>
    %93 = vector.shape_cast %92 : vector<4x8xf32> to vector<4x8x1xf32>
    %94 = tpu.reciprocal %93 : vector<4x8x1xf32> -> vector<4x8x1xf32>
    %95 = vector.broadcast %94 : vector<4x8x1xf32> to vector<4x8x8xf32>
    %96 = arith.mulf %91, %95 : vector<4x8x8xf32>
    "tpu.trace_start"() <{level = 10 : i32, message = "bqk,bkd->bqd"}> : () -> ()
    %cst_31 = arith.constant dense<0.000000e+00> : vector<4x8x32xf32>
    %97 = tpu.matmul %96, %85, %cst_31 {dimension_numbers = #tpu.dot_dimension_numbers<[2], [1], [1], [2], [0, 0, 0, 1, 1, 2], [0], [0]>} : vector<4x8x8xf32>, vector<4x8x32xf32>, vector<4x8x32xf32> -> vector<4x8x32xf32>
    "tpu.trace_stop"() : () -> ()
    %98 = vector.shape_cast %97 : vector<4x8x32xf32> to vector<32x32xf32>
    %99 = tpu.concatenate %41, %60, %79, %98 in 1 : vector<32x32xf32>, vector<32x32xf32>, vector<32x32xf32>, vector<32x32xf32> -> vector<32x128xf32>
    %c0_32 = arith.constant 0 : index
    %c0_33 = arith.constant 0 : index
    %100 = vector.load %arg8[%c0_32, %c0_33] : memref<128x128xf32, #tpu.memory_space<vmem>>, vector<128x128xf32>
    %cst_34 = arith.constant dense<0.000000e+00> : vector<32x128xf32>
    %101 = tpu.matmul %99, %100, %cst_34 {dimension_numbers = #tpu.dot_dimension_numbers<[1], [0], [0], [1], [0, 0, 1, 1], [], []>} : vector<32x128xf32>, vector<128x128xf32>, vector<32x128xf32> -> vector<32x128xf32>
    %c0_35 = arith.constant 0 : index
    %c0_36 = arith.constant 0 : index
    %102 = vector.load %arg9[%c0_35, %c0_36] : memref<1x128xf32, #tpu.memory_space<vmem>>, vector<1x128xf32>
    %103 = vector.shape_cast %102 : vector<1x128xf32> to vector<128xf32>
    %104 = vector.shape_cast %103 : vector<128xf32> to vector<1x128xf32>
    %105 = vector.broadcast %104 : vector<1x128xf32> to vector<32x128xf32>
    %106 = arith.addf %101, %105 : vector<32x128xf32>
    %107 = arith.addf %1, %106 : vector<32x128xf32>
    %cst_37 = arith.constant dense<0.000000e+00> : vector<32xf32>
    %108 = vector.multi_reduction <add>, %107, %cst_37 [1] : vector<32x128xf32> to vector<32xf32>
    %109 = vector.shape_cast %108 : vector<32xf32> to vector<32x1xf32>
    %cst_38 = arith.constant 1.280000e+02 : f32
    %110 = vector.broadcast %cst_38 : f32 to vector<32x1xf32>
    %111 = arith.divf %109, %110 : vector<32x1xf32>
    %112 = vector.broadcast %111 : vector<32x1xf32> to vector<32x128xf32>
    %113 = arith.subf %107, %112 : vector<32x128xf32>
    %114 = arith.mulf %113, %113 : vector<32x128xf32>
    %cst_39 = arith.constant dense<0.000000e+00> : vector<32xf32>
    %115 = vector.multi_reduction <add>, %114, %cst_39 [1] : vector<32x128xf32> to vector<32xf32>
    %116 = vector.shape_cast %115 : vector<32xf32> to vector<32x1xf32>
    %cst_40 = arith.constant 1.280000e+02 : f32
    %117 = vector.broadcast %cst_40 : f32 to vector<32x1xf32>
    %118 = arith.divf %116, %117 : vector<32x1xf32>
    %cst_41 = arith.constant 9.99999974E-6 : f32
    %119 = vector.broadcast %cst_41 : f32 to vector<32x1xf32>
    %120 = arith.addf %118, %119 : vector<32x1xf32>
    %121 = math.rsqrt %120 : vector<32x1xf32>
    %122 = vector.broadcast %121 : vector<32x1xf32> to vector<32x128xf32>
    %123 = arith.mulf %113, %122 : vector<32x128xf32>
    %c0_42 = arith.constant 0 : index
    %c0_43 = arith.constant 0 : index
    %124 = vector.load %arg10[%c0_42, %c0_43] : memref<1x128xf32, #tpu.memory_space<vmem>>, vector<1x128xf32>
    %125 = vector.shape_cast %124 : vector<1x128xf32> to vector<128xf32>
    %126 = vector.shape_cast %125 : vector<128xf32> to vector<1x128xf32>
    %127 = vector.broadcast %126 : vector<1x128xf32> to vector<32x128xf32>
    %128 = arith.mulf %123, %127 : vector<32x128xf32>
    %c0_44 = arith.constant 0 : index
    %c0_45 = arith.constant 0 : index
    %129 = vector.load %arg11[%c0_44, %c0_45] : memref<1x128xf32, #tpu.memory_space<vmem>>, vector<1x128xf32>
    %130 = vector.shape_cast %129 : vector<1x128xf32> to vector<128xf32>
    %131 = vector.shape_cast %130 : vector<128xf32> to vector<1x128xf32>
    %132 = vector.broadcast %131 : vector<1x128xf32> to vector<32x128xf32>
    %133 = arith.addf %128, %132 : vector<32x128xf32>
    %c0_46 = arith.constant 0 : index
    %c0_47 = arith.constant 0 : index
    %134 = vector.load %arg12[%c0_46, %c0_47] : memref<128x512xf32, #tpu.memory_space<vmem>>, vector<128x512xf32>
    %cst_48 = arith.constant dense<0.000000e+00> : vector<32x512xf32>
    %135 = tpu.matmul %133, %134, %cst_48 {dimension_numbers = #tpu.dot_dimension_numbers<[1], [0], [0], [1], [0, 0, 1, 1], [], []>} : vector<32x128xf32>, vector<128x512xf32>, vector<32x512xf32> -> vector<32x512xf32>
    %c0_49 = arith.constant 0 : index
    %c0_50 = arith.constant 0 : index
    %136 = vector.load %arg13[%c0_49, %c0_50] : memref<1x512xf32, #tpu.memory_space<vmem>>, vector<1x512xf32>
    %137 = vector.shape_cast %136 : vector<1x512xf32> to vector<512xf32>
    %138 = vector.shape_cast %137 : vector<512xf32> to vector<1x512xf32>
    %139 = vector.broadcast %138 : vector<1x512xf32> to vector<32x512xf32>
    %140 = arith.addf %135, %139 : vector<32x512xf32>
    %cst_51 = arith.constant 0.000000e+00 : f32
    %141 = vector.broadcast %cst_51 : f32 to vector<32x512xf32>
    %142 = arith.maximumf %140, %141 : vector<32x512xf32>
    %c0_52 = arith.constant 0 : index
    %c0_53 = arith.constant 0 : index
    %143 = vector.load %arg14[%c0_52, %c0_53] : memref<512x128xf32, #tpu.memory_space<vmem>>, vector<512x128xf32>
    %cst_54 = arith.constant dense<0.000000e+00> : vector<32x128xf32>
    %144 = tpu.matmul %142, %143, %cst_54 {dimension_numbers = #tpu.dot_dimension_numbers<[1], [0], [0], [1], [0, 0, 1, 1], [], []>} : vector<32x512xf32>, vector<512x128xf32>, vector<32x128xf32> -> vector<32x128xf32>
    %c0_55 = arith.constant 0 : index
    %c0_56 = arith.constant 0 : index
    %145 = vector.load %arg15[%c0_55, %c0_56] : memref<1x128xf32, #tpu.memory_space<vmem>>, vector<1x128xf32>
    %146 = vector.shape_cast %145 : vector<1x128xf32> to vector<128xf32>
    %147 = vector.shape_cast %146 : vector<128xf32> to vector<1x128xf32>
    %148 = vector.broadcast %147 : vector<1x128xf32> to vector<32x128xf32>
    %149 = arith.addf %144, %148 : vector<32x128xf32>
    %150 = arith.addf %133, %149 : vector<32x128xf32>
    %cst_57 = arith.constant dense<0.000000e+00> : vector<32xf32>
    %151 = vector.multi_reduction <add>, %150, %cst_57 [1] : vector<32x128xf32> to vector<32xf32>
    %152 = vector.shape_cast %151 : vector<32xf32> to vector<32x1xf32>
    %cst_58 = arith.constant 1.280000e+02 : f32
    %153 = vector.broadcast %cst_58 : f32 to vector<32x1xf32>
    %154 = arith.divf %152, %153 : vector<32x1xf32>
    %155 = vector.broadcast %154 : vector<32x1xf32> to vector<32x128xf32>
    %156 = arith.subf %150, %155 : vector<32x128xf32>
    %157 = arith.mulf %156, %156 : vector<32x128xf32>
    %cst_59 = arith.constant dense<0.000000e+00> : vector<32xf32>
    %158 = vector.multi_reduction <add>, %157, %cst_59 [1] : vector<32x128xf32> to vector<32xf32>
    %159 = vector.shape_cast %158 : vector<32xf32> to vector<32x1xf32>
    %cst_60 = arith.constant 1.280000e+02 : f32
    %160 = vector.broadcast %cst_60 : f32 to vector<32x1xf32>
    %161 = arith.divf %159, %160 : vector<32x1xf32>
    %cst_61 = arith.constant 9.99999974E-6 : f32
    %162 = vector.broadcast %cst_61 : f32 to vector<32x1xf32>
    %163 = arith.addf %161, %162 : vector<32x1xf32>
    %164 = math.rsqrt %163 : vector<32x1xf32>
    %165 = vector.broadcast %164 : vector<32x1xf32> to vector<32x128xf32>
    %166 = arith.mulf %156, %165 : vector<32x128xf32>
    %c0_62 = arith.constant 0 : index
    %c0_63 = arith.constant 0 : index
    %167 = vector.load %arg16[%c0_62, %c0_63] : memref<1x128xf32, #tpu.memory_space<vmem>>, vector<1x128xf32>
    %168 = vector.shape_cast %167 : vector<1x128xf32> to vector<128xf32>
    %169 = vector.shape_cast %168 : vector<128xf32> to vector<1x128xf32>
    %170 = vector.broadcast %169 : vector<1x128xf32> to vector<32x128xf32>
    %171 = arith.mulf %166, %170 : vector<32x128xf32>
    %c0_64 = arith.constant 0 : index
    %c0_65 = arith.constant 0 : index
    %172 = vector.load %arg17[%c0_64, %c0_65] : memref<1x128xf32, #tpu.memory_space<vmem>>, vector<1x128xf32>
    %173 = vector.shape_cast %172 : vector<1x128xf32> to vector<128xf32>
    %174 = vector.shape_cast %173 : vector<128xf32> to vector<1x128xf32>
    %175 = vector.broadcast %174 : vector<1x128xf32> to vector<32x128xf32>
    %176 = arith.addf %171, %175 : vector<32x128xf32>
    %177 = vector.shape_cast %176 : vector<32x128xf32> to vector<4x8x128xf32>
    %c0_66 = arith.constant 0 : index
    %c0_67 = arith.constant 0 : index
    %c0_68 = arith.constant 0 : index
    %178 = vector.load %arg18[%c0_66, %c0_67, %c0_68] : memref<4x8x128xf32, #tpu.memory_space<vmem>>, vector<4x8x128xf32>
    tpu.vector_store %arg18[%c0_66, %c0_67, %c0_68], %177 {strides = array<i32>} : memref<4x8x128xf32, #tpu.memory_space<vmem>>, vector<4x8x128xf32>,
    return
  }
  func.func @transform_0(%arg0: i32) -> (i32, i32, i32) {
    %c0_i32 = arith.constant 0 : i32
    %c0_i32_0 = arith.constant 0 : i32
    %c0_i32_1 = arith.constant 0 : i32
    return %arg0, %c0_i32, %c0_i32_0 : i32, i32, i32
  }
  func.func @transform_1(%arg0: i32) -> (i32, i32) {
    %c0_i32 = arith.constant 0 : i32
    %c0_i32_0 = arith.constant 0 : i32
    %c0_i32_1 = arith.constant 0 : i32
    return %c0_i32, %c0_i32_0 : i32, i32
  }
  func.func @transform_2(%arg0: i32) -> (i32, i32) {
    %c0_i32 = arith.constant 0 : i32
    %c0_i32_0 = arith.constant 0 : i32
    %c0_i32_1 = arith.constant 0 : i32
    return %c0_i32, %c0_i32_0 : i32, i32
  }
  func.func @transform_3(%arg0: i32) -> (i32, i32) {
    %c0_i32 = arith.constant 0 : i32
    %c0_i32_0 = arith.constant 0 : i32
    %c0_i32_1 = arith.constant 0 : i32
    return %c0_i32, %c0_i32_0 : i32, i32
  }
  func.func @transform_4(%arg0: i32) -> (i32, i32) {
    %c0_i32 = arith.constant 0 : i32
    %c0_i32_0 = arith.constant 0 : i32
    %c0_i32_1 = arith.constant 0 : i32
    return %c0_i32, %c0_i32_0 : i32, i32
  }
  func.func @transform_5(%arg0: i32) -> (i32, i32) {
    %c0_i32 = arith.constant 0 : i32
    %c0_i32_0 = arith.constant 0 : i32
    %c0_i32_1 = arith.constant 0 : i32
    return %c0_i32, %c0_i32_0 : i32, i32
  }
  func.func @transform_6(%arg0: i32) -> (i32, i32) {
    %c0_i32 = arith.constant 0 : i32
    %c0_i32_0 = arith.constant 0 : i32
    %c0_i32_1 = arith.constant 0 : i32
    return %c0_i32, %c0_i32_0 : i32, i32
  }
  func.func @transform_7(%arg0: i32) -> (i32, i32) {
    %c0_i32 = arith.constant 0 : i32
    %c0_i32_0 = arith.constant 0 : i32
    %c0_i32_1 = arith.constant 0 : i32
    return %c0_i32, %c0_i32_0 : i32, i32
  }
  func.func @transform_8(%arg0: i32) -> (i32, i32) {
    %c0_i32 = arith.constant 0 : i32
    %c0_i32_0 = arith.constant 0 : i32
    %c0_i32_1 = arith.constant 0 : i32
    return %c0_i32, %c0_i32_0 : i32, i32
  }
  func.func @transform_9(%arg0: i32) -> (i32, i32) {
    %c0_i32 = arith.constant 0 : i32
    %c0_i32_0 = arith.constant 0 : i32
    %c0_i32_1 = arith.constant 0 : i32
    return %c0_i32, %c0_i32_0 : i32, i32
  }
  func.func @transform_10(%arg0: i32) -> (i32, i32) {
    %c0_i32 = arith.constant 0 : i32
    %c0_i32_0 = arith.constant 0 : i32
    %c0_i32_1 = arith.constant 0 : i32
    return %c0_i32, %c0_i32_0 : i32, i32
  }
  func.func @transform_11(%arg0: i32) -> (i32, i32) {
    %c0_i32 = arith.constant 0 : i32
    %c0_i32_0 = arith.constant 0 : i32
    %c0_i32_1 = arith.constant 0 : i32
    return %c0_i32, %c0_i32_0 : i32, i32
  }
  func.func @transform_12(%arg0: i32) -> (i32, i32) {
    %c0_i32 = arith.constant 0 : i32
    %c0_i32_0 = arith.constant 0 : i32
    %c0_i32_1 = arith.constant 0 : i32
    return %c0_i32, %c0_i32_0 : i32, i32
  }
  func.func @transform_13(%arg0: i32) -> (i32, i32) {
    %c0_i32 = arith.constant 0 : i32
    %c0_i32_0 = arith.constant 0 : i32
    %c0_i32_1 = arith.constant 0 : i32
    return %c0_i32, %c0_i32_0 : i32, i32
  }
  func.func @transform_14(%arg0: i32) -> (i32, i32) {
    %c0_i32 = arith.constant 0 : i32
    %c0_i32_0 = arith.constant 0 : i32
    %c0_i32_1 = arith.constant 0 : i32
    return %c0_i32, %c0_i32_0 : i32, i32
  }
  func.func @transform_15(%arg0: i32) -> (i32, i32) {
    %c0_i32 = arith.constant 0 : i32
    %c0_i32_0 = arith.constant 0 : i32
    %c0_i32_1 = arith.constant 0 : i32
    return %c0_i32, %c0_i32_0 : i32, i32
  }
  func.func @transform_16(%arg0: i32) -> (i32, i32) {
    %c0_i32 = arith.constant 0 : i32
    %c0_i32_0 = arith.constant 0 : i32
    %c0_i32_1 = arith.constant 0 : i32
    return %c0_i32, %c0_i32_0 : i32, i32
  }
  func.func @transform_17(%arg0: i32) -> (i32, i32, i32) {
    %c0_i32 = arith.constant 0 : i32
    %c0_i32_0 = arith.constant 0 : i32
    %c0_i32_1 = arith.constant 0 : i32
    return %arg0, %c0_i32, %c0_i32_0 : i32, i32, i32
  }
}

</mosaic_0001>

<llo_original>
// kernel: tpu_custom_call.1
$region0: #{tpu_custom_call.1}
  #allocation0 [shape = 'u32[]', space=smem, size = 0x4, offset = 0x4, fixed_abs, tag = 'smem constant byte address 0x4 - core index']
  #allocation1 [shape = 'u32[144,128]{1,0:T(1,128)}', space=vmem, size = 0x12000, scoped, tag = 'internal scratch']
  %s0 = inlined_call_operand.hbm [shape: f32[4,8,128], index: 0, kind: input, shape index: {}]
  %s1 = inlined_call_operand.hbm [shape: f32[128,128], index: 1, kind: input, shape index: {}]
  %s2 = inlined_call_operand.hbm [shape: f32[128,128], index: 2, kind: input, shape index: {}]
  %s3 = inlined_call_operand.hbm [shape: f32[128,128], index: 3, kind: input, shape index: {}]
  %s4 = inlined_call_operand.vmem [shape: f32[1,128], index: 4, kind: input, shape index: {}]
  %s5 = inlined_call_operand.vmem [shape: f32[1,128], index: 5, kind: input, shape index: {}]
  %s6 = inlined_call_operand.vmem [shape: f32[1,128], index: 6, kind: input, shape index: {}]
  %s7 = inlined_call_operand.hbm [shape: f32[128,128], index: 7, kind: input, shape index: {}]
  %s8 = inlined_call_operand.vmem [shape: f32[1,128], index: 8, kind: input, shape index: {}]
  %s9 = inlined_call_operand.vmem [shape: f32[1,128], index: 9, kind: input, shape index: {}]
  %s10 = inlined_call_operand.vmem [shape: f32[1,128], index: 10, kind: input, shape index: {}]
  %s11 = inlined_call_operand.hbm [shape: f32[128,512], index: 11, kind: input, shape index: {}]
  %s12 = inlined_call_operand.vmem [shape: f32[1,512], index: 12, kind: input, shape index: {}]
  %s13 = inlined_call_operand.hbm [shape: f32[512,128], index: 13, kind: input, shape index: {}]
  %s14 = inlined_call_operand.vmem [shape: f32[1,128], index: 14, kind: input, shape index: {}]
  %s15 = inlined_call_operand.vmem [shape: f32[1,128], index: 15, kind: input, shape index: {}]
  %s16 = inlined_call_operand.vmem [shape: f32[1,128], index: 16, kind: input, shape index: {}]
  %s17 = inlined_call_operand.hbm [shape: f32[4,8,128], index: 17, kind: output, shape index: {}]
  %s18 = sld [smem:[#allocation0]]
  $region106: #{tpu_custom_call.1} parent=0
    _
  %s20 = ssub.s32 1, %s18
  %s21 = scalar_select 0, %s20, %s18
  $region1: #{tpu_custom_call.1} parent=0
    #allocation2 [shape = 'u8[16384]{0}', space=vmem, size = 0x4000, scoped, tag = 'input window, operand 0, single buffered']
    #allocation3 [shape = 's32[1]{0}', space=sflag, size = 0x4, scoped, tag = 'scoped memory for tpu_custom_call.1']
    #allocation4 [shape = 's32[1]{0}', space=sflag, size = 0x4, scoped, tag = 'scoped memory for tpu_custom_call.1']
    #allocation5 [shape = 'u8[65536]{0}', space=vmem, size = 0x10000, scoped, tag = 'input window, operand 1, single buffered']
    #allocation6 [shape = 's32[1]{0}', space=sflag, size = 0x4, scoped, tag = 'scoped memory for tpu_custom_call.1']
    #allocation7 [shape = 'u8[65536]{0}', space=vmem, size = 0x10000, scoped, tag = 'input window, operand 2, single buffered']
    #allocation8 [shape = 'u8[65536]{0}', space=vmem, size = 0x10000, scoped, tag = 'input window, operand 3, single buffered']
    #allocation9 [shape = 's32[1]{0}', space=sflag, size = 0x4, scoped, tag = 'scoped memory for tpu_custom_call.1']
    #allocation10 [shape = 'u8[65536]{0}', space=vmem, size = 0x10000, scoped, tag = 'input window, operand 7, single buffered']
    #allocation11 [shape = 'u8[262144]{0}', space=vmem, size = 0x40000, scoped, tag = 'input window, operand 11, single buffered']
    #allocation12 [shape = 's32[1]{0}', space=sflag, size = 0x4, scoped, tag = 'scoped memory for tpu_custom_call.1']
    #allocation13 [shape = 'u8[262144]{0}', space=vmem, size = 0x40000, scoped, tag = 'input window, operand 13, single buffered']
    #allocation14 [shape = 'u8[16384]{0}', space=vmem, size = 0x4000, scoped, tag = 'output window, operand 0, single buffered']
    %22 = vsyncpa [#allocation3], 0
    %23 = vsyncpa [#allocation6], 0
    %24 = vsyncpa [#allocation9], 0
    %25 = vsyncpa [#allocation12], 0
    %26 = vsyncpa [#allocation4], 0
    // Predicated region
    $region2: #{tpu_custom_call.1} parent=1 // pred_check
      _
    $region3: #{tpu_custom_call.1} parent=1 // pred_check_branch
      %28 = sbr.rel (0) target = $region5
    $region4: #{tpu_custom_call.1} parent=1 // pred_region
      %s30 = ssub.s32 512, 512
      %31 = vsyncadd [#allocation3], %s30
      %s32 = sshll.u32 [#allocation2], 4
      %s33 = int_to_ptr.vmem [resolvable:$true] %s32
      %38 = dma.hbm_to_vmem [thread:$0]  %s0, 512, %s33, [#allocation3], 128, 128, 8
    $region5: #{tpu_custom_call.1} parent=1 // pred_fallthru
      _
    // Predicated region
    $region6: #{tpu_custom_call.1} parent=1 // pred_check
      _
    $region7: #{tpu_custom_call.1} parent=1 // pred_check_branch
      %40 = sbr.rel (0) target = $region9
    $region8: #{tpu_custom_call.1} parent=1 // pred_region
      %s42 = ssub.s32 2048, 2048
      %43 = vsyncadd [#allocation6], %s42
      %s44 = sshll.u32 [#allocation5], 4
      %s45 = int_to_ptr.vmem [resolvable:$true] %s44
      %50 = dma.hbm_to_vmem [thread:$0]  %s1, 2048, %s45, [#allocation6], 128, 128, 8
    $region9: #{tpu_custom_call.1} parent=1 // pred_fallthru
      _
    // Predicated region
    $region10: #{tpu_custom_call.1} parent=1 // pred_check
      _
    $region11: #{tpu_custom_call.1} parent=1 // pred_check_branch
      %52 = sbr.rel (0) target = $region13
    $region12: #{tpu_custom_call.1} parent=1 // pred_region
      %s54 = ssub.s32 2048, 2048
      %55 = vsyncadd [#allocation6], %s54
      %s56 = sshll.u32 [#allocation7], 4
      %s57 = int_to_ptr.vmem [resolvable:$true] %s56
      %62 = dma.hbm_to_vmem [thread:$0]  %s2, 2048, %s57, [#allocation6], 128, 128, 8
    $region13: #{tpu_custom_call.1} parent=1 // pred_fallthru
      _
    // Predicated region
    $region14: #{tpu_custom_call.1} parent=1 // pred_check
      _
    $region15: #{tpu_custom_call.1} parent=1 // pred_check_branch
      %64 = sbr.rel (0) target = $region17
    $region16: #{tpu_custom_call.1} parent=1 // pred_region
      %s66 = ssub.s32 2048, 2048
      %67 = vsyncadd [#allocation9], %s66
      %s68 = sshll.u32 [#allocation8], 4
      %s69 = int_to_ptr.vmem [resolvable:$true] %s68
      %74 = dma.hbm_to_vmem [thread:$0]  %s3, 2048, %s69, [#allocation9], 128, 128, 8
    $region17: #{tpu_custom_call.1} parent=1 // pred_fallthru
      _
    // Predicated region
    $region18: #{tpu_custom_call.1} parent=1 // pred_check
      _
    $region19: #{tpu_custom_call.1} parent=1 // pred_check_branch
      %76 = sbr.rel (0) target = $region21
    $region20: #{tpu_custom_call.1} parent=1 // pred_region
      _
    $region21: #{tpu_custom_call.1} parent=1 // pred_fallthru
      _
    // Predicated region
    $region22: #{tpu_custom_call.1} parent=1 // pred_check
      _
    $region23: #{tpu_custom_call.1} parent=1 // pred_check_branch
      %78 = sbr.rel (0) target = $region25
    $region24: #{tpu_custom_call.1} parent=1 // pred_region
      _
    $region25: #{tpu_custom_call.1} parent=1 // pred_fallthru
      _
    // Predicated region
    $region26: #{tpu_custom_call.1} parent=1 // pred_check
      _
    $region27: #{tpu_custom_call.1} parent=1 // pred_check_branch
      %80 = sbr.rel (0) target = $region29
    $region28: #{tpu_custom_call.1} parent=1 // pred_region
      _
    $region29: #{tpu_custom_call.1} parent=1 // pred_fallthru
      _
    // Predicated region
    $region30: #{tpu_custom_call.1} parent=1 // pred_check
      _
    $region31: #{tpu_custom_call.1} parent=1 // pred_check_branch
      %82 = sbr.rel (0) target = $region33
    $region32: #{tpu_custom_call.1} parent=1 // pred_region
      %s84 = ssub.s32 2048, 2048
      %85 = vsyncadd [#allocation9], %s84
      %s86 = sshll.u32 [#allocation10], 4
      %s87 = int_to_ptr.vmem [resolvable:$true] %s86
      %92 = dma.hbm_to_vmem [thread:$0]  %s7, 2048, %s87, [#allocation9], 128, 128, 8
    $region33: #{tpu_custom_call.1} parent=1 // pred_fallthru
      _
    // Predicated region
    $region34: #{tpu_custom_call.1} parent=1 // pred_check
      _
    $region35: #{tpu_custom_call.1} parent=1 // pred_check_branch
      %94 = sbr.rel (0) target = $region37
    $region36: #{tpu_custom_call.1} parent=1 // pred_region
      _
    $region37: #{tpu_custom_call.1} parent=1 // pred_fallthru
      _
    // Predicated region
    $region38: #{tpu_custom_call.1} parent=1 // pred_check
      _
    $region39: #{tpu_custom_call.1} parent=1 // pred_check_branch
      %96 = sbr.rel (0) target = $region41
    $region40: #{tpu_custom_call.1} parent=1 // pred_region
      _
    $region41: #{tpu_custom_call.1} parent=1 // pred_fallthru
      _
    // Predicated region
    $region42: #{tpu_custom_call.1} parent=1 // pred_check
      _
    $region43: #{tpu_custom_call.1} parent=1 // pred_check_branch
      %98 = sbr.rel (0) target = $region45
    $region44: #{tpu_custom_call.1} parent=1 // pred_region
      _
    $region45: #{tpu_custom_call.1} parent=1 // pred_fallthru
      _
    // Predicated region
    $region46: #{tpu_custom_call.1} parent=1 // pred_check
      _
    $region47: #{tpu_custom_call.1} parent=1 // pred_check_branch
      %100 = sbr.rel (0) target = $region49
    $region48: #{tpu_custom_call.1} parent=1 // pred_region
      %s102 = ssub.s32 8192, 8192
      %103 = vsyncadd [#allocation12], %s102
      %s104 = sshll.u32 [#allocation11], 4
      %s105 = int_to_ptr.vmem [resolvable:$true] %s104
      %110 = dma.hbm_to_vmem [thread:$0]  %s11, 8192, %s105, [#allocation12], 512, 512, 32
    $region49: #{tpu_custom_call.1} parent=1 // pred_fallthru
      _
    // Predicated region
    $region50: #{tpu_custom_call.1} parent=1 // pred_check
      _
    $region51: #{tpu_custom_call.1} parent=1 // pred_check_branch
      %112 = sbr.rel (0) target = $region53
    $region52: #{tpu_custom_call.1} parent=1 // pred_region
      _
    $region53: #{tpu_custom_call.1} parent=1 // pred_fallthru
      _
    // Predicated region
    $region54: #{tpu_custom_call.1} parent=1 // pred_check
      _
    $region55: #{tpu_custom_call.1} parent=1 // pred_check_branch
      %114 = sbr.rel (0) target = $region57
    $region56: #{tpu_custom_call.1} parent=1 // pred_region
      %s116 = ssub.s32 8192, 8192
      %117 = vsyncadd [#allocation12], %s116
      %s118 = sshll.u32 [#allocation13], 4
      %s119 = int_to_ptr.vmem [resolvable:$true] %s118
      %124 = dma.hbm_to_vmem [thread:$0]  %s13, 8192, %s119, [#allocation12], 128, 128, 8
    $region57: #{tpu_custom_call.1} parent=1 // pred_fallthru
      _
    // Predicated region
    $region58: #{tpu_custom_call.1} parent=1 // pred_check
      _
    $region59: #{tpu_custom_call.1} parent=1 // pred_check_branch
      %126 = sbr.rel (0) target = $region61
    $region60: #{tpu_custom_call.1} parent=1 // pred_region
      _
    $region61: #{tpu_custom_call.1} parent=1 // pred_fallthru
      _
    // Predicated region
    $region62: #{tpu_custom_call.1} parent=1 // pred_check
      _
    $region63: #{tpu_custom_call.1} parent=1 // pred_check_branch
      %128 = sbr.rel (0) target = $region65
    $region64: #{tpu_custom_call.1} parent=1 // pred_region
      _
    $region65: #{tpu_custom_call.1} parent=1 // pred_fallthru
      _
    // Predicated region
    $region66: #{tpu_custom_call.1} parent=1 // pred_check
      _
    $region67: #{tpu_custom_call.1} parent=1 // pred_check_branch
      %130 = sbr.rel (0) target = $region69
    $region68: #{tpu_custom_call.1} parent=1 // pred_region
      _
    $region69: #{tpu_custom_call.1} parent=1 // pred_fallthru
      _
    // Predicated region
    $region70: #{tpu_custom_call.1} parent=1 // pred_check
      _
    $region71: #{tpu_custom_call.1} parent=1 // pred_check_branch
      %132 = sbr.rel (0) target = $region73
    $region72: #{tpu_custom_call.1} parent=1 // pred_region
      %133 = dma.done [#allocation3], 512
    $region73: #{tpu_custom_call.1} parent=1 // pred_fallthru
      _
    // Predicated region
    $region74: #{tpu_custom_call.1} parent=1 // pred_check
      _
    $region75: #{tpu_custom_call.1} parent=1 // pred_check_branch
      %135 = sbr.rel (0) target = $region77
    $region76: #{tpu_custom_call.1} parent=1 // pred_region
      %136 = dma.done [#allocation6], 2048
    $region77: #{tpu_custom_call.1} parent=1 // pred_fallthru
      _
    // Predicated region
    $region78: #{tpu_custom_call.1} parent=1 // pred_check
      _
    $region79: #{tpu_custom_call.1} parent=1 // pred_check_branch
      %138 = sbr.rel (0) target = $region81
    $region80: #{tpu_custom_call.1} parent=1 // pred_region
      %139 = dma.done [#allocation6], 2048
    $region81: #{tpu_custom_call.1} parent=1 // pred_fallthru
      _
    // Predicated region
    $region82: #{tpu_custom_call.1} parent=1 // pred_check
      _
    $region83: #{tpu_custom_call.1} parent=1 // pred_check_branch
      %141 = sbr.rel (0) target = $region85
    $region84: #{tpu_custom_call.1} parent=1 // pred_region
      %142 = dma.done [#allocation9], 2048
    $region85: #{tpu_custom_call.1} parent=1 // pred_fallthru
      _
    // Predicated region
    $region86: #{tpu_custom_call.1} parent=1 // pred_check
      _
    $region87: #{tpu_custom_call.1} parent=1 // pred_check_branch
      %144 = sbr.rel (0) target = $region89
    $region88: #{tpu_custom_call.1} parent=1 // pred_region
      %145 = dma.done [#allocation9], 2048
    $region89: #{tpu_custom_call.1} parent=1 // pred_fallthru
      _
    // Predicated region
    $region90: #{tpu_custom_call.1} parent=1 // pred_check
      _
    $region91: #{tpu_custom_call.1} parent=1 // pred_check_branch
      %147 = sbr.rel (0) target = $region93
    $region92: #{tpu_custom_call.1} parent=1 // pred_region
      %148 = dma.done [#allocation12], 8192
    $region93: #{tpu_custom_call.1} parent=1 // pred_fallthru
      _
    // Predicated region
    $region94: #{tpu_custom_call.1} parent=1 // pred_check
      _
    $region95: #{tpu_custom_call.1} parent=1 // pred_check_branch
      %150 = sbr.rel (0) target = $region97
    $region96: #{tpu_custom_call.1} parent=1 // pred_region
      %151 = dma.done [#allocation12], 8192
    $region97: #{tpu_custom_call.1} parent=1 // pred_fallthru
      _
    %v152 = vld [vmem:[#allocation2] sm:$0xff]
    %v153 = vld [vmem:[#allocation2 + $0x8] sm:$0xff]
    %v154 = vld [vmem:[#allocation2 + $0x10] sm:$0xff]
    %v155 = vld [vmem:[#allocation2 + $0x18] sm:$0xff]
    %v156 = vld [vmem:[#allocation5] sm:$0xff]
    %v157 = vld [vmem:[#allocation5 + $0x8] sm:$0xff]
    %v158 = vld [vmem:[#allocation5 + $0x10] sm:$0xff]
    %v159 = vld [vmem:[#allocation5 + $0x18] sm:$0xff]
    %v160 = vld [vmem:[#allocation5 + $0x20] sm:$0xff]
    %v161 = vld [vmem:[#allocation5 + $0x28] sm:$0xff]
    %v162 = vld [vmem:[#allocation5 + $0x30] sm:$0xff]
    %v163 = vld [vmem:[#allocation5 + $0x38] sm:$0xff]
    %v164 = vld [vmem:[#allocation5 + $0x40] sm:$0xff]
    %v165 = vld [vmem:[#allocation5 + $0x48] sm:$0xff]
    %v166 = vld [vmem:[#allocation5 + $0x50] sm:$0xff]
    %v167 = vld [vmem:[#allocation5 + $0x58] sm:$0xff]
    %v168 = vld [vmem:[#allocation5 + $0x60] sm:$0xff]
    %v169 = vld [vmem:[#allocation5 + $0x68] sm:$0xff]
    %v170 = vld [vmem:[#allocation5 + $0x70] sm:$0xff]
    %v171 = vld [vmem:[#allocation5 + $0x78] sm:$0xff]
    %v172 = vld [vmem:[%s4] sm:$0x1]
    %v174 = vlaneseq
    %v175 = vshrl.u32 %v174, 7
    %v176 = vsub.s32 0, %v175
    %v177 = vrot.slane %v172, %v176
    %179 = vmatprep.subr.mxu0 0.0
    %180 = vmatpush1.msra.mxu0 %v171
    %181 = vmatprep.subr.mxu0 0.0
    %182 = vmatpush1.msra.mxu0 %v170
    %183 = vmatprep.subr.mxu0 0.0
    %184 = vmatpush1.msra.mxu0 %v169
    %185 = vmatprep.subr.mxu0 0.0
    %186 = vmatpush1.msra.mxu0 %v168
    %187 = vmatprep.subr.mxu0 0.0
    %188 = vmatpush1.msra.mxu0 %v167
    %189 = vmatprep.subr.mxu0 0.0
    %190 = vmatpush1.msra.mxu0 %v166
    %191 = vmatprep.subr.mxu0 0.0
    %192 = vmatpush1.msra.mxu0 %v165
    %193 = vmatprep.subr.mxu0 0.0
    %194 = vmatpush1.msra.mxu0 %v164
    %195 = vmatprep.subr.mxu0 0.0
    %196 = vmatpush1.msra.mxu0 %v163
    %197 = vmatprep.subr.mxu0 0.0
    %198 = vmatpush1.msra.mxu0 %v162
    %199 = vmatprep.subr.mxu0 0.0
    %200 = vmatpush1.msra.mxu0 %v161
    %201 = vmatprep.subr.mxu0 0.0
    %202 = vmatpush1.msra.mxu0 %v160
    %203 = vmatprep.subr.mxu0 0.0
    %204 = vmatpush1.msra.mxu0 %v159
    %205 = vmatprep.subr.mxu0 0.0
    %206 = vmatpush1.msra.mxu0 %v158
    %207 = vmatprep.subr.mxu0 0.0
    %208 = vmatpush1.msra.mxu0 %v157
    %209 = vmatprep.subr.mxu0 0.0
    %210 = vmatpush1.msra.mxu0 %v156
    %211 = vmatprep.subr.mxu0 0.0
    %212 = vmatpush2.msra.mxu0 0.0
    %213 = vmatprep.subr.mxu0 0.0
    %214 = vmatpush2.msra.mxu0 0.0
    %215 = vmatprep.subr.mxu0 0.0
    %216 = vmatpush2.msra.mxu0 0.0
    %217 = vmatprep.subr.mxu0 0.0
    %218 = vmatpush2.msra.mxu0 0.0
    %219 = vmatprep.subr.mxu0 0.0
    %220 = vmatpush2.msra.mxu0 0.0
    %221 = vmatprep.subr.mxu0 0.0
    %222 = vmatpush2.msra.mxu0 0.0
    %223 = vmatprep.subr.mxu0 0.0
    %224 = vmatpush2.msra.mxu0 0.0
    %225 = vmatprep.subr.mxu0 0.0
    %226 = vmatpush2.msra.mxu0 0.0
    %227 = vmatprep.subr.mxu0 0.0
    %228 = vmatpush2.msra.mxu0 0.0
    %229 = vmatprep.subr.mxu0 0.0
    %230 = vmatpush2.msra.mxu0 0.0
    %231 = vmatprep.subr.mxu0 0.0
    %232 = vmatpush2.msra.mxu0 0.0
    %233 = vmatprep.subr.mxu0 0.0
    %234 = vmatpush2.msra.mxu0 0.0
    %235 = vmatprep.subr.mxu0 0.0
    %236 = vmatpush2.msra.mxu0 0.0
    %237 = vmatprep.subr.mxu0 0.0
    %238 = vmatpush2.msra.mxu0 0.0
    %239 = vmatprep.subr.mxu0 0.0
    %240 = vmatpush2.msra.mxu0 0.0
    %241 = vmatprep.subr.mxu0 0.0
    %242 = vmatpush2.msra.mxu0 0.0
    %243 = vmatprep.mubr.f32.mxu0 0.0
    %244 = vmatmul.mubr.f32.gmra.mxu0 %v152
    %v245 = vpop.f32.mrf.mxu0
    %v246 = vadd.f32 %v177, %v245
    %v247 = vpop.f32.mrf.mxu0
    %248 = vmatprep.mubr.f32.mxu0 0.0
    %249 = vmatmul.mubr.f32.gmra.mxu0 %v153
    %v250 = vpop.f32.mrf.mxu0
    %v251 = vadd.f32 %v177, %v250
    %v252 = vpop.f32.mrf.mxu0
    %253 = vmatprep.mubr.f32.mxu0 0.0
    %254 = vmatmul.mubr.f32.gmra.mxu0 %v154
    %v255 = vpop.f32.mrf.mxu0
    %v256 = vadd.f32 %v177, %v255
    %v257 = vpop.f32.mrf.mxu0
    %258 = vmatprep.mubr.f32.mxu0 0.0
    %259 = vmatmul.mubr.f32.gmra.mxu0 %v155
    %v260 = vpop.f32.mrf.mxu0
    %v261 = vadd.f32 %v177, %v260
    %v262 = vpop.f32.mrf.mxu0
    %263 = vdwg.mxu0
    %v264 = vld [vmem:[#allocation7] sm:$0xff]
    %v265 = vld [vmem:[#allocation7 + $0x8] sm:$0xff]
    %v266 = vld [vmem:[#allocation7 + $0x10] sm:$0xff]
    %v267 = vld [vmem:[#allocation7 + $0x18] sm:$0xff]
    %v268 = vld [vmem:[#allocation7 + $0x20] sm:$0xff]
    %v269 = vld [vmem:[#allocation7 + $0x28] sm:$0xff]
    %v270 = vld [vmem:[#allocation7 + $0x30] sm:$0xff]
    %v271 = vld [vmem:[#allocation7 + $0x38] sm:$0xff]
    %v272 = vld [vmem:[#allocation7 + $0x40] sm:$0xff]
    %v273 = vld [vmem:[#allocation7 + $0x48] sm:$0xff]
    %v274 = vld [vmem:[#allocation7 + $0x50] sm:$0xff]
    %v275 = vld [vmem:[#allocation7 + $0x58] sm:$0xff]
    %v276 = vld [vmem:[#allocation7 + $0x60] sm:$0xff]
    %v277 = vld [vmem:[#allocation7 + $0x68] sm:$0xff]
    %v278 = vld [vmem:[#allocation7 + $0x70] sm:$0xff]
    %v279 = vld [vmem:[#allocation7 + $0x78] sm:$0xff]
    %v280 = vld [vmem:[%s5] sm:$0x1]
    %v282 = vlaneseq
    %v283 = vshrl.u32 %v282, 7
    %v284 = vsub.s32 0, %v283
    %v285 = vrot.slane %v280, %v284
    %287 = vmatprep.subr.mxu0 0.0
    %288 = vmatpush1.msra.mxu0 %v279
    %289 = vmatprep.subr.mxu0 0.0
    %290 = vmatpush1.msra.mxu0 %v278
    %291 = vmatprep.subr.mxu0 0.0
    %292 = vmatpush1.msra.mxu0 %v277
    %293 = vmatprep.subr.mxu0 0.0
    %294 = vmatpush1.msra.mxu0 %v276
    %295 = vmatprep.subr.mxu0 0.0
    %296 = vmatpush1.msra.mxu0 %v275
    %297 = vmatprep.subr.mxu0 0.0
    %298 = vmatpush1.msra.mxu0 %v274
    %299 = vmatprep.subr.mxu0 0.0
    %300 = vmatpush1.msra.mxu0 %v273
    %301 = vmatprep.subr.mxu0 0.0
    %302 = vmatpush1.msra.mxu0 %v272
    %303 = vmatprep.subr.mxu0 0.0
    %304 = vmatpush1.msra.mxu0 %v271
    %305 = vmatprep.subr.mxu0 0.0
    %306 = vmatpush1.msra.mxu0 %v270
    %307 = vmatprep.subr.mxu0 0.0
    %308 = vmatpush1.msra.mxu0 %v269
    %309 = vmatprep.subr.mxu0 0.0
    %310 = vmatpush1.msra.mxu0 %v268
    %311 = vmatprep.subr.mxu0 0.0
    %312 = vmatpush1.msra.mxu0 %v267
    %313 = vmatprep.subr.mxu0 0.0
    %314 = vmatpush1.msra.mxu0 %v266
    %315 = vmatprep.subr.mxu0 0.0
    %316 = vmatpush1.msra.mxu0 %v265
    %317 = vmatprep.subr.mxu0 0.0
    %318 = vmatpush1.msra.mxu0 %v264
    %319 = vmatprep.subr.mxu0 0.0
    %320 = vmatpush2.msra.mxu0 0.0
    %321 = vmatprep.subr.mxu0 0.0
    %322 = vmatpush2.msra.mxu0 0.0
    %323 = vmatprep.subr.mxu0 0.0
    %324 = vmatpush2.msra.mxu0 0.0
    %325 = vmatprep.subr.mxu0 0.0
    %326 = vmatpush2.msra.mxu0 0.0
    %327 = vmatprep.subr.mxu0 0.0
    %328 = vmatpush2.msra.mxu0 0.0
    %329 = vmatprep.subr.mxu0 0.0
    %330 = vmatpush2.msra.mxu0 0.0
    %331 = vmatprep.subr.mxu0 0.0
    %332 = vmatpush2.msra.mxu0 0.0
    %333 = vmatprep.subr.mxu0 0.0
    %334 = vmatpush2.msra.mxu0 0.0
    %335 = vmatprep.subr.mxu0 0.0
    %336 = vmatpush2.msra.mxu0 0.0
    %337 = vmatprep.subr.mxu0 0.0
    %338 = vmatpush2.msra.mxu0 0.0
    %339 = vmatprep.subr.mxu0 0.0
    %340 = vmatpush2.msra.mxu0 0.0
    %341 = vmatprep.subr.mxu0 0.0
    %342 = vmatpush2.msra.mxu0 0.0
    %343 = vmatprep.subr.mxu0 0.0
    %344 = vmatpush2.msra.mxu0 0.0
    %345 = vmatprep.subr.mxu0 0.0
    %346 = vmatpush2.msra.mxu0 0.0
    %347 = vmatprep.subr.mxu0 0.0
    %348 = vmatpush2.msra.mxu0 0.0
    %349 = vmatprep.subr.mxu0 0.0
    %350 = vmatpush2.msra.mxu0 0.0
    %351 = vmatprep.mubr.f32.mxu0 0.0
    %352 = vmatmul.mubr.f32.gmra.mxu0 %v152
    %v353 = vpop.f32.mrf.mxu0
    %v354 = vadd.f32 %v285, %v353
    %v355 = vpop.f32.mrf.mxu0
    %356 = vmatprep.mubr.f32.mxu0 0.0
    %357 = vmatmul.mubr.f32.gmra.mxu0 %v153
    %v358 = vpop.f32.mrf.mxu0
    %v359 = vadd.f32 %v285, %v358
    %v360 = vpop.f32.mrf.mxu0
    %361 = vmatprep.mubr.f32.mxu0 0.0
    %362 = vmatmul.mubr.f32.gmra.mxu0 %v154
    %v363 = vpop.f32.mrf.mxu0
    %v364 = vadd.f32 %v285, %v363
    %v365 = vpop.f32.mrf.mxu0
    %366 = vmatprep.mubr.f32.mxu0 0.0
    %367 = vmatmul.mubr.f32.gmra.mxu0 %v155
    %v368 = vpop.f32.mrf.mxu0
    %v369 = vadd.f32 %v285, %v368
    %v370 = vpop.f32.mrf.mxu0
    %371 = vdwg.mxu0
    %v372 = vld [vmem:[#allocation8] sm:$0xff]
    %v373 = vld [vmem:[#allocation8 + $0x8] sm:$0xff]
    %v374 = vld [vmem:[#allocation8 + $0x10] sm:$0xff]
    %v375 = vld [vmem:[#allocation8 + $0x18] sm:$0xff]
    %v376 = vld [vmem:[#allocation8 + $0x20] sm:$0xff]
    %v377 = vld [vmem:[#allocation8 + $0x28] sm:$0xff]
    %v378 = vld [vmem:[#allocation8 + $0x30] sm:$0xff]
    %v379 = vld [vmem:[#allocation8 + $0x38] sm:$0xff]
    %v380 = vld [vmem:[#allocation8 + $0x40] sm:$0xff]
    %v381 = vld [vmem:[#allocation8 + $0x48] sm:$0xff]
    %v382 = vld [vmem:[#allocation8 + $0x50] sm:$0xff]
    %v383 = vld [vmem:[#allocation8 + $0x58] sm:$0xff]
    %v384 = vld [vmem:[#allocation8 + $0x60] sm:$0xff]
    %v385 = vld [vmem:[#allocation8 + $0x68] sm:$0xff]
    %v386 = vld [vmem:[#allocation8 + $0x70] sm:$0xff]
    %v387 = vld [vmem:[#allocation8 + $0x78] sm:$0xff]
    %v388 = vld [vmem:[%s6] sm:$0x1]
    %v390 = vlaneseq
    %v391 = vshrl.u32 %v390, 7
    %v392 = vsub.s32 0, %v391
    %v393 = vrot.slane %v388, %v392
    %395 = vmatprep.subr.mxu0 0.0
    %396 = vmatpush1.msra.mxu0 %v387
    %397 = vmatprep.subr.mxu0 0.0
    %398 = vmatpush1.msra.mxu0 %v386
    %399 = vmatprep.subr.mxu0 0.0
    %400 = vmatpush1.msra.mxu0 %v385
    %401 = vmatprep.subr.mxu0 0.0
    %402 = vmatpush1.msra.mxu0 %v384
    %403 = vmatprep.subr.mxu0 0.0
    %404 = vmatpush1.msra.mxu0 %v383
    %405 = vmatprep.subr.mxu0 0.0
    %406 = vmatpush1.msra.mxu0 %v382
    %407 = vmatprep.subr.mxu0 0.0
    %408 = vmatpush1.msra.mxu0 %v381
    %409 = vmatprep.subr.mxu0 0.0
    %410 = vmatpush1.msra.mxu0 %v380
    %411 = vmatprep.subr.mxu0 0.0
    %412 = vmatpush1.msra.mxu0 %v379
    %413 = vmatprep.subr.mxu0 0.0
    %414 = vmatpush1.msra.mxu0 %v378
    %415 = vmatprep.subr.mxu0 0.0
    %416 = vmatpush1.msra.mxu0 %v377
    %417 = vmatprep.subr.mxu0 0.0
    %418 = vmatpush1.msra.mxu0 %v376
    %419 = vmatprep.subr.mxu0 0.0
    %420 = vmatpush1.msra.mxu0 %v375
    %421 = vmatprep.subr.mxu0 0.0
    %422 = vmatpush1.msra.mxu0 %v374
    %423 = vmatprep.subr.mxu0 0.0
    %424 = vmatpush1.msra.mxu0 %v373
    %425 = vmatprep.subr.mxu0 0.0
    %426 = vmatpush1.msra.mxu0 %v372
    %427 = vmatprep.subr.mxu0 0.0
    %428 = vmatpush2.msra.mxu0 0.0
    %429 = vmatprep.subr.mxu0 0.0
    %430 = vmatpush2.msra.mxu0 0.0
    %431 = vmatprep.subr.mxu0 0.0
    %432 = vmatpush2.msra.mxu0 0.0
    %433 = vmatprep.subr.mxu0 0.0
    %434 = vmatpush2.msra.mxu0 0.0
    %435 = vmatprep.subr.mxu0 0.0
    %436 = vmatpush2.msra.mxu0 0.0
    %437 = vmatprep.subr.mxu0 0.0
    %438 = vmatpush2.msra.mxu0 0.0
    %439 = vmatprep.subr.mxu0 0.0
    %440 = vmatpush2.msra.mxu0 0.0
    %441 = vmatprep.subr.mxu0 0.0
    %442 = vmatpush2.msra.mxu0 0.0
    %443 = vmatprep.subr.mxu0 0.0
    %444 = vmatpush2.msra.mxu0 0.0
    %445 = vmatprep.subr.mxu0 0.0
    %446 = vmatpush2.msra.mxu0 0.0
    %447 = vmatprep.subr.mxu0 0.0
    %448 = vmatpush2.msra.mxu0 0.0
    %449 = vmatprep.subr.mxu0 0.0
    %450 = vmatpush2.msra.mxu0 0.0
    %451 = vmatprep.subr.mxu0 0.0
    %452 = vmatpush2.msra.mxu0 0.0
    %453 = vmatprep.subr.mxu0 0.0
    %454 = vmatpush2.msra.mxu0 0.0
    %455 = vmatprep.subr.mxu0 0.0
    %456 = vmatpush2.msra.mxu0 0.0
    %457 = vmatprep.subr.mxu0 0.0
    %458 = vmatpush2.msra.mxu0 0.0
    %459 = vmatprep.mubr.f32.mxu0 0.0
    %460 = vmatmul.mubr.f32.gmra.mxu0 %v152
    %v461 = vpop.f32.mrf.mxu0
    %v462 = vadd.f32 %v393, %v461
    %v463 = vpop.f32.mrf.mxu0
    %464 = vmatprep.mubr.f32.mxu0 0.0
    %465 = vmatmul.mubr.f32.gmra.mxu0 %v153
    %v466 = vpop.f32.mrf.mxu0
    %v467 = vadd.f32 %v393, %v466
    %v468 = vpop.f32.mrf.mxu0
    %469 = vmatprep.mubr.f32.mxu0 0.0
    %470 = vmatmul.mubr.f32.gmra.mxu0 %v154
    %v471 = vpop.f32.mrf.mxu0
    %v472 = vadd.f32 %v393, %v471
    %v473 = vpop.f32.mrf.mxu0
    %474 = vmatprep.mubr.f32.mxu0 0.0
    %475 = vmatmul.mubr.f32.gmra.mxu0 %v155
    %v476 = vpop.f32.mrf.mxu0
    %v477 = vadd.f32 %v393, %v476
    %v478 = vpop.f32.mrf.mxu0
    %479 = vdwg.mxu0
    %vm480 = vcmask 261120
    %v482 = vsel %vm480, %v246, 0
    %v485 = vsel %vm480, %v354, 0
    %487 = vmatprep.subr.mxu0 0.0
    %488 = vmatpush1.xpose.msra.mxu0 0.0
    %489 = vmatprep.subr.mxu0 0.0
    %490 = vmatpush1.xpose.msra.mxu0 0.0
    %491 = vmatprep.subr.mxu0 0.0
    %492 = vmatpush1.xpose.msra.mxu0 0.0
    %493 = vmatprep.subr.mxu0 0.0
    %494 = vmatpush1.xpose.msra.mxu0 0.0
    %495 = vmatprep.subr.mxu0 0.0
    %496 = vmatpush1.xpose.msra.mxu0 0.0
    %497 = vmatprep.subr.mxu0 0.0
    %498 = vmatpush1.xpose.msra.mxu0 0.0
    %499 = vmatprep.subr.mxu0 0.0
    %500 = vmatpush1.xpose.msra.mxu0 0.0
    %501 = vmatprep.subr.mxu0 0.0
    %502 = vmatpush1.xpose.msra.mxu0 0.0
    %503 = vmatprep.subr.mxu0 0.0
    %504 = vmatpush1.xpose.msra.mxu0 0.0
    %505 = vmatprep.subr.mxu0 0.0
    %506 = vmatpush1.xpose.msra.mxu0 0.0
    %507 = vmatprep.subr.mxu0 0.0
    %508 = vmatpush1.xpose.msra.mxu0 0.0
    %509 = vmatprep.subr.mxu0 0.0
    %510 = vmatpush1.xpose.msra.mxu0 0.0
    %511 = vmatprep.subr.mxu0 0.0
    %512 = vmatpush1.xpose.msra.mxu0 0.0
    %513 = vmatprep.subr.mxu0 0.0
    %514 = vmatpush1.xpose.msra.mxu0 0.0
    %515 = vmatprep.subr.mxu0 0.0
    %516 = vmatpush1.xpose.msra.mxu0 0.0
    %517 = vmatprep.subr.mxu0 0.0
    %518 = vmatpush1.xpose.msra.mxu0 %v485
    %519 = vmatprep.subr.mxu0 0.0
    %520 = vmatpush2.xpose.msra.mxu0 0.0
    %521 = vmatprep.subr.mxu0 0.0
    %522 = vmatpush2.xpose.msra.mxu0 0.0
    %523 = vmatprep.subr.mxu0 0.0
    %524 = vmatpush2.xpose.msra.mxu0 0.0
    %525 = vmatprep.subr.mxu0 0.0
    %526 = vmatpush2.xpose.msra.mxu0 0.0
    %527 = vmatprep.subr.mxu0 0.0
    %528 = vmatpush2.xpose.msra.mxu0 0.0
    %529 = vmatprep.subr.mxu0 0.0
    %530 = vmatpush2.xpose.msra.mxu0 0.0
    %531 = vmatprep.subr.mxu0 0.0
    %532 = vmatpush2.xpose.msra.mxu0 0.0
    %533 = vmatprep.subr.mxu0 0.0
    %534 = vmatpush2.xpose.msra.mxu0 0.0
    %535 = vmatprep.subr.mxu0 0.0
    %536 = vmatpush2.xpose.msra.mxu0 0.0
    %537 = vmatprep.subr.mxu0 0.0
    %538 = vmatpush2.xpose.msra.mxu0 0.0
    %539 = vmatprep.subr.mxu0 0.0
    %540 = vmatpush2.xpose.msra.mxu0 0.0
    %541 = vmatprep.subr.mxu0 0.0
    %542 = vmatpush2.xpose.msra.mxu0 0.0
    %543 = vmatprep.subr.mxu0 0.0
    %544 = vmatpush2.xpose.msra.mxu0 0.0
    %545 = vmatprep.subr.mxu0 0.0
    %546 = vmatpush2.xpose.msra.mxu0 0.0
    %547 = vmatprep.subr.mxu0 0.0
    %548 = vmatpush2.xpose.msra.mxu0 0.0
    %549 = vmatprep.subr.mxu0 0.0
    %550 = vmatpush2.xpose.msra.mxu0 0.0
    %551 = vmatprep.mubr.f32.mxu0 0.0
    %552 = vmatmul.mubr.f32.gmra.mxu0 %v482
    %v553 = vpop.f32.mrf.mxu0
    %v554 = vadd.f32 0.0, %v553
    %v555 = vpop.f32.mrf.mxu0
    %556 = vdwg.mxu0
    %v558 = vsel %vm480, %v251, 0
    %v561 = vsel %vm480, %v359, 0
    %563 = vmatprep.subr.mxu0 0.0
    %564 = vmatpush1.xpose.msra.mxu0 0.0
    %565 = vmatprep.subr.mxu0 0.0
    %566 = vmatpush1.xpose.msra.mxu0 0.0
    %567 = vmatprep.subr.mxu0 0.0
    %568 = vmatpush1.xpose.msra.mxu0 0.0
    %569 = vmatprep.subr.mxu0 0.0
    %570 = vmatpush1.xpose.msra.mxu0 0.0
    %571 = vmatprep.subr.mxu0 0.0
    %572 = vmatpush1.xpose.msra.mxu0 0.0
    %573 = vmatprep.subr.mxu0 0.0
    %574 = vmatpush1.xpose.msra.mxu0 0.0
    %575 = vmatprep.subr.mxu0 0.0
    %576 = vmatpush1.xpose.msra.mxu0 0.0
    %577 = vmatprep.subr.mxu0 0.0
    %578 = vmatpush1.xpose.msra.mxu0 0.0
    %579 = vmatprep.subr.mxu0 0.0
    %580 = vmatpush1.xpose.msra.mxu0 0.0
    %581 = vmatprep.subr.mxu0 0.0
    %582 = vmatpush1.xpose.msra.mxu0 0.0
    %583 = vmatprep.subr.mxu0 0.0
    %584 = vmatpush1.xpose.msra.mxu0 0.0
    %585 = vmatprep.subr.mxu0 0.0
    %586 = vmatpush1.xpose.msra.mxu0 0.0
    %587 = vmatprep.subr.mxu0 0.0
    %588 = vmatpush1.xpose.msra.mxu0 0.0
    %589 = vmatprep.subr.mxu0 0.0
    %590 = vmatpush1.xpose.msra.mxu0 0.0
    %591 = vmatprep.subr.mxu0 0.0
    %592 = vmatpush1.xpose.msra.mxu0 0.0
    %593 = vmatprep.subr.mxu0 0.0
    %594 = vmatpush1.xpose.msra.mxu0 %v561
    %595 = vmatprep.subr.mxu0 0.0
    %596 = vmatpush2.xpose.msra.mxu0 0.0
    %597 = vmatprep.subr.mxu0 0.0
    %598 = vmatpush2.xpose.msra.mxu0 0.0
    %599 = vmatprep.subr.mxu0 0.0
    %600 = vmatpush2.xpose.msra.mxu0 0.0
    %601 = vmatprep.subr.mxu0 0.0
    %602 = vmatpush2.xpose.msra.mxu0 0.0
    %603 = vmatprep.subr.mxu0 0.0
    %604 = vmatpush2.xpose.msra.mxu0 0.0
    %605 = vmatprep.subr.mxu0 0.0
    %606 = vmatpush2.xpose.msra.mxu0 0.0
    %607 = vmatprep.subr.mxu0 0.0
    %608 = vmatpush2.xpose.msra.mxu0 0.0
    %609 = vmatprep.subr.mxu0 0.0
    %610 = vmatpush2.xpose.msra.mxu0 0.0
    %611 = vmatprep.subr.mxu0 0.0
    %612 = vmatpush2.xpose.msra.mxu0 0.0
    %613 = vmatprep.subr.mxu0 0.0
    %614 = vmatpush2.xpose.msra.mxu0 0.0
    %615 = vmatprep.subr.mxu0 0.0
    %616 = vmatpush2.xpose.msra.mxu0 0.0
    %617 = vmatprep.subr.mxu0 0.0
    %618 = vmatpush2.xpose.msra.mxu0 0.0
    %619 = vmatprep.subr.mxu0 0.0
    %620 = vmatpush2.xpose.msra.mxu0 0.0
    %621 = vmatprep.subr.mxu0 0.0
    %622 = vmatpush2.xpose.msra.mxu0 0.0
    %623 = vmatprep.subr.mxu0 0.0
    %624 = vmatpush2.xpose.msra.mxu0 0.0
    %625 = vmatprep.subr.mxu0 0.0
    %626 = vmatpush2.xpose.msra.mxu0 0.0
    %627 = vmatprep.mubr.f32.mxu0 0.0
    %628 = vmatmul.mubr.f32.gmra.mxu0 %v558
    %v629 = vpop.f32.mrf.mxu0
    %v630 = vadd.f32 0.0, %v629
    %v631 = vpop.f32.mrf.mxu0
    %632 = vdwg.mxu0
    %v634 = vsel %vm480, %v256, 0
    %v637 = vsel %vm480, %v364, 0
    %639 = vmatprep.subr.mxu0 0.0
    %640 = vmatpush1.xpose.msra.mxu0 0.0
    %641 = vmatprep.subr.mxu0 0.0
    %642 = vmatpush1.xpose.msra.mxu0 0.0
    %643 = vmatprep.subr.mxu0 0.0
    %644 = vmatpush1.xpose.msra.mxu0 0.0
    %645 = vmatprep.subr.mxu0 0.0
    %646 = vmatpush1.xpose.msra.mxu0 0.0
    %647 = vmatprep.subr.mxu0 0.0
    %648 = vmatpush1.xpose.msra.mxu0 0.0
    %649 = vmatprep.subr.mxu0 0.0
    %650 = vmatpush1.xpose.msra.mxu0 0.0
    %651 = vmatprep.subr.mxu0 0.0
    %652 = vmatpush1.xpose.msra.mxu0 0.0
    %653 = vmatprep.subr.mxu0 0.0
    %654 = vmatpush1.xpose.msra.mxu0 0.0
    %655 = vmatprep.subr.mxu0 0.0
    %656 = vmatpush1.xpose.msra.mxu0 0.0
    %657 = vmatprep.subr.mxu0 0.0
    %658 = vmatpush1.xpose.msra.mxu0 0.0
    %659 = vmatprep.subr.mxu0 0.0
    %660 = vmatpush1.xpose.msra.mxu0 0.0
    %661 = vmatprep.subr.mxu0 0.0
    %662 = vmatpush1.xpose.msra.mxu0 0.0
    %663 = vmatprep.subr.mxu0 0.0
    %664 = vmatpush1.xpose.msra.mxu0 0.0
    %665 = vmatprep.subr.mxu0 0.0
    %666 = vmatpush1.xpose.msra.mxu0 0.0
    %667 = vmatprep.subr.mxu0 0.0
    %668 = vmatpush1.xpose.msra.mxu0 0.0
    %669 = vmatprep.subr.mxu0 0.0
    %670 = vmatpush1.xpose.msra.mxu0 %v637
    %671 = vmatprep.subr.mxu0 0.0
    %672 = vmatpush2.xpose.msra.mxu0 0.0
    %673 = vmatprep.subr.mxu0 0.0
    %674 = vmatpush2.xpose.msra.mxu0 0.0
    %675 = vmatprep.subr.mxu0 0.0
    %676 = vmatpush2.xpose.msra.mxu0 0.0
    %677 = vmatprep.subr.mxu0 0.0
    %678 = vmatpush2.xpose.msra.mxu0 0.0
    %679 = vmatprep.subr.mxu0 0.0
    %680 = vmatpush2.xpose.msra.mxu0 0.0
    %681 = vmatprep.subr.mxu0 0.0
    %682 = vmatpush2.xpose.msra.mxu0 0.0
    %683 = vmatprep.subr.mxu0 0.0
    %684 = vmatpush2.xpose.msra.mxu0 0.0
    %685 = vmatprep.subr.mxu0 0.0
    %686 = vmatpush2.xpose.msra.mxu0 0.0
    %687 = vmatprep.subr.mxu0 0.0
    %688 = vmatpush2.xpose.msra.mxu0 0.0
    %689 = vmatprep.subr.mxu0 0.0
    %690 = vmatpush2.xpose.msra.mxu0 0.0
    %691 = vmatprep.subr.mxu0 0.0
    %692 = vmatpush2.xpose.msra.mxu0 0.0
    %693 = vmatprep.subr.mxu0 0.0
    %694 = vmatpush2.xpose.msra.mxu0 0.0
    %695 = vmatprep.subr.mxu0 0.0
    %696 = vmatpush2.xpose.msra.mxu0 0.0
    %697 = vmatprep.subr.mxu0 0.0
    %698 = vmatpush2.xpose.msra.mxu0 0.0
    %699 = vmatprep.subr.mxu0 0.0
    %700 = vmatpush2.xpose.msra.mxu0 0.0
    %701 = vmatprep.subr.mxu0 0.0
    %702 = vmatpush2.xpose.msra.mxu0 0.0
    %703 = vmatprep.mubr.f32.mxu0 0.0
    %704 = vmatmul.mubr.f32.gmra.mxu0 %v634
    %v705 = vpop.f32.mrf.mxu0
    %v706 = vadd.f32 0.0, %v705
    %v707 = vpop.f32.mrf.mxu0
    %708 = vdwg.mxu0
    %v710 = vsel %vm480, %v261, 0
    %v713 = vsel %vm480, %v369, 0
    %715 = vmatprep.subr.mxu0 0.0
    %716 = vmatpush1.xpose.msra.mxu0 0.0
    %717 = vmatprep.subr.mxu0 0.0
    %718 = vmatpush1.xpose.msra.mxu0 0.0
    %719 = vmatprep.subr.mxu0 0.0
    %720 = vmatpush1.xpose.msra.mxu0 0.0
    %721 = vmatprep.subr.mxu0 0.0
    %722 = vmatpush1.xpose.msra.mxu0 0.0
    %723 = vmatprep.subr.mxu0 0.0
    %724 = vmatpush1.xpose.msra.mxu0 0.0
    %725 = vmatprep.subr.mxu0 0.0
    %726 = vmatpush1.xpose.msra.mxu0 0.0
    %727 = vmatprep.subr.mxu0 0.0
    %728 = vmatpush1.xpose.msra.mxu0 0.0
    %729 = vmatprep.subr.mxu0 0.0
    %730 = vmatpush1.xpose.msra.mxu0 0.0
    %731 = vmatprep.subr.mxu0 0.0
    %732 = vmatpush1.xpose.msra.mxu0 0.0
    %733 = vmatprep.subr.mxu0 0.0
    %734 = vmatpush1.xpose.msra.mxu0 0.0
    %735 = vmatprep.subr.mxu0 0.0
    %736 = vmatpush1.xpose.msra.mxu0 0.0
    %737 = vmatprep.subr.mxu0 0.0
    %738 = vmatpush1.xpose.msra.mxu0 0.0
    %739 = vmatprep.subr.mxu0 0.0
    %740 = vmatpush1.xpose.msra.mxu0 0.0
    %741 = vmatprep.subr.mxu0 0.0
    %742 = vmatpush1.xpose.msra.mxu0 0.0
    %743 = vmatprep.subr.mxu0 0.0
    %744 = vmatpush1.xpose.msra.mxu0 0.0
    %745 = vmatprep.subr.mxu0 0.0
    %746 = vmatpush1.xpose.msra.mxu0 %v713
    %747 = vmatprep.subr.mxu0 0.0
    %748 = vmatpush2.xpose.msra.mxu0 0.0
    %749 = vmatprep.subr.mxu0 0.0
    %750 = vmatpush2.xpose.msra.mxu0 0.0
    %751 = vmatprep.subr.mxu0 0.0
    %752 = vmatpush2.xpose.msra.mxu0 0.0
    %753 = vmatprep.subr.mxu0 0.0
    %754 = vmatpush2.xpose.msra.mxu0 0.0
    %755 = vmatprep.subr.mxu0 0.0
    %756 = vmatpush2.xpose.msra.mxu0 0.0
    %757 = vmatprep.subr.mxu0 0.0
    %758 = vmatpush2.xpose.msra.mxu0 0.0
    %759 = vmatprep.subr.mxu0 0.0
    %760 = vmatpush2.xpose.msra.mxu0 0.0
    %761 = vmatprep.subr.mxu0 0.0
    %762 = vmatpush2.xpose.msra.mxu0 0.0
    %763 = vmatprep.subr.mxu0 0.0
    %764 = vmatpush2.xpose.msra.mxu0 0.0
    %765 = vmatprep.subr.mxu0 0.0
    %766 = vmatpush2.xpose.msra.mxu0 0.0
    %767 = vmatprep.subr.mxu0 0.0
    %768 = vmatpush2.xpose.msra.mxu0 0.0
    %769 = vmatprep.subr.mxu0 0.0
    %770 = vmatpush2.xpose.msra.mxu0 0.0
    %771 = vmatprep.subr.mxu0 0.0
    %772 = vmatpush2.xpose.msra.mxu0 0.0
    %773 = vmatprep.subr.mxu0 0.0
    %774 = vmatpush2.xpose.msra.mxu0 0.0
    %775 = vmatprep.subr.mxu0 0.0
    %776 = vmatpush2.xpose.msra.mxu0 0.0
    %777 = vmatprep.subr.mxu0 0.0
    %778 = vmatpush2.xpose.msra.mxu0 0.0
    %779 = vmatprep.mubr.f32.mxu0 0.0
    %780 = vmatmul.mubr.f32.gmra.mxu0 %v710
    %v781 = vpop.f32.mrf.mxu0
    %v782 = vadd.f32 0.0, %v781
    %v783 = vpop.f32.mrf.mxu0
    %784 = vdwg.mxu0
    %vm785 = vcmask 64512
    %v786 = vsel %vm785, %v554, -inf
    %787 = vmax.xlane.f32.xlu0 %v786
    %v788 = vpop.xlane.xlu0 %787
    %v789 = vsel %vm785, %v630, -inf
    %790 = vmax.xlane.f32.xlu0 %v789
    %v791 = vpop.xlane.xlu0 %790
    %v792 = vsel %vm785, %v706, -inf
    %793 = vmax.xlane.f32.xlu0 %v792
    %v794 = vpop.xlane.xlu0 %793
    %v795 = vsel %vm785, %v782, -inf
    %796 = vmax.xlane.f32.xlu0 %v795
    %v797 = vpop.xlane.xlu0 %796
    %v798 = vsub.f32 %v554, %v788
    %v799 = vsub.f32 %v630, %v791
    %v800 = vsub.f32 %v706, %v794
    %v801 = vsub.f32 %v782, %v797
    %v802 = vmul.f32 %v798, 1.442695
    %v803 = vpow.pop %v802
    %v804 = vmul.f32 %v799, 1.442695
    %v805 = vpow.pop %v804
    %v806 = vmul.f32 %v800, 1.442695
    %v807 = vpow.pop %v806
    %v808 = vmul.f32 %v801, 1.442695
    %v809 = vpow.pop %v808
    %v810 = vsel %vm785, %v803, 0.0
    %811 = vadd.xlane.f32.xlu0 %v810
    %v812 = vpop.xlane.xlu0 %811
    %v813 = vsel %vm785, %v805, 0.0
    %814 = vadd.xlane.f32.xlu0 %v813
    %v815 = vpop.xlane.xlu0 %814
    %v816 = vsel %vm785, %v807, 0.0
    %817 = vadd.xlane.f32.xlu0 %v816
    %v818 = vpop.xlane.xlu0 %817
    %v819 = vsel %vm785, %v809, 0.0
    %820 = vadd.xlane.f32.xlu0 %v819
    %v821 = vpop.xlane.xlu0 %820
    %v822 = vrcp.pop %v812
    %v823 = vrcp.pop %v815
    %v824 = vrcp.pop %v818
    %v825 = vrcp.pop %v821
    %v826 = vmul.f32 %v803, %v822
    %v827 = vmul.f32 %v805, %v823
    %v828 = vmul.f32 %v807, %v824
    %v829 = vmul.f32 %v809, %v825
    %v831 = vsel %vm785, %v826, 0
    %833 = vmatprep.subr.mxu0 0.0
    %834 = vmatpush1.msra.mxu0 0.0
    %835 = vmatprep.subr.mxu0 0.0
    %836 = vmatpush1.msra.mxu0 0.0
    %837 = vmatprep.subr.mxu0 0.0
    %838 = vmatpush1.msra.mxu0 0.0
    %839 = vmatprep.subr.mxu0 0.0
    %840 = vmatpush1.msra.mxu0 0.0
    %841 = vmatprep.subr.mxu0 0.0
    %842 = vmatpush1.msra.mxu0 0.0
    %843 = vmatprep.subr.mxu0 0.0
    %844 = vmatpush1.msra.mxu0 0.0
    %845 = vmatprep.subr.mxu0 0.0
    %846 = vmatpush1.msra.mxu0 0.0
    %847 = vmatprep.subr.mxu0 0.0
    %848 = vmatpush1.msra.mxu0 0.0
    %849 = vmatprep.subr.mxu0 0.0
    %850 = vmatpush1.msra.mxu0 0.0
    %851 = vmatprep.subr.mxu0 0.0
    %852 = vmatpush1.msra.mxu0 0.0
    %853 = vmatprep.subr.mxu0 0.0
    %854 = vmatpush1.msra.mxu0 0.0
    %855 = vmatprep.subr.mxu0 0.0
    %856 = vmatpush1.msra.mxu0 0.0
    %857 = vmatprep.subr.mxu0 0.0
    %858 = vmatpush1.msra.mxu0 0.0
    %859 = vmatprep.subr.mxu0 0.0
    %860 = vmatpush1.msra.mxu0 0.0
    %861 = vmatprep.subr.mxu0 0.0
    %862 = vmatpush1.msra.mxu0 0.0
    %863 = vmatprep.subr.mxu0 0.0
    %864 = vmatpush1.msra.mxu0 %v462
    %865 = vmatprep.subr.mxu0 0.0
    %866 = vmatpush2.msra.mxu0 0.0
    %867 = vmatprep.subr.mxu0 0.0
    %868 = vmatpush2.msra.mxu0 0.0
    %869 = vmatprep.subr.mxu0 0.0
    %870 = vmatpush2.msra.mxu0 0.0
    %871 = vmatprep.subr.mxu0 0.0
    %872 = vmatpush2.msra.mxu0 0.0
    %873 = vmatprep.subr.mxu0 0.0
    %874 = vmatpush2.msra.mxu0 0.0
    %875 = vmatprep.subr.mxu0 0.0
    %876 = vmatpush2.msra.mxu0 0.0
    %877 = vmatprep.subr.mxu0 0.0
    %878 = vmatpush2.msra.mxu0 0.0
    %879 = vmatprep.subr.mxu0 0.0
    %880 = vmatpush2.msra.mxu0 0.0
    %881 = vmatprep.subr.mxu0 0.0
    %882 = vmatpush2.msra.mxu0 0.0
    %883 = vmatprep.subr.mxu0 0.0
    %884 = vmatpush2.msra.mxu0 0.0
    %885 = vmatprep.subr.mxu0 0.0
    %886 = vmatpush2.msra.mxu0 0.0
    %887 = vmatprep.subr.mxu0 0.0
    %888 = vmatpush2.msra.mxu0 0.0
    %889 = vmatprep.subr.mxu0 0.0
    %890 = vmatpush2.msra.mxu0 0.0
    %891 = vmatprep.subr.mxu0 0.0
    %892 = vmatpush2.msra.mxu0 0.0
    %893 = vmatprep.subr.mxu0 0.0
    %894 = vmatpush2.msra.mxu0 0.0
    %895 = vmatprep.subr.mxu0 0.0
    %896 = vmatpush2.msra.mxu0 0.0
    %897 = vmatprep.mubr.f32.mxu0 0.0
    %898 = vmatmul.mubr.f32.gmra.mxu0 %v831
    %v899 = vpop.f32.mrf.mxu0
    %v900 = vadd.f32 0.0, %v899
    %v901 = vpop.f32.mrf.mxu0
    %902 = vdwg.mxu0
    %v904 = vsel %vm785, %v827, 0
    %906 = vmatprep.subr.mxu0 0.0
    %907 = vmatpush1.msra.mxu0 0.0
    %908 = vmatprep.subr.mxu0 0.0
    %909 = vmatpush1.msra.mxu0 0.0
    %910 = vmatprep.subr.mxu0 0.0
    %911 = vmatpush1.msra.mxu0 0.0
    %912 = vmatprep.subr.mxu0 0.0
    %913 = vmatpush1.msra.mxu0 0.0
    %914 = vmatprep.subr.mxu0 0.0
    %915 = vmatpush1.msra.mxu0 0.0
    %916 = vmatprep.subr.mxu0 0.0
    %917 = vmatpush1.msra.mxu0 0.0
    %918 = vmatprep.subr.mxu0 0.0
    %919 = vmatpush1.msra.mxu0 0.0
    %920 = vmatprep.subr.mxu0 0.0
    %921 = vmatpush1.msra.mxu0 0.0
    %922 = vmatprep.subr.mxu0 0.0
    %923 = vmatpush1.msra.mxu0 0.0
    %924 = vmatprep.subr.mxu0 0.0
    %925 = vmatpush1.msra.mxu0 0.0
    %926 = vmatprep.subr.mxu0 0.0
    %927 = vmatpush1.msra.mxu0 0.0
    %928 = vmatprep.subr.mxu0 0.0
    %929 = vmatpush1.msra.mxu0 0.0
    %930 = vmatprep.subr.mxu0 0.0
    %931 = vmatpush1.msra.mxu0 0.0
    %932 = vmatprep.subr.mxu0 0.0
    %933 = vmatpush1.msra.mxu0 0.0
    %934 = vmatprep.subr.mxu0 0.0
    %935 = vmatpush1.msra.mxu0 0.0
    %936 = vmatprep.subr.mxu0 0.0
    %937 = vmatpush1.msra.mxu0 %v467
    %938 = vmatprep.subr.mxu0 0.0
    %939 = vmatpush2.msra.mxu0 0.0
    %940 = vmatprep.subr.mxu0 0.0
    %941 = vmatpush2.msra.mxu0 0.0
    %942 = vmatprep.subr.mxu0 0.0
    %943 = vmatpush2.msra.mxu0 0.0
    %944 = vmatprep.subr.mxu0 0.0
    %945 = vmatpush2.msra.mxu0 0.0
    %946 = vmatprep.subr.mxu0 0.0
    %947 = vmatpush2.msra.mxu0 0.0
    %948 = vmatprep.subr.mxu0 0.0
    %949 = vmatpush2.msra.mxu0 0.0
    %950 = vmatprep.subr.mxu0 0.0
    %951 = vmatpush2.msra.mxu0 0.0
    %952 = vmatprep.subr.mxu0 0.0
    %953 = vmatpush2.msra.mxu0 0.0
    %954 = vmatprep.subr.mxu0 0.0
    %955 = vmatpush2.msra.mxu0 0.0
    %956 = vmatprep.subr.mxu0 0.0
    %957 = vmatpush2.msra.mxu0 0.0
    %958 = vmatprep.subr.mxu0 0.0
    %959 = vmatpush2.msra.mxu0 0.0
    %960 = vmatprep.subr.mxu0 0.0
    %961 = vmatpush2.msra.mxu0 0.0
    %962 = vmatprep.subr.mxu0 0.0
    %963 = vmatpush2.msra.mxu0 0.0
    %964 = vmatprep.subr.mxu0 0.0
    %965 = vmatpush2.msra.mxu0 0.0
    %966 = vmatprep.subr.mxu0 0.0
    %967 = vmatpush2.msra.mxu0 0.0
    %968 = vmatprep.subr.mxu0 0.0
    %969 = vmatpush2.msra.mxu0 0.0
    %970 = vmatprep.mubr.f32.mxu0 0.0
    %971 = vmatmul.mubr.f32.gmra.mxu0 %v904
    %v972 = vpop.f32.mrf.mxu0
    %v973 = vadd.f32 0.0, %v972
    %v974 = vpop.f32.mrf.mxu0
    %975 = vdwg.mxu0
    %v977 = vsel %vm785, %v828, 0
    %979 = vmatprep.subr.mxu0 0.0
    %980 = vmatpush1.msra.mxu0 0.0
    %981 = vmatprep.subr.mxu0 0.0
    %982 = vmatpush1.msra.mxu0 0.0
    %983 = vmatprep.subr.mxu0 0.0
    %984 = vmatpush1.msra.mxu0 0.0
    %985 = vmatprep.subr.mxu0 0.0
    %986 = vmatpush1.msra.mxu0 0.0
    %987 = vmatprep.subr.mxu0 0.0
    %988 = vmatpush1.msra.mxu0 0.0
    %989 = vmatprep.subr.mxu0 0.0
    %990 = vmatpush1.msra.mxu0 0.0
    %991 = vmatprep.subr.mxu0 0.0
    %992 = vmatpush1.msra.mxu0 0.0
    %993 = vmatprep.subr.mxu0 0.0
    %994 = vmatpush1.msra.mxu0 0.0
    %995 = vmatprep.subr.mxu0 0.0
    %996 = vmatpush1.msra.mxu0 0.0
    %997 = vmatprep.subr.mxu0 0.0
    %998 = vmatpush1.msra.mxu0 0.0
    %999 = vmatprep.subr.mxu0 0.0
    %1000 = vmatpush1.msra.mxu0 0.0
    %1001 = vmatprep.subr.mxu0 0.0
    %1002 = vmatpush1.msra.mxu0 0.0
    %1003 = vmatprep.subr.mxu0 0.0
    %1004 = vmatpush1.msra.mxu0 0.0
    %1005 = vmatprep.subr.mxu0 0.0
    %1006 = vmatpush1.msra.mxu0 0.0
    %1007 = vmatprep.subr.mxu0 0.0
    %1008 = vmatpush1.msra.mxu0 0.0
    %1009 = vmatprep.subr.mxu0 0.0
    %1010 = vmatpush1.msra.mxu0 %v472
    %1011 = vmatprep.subr.mxu0 0.0
    %1012 = vmatpush2.msra.mxu0 0.0
    %1013 = vmatprep.subr.mxu0 0.0
    %1014 = vmatpush2.msra.mxu0 0.0
    %1015 = vmatprep.subr.mxu0 0.0
    %1016 = vmatpush2.msra.mxu0 0.0
    %1017 = vmatprep.subr.mxu0 0.0
    %1018 = vmatpush2.msra.mxu0 0.0
    %1019 = vmatprep.subr.mxu0 0.0
    %1020 = vmatpush2.msra.mxu0 0.0
    %1021 = vmatprep.subr.mxu0 0.0
    %1022 = vmatpush2.msra.mxu0 0.0
    %1023 = vmatprep.subr.mxu0 0.0
    %1024 = vmatpush2.msra.mxu0 0.0
    %1025 = vmatprep.subr.mxu0 0.0
    %1026 = vmatpush2.msra.mxu0 0.0
    %1027 = vmatprep.subr.mxu0 0.0
    %1028 = vmatpush2.msra.mxu0 0.0
    %1029 = vmatprep.subr.mxu0 0.0
    %1030 = vmatpush2.msra.mxu0 0.0
    %1031 = vmatprep.subr.mxu0 0.0
    %1032 = vmatpush2.msra.mxu0 0.0
    %1033 = vmatprep.subr.mxu0 0.0
    %1034 = vmatpush2.msra.mxu0 0.0
    %1035 = vmatprep.subr.mxu0 0.0
    %1036 = vmatpush2.msra.mxu0 0.0
    %1037 = vmatprep.subr.mxu0 0.0
    %1038 = vmatpush2.msra.mxu0 0.0
    %1039 = vmatprep.subr.mxu0 0.0
    %1040 = vmatpush2.msra.mxu0 0.0
    %1041 = vmatprep.subr.mxu0 0.0
    %1042 = vmatpush2.msra.mxu0 0.0
    %1043 = vmatprep.mubr.f32.mxu0 0.0
    %1044 = vmatmul.mubr.f32.gmra.mxu0 %v977
    %v1045 = vpop.f32.mrf.mxu0
    %v1046 = vadd.f32 0.0, %v1045
    %v1047 = vpop.f32.mrf.mxu0
    %1048 = vdwg.mxu0
    %v1050 = vsel %vm785, %v829, 0
    %1052 = vmatprep.subr.mxu0 0.0
    %1053 = vmatpush1.msra.mxu0 0.0
    %1054 = vmatprep.subr.mxu0 0.0
    %1055 = vmatpush1.msra.mxu0 0.0
    %1056 = vmatprep.subr.mxu0 0.0
    %1057 = vmatpush1.msra.mxu0 0.0
    %1058 = vmatprep.subr.mxu0 0.0
    %1059 = vmatpush1.msra.mxu0 0.0
    %1060 = vmatprep.subr.mxu0 0.0
    %1061 = vmatpush1.msra.mxu0 0.0
    %1062 = vmatprep.subr.mxu0 0.0
    %1063 = vmatpush1.msra.mxu0 0.0
    %1064 = vmatprep.subr.mxu0 0.0
    %1065 = vmatpush1.msra.mxu0 0.0
    %1066 = vmatprep.subr.mxu0 0.0
    %1067 = vmatpush1.msra.mxu0 0.0
    %1068 = vmatprep.subr.mxu0 0.0
    %1069 = vmatpush1.msra.mxu0 0.0
    %1070 = vmatprep.subr.mxu0 0.0
    %1071 = vmatpush1.msra.mxu0 0.0
    %1072 = vmatprep.subr.mxu0 0.0
    %1073 = vmatpush1.msra.mxu0 0.0
    %1074 = vmatprep.subr.mxu0 0.0
    %1075 = vmatpush1.msra.mxu0 0.0
    %1076 = vmatprep.subr.mxu0 0.0
    %1077 = vmatpush1.msra.mxu0 0.0
    %1078 = vmatprep.subr.mxu0 0.0
    %1079 = vmatpush1.msra.mxu0 0.0
    %1080 = vmatprep.subr.mxu0 0.0
    %1081 = vmatpush1.msra.mxu0 0.0
    %1082 = vmatprep.subr.mxu0 0.0
    %1083 = vmatpush1.msra.mxu0 %v477
    %1084 = vmatprep.subr.mxu0 0.0
    %1085 = vmatpush2.msra.mxu0 0.0
    %1086 = vmatprep.subr.mxu0 0.0
    %1087 = vmatpush2.msra.mxu0 0.0
    %1088 = vmatprep.subr.mxu0 0.0
    %1089 = vmatpush2.msra.mxu0 0.0
    %1090 = vmatprep.subr.mxu0 0.0
    %1091 = vmatpush2.msra.mxu0 0.0
    %1092 = vmatprep.subr.mxu0 0.0
    %1093 = vmatpush2.msra.mxu0 0.0
    %1094 = vmatprep.subr.mxu0 0.0
    %1095 = vmatpush2.msra.mxu0 0.0
    %1096 = vmatprep.subr.mxu0 0.0
    %1097 = vmatpush2.msra.mxu0 0.0
    %1098 = vmatprep.subr.mxu0 0.0
    %1099 = vmatpush2.msra.mxu0 0.0
    %1100 = vmatprep.subr.mxu0 0.0
    %1101 = vmatpush2.msra.mxu0 0.0
    %1102 = vmatprep.subr.mxu0 0.0
    %1103 = vmatpush2.msra.mxu0 0.0
    %1104 = vmatprep.subr.mxu0 0.0
    %1105 = vmatpush2.msra.mxu0 0.0
    %1106 = vmatprep.subr.mxu0 0.0
    %1107 = vmatpush2.msra.mxu0 0.0
    %1108 = vmatprep.subr.mxu0 0.0
    %1109 = vmatpush2.msra.mxu0 0.0
    %1110 = vmatprep.subr.mxu0 0.0
    %1111 = vmatpush2.msra.mxu0 0.0
    %1112 = vmatprep.subr.mxu0 0.0
    %1113 = vmatpush2.msra.mxu0 0.0
    %1114 = vmatprep.subr.mxu0 0.0
    %1115 = vmatpush2.msra.mxu0 0.0
    %1116 = vmatprep.mubr.f32.mxu0 0.0
    %1117 = vmatmul.mubr.f32.gmra.mxu0 %v1050
    %v1118 = vpop.f32.mrf.mxu0
    %v1119 = vadd.f32 0.0, %v1118
    %v1120 = vpop.f32.mrf.mxu0
    %1121 = vdwg.mxu0
    %1122 = vrot.lane.b32.xlu0 %v246, 96
    %v1123 = vpop.permute.xlu0 %1122
    %1124 = vrot.lane.b32.xlu0 %v354, 96
    %v1125 = vpop.permute.xlu0 %1124
    %v1126 = vsel %vm480, %v1123, 0
    %v1128 = vsel %vm480, %v1125, 0
    %1130 = vmatprep.subr.mxu0 0.0
    %1131 = vmatpush1.xpose.msra.mxu0 0.0
    %1132 = vmatprep.subr.mxu0 0.0
    %1133 = vmatpush1.xpose.msra.mxu0 0.0
    %1134 = vmatprep.subr.mxu0 0.0
    %1135 = vmatpush1.xpose.msra.mxu0 0.0
    %1136 = vmatprep.subr.mxu0 0.0
    %1137 = vmatpush1.xpose.msra.mxu0 0.0
    %1138 = vmatprep.subr.mxu0 0.0
    %1139 = vmatpush1.xpose.msra.mxu0 0.0
    %1140 = vmatprep.subr.mxu0 0.0
    %1141 = vmatpush1.xpose.msra.mxu0 0.0
    %1142 = vmatprep.subr.mxu0 0.0
    %1143 = vmatpush1.xpose.msra.mxu0 0.0
    %1144 = vmatprep.subr.mxu0 0.0
    %1145 = vmatpush1.xpose.msra.mxu0 0.0
    %1146 = vmatprep.subr.mxu0 0.0
    %1147 = vmatpush1.xpose.msra.mxu0 0.0
    %1148 = vmatprep.subr.mxu0 0.0
    %1149 = vmatpush1.xpose.msra.mxu0 0.0
    %1150 = vmatprep.subr.mxu0 0.0
    %1151 = vmatpush1.xpose.msra.mxu0 0.0
    %1152 = vmatprep.subr.mxu0 0.0
    %1153 = vmatpush1.xpose.msra.mxu0 0.0
    %1154 = vmatprep.subr.mxu0 0.0
    %1155 = vmatpush1.xpose.msra.mxu0 0.0
    %1156 = vmatprep.subr.mxu0 0.0
    %1157 = vmatpush1.xpose.msra.mxu0 0.0
    %1158 = vmatprep.subr.mxu0 0.0
    %1159 = vmatpush1.xpose.msra.mxu0 0.0
    %1160 = vmatprep.subr.mxu0 0.0
    %1161 = vmatpush1.xpose.msra.mxu0 %v1128
    %1162 = vmatprep.subr.mxu0 0.0
    %1163 = vmatpush2.xpose.msra.mxu0 0.0
    %1164 = vmatprep.subr.mxu0 0.0
    %1165 = vmatpush2.xpose.msra.mxu0 0.0
    %1166 = vmatprep.subr.mxu0 0.0
    %1167 = vmatpush2.xpose.msra.mxu0 0.0
    %1168 = vmatprep.subr.mxu0 0.0
    %1169 = vmatpush2.xpose.msra.mxu0 0.0
    %1170 = vmatprep.subr.mxu0 0.0
    %1171 = vmatpush2.xpose.msra.mxu0 0.0
    %1172 = vmatprep.subr.mxu0 0.0
    %1173 = vmatpush2.xpose.msra.mxu0 0.0
    %1174 = vmatprep.subr.mxu0 0.0
    %1175 = vmatpush2.xpose.msra.mxu0 0.0
    %1176 = vmatprep.subr.mxu0 0.0
    %1177 = vmatpush2.xpose.msra.mxu0 0.0
    %1178 = vmatprep.subr.mxu0 0.0
    %1179 = vmatpush2.xpose.msra.mxu0 0.0
    %1180 = vmatprep.subr.mxu0 0.0
    %1181 = vmatpush2.xpose.msra.mxu0 0.0
    %1182 = vmatprep.subr.mxu0 0.0
    %1183 = vmatpush2.xpose.msra.mxu0 0.0
    %1184 = vmatprep.subr.mxu0 0.0
    %1185 = vmatpush2.xpose.msra.mxu0 0.0
    %1186 = vmatprep.subr.mxu0 0.0
    %1187 = vmatpush2.xpose.msra.mxu0 0.0
    %1188 = vmatprep.subr.mxu0 0.0
    %1189 = vmatpush2.xpose.msra.mxu0 0.0
    %1190 = vmatprep.subr.mxu0 0.0
    %1191 = vmatpush2.xpose.msra.mxu0 0.0
    %1192 = vmatprep.subr.mxu0 0.0
    %1193 = vmatpush2.xpose.msra.mxu0 0.0
    %1194 = vmatprep.mubr.f32.mxu0 0.0
    %1195 = vmatmul.mubr.f32.gmra.mxu0 %v1126
    %v1196 = vpop.f32.mrf.mxu0
    %v1197 = vadd.f32 0.0, %v1196
    %v1198 = vpop.f32.mrf.mxu0
    %1199 = vdwg.mxu0
    %1200 = vrot.lane.b32.xlu0 %v251, 96
    %v1201 = vpop.permute.xlu0 %1200
    %1202 = vrot.lane.b32.xlu0 %v359, 96
    %v1203 = vpop.permute.xlu0 %1202
    %v1204 = vsel %vm480, %v1201, 0
    %v1206 = vsel %vm480, %v1203, 0
    %1208 = vmatprep.subr.mxu0 0.0
    %1209 = vmatpush1.xpose.msra.mxu0 0.0
    %1210 = vmatprep.subr.mxu0 0.0
    %1211 = vmatpush1.xpose.msra.mxu0 0.0
    %1212 = vmatprep.subr.mxu0 0.0
    %1213 = vmatpush1.xpose.msra.mxu0 0.0
    %1214 = vmatprep.subr.mxu0 0.0
    %1215 = vmatpush1.xpose.msra.mxu0 0.0
    %1216 = vmatprep.subr.mxu0 0.0
    %1217 = vmatpush1.xpose.msra.mxu0 0.0
    %1218 = vmatprep.subr.mxu0 0.0
    %1219 = vmatpush1.xpose.msra.mxu0 0.0
    %1220 = vmatprep.subr.mxu0 0.0
    %1221 = vmatpush1.xpose.msra.mxu0 0.0
    %1222 = vmatprep.subr.mxu0 0.0
    %1223 = vmatpush1.xpose.msra.mxu0 0.0
    %1224 = vmatprep.subr.mxu0 0.0
    %1225 = vmatpush1.xpose.msra.mxu0 0.0
    %1226 = vmatprep.subr.mxu0 0.0
    %1227 = vmatpush1.xpose.msra.mxu0 0.0
    %1228 = vmatprep.subr.mxu0 0.0
    %1229 = vmatpush1.xpose.msra.mxu0 0.0
    %1230 = vmatprep.subr.mxu0 0.0
    %1231 = vmatpush1.xpose.msra.mxu0 0.0
    %1232 = vmatprep.subr.mxu0 0.0
    %1233 = vmatpush1.xpose.msra.mxu0 0.0
    %1234 = vmatprep.subr.mxu0 0.0
    %1235 = vmatpush1.xpose.msra.mxu0 0.0
    %1236 = vmatprep.subr.mxu0 0.0
    %1237 = vmatpush1.xpose.msra.mxu0 0.0
    %1238 = vmatprep.subr.mxu0 0.0
    %1239 = vmatpush1.xpose.msra.mxu0 %v1206
    %1240 = vmatprep.subr.mxu0 0.0
    %1241 = vmatpush2.xpose.msra.mxu0 0.0
    %1242 = vmatprep.subr.mxu0 0.0
    %1243 = vmatpush2.xpose.msra.mxu0 0.0
    %1244 = vmatprep.subr.mxu0 0.0
    %1245 = vmatpush2.xpose.msra.mxu0 0.0
    %1246 = vmatprep.subr.mxu0 0.0
    %1247 = vmatpush2.xpose.msra.mxu0 0.0
    %1248 = vmatprep.subr.mxu0 0.0
    %1249 = vmatpush2.xpose.msra.mxu0 0.0
    %1250 = vmatprep.subr.mxu0 0.0
    %1251 = vmatpush2.xpose.msra.mxu0 0.0
    %1252 = vmatprep.subr.mxu0 0.0
    %1253 = vmatpush2.xpose.msra.mxu0 0.0
    %1254 = vmatprep.subr.mxu0 0.0
    %1255 = vmatpush2.xpose.msra.mxu0 0.0
    %1256 = vmatprep.subr.mxu0 0.0
    %1257 = vmatpush2.xpose.msra.mxu0 0.0
    %1258 = vmatprep.subr.mxu0 0.0
    %1259 = vmatpush2.xpose.msra.mxu0 0.0
    %1260 = vmatprep.subr.mxu0 0.0
    %1261 = vmatpush2.xpose.msra.mxu0 0.0
    %1262 = vmatprep.subr.mxu0 0.0
    %1263 = vmatpush2.xpose.msra.mxu0 0.0
    %1264 = vmatprep.subr.mxu0 0.0
    %1265 = vmatpush2.xpose.msra.mxu0 0.0
    %1266 = vmatprep.subr.mxu0 0.0
    %1267 = vmatpush2.xpose.msra.mxu0 0.0
    %1268 = vmatprep.subr.mxu0 0.0
    %1269 = vmatpush2.xpose.msra.mxu0 0.0
    %1270 = vmatprep.subr.mxu0 0.0
    %1271 = vmatpush2.xpose.msra.mxu0 0.0
    %1272 = vmatprep.mubr.f32.mxu0 0.0
    %1273 = vmatmul.mubr.f32.gmra.mxu0 %v1204
    %v1274 = vpop.f32.mrf.mxu0
    %v1275 = vadd.f32 0.0, %v1274
    %v1276 = vpop.f32.mrf.mxu0
    %1277 = vdwg.mxu0
    %1278 = vrot.lane.b32.xlu0 %v256, 96
    %v1279 = vpop.permute.xlu0 %1278
    %1280 = vrot.lane.b32.xlu0 %v364, 96
    %v1281 = vpop.permute.xlu0 %1280
    %v1282 = vsel %vm480, %v1279, 0
    %v1284 = vsel %vm480, %v1281, 0
    %1286 = vmatprep.subr.mxu0 0.0
    %1287 = vmatpush1.xpose.msra.mxu0 0.0
    %1288 = vmatprep.subr.mxu0 0.0
    %1289 = vmatpush1.xpose.msra.mxu0 0.0
    %1290 = vmatprep.subr.mxu0 0.0
    %1291 = vmatpush1.xpose.msra.mxu0 0.0
    %1292 = vmatprep.subr.mxu0 0.0
    %1293 = vmatpush1.xpose.msra.mxu0 0.0
    %1294 = vmatprep.subr.mxu0 0.0
    %1295 = vmatpush1.xpose.msra.mxu0 0.0
    %1296 = vmatprep.subr.mxu0 0.0
    %1297 = vmatpush1.xpose.msra.mxu0 0.0
    %1298 = vmatprep.subr.mxu0 0.0
    %1299 = vmatpush1.xpose.msra.mxu0 0.0
    %1300 = vmatprep.subr.mxu0 0.0
    %1301 = vmatpush1.xpose.msra.mxu0 0.0
    %1302 = vmatprep.subr.mxu0 0.0
    %1303 = vmatpush1.xpose.msra.mxu0 0.0
    %1304 = vmatprep.subr.mxu0 0.0
    %1305 = vmatpush1.xpose.msra.mxu0 0.0
    %1306 = vmatprep.subr.mxu0 0.0
    %1307 = vmatpush1.xpose.msra.mxu0 0.0
    %1308 = vmatprep.subr.mxu0 0.0
    %1309 = vmatpush1.xpose.msra.mxu0 0.0
    %1310 = vmatprep.subr.mxu0 0.0
    %1311 = vmatpush1.xpose.msra.mxu0 0.0
    %1312 = vmatprep.subr.mxu0 0.0
    %1313 = vmatpush1.xpose.msra.mxu0 0.0
    %1314 = vmatprep.subr.mxu0 0.0
    %1315 = vmatpush1.xpose.msra.mxu0 0.0
    %1316 = vmatprep.subr.mxu0 0.0
    %1317 = vmatpush1.xpose.msra.mxu0 %v1284
    %1318 = vmatprep.subr.mxu0 0.0
    %1319 = vmatpush2.xpose.msra.mxu0 0.0
    %1320 = vmatprep.subr.mxu0 0.0
    %1321 = vmatpush2.xpose.msra.mxu0 0.0
    %1322 = vmatprep.subr.mxu0 0.0
    %1323 = vmatpush2.xpose.msra.mxu0 0.0
    %1324 = vmatprep.subr.mxu0 0.0
    %1325 = vmatpush2.xpose.msra.mxu0 0.0
    %1326 = vmatprep.subr.mxu0 0.0
    %1327 = vmatpush2.xpose.msra.mxu0 0.0
    %1328 = vmatprep.subr.mxu0 0.0
    %1329 = vmatpush2.xpose.msra.mxu0 0.0
    %1330 = vmatprep.subr.mxu0 0.0
    %1331 = vmatpush2.xpose.msra.mxu0 0.0
    %1332 = vmatprep.subr.mxu0 0.0
    %1333 = vmatpush2.xpose.msra.mxu0 0.0
    %1334 = vmatprep.subr.mxu0 0.0
    %1335 = vmatpush2.xpose.msra.mxu0 0.0
    %1336 = vmatprep.subr.mxu0 0.0
    %1337 = vmatpush2.xpose.msra.mxu0 0.0
    %1338 = vmatprep.subr.mxu0 0.0
    %1339 = vmatpush2.xpose.msra.mxu0 0.0
    %1340 = vmatprep.subr.mxu0 0.0
    %1341 = vmatpush2.xpose.msra.mxu0 0.0
    %1342 = vmatprep.subr.mxu0 0.0
    %1343 = vmatpush2.xpose.msra.mxu0 0.0
    %1344 = vmatprep.subr.mxu0 0.0
    %1345 = vmatpush2.xpose.msra.mxu0 0.0
    %1346 = vmatprep.subr.mxu0 0.0
    %1347 = vmatpush2.xpose.msra.mxu0 0.0
    %1348 = vmatprep.subr.mxu0 0.0
    %1349 = vmatpush2.xpose.msra.mxu0 0.0
    %1350 = vmatprep.mubr.f32.mxu0 0.0
    %1351 = vmatmul.mubr.f32.gmra.mxu0 %v1282
    %v1352 = vpop.f32.mrf.mxu0
    %v1353 = vadd.f32 0.0, %v1352
    %v1354 = vpop.f32.mrf.mxu0
    %1355 = vdwg.mxu0
    %1356 = vrot.lane.b32.xlu0 %v261, 96
    %v1357 = vpop.permute.xlu0 %1356
    %1358 = vrot.lane.b32.xlu0 %v369, 96
    %v1359 = vpop.permute.xlu0 %1358
    %v1360 = vsel %vm480, %v1357, 0
    %v1362 = vsel %vm480, %v1359, 0
    %1364 = vmatprep.subr.mxu0 0.0
    %1365 = vmatpush1.xpose.msra.mxu0 0.0
    %1366 = vmatprep.subr.mxu0 0.0
    %1367 = vmatpush1.xpose.msra.mxu0 0.0
    %1368 = vmatprep.subr.mxu0 0.0
    %1369 = vmatpush1.xpose.msra.mxu0 0.0
    %1370 = vmatprep.subr.mxu0 0.0
    %1371 = vmatpush1.xpose.msra.mxu0 0.0
    %1372 = vmatprep.subr.mxu0 0.0
    %1373 = vmatpush1.xpose.msra.mxu0 0.0
    %1374 = vmatprep.subr.mxu0 0.0
    %1375 = vmatpush1.xpose.msra.mxu0 0.0
    %1376 = vmatprep.subr.mxu0 0.0
    %1377 = vmatpush1.xpose.msra.mxu0 0.0
    %1378 = vmatprep.subr.mxu0 0.0
    %1379 = vmatpush1.xpose.msra.mxu0 0.0
    %1380 = vmatprep.subr.mxu0 0.0
    %1381 = vmatpush1.xpose.msra.mxu0 0.0
    %1382 = vmatprep.subr.mxu0 0.0
    %1383 = vmatpush1.xpose.msra.mxu0 0.0
    %1384 = vmatprep.subr.mxu0 0.0
    %1385 = vmatpush1.xpose.msra.mxu0 0.0
    %1386 = vmatprep.subr.mxu0 0.0
    %1387 = vmatpush1.xpose.msra.mxu0 0.0
    %1388 = vmatprep.subr.mxu0 0.0
    %1389 = vmatpush1.xpose.msra.mxu0 0.0
    %1390 = vmatprep.subr.mxu0 0.0
    %1391 = vmatpush1.xpose.msra.mxu0 0.0
    %1392 = vmatprep.subr.mxu0 0.0
    %1393 = vmatpush1.xpose.msra.mxu0 0.0
    %1394 = vmatprep.subr.mxu0 0.0
    %1395 = vmatpush1.xpose.msra.mxu0 %v1362
    %1396 = vmatprep.subr.mxu0 0.0
    %1397 = vmatpush2.xpose.msra.mxu0 0.0
    %1398 = vmatprep.subr.mxu0 0.0
    %1399 = vmatpush2.xpose.msra.mxu0 0.0
    %1400 = vmatprep.subr.mxu0 0.0
    %1401 = vmatpush2.xpose.msra.mxu0 0.0
    %1402 = vmatprep.subr.mxu0 0.0
    %1403 = vmatpush2.xpose.msra.mxu0 0.0
    %1404 = vmatprep.subr.mxu0 0.0
    %1405 = vmatpush2.xpose.msra.mxu0 0.0
    %1406 = vmatprep.subr.mxu0 0.0
    %1407 = vmatpush2.xpose.msra.mxu0 0.0
    %1408 = vmatprep.subr.mxu0 0.0
    %1409 = vmatpush2.xpose.msra.mxu0 0.0
    %1410 = vmatprep.subr.mxu0 0.0
    %1411 = vmatpush2.xpose.msra.mxu0 0.0
    %1412 = vmatprep.subr.mxu0 0.0
    %1413 = vmatpush2.xpose.msra.mxu0 0.0
    %1414 = vmatprep.subr.mxu0 0.0
    %1415 = vmatpush2.xpose.msra.mxu0 0.0
    %1416 = vmatprep.subr.mxu0 0.0
    %1417 = vmatpush2.xpose.msra.mxu0 0.0
    %1418 = vmatprep.subr.mxu0 0.0
    %1419 = vmatpush2.xpose.msra.mxu0 0.0
    %1420 = vmatprep.subr.mxu0 0.0
    %1421 = vmatpush2.xpose.msra.mxu0 0.0
    %1422 = vmatprep.subr.mxu0 0.0
    %1423 = vmatpush2.xpose.msra.mxu0 0.0
    %1424 = vmatprep.subr.mxu0 0.0
    %1425 = vmatpush2.xpose.msra.mxu0 0.0
    %1426 = vmatprep.subr.mxu0 0.0
    %1427 = vmatpush2.xpose.msra.mxu0 0.0
    %1428 = vmatprep.mubr.f32.mxu0 0.0
    %1429 = vmatmul.mubr.f32.gmra.mxu0 %v1360
    %v1430 = vpop.f32.mrf.mxu0
    %v1431 = vadd.f32 0.0, %v1430
    %v1432 = vpop.f32.mrf.mxu0
    %1433 = vdwg.mxu0
    %v1434 = vsel %vm785, %v1197, -inf
    %1435 = vmax.xlane.f32.xlu0 %v1434
    %v1436 = vpop.xlane.xlu0 %1435
    %v1437 = vsel %vm785, %v1275, -inf
    %1438 = vmax.xlane.f32.xlu0 %v1437
    %v1439 = vpop.xlane.xlu0 %1438
    %v1440 = vsel %vm785, %v1353, -inf
    %1441 = vmax.xlane.f32.xlu0 %v1440
    %v1442 = vpop.xlane.xlu0 %1441
    %v1443 = vsel %vm785, %v1431, -inf
    %1444 = vmax.xlane.f32.xlu0 %v1443
    %v1445 = vpop.xlane.xlu0 %1444
    %v1446 = vsub.f32 %v1197, %v1436
    %v1447 = vsub.f32 %v1275, %v1439
    %v1448 = vsub.f32 %v1353, %v1442
    %v1449 = vsub.f32 %v1431, %v1445
    %v1450 = vmul.f32 %v1446, 1.442695
    %v1451 = vpow.pop %v1450
    %v1452 = vmul.f32 %v1447, 1.442695
    %v1453 = vpow.pop %v1452
    %v1454 = vmul.f32 %v1448, 1.442695
    %v1455 = vpow.pop %v1454
    %v1456 = vmul.f32 %v1449, 1.442695
    %v1457 = vpow.pop %v1456
    %v1458 = vsel %vm785, %v1451, 0.0
    %1459 = vadd.xlane.f32.xlu0 %v1458
    %v1460 = vpop.xlane.xlu0 %1459
    %v1461 = vsel %vm785, %v1453, 0.0
    %1462 = vadd.xlane.f32.xlu0 %v1461
    %v1463 = vpop.xlane.xlu0 %1462
    %v1464 = vsel %vm785, %v1455, 0.0
    %1465 = vadd.xlane.f32.xlu0 %v1464
    %v1466 = vpop.xlane.xlu0 %1465
    %v1467 = vsel %vm785, %v1457, 0.0
    %1468 = vadd.xlane.f32.xlu0 %v1467
    %v1469 = vpop.xlane.xlu0 %1468
    %v1470 = vrcp.pop %v1460
    %v1471 = vrcp.pop %v1463
    %v1472 = vrcp.pop %v1466
    %v1473 = vrcp.pop %v1469
    %v1474 = vmul.f32 %v1451, %v1470
    %v1475 = vmul.f32 %v1453, %v1471
    %v1476 = vmul.f32 %v1455, %v1472
    %v1477 = vmul.f32 %v1457, %v1473
    %1479 = vrot.lane.b32.xlu0 %v462, 96
    %v1480 = vpop.permute.xlu0 %1479
    %v1483 = vsel %vm785, %v1474, 0
    %1485 = vmatprep.subr.mxu0 0.0
    %1486 = vmatpush1.msra.mxu0 0.0
    %1487 = vmatprep.subr.mxu0 0.0
    %1488 = vmatpush1.msra.mxu0 0.0
    %1489 = vmatprep.subr.mxu0 0.0
    %1490 = vmatpush1.msra.mxu0 0.0
    %1491 = vmatprep.subr.mxu0 0.0
    %1492 = vmatpush1.msra.mxu0 0.0
    %1493 = vmatprep.subr.mxu0 0.0
    %1494 = vmatpush1.msra.mxu0 0.0
    %1495 = vmatprep.subr.mxu0 0.0
    %1496 = vmatpush1.msra.mxu0 0.0
    %1497 = vmatprep.subr.mxu0 0.0
    %1498 = vmatpush1.msra.mxu0 0.0
    %1499 = vmatprep.subr.mxu0 0.0
    %1500 = vmatpush1.msra.mxu0 0.0
    %1501 = vmatprep.subr.mxu0 0.0
    %1502 = vmatpush1.msra.mxu0 0.0
    %1503 = vmatprep.subr.mxu0 0.0
    %1504 = vmatpush1.msra.mxu0 0.0
    %1505 = vmatprep.subr.mxu0 0.0
    %1506 = vmatpush1.msra.mxu0 0.0
    %1507 = vmatprep.subr.mxu0 0.0
    %1508 = vmatpush1.msra.mxu0 0.0
    %1509 = vmatprep.subr.mxu0 0.0
    %1510 = vmatpush1.msra.mxu0 0.0
    %1511 = vmatprep.subr.mxu0 0.0
    %1512 = vmatpush1.msra.mxu0 0.0
    %1513 = vmatprep.subr.mxu0 0.0
    %1514 = vmatpush1.msra.mxu0 0.0
    %1515 = vmatprep.subr.mxu0 0.0
    %1516 = vmatpush1.msra.mxu0 %v1480
    %1517 = vmatprep.subr.mxu0 0.0
    %1518 = vmatpush2.msra.mxu0 0.0
    %1519 = vmatprep.subr.mxu0 0.0
    %1520 = vmatpush2.msra.mxu0 0.0
    %1521 = vmatprep.subr.mxu0 0.0
    %1522 = vmatpush2.msra.mxu0 0.0
    %1523 = vmatprep.subr.mxu0 0.0
    %1524 = vmatpush2.msra.mxu0 0.0
    %1525 = vmatprep.subr.mxu0 0.0
    %1526 = vmatpush2.msra.mxu0 0.0
    %1527 = vmatprep.subr.mxu0 0.0
    %1528 = vmatpush2.msra.mxu0 0.0
    %1529 = vmatprep.subr.mxu0 0.0
    %1530 = vmatpush2.msra.mxu0 0.0
    %1531 = vmatprep.subr.mxu0 0.0
    %1532 = vmatpush2.msra.mxu0 0.0
    %1533 = vmatprep.subr.mxu0 0.0
    %1534 = vmatpush2.msra.mxu0 0.0
    %1535 = vmatprep.subr.mxu0 0.0
    %1536 = vmatpush2.msra.mxu0 0.0
    %1537 = vmatprep.subr.mxu0 0.0
    %1538 = vmatpush2.msra.mxu0 0.0
    %1539 = vmatprep.subr.mxu0 0.0
    %1540 = vmatpush2.msra.mxu0 0.0
    %1541 = vmatprep.subr.mxu0 0.0
    %1542 = vmatpush2.msra.mxu0 0.0
    %1543 = vmatprep.subr.mxu0 0.0
    %1544 = vmatpush2.msra.mxu0 0.0
    %1545 = vmatprep.subr.mxu0 0.0
    %1546 = vmatpush2.msra.mxu0 0.0
    %1547 = vmatprep.subr.mxu0 0.0
    %1548 = vmatpush2.msra.mxu0 0.0
    %1549 = vmatprep.mubr.f32.mxu0 0.0
    %1550 = vmatmul.mubr.f32.gmra.mxu0 %v1483
    %v1551 = vpop.f32.mrf.mxu0
    %v1552 = vadd.f32 0.0, %v1551
    %v1553 = vpop.f32.mrf.mxu0
    %1554 = vdwg.mxu0
    %1556 = vrot.lane.b32.xlu0 %v467, 96
    %v1557 = vpop.permute.xlu0 %1556
    %v1560 = vsel %vm785, %v1475, 0
    %1562 = vmatprep.subr.mxu0 0.0
    %1563 = vmatpush1.msra.mxu0 0.0
    %1564 = vmatprep.subr.mxu0 0.0
    %1565 = vmatpush1.msra.mxu0 0.0
    %1566 = vmatprep.subr.mxu0 0.0
    %1567 = vmatpush1.msra.mxu0 0.0
    %1568 = vmatprep.subr.mxu0 0.0
    %1569 = vmatpush1.msra.mxu0 0.0
    %1570 = vmatprep.subr.mxu0 0.0
    %1571 = vmatpush1.msra.mxu0 0.0
    %1572 = vmatprep.subr.mxu0 0.0
    %1573 = vmatpush1.msra.mxu0 0.0
    %1574 = vmatprep.subr.mxu0 0.0
    %1575 = vmatpush1.msra.mxu0 0.0
    %1576 = vmatprep.subr.mxu0 0.0
    %1577 = vmatpush1.msra.mxu0 0.0
    %1578 = vmatprep.subr.mxu0 0.0
    %1579 = vmatpush1.msra.mxu0 0.0
    %1580 = vmatprep.subr.mxu0 0.0
    %1581 = vmatpush1.msra.mxu0 0.0
    %1582 = vmatprep.subr.mxu0 0.0
    %1583 = vmatpush1.msra.mxu0 0.0
    %1584 = vmatprep.subr.mxu0 0.0
    %1585 = vmatpush1.msra.mxu0 0.0
    %1586 = vmatprep.subr.mxu0 0.0
    %1587 = vmatpush1.msra.mxu0 0.0
    %1588 = vmatprep.subr.mxu0 0.0
    %1589 = vmatpush1.msra.mxu0 0.0
    %1590 = vmatprep.subr.mxu0 0.0
    %1591 = vmatpush1.msra.mxu0 0.0
    %1592 = vmatprep.subr.mxu0 0.0
    %1593 = vmatpush1.msra.mxu0 %v1557
    %1594 = vmatprep.subr.mxu0 0.0
    %1595 = vmatpush2.msra.mxu0 0.0
    %1596 = vmatprep.subr.mxu0 0.0
    %1597 = vmatpush2.msra.mxu0 0.0
    %1598 = vmatprep.subr.mxu0 0.0
    %1599 = vmatpush2.msra.mxu0 0.0
    %1600 = vmatprep.subr.mxu0 0.0
    %1601 = vmatpush2.msra.mxu0 0.0
    %1602 = vmatprep.subr.mxu0 0.0
    %1603 = vmatpush2.msra.mxu0 0.0
    %1604 = vmatprep.subr.mxu0 0.0
    %1605 = vmatpush2.msra.mxu0 0.0
    %1606 = vmatprep.subr.mxu0 0.0
    %1607 = vmatpush2.msra.mxu0 0.0
    %1608 = vmatprep.subr.mxu0 0.0
    %1609 = vmatpush2.msra.mxu0 0.0
    %1610 = vmatprep.subr.mxu0 0.0
    %1611 = vmatpush2.msra.mxu0 0.0
    %1612 = vmatprep.subr.mxu0 0.0
    %1613 = vmatpush2.msra.mxu0 0.0
    %1614 = vmatprep.subr.mxu0 0.0
    %1615 = vmatpush2.msra.mxu0 0.0
    %1616 = vmatprep.subr.mxu0 0.0
    %1617 = vmatpush2.msra.mxu0 0.0
    %1618 = vmatprep.subr.mxu0 0.0
    %1619 = vmatpush2.msra.mxu0 0.0
    %1620 = vmatprep.subr.mxu0 0.0
    %1621 = vmatpush2.msra.mxu0 0.0
    %1622 = vmatprep.subr.mxu0 0.0
    %1623 = vmatpush2.msra.mxu0 0.0
    %1624 = vmatprep.subr.mxu0 0.0
    %1625 = vmatpush2.msra.mxu0 0.0
    %1626 = vmatprep.mubr.f32.mxu0 0.0
    %1627 = vmatmul.mubr.f32.gmra.mxu0 %v1560
    %v1628 = vpop.f32.mrf.mxu0
    %v1629 = vadd.f32 0.0, %v1628
    %v1630 = vpop.f32.mrf.mxu0
    %1631 = vdwg.mxu0
    %1633 = vrot.lane.b32.xlu0 %v472, 96
    %v1634 = vpop.permute.xlu0 %1633
    %v1637 = vsel %vm785, %v1476, 0
    %1639 = vmatprep.subr.mxu0 0.0
    %1640 = vmatpush1.msra.mxu0 0.0
    %1641 = vmatprep.subr.mxu0 0.0
    %1642 = vmatpush1.msra.mxu0 0.0
    %1643 = vmatprep.subr.mxu0 0.0
    %1644 = vmatpush1.msra.mxu0 0.0
    %1645 = vmatprep.subr.mxu0 0.0
    %1646 = vmatpush1.msra.mxu0 0.0
    %1647 = vmatprep.subr.mxu0 0.0
    %1648 = vmatpush1.msra.mxu0 0.0
    %1649 = vmatprep.subr.mxu0 0.0
    %1650 = vmatpush1.msra.mxu0 0.0
    %1651 = vmatprep.subr.mxu0 0.0
    %1652 = vmatpush1.msra.mxu0 0.0
    %1653 = vmatprep.subr.mxu0 0.0
    %1654 = vmatpush1.msra.mxu0 0.0
    %1655 = vmatprep.subr.mxu0 0.0
    %1656 = vmatpush1.msra.mxu0 0.0
    %1657 = vmatprep.subr.mxu0 0.0
    %1658 = vmatpush1.msra.mxu0 0.0
    %1659 = vmatprep.subr.mxu0 0.0
    %1660 = vmatpush1.msra.mxu0 0.0
    %1661 = vmatprep.subr.mxu0 0.0
    %1662 = vmatpush1.msra.mxu0 0.0
    %1663 = vmatprep.subr.mxu0 0.0
    %1664 = vmatpush1.msra.mxu0 0.0
    %1665 = vmatprep.subr.mxu0 0.0
    %1666 = vmatpush1.msra.mxu0 0.0
    %1667 = vmatprep.subr.mxu0 0.0
    %1668 = vmatpush1.msra.mxu0 0.0
    %1669 = vmatprep.subr.mxu0 0.0
    %1670 = vmatpush1.msra.mxu0 %v1634
    %1671 = vmatprep.subr.mxu0 0.0
    %1672 = vmatpush2.msra.mxu0 0.0
    %1673 = vmatprep.subr.mxu0 0.0
    %1674 = vmatpush2.msra.mxu0 0.0
    %1675 = vmatprep.subr.mxu0 0.0
    %1676 = vmatpush2.msra.mxu0 0.0
    %1677 = vmatprep.subr.mxu0 0.0
    %1678 = vmatpush2.msra.mxu0 0.0
    %1679 = vmatprep.subr.mxu0 0.0
    %1680 = vmatpush2.msra.mxu0 0.0
    %1681 = vmatprep.subr.mxu0 0.0
    %1682 = vmatpush2.msra.mxu0 0.0
    %1683 = vmatprep.subr.mxu0 0.0
    %1684 = vmatpush2.msra.mxu0 0.0
    %1685 = vmatprep.subr.mxu0 0.0
    %1686 = vmatpush2.msra.mxu0 0.0
    %1687 = vmatprep.subr.mxu0 0.0
    %1688 = vmatpush2.msra.mxu0 0.0
    %1689 = vmatprep.subr.mxu0 0.0
    %1690 = vmatpush2.msra.mxu0 0.0
    %1691 = vmatprep.subr.mxu0 0.0
    %1692 = vmatpush2.msra.mxu0 0.0
    %1693 = vmatprep.subr.mxu0 0.0
    %1694 = vmatpush2.msra.mxu0 0.0
    %1695 = vmatprep.subr.mxu0 0.0
    %1696 = vmatpush2.msra.mxu0 0.0
    %1697 = vmatprep.subr.mxu0 0.0
    %1698 = vmatpush2.msra.mxu0 0.0
    %1699 = vmatprep.subr.mxu0 0.0
    %1700 = vmatpush2.msra.mxu0 0.0
    %1701 = vmatprep.subr.mxu0 0.0
    %1702 = vmatpush2.msra.mxu0 0.0
    %1703 = vmatprep.mubr.f32.mxu0 0.0
    %1704 = vmatmul.mubr.f32.gmra.mxu0 %v1637
    %v1705 = vpop.f32.mrf.mxu0
    %v1706 = vadd.f32 0.0, %v1705
    %v1707 = vpop.f32.mrf.mxu0
    %1708 = vdwg.mxu0
    %1710 = vrot.lane.b32.xlu0 %v477, 96
    %v1711 = vpop.permute.xlu0 %1710
    %v1714 = vsel %vm785, %v1477, 0
    %1716 = vmatprep.subr.mxu0 0.0
    %1717 = vmatpush1.msra.mxu0 0.0
    %1718 = vmatprep.subr.mxu0 0.0
    %1719 = vmatpush1.msra.mxu0 0.0
    %1720 = vmatprep.subr.mxu0 0.0
    %1721 = vmatpush1.msra.mxu0 0.0
    %1722 = vmatprep.subr.mxu0 0.0
    %1723 = vmatpush1.msra.mxu0 0.0
    %1724 = vmatprep.subr.mxu0 0.0
    %1725 = vmatpush1.msra.mxu0 0.0
    %1726 = vmatprep.subr.mxu0 0.0
    %1727 = vmatpush1.msra.mxu0 0.0
    %1728 = vmatprep.subr.mxu0 0.0
    %1729 = vmatpush1.msra.mxu0 0.0
    %1730 = vmatprep.subr.mxu0 0.0
    %1731 = vmatpush1.msra.mxu0 0.0
    %1732 = vmatprep.subr.mxu0 0.0
    %1733 = vmatpush1.msra.mxu0 0.0
    %1734 = vmatprep.subr.mxu0 0.0
    %1735 = vmatpush1.msra.mxu0 0.0
    %1736 = vmatprep.subr.mxu0 0.0
    %1737 = vmatpush1.msra.mxu0 0.0
    %1738 = vmatprep.subr.mxu0 0.0
    %1739 = vmatpush1.msra.mxu0 0.0
    %1740 = vmatprep.subr.mxu0 0.0
    %1741 = vmatpush1.msra.mxu0 0.0
    %1742 = vmatprep.subr.mxu0 0.0
    %1743 = vmatpush1.msra.mxu0 0.0
    %1744 = vmatprep.subr.mxu0 0.0
    %1745 = vmatpush1.msra.mxu0 0.0
    %1746 = vmatprep.subr.mxu0 0.0
    %1747 = vmatpush1.msra.mxu0 %v1711
    %1748 = vmatprep.subr.mxu0 0.0
    %1749 = vmatpush2.msra.mxu0 0.0
    %1750 = vmatprep.subr.mxu0 0.0
    %1751 = vmatpush2.msra.mxu0 0.0
    %1752 = vmatprep.subr.mxu0 0.0
    %1753 = vmatpush2.msra.mxu0 0.0
    %1754 = vmatprep.subr.mxu0 0.0
    %1755 = vmatpush2.msra.mxu0 0.0
    %1756 = vmatprep.subr.mxu0 0.0
    %1757 = vmatpush2.msra.mxu0 0.0
    %1758 = vmatprep.subr.mxu0 0.0
    %1759 = vmatpush2.msra.mxu0 0.0
    %1760 = vmatprep.subr.mxu0 0.0
    %1761 = vmatpush2.msra.mxu0 0.0
    %1762 = vmatprep.subr.mxu0 0.0
    %1763 = vmatpush2.msra.mxu0 0.0
    %1764 = vmatprep.subr.mxu0 0.0
    %1765 = vmatpush2.msra.mxu0 0.0
    %1766 = vmatprep.subr.mxu0 0.0
    %1767 = vmatpush2.msra.mxu0 0.0
    %1768 = vmatprep.subr.mxu0 0.0
    %1769 = vmatpush2.msra.mxu0 0.0
    %1770 = vmatprep.subr.mxu0 0.0
    %1771 = vmatpush2.msra.mxu0 0.0
    %1772 = vmatprep.subr.mxu0 0.0
    %1773 = vmatpush2.msra.mxu0 0.0
    %1774 = vmatprep.subr.mxu0 0.0
    %1775 = vmatpush2.msra.mxu0 0.0
    %1776 = vmatprep.subr.mxu0 0.0
    %1777 = vmatpush2.msra.mxu0 0.0
    %1778 = vmatprep.subr.mxu0 0.0
    %1779 = vmatpush2.msra.mxu0 0.0
    %1780 = vmatprep.mubr.f32.mxu0 0.0
    %1781 = vmatmul.mubr.f32.gmra.mxu0 %v1714
    %v1782 = vpop.f32.mrf.mxu0
    %v1783 = vadd.f32 0.0, %v1782
    %v1784 = vpop.f32.mrf.mxu0
    %1785 = vdwg.mxu0
    %1786 = vrot.lane.b32.xlu0 %v246, 64
    %v1787 = vpop.permute.xlu0 %1786
    %1788 = vrot.lane.b32.xlu0 %v354, 64
    %v1789 = vpop.permute.xlu0 %1788
    %v1790 = vsel %vm480, %v1787, 0
    %v1792 = vsel %vm480, %v1789, 0
    %1794 = vmatprep.subr.mxu0 0.0
    %1795 = vmatpush1.xpose.msra.mxu0 0.0
    %1796 = vmatprep.subr.mxu0 0.0
    %1797 = vmatpush1.xpose.msra.mxu0 0.0
    %1798 = vmatprep.subr.mxu0 0.0
    %1799 = vmatpush1.xpose.msra.mxu0 0.0
    %1800 = vmatprep.subr.mxu0 0.0
    %1801 = vmatpush1.xpose.msra.mxu0 0.0
    %1802 = vmatprep.subr.mxu0 0.0
    %1803 = vmatpush1.xpose.msra.mxu0 0.0
    %1804 = vmatprep.subr.mxu0 0.0
    %1805 = vmatpush1.xpose.msra.mxu0 0.0
    %1806 = vmatprep.subr.mxu0 0.0
    %1807 = vmatpush1.xpose.msra.mxu0 0.0
    %1808 = vmatprep.subr.mxu0 0.0
    %1809 = vmatpush1.xpose.msra.mxu0 0.0
    %1810 = vmatprep.subr.mxu0 0.0
    %1811 = vmatpush1.xpose.msra.mxu0 0.0
    %1812 = vmatprep.subr.mxu0 0.0
    %1813 = vmatpush1.xpose.msra.mxu0 0.0
    %1814 = vmatprep.subr.mxu0 0.0
    %1815 = vmatpush1.xpose.msra.mxu0 0.0
    %1816 = vmatprep.subr.mxu0 0.0
    %1817 = vmatpush1.xpose.msra.mxu0 0.0
    %1818 = vmatprep.subr.mxu0 0.0
    %1819 = vmatpush1.xpose.msra.mxu0 0.0
    %1820 = vmatprep.subr.mxu0 0.0
    %1821 = vmatpush1.xpose.msra.mxu0 0.0
    %1822 = vmatprep.subr.mxu0 0.0
    %1823 = vmatpush1.xpose.msra.mxu0 0.0
    %1824 = vmatprep.subr.mxu0 0.0
    %1825 = vmatpush1.xpose.msra.mxu0 %v1792
    %1826 = vmatprep.subr.mxu0 0.0
    %1827 = vmatpush2.xpose.msra.mxu0 0.0
    %1828 = vmatprep.subr.mxu0 0.0
    %1829 = vmatpush2.xpose.msra.mxu0 0.0
    %1830 = vmatprep.subr.mxu0 0.0
    %1831 = vmatpush2.xpose.msra.mxu0 0.0
    %1832 = vmatprep.subr.mxu0 0.0
    %1833 = vmatpush2.xpose.msra.mxu0 0.0
    %1834 = vmatprep.subr.mxu0 0.0
    %1835 = vmatpush2.xpose.msra.mxu0 0.0
    %1836 = vmatprep.subr.mxu0 0.0
    %1837 = vmatpush2.xpose.msra.mxu0 0.0
    %1838 = vmatprep.subr.mxu0 0.0
    %1839 = vmatpush2.xpose.msra.mxu0 0.0
    %1840 = vmatprep.subr.mxu0 0.0
    %1841 = vmatpush2.xpose.msra.mxu0 0.0
    %1842 = vmatprep.subr.mxu0 0.0
    %1843 = vmatpush2.xpose.msra.mxu0 0.0
    %1844 = vmatprep.subr.mxu0 0.0
    %1845 = vmatpush2.xpose.msra.mxu0 0.0
    %1846 = vmatprep.subr.mxu0 0.0
    %1847 = vmatpush2.xpose.msra.mxu0 0.0
    %1848 = vmatprep.subr.mxu0 0.0
    %1849 = vmatpush2.xpose.msra.mxu0 0.0
    %1850 = vmatprep.subr.mxu0 0.0
    %1851 = vmatpush2.xpose.msra.mxu0 0.0
    %1852 = vmatprep.subr.mxu0 0.0
    %1853 = vmatpush2.xpose.msra.mxu0 0.0
    %1854 = vmatprep.subr.mxu0 0.0
    %1855 = vmatpush2.xpose.msra.mxu0 0.0
    %1856 = vmatprep.subr.mxu0 0.0
    %1857 = vmatpush2.xpose.msra.mxu0 0.0
    %1858 = vmatprep.mubr.f32.mxu0 0.0
    %1859 = vmatmul.mubr.f32.gmra.mxu0 %v1790
    %v1860 = vpop.f32.mrf.mxu0
    %v1861 = vadd.f32 0.0, %v1860
    %v1862 = vpop.f32.mrf.mxu0
    %1863 = vdwg.mxu0
    %1864 = vrot.lane.b32.xlu0 %v251, 64
    %v1865 = vpop.permute.xlu0 %1864
    %1866 = vrot.lane.b32.xlu0 %v359, 64
    %v1867 = vpop.permute.xlu0 %1866
    %v1868 = vsel %vm480, %v1865, 0
    %v1870 = vsel %vm480, %v1867, 0
    %1872 = vmatprep.subr.mxu0 0.0
    %1873 = vmatpush1.xpose.msra.mxu0 0.0
    %1874 = vmatprep.subr.mxu0 0.0
    %1875 = vmatpush1.xpose.msra.mxu0 0.0
    %1876 = vmatprep.subr.mxu0 0.0
    %1877 = vmatpush1.xpose.msra.mxu0 0.0
    %1878 = vmatprep.subr.mxu0 0.0
    %1879 = vmatpush1.xpose.msra.mxu0 0.0
    %1880 = vmatprep.subr.mxu0 0.0
    %1881 = vmatpush1.xpose.msra.mxu0 0.0
    %1882 = vmatprep.subr.mxu0 0.0
    %1883 = vmatpush1.xpose.msra.mxu0 0.0
    %1884 = vmatprep.subr.mxu0 0.0
    %1885 = vmatpush1.xpose.msra.mxu0 0.0
    %1886 = vmatprep.subr.mxu0 0.0
    %1887 = vmatpush1.xpose.msra.mxu0 0.0
    %1888 = vmatprep.subr.mxu0 0.0
    %1889 = vmatpush1.xpose.msra.mxu0 0.0
    %1890 = vmatprep.subr.mxu0 0.0
    %1891 = vmatpush1.xpose.msra.mxu0 0.0
    %1892 = vmatprep.subr.mxu0 0.0
    %1893 = vmatpush1.xpose.msra.mxu0 0.0
    %1894 = vmatprep.subr.mxu0 0.0
    %1895 = vmatpush1.xpose.msra.mxu0 0.0
    %1896 = vmatprep.subr.mxu0 0.0
    %1897 = vmatpush1.xpose.msra.mxu0 0.0
    %1898 = vmatprep.subr.mxu0 0.0
    %1899 = vmatpush1.xpose.msra.mxu0 0.0
    %1900 = vmatprep.subr.mxu0 0.0
    %1901 = vmatpush1.xpose.msra.mxu0 0.0
    %1902 = vmatprep.subr.mxu0 0.0
    %1903 = vmatpush1.xpose.msra.mxu0 %v1870
    %1904 = vmatprep.subr.mxu0 0.0
    %1905 = vmatpush2.xpose.msra.mxu0 0.0
    %1906 = vmatprep.subr.mxu0 0.0
    %1907 = vmatpush2.xpose.msra.mxu0 0.0
    %1908 = vmatprep.subr.mxu0 0.0
    %1909 = vmatpush2.xpose.msra.mxu0 0.0
    %1910 = vmatprep.subr.mxu0 0.0
    %1911 = vmatpush2.xpose.msra.mxu0 0.0
    %1912 = vmatprep.subr.mxu0 0.0
    %1913 = vmatpush2.xpose.msra.mxu0 0.0
    %1914 = vmatprep.subr.mxu0 0.0
    %1915 = vmatpush2.xpose.msra.mxu0 0.0
    %1916 = vmatprep.subr.mxu0 0.0
    %1917 = vmatpush2.xpose.msra.mxu0 0.0
    %1918 = vmatprep.subr.mxu0 0.0
    %1919 = vmatpush2.xpose.msra.mxu0 0.0
    %1920 = vmatprep.subr.mxu0 0.0
    %1921 = vmatpush2.xpose.msra.mxu0 0.0
    %1922 = vmatprep.subr.mxu0 0.0
    %1923 = vmatpush2.xpose.msra.mxu0 0.0
    %1924 = vmatprep.subr.mxu0 0.0
    %1925 = vmatpush2.xpose.msra.mxu0 0.0
    %1926 = vmatprep.subr.mxu0 0.0
    %1927 = vmatpush2.xpose.msra.mxu0 0.0
    %1928 = vmatprep.subr.mxu0 0.0
    %1929 = vmatpush2.xpose.msra.mxu0 0.0
    %1930 = vmatprep.subr.mxu0 0.0
    %1931 = vmatpush2.xpose.msra.mxu0 0.0
    %1932 = vmatprep.subr.mxu0 0.0
    %1933 = vmatpush2.xpose.msra.mxu0 0.0
    %1934 = vmatprep.subr.mxu0 0.0
    %1935 = vmatpush2.xpose.msra.mxu0 0.0
    %1936 = vmatprep.mubr.f32.mxu0 0.0
    %1937 = vmatmul.mubr.f32.gmra.mxu0 %v1868
    %v1938 = vpop.f32.mrf.mxu0
    %v1939 = vadd.f32 0.0, %v1938
    %v1940 = vpop.f32.mrf.mxu0
    %1941 = vdwg.mxu0
    %1942 = vrot.lane.b32.xlu0 %v256, 64
    %v1943 = vpop.permute.xlu0 %1942
    %1944 = vrot.lane.b32.xlu0 %v364, 64
    %v1945 = vpop.permute.xlu0 %1944
    %v1946 = vsel %vm480, %v1943, 0
    %v1948 = vsel %vm480, %v1945, 0
    %1950 = vmatprep.subr.mxu0 0.0
    %1951 = vmatpush1.xpose.msra.mxu0 0.0
    %1952 = vmatprep.subr.mxu0 0.0
    %1953 = vmatpush1.xpose.msra.mxu0 0.0
    %1954 = vmatprep.subr.mxu0 0.0
    %1955 = vmatpush1.xpose.msra.mxu0 0.0
    %1956 = vmatprep.subr.mxu0 0.0
    %1957 = vmatpush1.xpose.msra.mxu0 0.0
    %1958 = vmatprep.subr.mxu0 0.0
    %1959 = vmatpush1.xpose.msra.mxu0 0.0
    %1960 = vmatprep.subr.mxu0 0.0
    %1961 = vmatpush1.xpose.msra.mxu0 0.0
    %1962 = vmatprep.subr.mxu0 0.0
    %1963 = vmatpush1.xpose.msra.mxu0 0.0
    %1964 = vmatprep.subr.mxu0 0.0
    %1965 = vmatpush1.xpose.msra.mxu0 0.0
    %1966 = vmatprep.subr.mxu0 0.0
    %1967 = vmatpush1.xpose.msra.mxu0 0.0
    %1968 = vmatprep.subr.mxu0 0.0
    %1969 = vmatpush1.xpose.msra.mxu0 0.0
    %1970 = vmatprep.subr.mxu0 0.0
    %1971 = vmatpush1.xpose.msra.mxu0 0.0
    %1972 = vmatprep.subr.mxu0 0.0
    %1973 = vmatpush1.xpose.msra.mxu0 0.0
    %1974 = vmatprep.subr.mxu0 0.0
    %1975 = vmatpush1.xpose.msra.mxu0 0.0
    %1976 = vmatprep.subr.mxu0 0.0
    %1977 = vmatpush1.xpose.msra.mxu0 0.0
    %1978 = vmatprep.subr.mxu0 0.0
    %1979 = vmatpush1.xpose.msra.mxu0 0.0
    %1980 = vmatprep.subr.mxu0 0.0
    %1981 = vmatpush1.xpose.msra.mxu0 %v1948
    %1982 = vmatprep.subr.mxu0 0.0
    %1983 = vmatpush2.xpose.msra.mxu0 0.0
    %1984 = vmatprep.subr.mxu0 0.0
    %1985 = vmatpush2.xpose.msra.mxu0 0.0
    %1986 = vmatprep.subr.mxu0 0.0
    %1987 = vmatpush2.xpose.msra.mxu0 0.0
    %1988 = vmatprep.subr.mxu0 0.0
    %1989 = vmatpush2.xpose.msra.mxu0 0.0
    %1990 = vmatprep.subr.mxu0 0.0
    %1991 = vmatpush2.xpose.msra.mxu0 0.0
    %1992 = vmatprep.subr.mxu0 0.0
    %1993 = vmatpush2.xpose.msra.mxu0 0.0
    %1994 = vmatprep.subr.mxu0 0.0
    %1995 = vmatpush2.xpose.msra.mxu0 0.0
    %1996 = vmatprep.subr.mxu0 0.0
    %1997 = vmatpush2.xpose.msra.mxu0 0.0
    %1998 = vmatprep.subr.mxu0 0.0
    %1999 = vmatpush2.xpose.msra.mxu0 0.0
    %2000 = vmatprep.subr.mxu0 0.0
    %2001 = vmatpush2.xpose.msra.mxu0 0.0
    %2002 = vmatprep.subr.mxu0 0.0
    %2003 = vmatpush2.xpose.msra.mxu0 0.0
    %2004 = vmatprep.subr.mxu0 0.0
    %2005 = vmatpush2.xpose.msra.mxu0 0.0
    %2006 = vmatprep.subr.mxu0 0.0
    %2007 = vmatpush2.xpose.msra.mxu0 0.0
    %2008 = vmatprep.subr.mxu0 0.0
    %2009 = vmatpush2.xpose.msra.mxu0 0.0
    %2010 = vmatprep.subr.mxu0 0.0
    %2011 = vmatpush2.xpose.msra.mxu0 0.0
    %2012 = vmatprep.subr.mxu0 0.0
    %2013 = vmatpush2.xpose.msra.mxu0 0.0
    %2014 = vmatprep.mubr.f32.mxu0 0.0
    %2015 = vmatmul.mubr.f32.gmra.mxu0 %v1946
    %v2016 = vpop.f32.mrf.mxu0
    %v2017 = vadd.f32 0.0, %v2016
    %v2018 = vpop.f32.mrf.mxu0
    %2019 = vdwg.mxu0
    %2020 = vrot.lane.b32.xlu0 %v261, 64
    %v2021 = vpop.permute.xlu0 %2020
    %2022 = vrot.lane.b32.xlu0 %v369, 64
    %v2023 = vpop.permute.xlu0 %2022
    %v2024 = vsel %vm480, %v2021, 0
    %v2026 = vsel %vm480, %v2023, 0
    %2028 = vmatprep.subr.mxu0 0.0
    %2029 = vmatpush1.xpose.msra.mxu0 0.0
    %2030 = vmatprep.subr.mxu0 0.0
    %2031 = vmatpush1.xpose.msra.mxu0 0.0
    %2032 = vmatprep.subr.mxu0 0.0
    %2033 = vmatpush1.xpose.msra.mxu0 0.0
    %2034 = vmatprep.subr.mxu0 0.0
    %2035 = vmatpush1.xpose.msra.mxu0 0.0
    %2036 = vmatprep.subr.mxu0 0.0
    %2037 = vmatpush1.xpose.msra.mxu0 0.0
    %2038 = vmatprep.subr.mxu0 0.0
    %2039 = vmatpush1.xpose.msra.mxu0 0.0
    %2040 = vmatprep.subr.mxu0 0.0
    %2041 = vmatpush1.xpose.msra.mxu0 0.0
    %2042 = vmatprep.subr.mxu0 0.0
    %2043 = vmatpush1.xpose.msra.mxu0 0.0
    %2044 = vmatprep.subr.mxu0 0.0
    %2045 = vmatpush1.xpose.msra.mxu0 0.0
    %2046 = vmatprep.subr.mxu0 0.0
    %2047 = vmatpush1.xpose.msra.mxu0 0.0
    %2048 = vmatprep.subr.mxu0 0.0
    %2049 = vmatpush1.xpose.msra.mxu0 0.0
    %2050 = vmatprep.subr.mxu0 0.0
    %2051 = vmatpush1.xpose.msra.mxu0 0.0
    %2052 = vmatprep.subr.mxu0 0.0
    %2053 = vmatpush1.xpose.msra.mxu0 0.0
    %2054 = vmatprep.subr.mxu0 0.0
    %2055 = vmatpush1.xpose.msra.mxu0 0.0
    %2056 = vmatprep.subr.mxu0 0.0
    %2057 = vmatpush1.xpose.msra.mxu0 0.0
    %2058 = vmatprep.subr.mxu0 0.0
    %2059 = vmatpush1.xpose.msra.mxu0 %v2026
    %2060 = vmatprep.subr.mxu0 0.0
    %2061 = vmatpush2.xpose.msra.mxu0 0.0
    %2062 = vmatprep.subr.mxu0 0.0
    %2063 = vmatpush2.xpose.msra.mxu0 0.0
    %2064 = vmatprep.subr.mxu0 0.0
    %2065 = vmatpush2.xpose.msra.mxu0 0.0
    %2066 = vmatprep.subr.mxu0 0.0
    %2067 = vmatpush2.xpose.msra.mxu0 0.0
    %2068 = vmatprep.subr.mxu0 0.0
    %2069 = vmatpush2.xpose.msra.mxu0 0.0
    %2070 = vmatprep.subr.mxu0 0.0
    %2071 = vmatpush2.xpose.msra.mxu0 0.0
    %2072 = vmatprep.subr.mxu0 0.0
    %2073 = vmatpush2.xpose.msra.mxu0 0.0
    %2074 = vmatprep.subr.mxu0 0.0
    %2075 = vmatpush2.xpose.msra.mxu0 0.0
    %2076 = vmatprep.subr.mxu0 0.0
    %2077 = vmatpush2.xpose.msra.mxu0 0.0
    %2078 = vmatprep.subr.mxu0 0.0
    %2079 = vmatpush2.xpose.msra.mxu0 0.0
    %2080 = vmatprep.subr.mxu0 0.0
    %2081 = vmatpush2.xpose.msra.mxu0 0.0
    %2082 = vmatprep.subr.mxu0 0.0
    %2083 = vmatpush2.xpose.msra.mxu0 0.0
    %2084 = vmatprep.subr.mxu0 0.0
    %2085 = vmatpush2.xpose.msra.mxu0 0.0
    %2086 = vmatprep.subr.mxu0 0.0
    %2087 = vmatpush2.xpose.msra.mxu0 0.0
    %2088 = vmatprep.subr.mxu0 0.0
    %2089 = vmatpush2.xpose.msra.mxu0 0.0
    %2090 = vmatprep.subr.mxu0 0.0
    %2091 = vmatpush2.xpose.msra.mxu0 0.0
    %2092 = vmatprep.mubr.f32.mxu0 0.0
    %2093 = vmatmul.mubr.f32.gmra.mxu0 %v2024
    %v2094 = vpop.f32.mrf.mxu0
    %v2095 = vadd.f32 0.0, %v2094
    %v2096 = vpop.f32.mrf.mxu0
    %2097 = vdwg.mxu0
    %v2098 = vsel %vm785, %v1861, -inf
    %2099 = vmax.xlane.f32.xlu0 %v2098
    %v2100 = vpop.xlane.xlu0 %2099
    %v2101 = vsel %vm785, %v1939, -inf
    %2102 = vmax.xlane.f32.xlu0 %v2101
    %v2103 = vpop.xlane.xlu0 %2102
    %v2104 = vsel %vm785, %v2017, -inf
    %2105 = vmax.xlane.f32.xlu0 %v2104
    %v2106 = vpop.xlane.xlu0 %2105
    %v2107 = vsel %vm785, %v2095, -inf
    %2108 = vmax.xlane.f32.xlu0 %v2107
    %v2109 = vpop.xlane.xlu0 %2108
    %v2110 = vsub.f32 %v1861, %v2100
    %v2111 = vsub.f32 %v1939, %v2103
    %v2112 = vsub.f32 %v2017, %v2106
    %v2113 = vsub.f32 %v2095, %v2109
    %v2114 = vmul.f32 %v2110, 1.442695
    %v2115 = vpow.pop %v2114
    %v2116 = vmul.f32 %v2111, 1.442695
    %v2117 = vpow.pop %v2116
    %v2118 = vmul.f32 %v2112, 1.442695
    %v2119 = vpow.pop %v2118
    %v2120 = vmul.f32 %v2113, 1.442695
    %v2121 = vpow.pop %v2120
    %v2122 = vsel %vm785, %v2115, 0.0
    %2123 = vadd.xlane.f32.xlu0 %v2122
    %v2124 = vpop.xlane.xlu0 %2123
    %v2125 = vsel %vm785, %v2117, 0.0
    %2126 = vadd.xlane.f32.xlu0 %v2125
    %v2127 = vpop.xlane.xlu0 %2126
    %v2128 = vsel %vm785, %v2119, 0.0
    %2129 = vadd.xlane.f32.xlu0 %v2128
    %v2130 = vpop.xlane.xlu0 %2129
    %v2131 = vsel %vm785, %v2121, 0.0
    %2132 = vadd.xlane.f32.xlu0 %v2131
    %v2133 = vpop.xlane.xlu0 %2132
    %v2134 = vrcp.pop %v2124
    %v2135 = vrcp.pop %v2127
    %v2136 = vrcp.pop %v2130
    %v2137 = vrcp.pop %v2133
    %v2138 = vmul.f32 %v2115, %v2134
    %v2139 = vmul.f32 %v2117, %v2135
    %v2140 = vmul.f32 %v2119, %v2136
    %v2141 = vmul.f32 %v2121, %v2137
    %2142 = vrot.lane.b32.xlu0 %v462, 64
    %v2143 = vpop.permute.xlu0 %2142
    %v2146 = vsel %vm785, %v2138, 0
    %2148 = vmatprep.subr.mxu0 0.0
    %2149 = vmatpush1.msra.mxu0 0.0
    %2150 = vmatprep.subr.mxu0 0.0
    %2151 = vmatpush1.msra.mxu0 0.0
    %2152 = vmatprep.subr.mxu0 0.0
    %2153 = vmatpush1.msra.mxu0 0.0
    %2154 = vmatprep.subr.mxu0 0.0
    %2155 = vmatpush1.msra.mxu0 0.0
    %2156 = vmatprep.subr.mxu0 0.0
    %2157 = vmatpush1.msra.mxu0 0.0
    %2158 = vmatprep.subr.mxu0 0.0
    %2159 = vmatpush1.msra.mxu0 0.0
    %2160 = vmatprep.subr.mxu0 0.0
    %2161 = vmatpush1.msra.mxu0 0.0
    %2162 = vmatprep.subr.mxu0 0.0
    %2163 = vmatpush1.msra.mxu0 0.0
    %2164 = vmatprep.subr.mxu0 0.0
    %2165 = vmatpush1.msra.mxu0 0.0
    %2166 = vmatprep.subr.mxu0 0.0
    %2167 = vmatpush1.msra.mxu0 0.0
    %2168 = vmatprep.subr.mxu0 0.0
    %2169 = vmatpush1.msra.mxu0 0.0
    %2170 = vmatprep.subr.mxu0 0.0
    %2171 = vmatpush1.msra.mxu0 0.0
    %2172 = vmatprep.subr.mxu0 0.0
    %2173 = vmatpush1.msra.mxu0 0.0
    %2174 = vmatprep.subr.mxu0 0.0
    %2175 = vmatpush1.msra.mxu0 0.0
    %2176 = vmatprep.subr.mxu0 0.0
    %2177 = vmatpush1.msra.mxu0 0.0
    %2178 = vmatprep.subr.mxu0 0.0
    %2179 = vmatpush1.msra.mxu0 %v2143
    %2180 = vmatprep.subr.mxu0 0.0
    %2181 = vmatpush2.msra.mxu0 0.0
    %2182 = vmatprep.subr.mxu0 0.0
    %2183 = vmatpush2.msra.mxu0 0.0
    %2184 = vmatprep.subr.mxu0 0.0
    %2185 = vmatpush2.msra.mxu0 0.0
    %2186 = vmatprep.subr.mxu0 0.0
    %2187 = vmatpush2.msra.mxu0 0.0
    %2188 = vmatprep.subr.mxu0 0.0
    %2189 = vmatpush2.msra.mxu0 0.0
    %2190 = vmatprep.subr.mxu0 0.0
    %2191 = vmatpush2.msra.mxu0 0.0
    %2192 = vmatprep.subr.mxu0 0.0
    %2193 = vmatpush2.msra.mxu0 0.0
    %2194 = vmatprep.subr.mxu0 0.0
    %2195 = vmatpush2.msra.mxu0 0.0
    %2196 = vmatprep.subr.mxu0 0.0
    %2197 = vmatpush2.msra.mxu0 0.0
    %2198 = vmatprep.subr.mxu0 0.0
    %2199 = vmatpush2.msra.mxu0 0.0
    %2200 = vmatprep.subr.mxu0 0.0
    %2201 = vmatpush2.msra.mxu0 0.0
    %2202 = vmatprep.subr.mxu0 0.0
    %2203 = vmatpush2.msra.mxu0 0.0
    %2204 = vmatprep.subr.mxu0 0.0
    %2205 = vmatpush2.msra.mxu0 0.0
    %2206 = vmatprep.subr.mxu0 0.0
    %2207 = vmatpush2.msra.mxu0 0.0
    %2208 = vmatprep.subr.mxu0 0.0
    %2209 = vmatpush2.msra.mxu0 0.0
    %2210 = vmatprep.subr.mxu0 0.0
    %2211 = vmatpush2.msra.mxu0 0.0
    %2212 = vmatprep.mubr.f32.mxu0 0.0
    %2213 = vmatmul.mubr.f32.gmra.mxu0 %v2146
    %v2214 = vpop.f32.mrf.mxu0
    %v2215 = vadd.f32 0.0, %v2214
    %v2216 = vpop.f32.mrf.mxu0
    %2217 = vdwg.mxu0
    %2218 = vrot.lane.b32.xlu0 %v467, 64
    %v2219 = vpop.permute.xlu0 %2218
    %v2222 = vsel %vm785, %v2139, 0
    %2224 = vmatprep.subr.mxu0 0.0
    %2225 = vmatpush1.msra.mxu0 0.0
    %2226 = vmatprep.subr.mxu0 0.0
    %2227 = vmatpush1.msra.mxu0 0.0
    %2228 = vmatprep.subr.mxu0 0.0
    %2229 = vmatpush1.msra.mxu0 0.0
    %2230 = vmatprep.subr.mxu0 0.0
    %2231 = vmatpush1.msra.mxu0 0.0
    %2232 = vmatprep.subr.mxu0 0.0
    %2233 = vmatpush1.msra.mxu0 0.0
    %2234 = vmatprep.subr.mxu0 0.0
    %2235 = vmatpush1.msra.mxu0 0.0
    %2236 = vmatprep.subr.mxu0 0.0
    %2237 = vmatpush1.msra.mxu0 0.0
    %2238 = vmatprep.subr.mxu0 0.0
    %2239 = vmatpush1.msra.mxu0 0.0
    %2240 = vmatprep.subr.mxu0 0.0
    %2241 = vmatpush1.msra.mxu0 0.0
    %2242 = vmatprep.subr.mxu0 0.0
    %2243 = vmatpush1.msra.mxu0 0.0
    %2244 = vmatprep.subr.mxu0 0.0
    %2245 = vmatpush1.msra.mxu0 0.0
    %2246 = vmatprep.subr.mxu0 0.0
    %2247 = vmatpush1.msra.mxu0 0.0
    %2248 = vmatprep.subr.mxu0 0.0
    %2249 = vmatpush1.msra.mxu0 0.0
    %2250 = vmatprep.subr.mxu0 0.0
    %2251 = vmatpush1.msra.mxu0 0.0
    %2252 = vmatprep.subr.mxu0 0.0
    %2253 = vmatpush1.msra.mxu0 0.0
    %2254 = vmatprep.subr.mxu0 0.0
    %2255 = vmatpush1.msra.mxu0 %v2219
    %2256 = vmatprep.subr.mxu0 0.0
    %2257 = vmatpush2.msra.mxu0 0.0
    %2258 = vmatprep.subr.mxu0 0.0
    %2259 = vmatpush2.msra.mxu0 0.0
    %2260 = vmatprep.subr.mxu0 0.0
    %2261 = vmatpush2.msra.mxu0 0.0
    %2262 = vmatprep.subr.mxu0 0.0
    %2263 = vmatpush2.msra.mxu0 0.0
    %2264 = vmatprep.subr.mxu0 0.0
    %2265 = vmatpush2.msra.mxu0 0.0
    %2266 = vmatprep.subr.mxu0 0.0
    %2267 = vmatpush2.msra.mxu0 0.0
    %2268 = vmatprep.subr.mxu0 0.0
    %2269 = vmatpush2.msra.mxu0 0.0
    %2270 = vmatprep.subr.mxu0 0.0
    %2271 = vmatpush2.msra.mxu0 0.0
    %2272 = vmatprep.subr.mxu0 0.0
    %2273 = vmatpush2.msra.mxu0 0.0
    %2274 = vmatprep.subr.mxu0 0.0
    %2275 = vmatpush2.msra.mxu0 0.0
    %2276 = vmatprep.subr.mxu0 0.0
    %2277 = vmatpush2.msra.mxu0 0.0
    %2278 = vmatprep.subr.mxu0 0.0
    %2279 = vmatpush2.msra.mxu0 0.0
    %2280 = vmatprep.subr.mxu0 0.0
    %2281 = vmatpush2.msra.mxu0 0.0
    %2282 = vmatprep.subr.mxu0 0.0
    %2283 = vmatpush2.msra.mxu0 0.0
    %2284 = vmatprep.subr.mxu0 0.0
    %2285 = vmatpush2.msra.mxu0 0.0
    %2286 = vmatprep.subr.mxu0 0.0
    %2287 = vmatpush2.msra.mxu0 0.0
    %2288 = vmatprep.mubr.f32.mxu0 0.0
    %2289 = vmatmul.mubr.f32.gmra.mxu0 %v2222
    %v2290 = vpop.f32.mrf.mxu0
    %v2291 = vadd.f32 0.0, %v2290
    %v2292 = vpop.f32.mrf.mxu0
    %2293 = vdwg.mxu0
    %2294 = vrot.lane.b32.xlu0 %v472, 64
    %v2295 = vpop.permute.xlu0 %2294
    %v2298 = vsel %vm785, %v2140, 0
    %2300 = vmatprep.subr.mxu0 0.0
    %2301 = vmatpush1.msra.mxu0 0.0
    %2302 = vmatprep.subr.mxu0 0.0
    %2303 = vmatpush1.msra.mxu0 0.0
    %2304 = vmatprep.subr.mxu0 0.0
    %2305 = vmatpush1.msra.mxu0 0.0
    %2306 = vmatprep.subr.mxu0 0.0
    %2307 = vmatpush1.msra.mxu0 0.0
    %2308 = vmatprep.subr.mxu0 0.0
    %2309 = vmatpush1.msra.mxu0 0.0
    %2310 = vmatprep.subr.mxu0 0.0
    %2311 = vmatpush1.msra.mxu0 0.0
    %2312 = vmatprep.subr.mxu0 0.0
    %2313 = vmatpush1.msra.mxu0 0.0
    %2314 = vmatprep.subr.mxu0 0.0
    %2315 = vmatpush1.msra.mxu0 0.0
    %2316 = vmatprep.subr.mxu0 0.0
    %2317 = vmatpush1.msra.mxu0 0.0
    %2318 = vmatprep.subr.mxu0 0.0
    %2319 = vmatpush1.msra.mxu0 0.0
    %2320 = vmatprep.subr.mxu0 0.0
    %2321 = vmatpush1.msra.mxu0 0.0
    %2322 = vmatprep.subr.mxu0 0.0
    %2323 = vmatpush1.msra.mxu0 0.0
    %2324 = vmatprep.subr.mxu0 0.0
    %2325 = vmatpush1.msra.mxu0 0.0
    %2326 = vmatprep.subr.mxu0 0.0
    %2327 = vmatpush1.msra.mxu0 0.0
    %2328 = vmatprep.subr.mxu0 0.0
    %2329 = vmatpush1.msra.mxu0 0.0
    %2330 = vmatprep.subr.mxu0 0.0
    %2331 = vmatpush1.msra.mxu0 %v2295
    %2332 = vmatprep.subr.mxu0 0.0
    %2333 = vmatpush2.msra.mxu0 0.0
    %2334 = vmatprep.subr.mxu0 0.0
    %2335 = vmatpush2.msra.mxu0 0.0
    %2336 = vmatprep.subr.mxu0 0.0
    %2337 = vmatpush2.msra.mxu0 0.0
    %2338 = vmatprep.subr.mxu0 0.0
    %2339 = vmatpush2.msra.mxu0 0.0
    %2340 = vmatprep.subr.mxu0 0.0
    %2341 = vmatpush2.msra.mxu0 0.0
    %2342 = vmatprep.subr.mxu0 0.0
    %2343 = vmatpush2.msra.mxu0 0.0
    %2344 = vmatprep.subr.mxu0 0.0
    %2345 = vmatpush2.msra.mxu0 0.0
    %2346 = vmatprep.subr.mxu0 0.0
    %2347 = vmatpush2.msra.mxu0 0.0
    %2348 = vmatprep.subr.mxu0 0.0
    %2349 = vmatpush2.msra.mxu0 0.0
    %2350 = vmatprep.subr.mxu0 0.0
    %2351 = vmatpush2.msra.mxu0 0.0
    %2352 = vmatprep.subr.mxu0 0.0
    %2353 = vmatpush2.msra.mxu0 0.0
    %2354 = vmatprep.subr.mxu0 0.0
    %2355 = vmatpush2.msra.mxu0 0.0
    %2356 = vmatprep.subr.mxu0 0.0
    %2357 = vmatpush2.msra.mxu0 0.0
    %2358 = vmatprep.subr.mxu0 0.0
    %2359 = vmatpush2.msra.mxu0 0.0
    %2360 = vmatprep.subr.mxu0 0.0
    %2361 = vmatpush2.msra.mxu0 0.0
    %2362 = vmatprep.subr.mxu0 0.0
    %2363 = vmatpush2.msra.mxu0 0.0
    %2364 = vmatprep.mubr.f32.mxu0 0.0
    %2365 = vmatmul.mubr.f32.gmra.mxu0 %v2298
    %v2366 = vpop.f32.mrf.mxu0
    %v2367 = vadd.f32 0.0, %v2366
    %v2368 = vpop.f32.mrf.mxu0
    %2369 = vdwg.mxu0
    %2370 = vrot.lane.b32.xlu0 %v477, 64
    %v2371 = vpop.permute.xlu0 %2370
    %v2374 = vsel %vm785, %v2141, 0
    %2376 = vmatprep.subr.mxu0 0.0
    %2377 = vmatpush1.msra.mxu0 0.0
    %2378 = vmatprep.subr.mxu0 0.0
    %2379 = vmatpush1.msra.mxu0 0.0
    %2380 = vmatprep.subr.mxu0 0.0
    %2381 = vmatpush1.msra.mxu0 0.0
    %2382 = vmatprep.subr.mxu0 0.0
    %2383 = vmatpush1.msra.mxu0 0.0
    %2384 = vmatprep.subr.mxu0 0.0
    %2385 = vmatpush1.msra.mxu0 0.0
    %2386 = vmatprep.subr.mxu0 0.0
    %2387 = vmatpush1.msra.mxu0 0.0
    %2388 = vmatprep.subr.mxu0 0.0
    %2389 = vmatpush1.msra.mxu0 0.0
    %2390 = vmatprep.subr.mxu0 0.0
    %2391 = vmatpush1.msra.mxu0 0.0
    %2392 = vmatprep.subr.mxu0 0.0
    %2393 = vmatpush1.msra.mxu0 0.0
    %2394 = vmatprep.subr.mxu0 0.0
    %2395 = vmatpush1.msra.mxu0 0.0
    %2396 = vmatprep.subr.mxu0 0.0
    %2397 = vmatpush1.msra.mxu0 0.0
    %2398 = vmatprep.subr.mxu0 0.0
    %2399 = vmatpush1.msra.mxu0 0.0
    %2400 = vmatprep.subr.mxu0 0.0
    %2401 = vmatpush1.msra.mxu0 0.0
    %2402 = vmatprep.subr.mxu0 0.0
    %2403 = vmatpush1.msra.mxu0 0.0
    %2404 = vmatprep.subr.mxu0 0.0
    %2405 = vmatpush1.msra.mxu0 0.0
    %2406 = vmatprep.subr.mxu0 0.0
    %2407 = vmatpush1.msra.mxu0 %v2371
    %2408 = vmatprep.subr.mxu0 0.0
    %2409 = vmatpush2.msra.mxu0 0.0
    %2410 = vmatprep.subr.mxu0 0.0
    %2411 = vmatpush2.msra.mxu0 0.0
    %2412 = vmatprep.subr.mxu0 0.0
    %2413 = vmatpush2.msra.mxu0 0.0
    %2414 = vmatprep.subr.mxu0 0.0
    %2415 = vmatpush2.msra.mxu0 0.0
    %2416 = vmatprep.subr.mxu0 0.0
    %2417 = vmatpush2.msra.mxu0 0.0
    %2418 = vmatprep.subr.mxu0 0.0
    %2419 = vmatpush2.msra.mxu0 0.0
    %2420 = vmatprep.subr.mxu0 0.0
    %2421 = vmatpush2.msra.mxu0 0.0
    %2422 = vmatprep.subr.mxu0 0.0
    %2423 = vmatpush2.msra.mxu0 0.0
    %2424 = vmatprep.subr.mxu0 0.0
    %2425 = vmatpush2.msra.mxu0 0.0
    %2426 = vmatprep.subr.mxu0 0.0
    %2427 = vmatpush2.msra.mxu0 0.0
    %2428 = vmatprep.subr.mxu0 0.0
    %2429 = vmatpush2.msra.mxu0 0.0
    %2430 = vmatprep.subr.mxu0 0.0
    %2431 = vmatpush2.msra.mxu0 0.0
    %2432 = vmatprep.subr.mxu0 0.0
    %2433 = vmatpush2.msra.mxu0 0.0
    %2434 = vmatprep.subr.mxu0 0.0
    %2435 = vmatpush2.msra.mxu0 0.0
    %2436 = vmatprep.subr.mxu0 0.0
    %2437 = vmatpush2.msra.mxu0 0.0
    %2438 = vmatprep.subr.mxu0 0.0
    %2439 = vmatpush2.msra.mxu0 0.0
    %2440 = vmatprep.mubr.f32.mxu0 0.0
    %2441 = vmatmul.mubr.f32.gmra.mxu0 %v2374
    %v2442 = vpop.f32.mrf.mxu0
    %v2443 = vadd.f32 0.0, %v2442
    %v2444 = vpop.f32.mrf.mxu0
    %2445 = vdwg.mxu0
    %2446 = vrot.lane.b32.xlu0 %v246, 32
    %v2447 = vpop.permute.xlu0 %2446
    %2448 = vrot.lane.b32.xlu0 %v354, 32
    %v2449 = vpop.permute.xlu0 %2448
    %v2450 = vsel %vm480, %v2447, 0
    %v2452 = vsel %vm480, %v2449, 0
    %2454 = vmatprep.subr.mxu0 0.0
    %2455 = vmatpush1.xpose.msra.mxu0 0.0
    %2456 = vmatprep.subr.mxu0 0.0
    %2457 = vmatpush1.xpose.msra.mxu0 0.0
    %2458 = vmatprep.subr.mxu0 0.0
    %2459 = vmatpush1.xpose.msra.mxu0 0.0
    %2460 = vmatprep.subr.mxu0 0.0
    %2461 = vmatpush1.xpose.msra.mxu0 0.0
    %2462 = vmatprep.subr.mxu0 0.0
    %2463 = vmatpush1.xpose.msra.mxu0 0.0
    %2464 = vmatprep.subr.mxu0 0.0
    %2465 = vmatpush1.xpose.msra.mxu0 0.0
    %2466 = vmatprep.subr.mxu0 0.0
    %2467 = vmatpush1.xpose.msra.mxu0 0.0
    %2468 = vmatprep.subr.mxu0 0.0
    %2469 = vmatpush1.xpose.msra.mxu0 0.0
    %2470 = vmatprep.subr.mxu0 0.0
    %2471 = vmatpush1.xpose.msra.mxu0 0.0
    %2472 = vmatprep.subr.mxu0 0.0
    %2473 = vmatpush1.xpose.msra.mxu0 0.0
    %2474 = vmatprep.subr.mxu0 0.0
    %2475 = vmatpush1.xpose.msra.mxu0 0.0
    %2476 = vmatprep.subr.mxu0 0.0
    %2477 = vmatpush1.xpose.msra.mxu0 0.0
    %2478 = vmatprep.subr.mxu0 0.0
    %2479 = vmatpush1.xpose.msra.mxu0 0.0
    %2480 = vmatprep.subr.mxu0 0.0
    %2481 = vmatpush1.xpose.msra.mxu0 0.0
    %2482 = vmatprep.subr.mxu0 0.0
    %2483 = vmatpush1.xpose.msra.mxu0 0.0
    %2484 = vmatprep.subr.mxu0 0.0
    %2485 = vmatpush1.xpose.msra.mxu0 %v2452
    %2486 = vmatprep.subr.mxu0 0.0
    %2487 = vmatpush2.xpose.msra.mxu0 0.0
    %2488 = vmatprep.subr.mxu0 0.0
    %2489 = vmatpush2.xpose.msra.mxu0 0.0
    %2490 = vmatprep.subr.mxu0 0.0
    %2491 = vmatpush2.xpose.msra.mxu0 0.0
    %2492 = vmatprep.subr.mxu0 0.0
    %2493 = vmatpush2.xpose.msra.mxu0 0.0
    %2494 = vmatprep.subr.mxu0 0.0
    %2495 = vmatpush2.xpose.msra.mxu0 0.0
    %2496 = vmatprep.subr.mxu0 0.0
    %2497 = vmatpush2.xpose.msra.mxu0 0.0
    %2498 = vmatprep.subr.mxu0 0.0
    %2499 = vmatpush2.xpose.msra.mxu0 0.0
    %2500 = vmatprep.subr.mxu0 0.0
    %2501 = vmatpush2.xpose.msra.mxu0 0.0
    %2502 = vmatprep.subr.mxu0 0.0
    %2503 = vmatpush2.xpose.msra.mxu0 0.0
    %2504 = vmatprep.subr.mxu0 0.0
    %2505 = vmatpush2.xpose.msra.mxu0 0.0
    %2506 = vmatprep.subr.mxu0 0.0
    %2507 = vmatpush2.xpose.msra.mxu0 0.0
    %2508 = vmatprep.subr.mxu0 0.0
    %2509 = vmatpush2.xpose.msra.mxu0 0.0
    %2510 = vmatprep.subr.mxu0 0.0
    %2511 = vmatpush2.xpose.msra.mxu0 0.0
    %2512 = vmatprep.subr.mxu0 0.0
    %2513 = vmatpush2.xpose.msra.mxu0 0.0
    %2514 = vmatprep.subr.mxu0 0.0
    %2515 = vmatpush2.xpose.msra.mxu0 0.0
    %2516 = vmatprep.subr.mxu0 0.0
    %2517 = vmatpush2.xpose.msra.mxu0 0.0
    %2518 = vmatprep.mubr.f32.mxu0 0.0
    %2519 = vmatmul.mubr.f32.gmra.mxu0 %v2450
    %v2520 = vpop.f32.mrf.mxu0
    %v2521 = vadd.f32 0.0, %v2520
    %v2522 = vpop.f32.mrf.mxu0
    %2523 = vdwg.mxu0
    %2524 = vrot.lane.b32.xlu0 %v251, 32
    %v2525 = vpop.permute.xlu0 %2524
    %2526 = vrot.lane.b32.xlu0 %v359, 32
    %v2527 = vpop.permute.xlu0 %2526
    %v2528 = vsel %vm480, %v2525, 0
    %v2530 = vsel %vm480, %v2527, 0
    %2532 = vmatprep.subr.mxu0 0.0
    %2533 = vmatpush1.xpose.msra.mxu0 0.0
    %2534 = vmatprep.subr.mxu0 0.0
    %2535 = vmatpush1.xpose.msra.mxu0 0.0
    %2536 = vmatprep.subr.mxu0 0.0
    %2537 = vmatpush1.xpose.msra.mxu0 0.0
    %2538 = vmatprep.subr.mxu0 0.0
    %2539 = vmatpush1.xpose.msra.mxu0 0.0
    %2540 = vmatprep.subr.mxu0 0.0
    %2541 = vmatpush1.xpose.msra.mxu0 0.0
    %2542 = vmatprep.subr.mxu0 0.0
    %2543 = vmatpush1.xpose.msra.mxu0 0.0
    %2544 = vmatprep.subr.mxu0 0.0
    %2545 = vmatpush1.xpose.msra.mxu0 0.0
    %2546 = vmatprep.subr.mxu0 0.0
    %2547 = vmatpush1.xpose.msra.mxu0 0.0
    %2548 = vmatprep.subr.mxu0 0.0
    %2549 = vmatpush1.xpose.msra.mxu0 0.0
    %2550 = vmatprep.subr.mxu0 0.0
    %2551 = vmatpush1.xpose.msra.mxu0 0.0
    %2552 = vmatprep.subr.mxu0 0.0
    %2553 = vmatpush1.xpose.msra.mxu0 0.0
    %2554 = vmatprep.subr.mxu0 0.0
    %2555 = vmatpush1.xpose.msra.mxu0 0.0
    %2556 = vmatprep.subr.mxu0 0.0
    %2557 = vmatpush1.xpose.msra.mxu0 0.0
    %2558 = vmatprep.subr.mxu0 0.0
    %2559 = vmatpush1.xpose.msra.mxu0 0.0
    %2560 = vmatprep.subr.mxu0 0.0
    %2561 = vmatpush1.xpose.msra.mxu0 0.0
    %2562 = vmatprep.subr.mxu0 0.0
    %2563 = vmatpush1.xpose.msra.mxu0 %v2530
    %2564 = vmatprep.subr.mxu0 0.0
    %2565 = vmatpush2.xpose.msra.mxu0 0.0
    %2566 = vmatprep.subr.mxu0 0.0
    %2567 = vmatpush2.xpose.msra.mxu0 0.0
    %2568 = vmatprep.subr.mxu0 0.0
    %2569 = vmatpush2.xpose.msra.mxu0 0.0
    %2570 = vmatprep.subr.mxu0 0.0
    %2571 = vmatpush2.xpose.msra.mxu0 0.0
    %2572 = vmatprep.subr.mxu0 0.0
    %2573 = vmatpush2.xpose.msra.mxu0 0.0
    %2574 = vmatprep.subr.mxu0 0.0
    %2575 = vmatpush2.xpose.msra.mxu0 0.0
    %2576 = vmatprep.subr.mxu0 0.0
    %2577 = vmatpush2.xpose.msra.mxu0 0.0
    %2578 = vmatprep.subr.mxu0 0.0
    %2579 = vmatpush2.xpose.msra.mxu0 0.0
    %2580 = vmatprep.subr.mxu0 0.0
    %2581 = vmatpush2.xpose.msra.mxu0 0.0
    %2582 = vmatprep.subr.mxu0 0.0
    %2583 = vmatpush2.xpose.msra.mxu0 0.0
    %2584 = vmatprep.subr.mxu0 0.0
    %2585 = vmatpush2.xpose.msra.mxu0 0.0
    %2586 = vmatprep.subr.mxu0 0.0
    %2587 = vmatpush2.xpose.msra.mxu0 0.0
    %2588 = vmatprep.subr.mxu0 0.0
    %2589 = vmatpush2.xpose.msra.mxu0 0.0
    %2590 = vmatprep.subr.mxu0 0.0
    %2591 = vmatpush2.xpose.msra.mxu0 0.0
    %2592 = vmatprep.subr.mxu0 0.0
    %2593 = vmatpush2.xpose.msra.mxu0 0.0
    %2594 = vmatprep.subr.mxu0 0.0
    %2595 = vmatpush2.xpose.msra.mxu0 0.0
    %2596 = vmatprep.mubr.f32.mxu0 0.0
    %2597 = vmatmul.mubr.f32.gmra.mxu0 %v2528
    %v2598 = vpop.f32.mrf.mxu0
    %v2599 = vadd.f32 0.0, %v2598
    %v2600 = vpop.f32.mrf.mxu0
    %2601 = vdwg.mxu0
    %2602 = vrot.lane.b32.xlu0 %v256, 32
    %v2603 = vpop.permute.xlu0 %2602
    %2604 = vrot.lane.b32.xlu0 %v364, 32
    %v2605 = vpop.permute.xlu0 %2604
    %v2606 = vsel %vm480, %v2603, 0
    %v2608 = vsel %vm480, %v2605, 0
    %2610 = vmatprep.subr.mxu0 0.0
    %2611 = vmatpush1.xpose.msra.mxu0 0.0
    %2612 = vmatprep.subr.mxu0 0.0
    %2613 = vmatpush1.xpose.msra.mxu0 0.0
    %2614 = vmatprep.subr.mxu0 0.0
    %2615 = vmatpush1.xpose.msra.mxu0 0.0
    %2616 = vmatprep.subr.mxu0 0.0
    %2617 = vmatpush1.xpose.msra.mxu0 0.0
    %2618 = vmatprep.subr.mxu0 0.0
    %2619 = vmatpush1.xpose.msra.mxu0 0.0
    %2620 = vmatprep.subr.mxu0 0.0
    %2621 = vmatpush1.xpose.msra.mxu0 0.0
    %2622 = vmatprep.subr.mxu0 0.0
    %2623 = vmatpush1.xpose.msra.mxu0 0.0
    %2624 = vmatprep.subr.mxu0 0.0
    %2625 = vmatpush1.xpose.msra.mxu0 0.0
    %2626 = vmatprep.subr.mxu0 0.0
    %2627 = vmatpush1.xpose.msra.mxu0 0.0
    %2628 = vmatprep.subr.mxu0 0.0
    %2629 = vmatpush1.xpose.msra.mxu0 0.0
    %2630 = vmatprep.subr.mxu0 0.0
    %2631 = vmatpush1.xpose.msra.mxu0 0.0
    %2632 = vmatprep.subr.mxu0 0.0
    %2633 = vmatpush1.xpose.msra.mxu0 0.0
    %2634 = vmatprep.subr.mxu0 0.0
    %2635 = vmatpush1.xpose.msra.mxu0 0.0
    %2636 = vmatprep.subr.mxu0 0.0
    %2637 = vmatpush1.xpose.msra.mxu0 0.0
    %2638 = vmatprep.subr.mxu0 0.0
    %2639 = vmatpush1.xpose.msra.mxu0 0.0
    %2640 = vmatprep.subr.mxu0 0.0
    %2641 = vmatpush1.xpose.msra.mxu0 %v2608
    %2642 = vmatprep.subr.mxu0 0.0
    %2643 = vmatpush2.xpose.msra.mxu0 0.0
    %2644 = vmatprep.subr.mxu0 0.0
    %2645 = vmatpush2.xpose.msra.mxu0 0.0
    %2646 = vmatprep.subr.mxu0 0.0
    %2647 = vmatpush2.xpose.msra.mxu0 0.0
    %2648 = vmatprep.subr.mxu0 0.0
    %2649 = vmatpush2.xpose.msra.mxu0 0.0
    %2650 = vmatprep.subr.mxu0 0.0
    %2651 = vmatpush2.xpose.msra.mxu0 0.0
    %2652 = vmatprep.subr.mxu0 0.0
    %2653 = vmatpush2.xpose.msra.mxu0 0.0
    %2654 = vmatprep.subr.mxu0 0.0
    %2655 = vmatpush2.xpose.msra.mxu0 0.0
    %2656 = vmatprep.subr.mxu0 0.0
    %2657 = vmatpush2.xpose.msra.mxu0 0.0
    %2658 = vmatprep.subr.mxu0 0.0
    %2659 = vmatpush2.xpose.msra.mxu0 0.0
    %2660 = vmatprep.subr.mxu0 0.0
    %2661 = vmatpush2.xpose.msra.mxu0 0.0
    %2662 = vmatprep.subr.mxu0 0.0
    %2663 = vmatpush2.xpose.msra.mxu0 0.0
    %2664 = vmatprep.subr.mxu0 0.0
    %2665 = vmatpush2.xpose.msra.mxu0 0.0
    %2666 = vmatprep.subr.mxu0 0.0
    %2667 = vmatpush2.xpose.msra.mxu0 0.0
    %2668 = vmatprep.subr.mxu0 0.0
    %2669 = vmatpush2.xpose.msra.mxu0 0.0
    %2670 = vmatprep.subr.mxu0 0.0
    %2671 = vmatpush2.xpose.msra.mxu0 0.0
    %2672 = vmatprep.subr.mxu0 0.0
    %2673 = vmatpush2.xpose.msra.mxu0 0.0
    %2674 = vmatprep.mubr.f32.mxu0 0.0
    %2675 = vmatmul.mubr.f32.gmra.mxu0 %v2606
    %v2676 = vpop.f32.mrf.mxu0
    %v2677 = vadd.f32 0.0, %v2676
    %v2678 = vpop.f32.mrf.mxu0
    %2679 = vdwg.mxu0
    %2680 = vrot.lane.b32.xlu0 %v261, 32
    %v2681 = vpop.permute.xlu0 %2680
    %2682 = vrot.lane.b32.xlu0 %v369, 32
    %v2683 = vpop.permute.xlu0 %2682
    %v2684 = vsel %vm480, %v2681, 0
    %v2686 = vsel %vm480, %v2683, 0
    %2688 = vmatprep.subr.mxu0 0.0
    %2689 = vmatpush1.xpose.msra.mxu0 0.0
    %2690 = vmatprep.subr.mxu0 0.0
    %2691 = vmatpush1.xpose.msra.mxu0 0.0
    %2692 = vmatprep.subr.mxu0 0.0
    %2693 = vmatpush1.xpose.msra.mxu0 0.0
    %2694 = vmatprep.subr.mxu0 0.0
    %2695 = vmatpush1.xpose.msra.mxu0 0.0
    %2696 = vmatprep.subr.mxu0 0.0
    %2697 = vmatpush1.xpose.msra.mxu0 0.0
    %2698 = vmatprep.subr.mxu0 0.0
    %2699 = vmatpush1.xpose.msra.mxu0 0.0
    %2700 = vmatprep.subr.mxu0 0.0
    %2701 = vmatpush1.xpose.msra.mxu0 0.0
    %2702 = vmatprep.subr.mxu0 0.0
    %2703 = vmatpush1.xpose.msra.mxu0 0.0
    %2704 = vmatprep.subr.mxu0 0.0
    %2705 = vmatpush1.xpose.msra.mxu0 0.0
    %2706 = vmatprep.subr.mxu0 0.0
    %2707 = vmatpush1.xpose.msra.mxu0 0.0
    %2708 = vmatprep.subr.mxu0 0.0
    %2709 = vmatpush1.xpose.msra.mxu0 0.0
    %2710 = vmatprep.subr.mxu0 0.0
    %2711 = vmatpush1.xpose.msra.mxu0 0.0
    %2712 = vmatprep.subr.mxu0 0.0
    %2713 = vmatpush1.xpose.msra.mxu0 0.0
    %2714 = vmatprep.subr.mxu0 0.0
    %2715 = vmatpush1.xpose.msra.mxu0 0.0
    %2716 = vmatprep.subr.mxu0 0.0
    %2717 = vmatpush1.xpose.msra.mxu0 0.0
    %2718 = vmatprep.subr.mxu0 0.0
    %2719 = vmatpush1.xpose.msra.mxu0 %v2686
    %2720 = vmatprep.subr.mxu0 0.0
    %2721 = vmatpush2.xpose.msra.mxu0 0.0
    %2722 = vmatprep.subr.mxu0 0.0
    %2723 = vmatpush2.xpose.msra.mxu0 0.0
    %2724 = vmatprep.subr.mxu0 0.0
    %2725 = vmatpush2.xpose.msra.mxu0 0.0
    %2726 = vmatprep.subr.mxu0 0.0
    %2727 = vmatpush2.xpose.msra.mxu0 0.0
    %2728 = vmatprep.subr.mxu0 0.0
    %2729 = vmatpush2.xpose.msra.mxu0 0.0
    %2730 = vmatprep.subr.mxu0 0.0
    %2731 = vmatpush2.xpose.msra.mxu0 0.0
    %2732 = vmatprep.subr.mxu0 0.0
    %2733 = vmatpush2.xpose.msra.mxu0 0.0
    %2734 = vmatprep.subr.mxu0 0.0
    %2735 = vmatpush2.xpose.msra.mxu0 0.0
    %2736 = vmatprep.subr.mxu0 0.0
    %2737 = vmatpush2.xpose.msra.mxu0 0.0
    %2738 = vmatprep.subr.mxu0 0.0
    %2739 = vmatpush2.xpose.msra.mxu0 0.0
    %2740 = vmatprep.subr.mxu0 0.0
    %2741 = vmatpush2.xpose.msra.mxu0 0.0
    %2742 = vmatprep.subr.mxu0 0.0
    %2743 = vmatpush2.xpose.msra.mxu0 0.0
    %2744 = vmatprep.subr.mxu0 0.0
    %2745 = vmatpush2.xpose.msra.mxu0 0.0
    %2746 = vmatprep.subr.mxu0 0.0
    %2747 = vmatpush2.xpose.msra.mxu0 0.0
    %2748 = vmatprep.subr.mxu0 0.0
    %2749 = vmatpush2.xpose.msra.mxu0 0.0
    %2750 = vmatprep.subr.mxu0 0.0
    %2751 = vmatpush2.xpose.msra.mxu0 0.0
    %2752 = vmatprep.mubr.f32.mxu0 0.0
    %2753 = vmatmul.mubr.f32.gmra.mxu0 %v2684
    %v2754 = vpop.f32.mrf.mxu0
    %v2755 = vadd.f32 0.0, %v2754
    %v2756 = vpop.f32.mrf.mxu0
    %2757 = vdwg.mxu0
    %v2758 = vsel %vm785, %v2521, -inf
    %2759 = vmax.xlane.f32.xlu0 %v2758
    %v2760 = vpop.xlane.xlu0 %2759
    %v2761 = vsel %vm785, %v2599, -inf
    %2762 = vmax.xlane.f32.xlu0 %v2761
    %v2763 = vpop.xlane.xlu0 %2762
    %v2764 = vsel %vm785, %v2677, -inf
    %2765 = vmax.xlane.f32.xlu0 %v2764
    %v2766 = vpop.xlane.xlu0 %2765
    %v2767 = vsel %vm785, %v2755, -inf
    %2768 = vmax.xlane.f32.xlu0 %v2767
    %v2769 = vpop.xlane.xlu0 %2768
    %v2770 = vsub.f32 %v2521, %v2760
    %v2771 = vsub.f32 %v2599, %v2763
    %v2772 = vsub.f32 %v2677, %v2766
    %v2773 = vsub.f32 %v2755, %v2769
    %v2774 = vmul.f32 %v2770, 1.442695
    %v2775 = vpow.pop %v2774
    %v2776 = vmul.f32 %v2771, 1.442695
    %v2777 = vpow.pop %v2776
    %v2778 = vmul.f32 %v2772, 1.442695
    %v2779 = vpow.pop %v2778
    %v2780 = vmul.f32 %v2773, 1.442695
    %v2781 = vpow.pop %v2780
    %v2782 = vsel %vm785, %v2775, 0.0
    %2783 = vadd.xlane.f32.xlu0 %v2782
    %v2784 = vpop.xlane.xlu0 %2783
    %v2785 = vsel %vm785, %v2777, 0.0
    %2786 = vadd.xlane.f32.xlu0 %v2785
    %v2787 = vpop.xlane.xlu0 %2786
    %v2788 = vsel %vm785, %v2779, 0.0
    %2789 = vadd.xlane.f32.xlu0 %v2788
    %v2790 = vpop.xlane.xlu0 %2789
    %v2791 = vsel %vm785, %v2781, 0.0
    %2792 = vadd.xlane.f32.xlu0 %v2791
    %v2793 = vpop.xlane.xlu0 %2792
    %v2794 = vrcp.pop %v2784
    %v2795 = vrcp.pop %v2787
    %v2796 = vrcp.pop %v2790
    %v2797 = vrcp.pop %v2793
    %v2798 = vmul.f32 %v2775, %v2794
    %v2799 = vmul.f32 %v2777, %v2795
    %v2800 = vmul.f32 %v2779, %v2796
    %v2801 = vmul.f32 %v2781, %v2797
    %2802 = vrot.lane.b32.xlu0 %v462, 32
    %v2803 = vpop.permute.xlu0 %2802
    %v2806 = vsel %vm785, %v2798, 0
    %2808 = vmatprep.subr.mxu0 0.0
    %2809 = vmatpush1.msra.mxu0 0.0
    %2810 = vmatprep.subr.mxu0 0.0
    %2811 = vmatpush1.msra.mxu0 0.0
    %2812 = vmatprep.subr.mxu0 0.0
    %2813 = vmatpush1.msra.mxu0 0.0
    %2814 = vmatprep.subr.mxu0 0.0
    %2815 = vmatpush1.msra.mxu0 0.0
    %2816 = vmatprep.subr.mxu0 0.0
    %2817 = vmatpush1.msra.mxu0 0.0
    %2818 = vmatprep.subr.mxu0 0.0
    %2819 = vmatpush1.msra.mxu0 0.0
    %2820 = vmatprep.subr.mxu0 0.0
    %2821 = vmatpush1.msra.mxu0 0.0
    %2822 = vmatprep.subr.mxu0 0.0
    %2823 = vmatpush1.msra.mxu0 0.0
    %2824 = vmatprep.subr.mxu0 0.0
    %2825 = vmatpush1.msra.mxu0 0.0
    %2826 = vmatprep.subr.mxu0 0.0
    %2827 = vmatpush1.msra.mxu0 0.0
    %2828 = vmatprep.subr.mxu0 0.0
    %2829 = vmatpush1.msra.mxu0 0.0
    %2830 = vmatprep.subr.mxu0 0.0
    %2831 = vmatpush1.msra.mxu0 0.0
    %2832 = vmatprep.subr.mxu0 0.0
    %2833 = vmatpush1.msra.mxu0 0.0
    %2834 = vmatprep.subr.mxu0 0.0
    %2835 = vmatpush1.msra.mxu0 0.0
    %2836 = vmatprep.subr.mxu0 0.0
    %2837 = vmatpush1.msra.mxu0 0.0
    %2838 = vmatprep.subr.mxu0 0.0
    %2839 = vmatpush1.msra.mxu0 %v2803
    %2840 = vmatprep.subr.mxu0 0.0
    %2841 = vmatpush2.msra.mxu0 0.0
    %2842 = vmatprep.subr.mxu0 0.0
    %2843 = vmatpush2.msra.mxu0 0.0
    %2844 = vmatprep.subr.mxu0 0.0
    %2845 = vmatpush2.msra.mxu0 0.0
    %2846 = vmatprep.subr.mxu0 0.0
    %2847 = vmatpush2.msra.mxu0 0.0
    %2848 = vmatprep.subr.mxu0 0.0
    %2849 = vmatpush2.msra.mxu0 0.0
    %2850 = vmatprep.subr.mxu0 0.0
    %2851 = vmatpush2.msra.mxu0 0.0
    %2852 = vmatprep.subr.mxu0 0.0
    %2853 = vmatpush2.msra.mxu0 0.0
    %2854 = vmatprep.subr.mxu0 0.0
    %2855 = vmatpush2.msra.mxu0 0.0
    %2856 = vmatprep.subr.mxu0 0.0
    %2857 = vmatpush2.msra.mxu0 0.0
    %2858 = vmatprep.subr.mxu0 0.0
    %2859 = vmatpush2.msra.mxu0 0.0
    %2860 = vmatprep.subr.mxu0 0.0
    %2861 = vmatpush2.msra.mxu0 0.0
    %2862 = vmatprep.subr.mxu0 0.0
    %2863 = vmatpush2.msra.mxu0 0.0
    %2864 = vmatprep.subr.mxu0 0.0
    %2865 = vmatpush2.msra.mxu0 0.0
    %2866 = vmatprep.subr.mxu0 0.0
    %2867 = vmatpush2.msra.mxu0 0.0
    %2868 = vmatprep.subr.mxu0 0.0
    %2869 = vmatpush2.msra.mxu0 0.0
    %2870 = vmatprep.subr.mxu0 0.0
    %2871 = vmatpush2.msra.mxu0 0.0
    %2872 = vmatprep.mubr.f32.mxu0 0.0
    %2873 = vmatmul.mubr.f32.gmra.mxu0 %v2806
    %v2874 = vpop.f32.mrf.mxu0
    %v2875 = vadd.f32 0.0, %v2874
    %v2876 = vpop.f32.mrf.mxu0
    %2877 = vdwg.mxu0
    %2878 = vrot.lane.b32.xlu0 %v467, 32
    %v2879 = vpop.permute.xlu0 %2878
    %v2882 = vsel %vm785, %v2799, 0
    %2884 = vmatprep.subr.mxu0 0.0
    %2885 = vmatpush1.msra.mxu0 0.0
    %2886 = vmatprep.subr.mxu0 0.0
    %2887 = vmatpush1.msra.mxu0 0.0
    %2888 = vmatprep.subr.mxu0 0.0
    %2889 = vmatpush1.msra.mxu0 0.0
    %2890 = vmatprep.subr.mxu0 0.0
    %2891 = vmatpush1.msra.mxu0 0.0
    %2892 = vmatprep.subr.mxu0 0.0
    %2893 = vmatpush1.msra.mxu0 0.0
    %2894 = vmatprep.subr.mxu0 0.0
    %2895 = vmatpush1.msra.mxu0 0.0
    %2896 = vmatprep.subr.mxu0 0.0
    %2897 = vmatpush1.msra.mxu0 0.0
    %2898 = vmatprep.subr.mxu0 0.0
    %2899 = vmatpush1.msra.mxu0 0.0
    %2900 = vmatprep.subr.mxu0 0.0
    %2901 = vmatpush1.msra.mxu0 0.0
    %2902 = vmatprep.subr.mxu0 0.0
    %2903 = vmatpush1.msra.mxu0 0.0
    %2904 = vmatprep.subr.mxu0 0.0
    %2905 = vmatpush1.msra.mxu0 0.0
    %2906 = vmatprep.subr.mxu0 0.0
    %2907 = vmatpush1.msra.mxu0 0.0
    %2908 = vmatprep.subr.mxu0 0.0
    %2909 = vmatpush1.msra.mxu0 0.0
    %2910 = vmatprep.subr.mxu0 0.0
    %2911 = vmatpush1.msra.mxu0 0.0
    %2912 = vmatprep.subr.mxu0 0.0
    %2913 = vmatpush1.msra.mxu0 0.0
    %2914 = vmatprep.subr.mxu0 0.0
    %2915 = vmatpush1.msra.mxu0 %v2879
    %2916 = vmatprep.subr.mxu0 0.0
    %2917 = vmatpush2.msra.mxu0 0.0
    %2918 = vmatprep.subr.mxu0 0.0
    %2919 = vmatpush2.msra.mxu0 0.0
    %2920 = vmatprep.subr.mxu0 0.0
    %2921 = vmatpush2.msra.mxu0 0.0
    %2922 = vmatprep.subr.mxu0 0.0
    %2923 = vmatpush2.msra.mxu0 0.0
    %2924 = vmatprep.subr.mxu0 0.0
    %2925 = vmatpush2.msra.mxu0 0.0
    %2926 = vmatprep.subr.mxu0 0.0
    %2927 = vmatpush2.msra.mxu0 0.0
    %2928 = vmatprep.subr.mxu0 0.0
    %2929 = vmatpush2.msra.mxu0 0.0
    %2930 = vmatprep.subr.mxu0 0.0
    %2931 = vmatpush2.msra.mxu0 0.0
    %2932 = vmatprep.subr.mxu0 0.0
    %2933 = vmatpush2.msra.mxu0 0.0
    %2934 = vmatprep.subr.mxu0 0.0
    %2935 = vmatpush2.msra.mxu0 0.0
    %2936 = vmatprep.subr.mxu0 0.0
    %2937 = vmatpush2.msra.mxu0 0.0
    %2938 = vmatprep.subr.mxu0 0.0
    %2939 = vmatpush2.msra.mxu0 0.0
    %2940 = vmatprep.subr.mxu0 0.0
    %2941 = vmatpush2.msra.mxu0 0.0
    %2942 = vmatprep.subr.mxu0 0.0
    %2943 = vmatpush2.msra.mxu0 0.0
    %2944 = vmatprep.subr.mxu0 0.0
    %2945 = vmatpush2.msra.mxu0 0.0
    %2946 = vmatprep.subr.mxu0 0.0
    %2947 = vmatpush2.msra.mxu0 0.0
    %2948 = vmatprep.mubr.f32.mxu0 0.0
    %2949 = vmatmul.mubr.f32.gmra.mxu0 %v2882
    %v2950 = vpop.f32.mrf.mxu0
    %v2951 = vadd.f32 0.0, %v2950
    %v2952 = vpop.f32.mrf.mxu0
    %2953 = vdwg.mxu0
    %2954 = vrot.lane.b32.xlu0 %v472, 32
    %v2955 = vpop.permute.xlu0 %2954
    %v2958 = vsel %vm785, %v2800, 0
    %2960 = vmatprep.subr.mxu0 0.0
    %2961 = vmatpush1.msra.mxu0 0.0
    %2962 = vmatprep.subr.mxu0 0.0
    %2963 = vmatpush1.msra.mxu0 0.0
    %2964 = vmatprep.subr.mxu0 0.0
    %2965 = vmatpush1.msra.mxu0 0.0
    %2966 = vmatprep.subr.mxu0 0.0
    %2967 = vmatpush1.msra.mxu0 0.0
    %2968 = vmatprep.subr.mxu0 0.0
    %2969 = vmatpush1.msra.mxu0 0.0
    %2970 = vmatprep.subr.mxu0 0.0
    %2971 = vmatpush1.msra.mxu0 0.0
    %2972 = vmatprep.subr.mxu0 0.0
    %2973 = vmatpush1.msra.mxu0 0.0
    %2974 = vmatprep.subr.mxu0 0.0
    %2975 = vmatpush1.msra.mxu0 0.0
    %2976 = vmatprep.subr.mxu0 0.0
    %2977 = vmatpush1.msra.mxu0 0.0
    %2978 = vmatprep.subr.mxu0 0.0
    %2979 = vmatpush1.msra.mxu0 0.0
    %2980 = vmatprep.subr.mxu0 0.0
    %2981 = vmatpush1.msra.mxu0 0.0
    %2982 = vmatprep.subr.mxu0 0.0
    %2983 = vmatpush1.msra.mxu0 0.0
    %2984 = vmatprep.subr.mxu0 0.0
    %2985 = vmatpush1.msra.mxu0 0.0
    %2986 = vmatprep.subr.mxu0 0.0
    %2987 = vmatpush1.msra.mxu0 0.0
    %2988 = vmatprep.subr.mxu0 0.0
    %2989 = vmatpush1.msra.mxu0 0.0
    %2990 = vmatprep.subr.mxu0 0.0
    %2991 = vmatpush1.msra.mxu0 %v2955
    %2992 = vmatprep.subr.mxu0 0.0
    %2993 = vmatpush2.msra.mxu0 0.0
    %2994 = vmatprep.subr.mxu0 0.0
    %2995 = vmatpush2.msra.mxu0 0.0
    %2996 = vmatprep.subr.mxu0 0.0
    %2997 = vmatpush2.msra.mxu0 0.0
    %2998 = vmatprep.subr.mxu0 0.0
    %2999 = vmatpush2.msra.mxu0 0.0
    %3000 = vmatprep.subr.mxu0 0.0
    %3001 = vmatpush2.msra.mxu0 0.0
    %3002 = vmatprep.subr.mxu0 0.0
    %3003 = vmatpush2.msra.mxu0 0.0
    %3004 = vmatprep.subr.mxu0 0.0
    %3005 = vmatpush2.msra.mxu0 0.0
    %3006 = vmatprep.subr.mxu0 0.0
    %3007 = vmatpush2.msra.mxu0 0.0
    %3008 = vmatprep.subr.mxu0 0.0
    %3009 = vmatpush2.msra.mxu0 0.0
    %3010 = vmatprep.subr.mxu0 0.0
    %3011 = vmatpush2.msra.mxu0 0.0
    %3012 = vmatprep.subr.mxu0 0.0
    %3013 = vmatpush2.msra.mxu0 0.0
    %3014 = vmatprep.subr.mxu0 0.0
    %3015 = vmatpush2.msra.mxu0 0.0
    %3016 = vmatprep.subr.mxu0 0.0
    %3017 = vmatpush2.msra.mxu0 0.0
    %3018 = vmatprep.subr.mxu0 0.0
    %3019 = vmatpush2.msra.mxu0 0.0
    %3020 = vmatprep.subr.mxu0 0.0
    %3021 = vmatpush2.msra.mxu0 0.0
    %3022 = vmatprep.subr.mxu0 0.0
    %3023 = vmatpush2.msra.mxu0 0.0
    %3024 = vmatprep.mubr.f32.mxu0 0.0
    %3025 = vmatmul.mubr.f32.gmra.mxu0 %v2958
    %v3026 = vpop.f32.mrf.mxu0
    %v3027 = vadd.f32 0.0, %v3026
    %v3028 = vpop.f32.mrf.mxu0
    %3029 = vdwg.mxu0
    %3030 = vrot.lane.b32.xlu0 %v477, 32
    %v3031 = vpop.permute.xlu0 %3030
    %v3034 = vsel %vm785, %v2801, 0
    %3036 = vmatprep.subr.mxu0 0.0
    %3037 = vmatpush1.msra.mxu0 0.0
    %3038 = vmatprep.subr.mxu0 0.0
    %3039 = vmatpush1.msra.mxu0 0.0
    %3040 = vmatprep.subr.mxu0 0.0
    %3041 = vmatpush1.msra.mxu0 0.0
    %3042 = vmatprep.subr.mxu0 0.0
    %3043 = vmatpush1.msra.mxu0 0.0
    %3044 = vmatprep.subr.mxu0 0.0
    %3045 = vmatpush1.msra.mxu0 0.0
    %3046 = vmatprep.subr.mxu0 0.0
    %3047 = vmatpush1.msra.mxu0 0.0
    %3048 = vmatprep.subr.mxu0 0.0
    %3049 = vmatpush1.msra.mxu0 0.0
    %3050 = vmatprep.subr.mxu0 0.0
    %3051 = vmatpush1.msra.mxu0 0.0
    %3052 = vmatprep.subr.mxu0 0.0
    %3053 = vmatpush1.msra.mxu0 0.0
    %3054 = vmatprep.subr.mxu0 0.0
    %3055 = vmatpush1.msra.mxu0 0.0
    %3056 = vmatprep.subr.mxu0 0.0
    %3057 = vmatpush1.msra.mxu0 0.0
    %3058 = vmatprep.subr.mxu0 0.0
    %3059 = vmatpush1.msra.mxu0 0.0
    %3060 = vmatprep.subr.mxu0 0.0
    %3061 = vmatpush1.msra.mxu0 0.0
    %3062 = vmatprep.subr.mxu0 0.0
    %3063 = vmatpush1.msra.mxu0 0.0
    %3064 = vmatprep.subr.mxu0 0.0
    %3065 = vmatpush1.msra.mxu0 0.0
    %3066 = vmatprep.subr.mxu0 0.0
    %3067 = vmatpush1.msra.mxu0 %v3031
    %3068 = vmatprep.subr.mxu0 0.0
    %3069 = vmatpush2.msra.mxu0 0.0
    %3070 = vmatprep.subr.mxu0 0.0
    %3071 = vmatpush2.msra.mxu0 0.0
    %3072 = vmatprep.subr.mxu0 0.0
    %3073 = vmatpush2.msra.mxu0 0.0
    %3074 = vmatprep.subr.mxu0 0.0
    %3075 = vmatpush2.msra.mxu0 0.0
    %3076 = vmatprep.subr.mxu0 0.0
    %3077 = vmatpush2.msra.mxu0 0.0
    %3078 = vmatprep.subr.mxu0 0.0
    %3079 = vmatpush2.msra.mxu0 0.0
    %3080 = vmatprep.subr.mxu0 0.0
    %3081 = vmatpush2.msra.mxu0 0.0
    %3082 = vmatprep.subr.mxu0 0.0
    %3083 = vmatpush2.msra.mxu0 0.0
    %3084 = vmatprep.subr.mxu0 0.0
    %3085 = vmatpush2.msra.mxu0 0.0
    %3086 = vmatprep.subr.mxu0 0.0
    %3087 = vmatpush2.msra.mxu0 0.0
    %3088 = vmatprep.subr.mxu0 0.0
    %3089 = vmatpush2.msra.mxu0 0.0
    %3090 = vmatprep.subr.mxu0 0.0
    %3091 = vmatpush2.msra.mxu0 0.0
    %3092 = vmatprep.subr.mxu0 0.0
    %3093 = vmatpush2.msra.mxu0 0.0
    %3094 = vmatprep.subr.mxu0 0.0
    %3095 = vmatpush2.msra.mxu0 0.0
    %3096 = vmatprep.subr.mxu0 0.0
    %3097 = vmatpush2.msra.mxu0 0.0
    %3098 = vmatprep.subr.mxu0 0.0
    %3099 = vmatpush2.msra.mxu0 0.0
    %3100 = vmatprep.mubr.f32.mxu0 0.0
    %3101 = vmatmul.mubr.f32.gmra.mxu0 %v3034
    %v3102 = vpop.f32.mrf.mxu0
    %v3103 = vadd.f32 0.0, %v3102
    %v3104 = vpop.f32.mrf.mxu0
    %3105 = vdwg.mxu0
    %3110 = vrot.lane.b32.xlu0 %v1552, 32
    %v3111 = vpop.permute.xlu0 %3110
    %3112 = vrot.lane.b32.xlu0 %v1629, 32
    %v3113 = vpop.permute.xlu0 %3112
    %3114 = vrot.lane.b32.xlu0 %v1706, 32
    %v3115 = vpop.permute.xlu0 %3114
    %3116 = vrot.lane.b32.xlu0 %v1783, 32
    %v3117 = vpop.permute.xlu0 %3116
    %3126 = vrot.lane.b32.xlu0 %v2215, 64
    %v3127 = vpop.permute.xlu0 %3126
    %3128 = vrot.lane.b32.xlu0 %v2291, 64
    %v3129 = vpop.permute.xlu0 %3128
    %3130 = vrot.lane.b32.xlu0 %v2367, 64
    %v3131 = vpop.permute.xlu0 %3130
    %3132 = vrot.lane.b32.xlu0 %v2443, 64
    %v3133 = vpop.permute.xlu0 %3132
    %3142 = vrot.lane.b32.xlu0 %v2875, 96
    %v3143 = vpop.permute.xlu0 %3142
    %3144 = vrot.lane.b32.xlu0 %v2951, 96
    %v3145 = vpop.permute.xlu0 %3144
    %3146 = vrot.lane.b32.xlu0 %v3027, 96
    %v3147 = vpop.permute.xlu0 %3146
    %3148 = vrot.lane.b32.xlu0 %v3103, 96
    %v3149 = vpop.permute.xlu0 %3148
    %v3154 = vsel %vm480, %v900, %v3111
    %v3155 = vsel %vm480, %v973, %v3113
    %v3156 = vsel %vm480, %v1046, %v3115
    %v3157 = vsel %vm480, %v1119, %v3117
    %vm3158 = vcmask 523264
    %v3159 = vsel %vm3158, %v3154, %v3127
    %v3160 = vsel %vm3158, %v3155, %v3129
    %v3161 = vsel %vm3158, %v3156, %v3131
    %v3162 = vsel %vm3158, %v3157, %v3133
    %vm3163 = vcmask 785408
    %v3164 = vsel %vm3163, %v3159, %v3143
    %v3165 = vsel %vm3163, %v3160, %v3145
    %v3166 = vsel %vm3163, %v3161, %v3147
    %v3167 = vsel %vm3163, %v3162, %v3149
    %v3168 = vld [vmem:[#allocation10] sm:$0xff]
    %v3169 = vld [vmem:[#allocation10 + $0x8] sm:$0xff]
    %v3170 = vld [vmem:[#allocation10 + $0x10] sm:$0xff]
    %v3171 = vld [vmem:[#allocation10 + $0x18] sm:$0xff]
    %v3172 = vld [vmem:[#allocation10 + $0x20] sm:$0xff]
    %v3173 = vld [vmem:[#allocation10 + $0x28] sm:$0xff]
    %v3174 = vld [vmem:[#allocation10 + $0x30] sm:$0xff]
    %v3175 = vld [vmem:[#allocation10 + $0x38] sm:$0xff]
    %v3176 = vld [vmem:[#allocation10 + $0x40] sm:$0xff]
    %v3177 = vld [vmem:[#allocation10 + $0x48] sm:$0xff]
    %v3178 = vld [vmem:[#allocation10 + $0x50] sm:$0xff]
    %v3179 = vld [vmem:[#allocation10 + $0x58] sm:$0xff]
    %v3180 = vld [vmem:[#allocation10 + $0x60] sm:$0xff]
    %v3181 = vld [vmem:[#allocation10 + $0x68] sm:$0xff]
    %v3182 = vld [vmem:[#allocation10 + $0x70] sm:$0xff]
    %v3183 = vld [vmem:[#allocation10 + $0x78] sm:$0xff]
    %v3184 = vld [vmem:[%s8] sm:$0x1]
    %v3186 = vlaneseq
    %v3187 = vshrl.u32 %v3186, 7
    %v3188 = vsub.s32 0, %v3187
    %v3189 = vrot.slane %v3184, %v3188
    %3191 = vmatprep.subr.mxu0 0.0
    %3192 = vmatpush1.msra.mxu0 %v3183
    %3193 = vmatprep.subr.mxu0 0.0
    %3194 = vmatpush1.msra.mxu0 %v3182
    %3195 = vmatprep.subr.mxu0 0.0
    %3196 = vmatpush1.msra.mxu0 %v3181
    %3197 = vmatprep.subr.mxu0 0.0
    %3198 = vmatpush1.msra.mxu0 %v3180
    %3199 = vmatprep.subr.mxu0 0.0
    %3200 = vmatpush1.msra.mxu0 %v3179
    %3201 = vmatprep.subr.mxu0 0.0
    %3202 = vmatpush1.msra.mxu0 %v3178
    %3203 = vmatprep.subr.mxu0 0.0
    %3204 = vmatpush1.msra.mxu0 %v3177
    %3205 = vmatprep.subr.mxu0 0.0
    %3206 = vmatpush1.msra.mxu0 %v3176
    %3207 = vmatprep.subr.mxu0 0.0
    %3208 = vmatpush1.msra.mxu0 %v3175
    %3209 = vmatprep.subr.mxu0 0.0
    %3210 = vmatpush1.msra.mxu0 %v3174
    %3211 = vmatprep.subr.mxu0 0.0
    %3212 = vmatpush1.msra.mxu0 %v3173
    %3213 = vmatprep.subr.mxu0 0.0
    %3214 = vmatpush1.msra.mxu0 %v3172
    %3215 = vmatprep.subr.mxu0 0.0
    %3216 = vmatpush1.msra.mxu0 %v3171
    %3217 = vmatprep.subr.mxu0 0.0
    %3218 = vmatpush1.msra.mxu0 %v3170
    %3219 = vmatprep.subr.mxu0 0.0
    %3220 = vmatpush1.msra.mxu0 %v3169
    %3221 = vmatprep.subr.mxu0 0.0
    %3222 = vmatpush1.msra.mxu0 %v3168
    %3223 = vmatprep.subr.mxu0 0.0
    %3224 = vmatpush2.msra.mxu0 0.0
    %3225 = vmatprep.subr.mxu0 0.0
    %3226 = vmatpush2.msra.mxu0 0.0
    %3227 = vmatprep.subr.mxu0 0.0
    %3228 = vmatpush2.msra.mxu0 0.0
    %3229 = vmatprep.subr.mxu0 0.0
    %3230 = vmatpush2.msra.mxu0 0.0
    %3231 = vmatprep.subr.mxu0 0.0
    %3232 = vmatpush2.msra.mxu0 0.0
    %3233 = vmatprep.subr.mxu0 0.0
    %3234 = vmatpush2.msra.mxu0 0.0
    %3235 = vmatprep.subr.mxu0 0.0
    %3236 = vmatpush2.msra.mxu0 0.0
    %3237 = vmatprep.subr.mxu0 0.0
    %3238 = vmatpush2.msra.mxu0 0.0
    %3239 = vmatprep.subr.mxu0 0.0
    %3240 = vmatpush2.msra.mxu0 0.0
    %3241 = vmatprep.subr.mxu0 0.0
    %3242 = vmatpush2.msra.mxu0 0.0
    %3243 = vmatprep.subr.mxu0 0.0
    %3244 = vmatpush2.msra.mxu0 0.0
    %3245 = vmatprep.subr.mxu0 0.0
    %3246 = vmatpush2.msra.mxu0 0.0
    %3247 = vmatprep.subr.mxu0 0.0
    %3248 = vmatpush2.msra.mxu0 0.0
    %3249 = vmatprep.subr.mxu0 0.0
    %3250 = vmatpush2.msra.mxu0 0.0
    %3251 = vmatprep.subr.mxu0 0.0
    %3252 = vmatpush2.msra.mxu0 0.0
    %3253 = vmatprep.subr.mxu0 0.0
    %3254 = vmatpush2.msra.mxu0 0.0
    %3255 = vmatprep.mubr.f32.mxu0 0.0
    %3256 = vmatmul.mubr.f32.gmra.mxu0 %v3164
    %v3257 = vpop.f32.mrf.mxu0
    %v3258 = vadd.f32 %v3189, %v3257
    %v3259 = vpop.f32.mrf.mxu0
    %3260 = vmatprep.mubr.f32.mxu0 0.0
    %3261 = vmatmul.mubr.f32.gmra.mxu0 %v3165
    %v3262 = vpop.f32.mrf.mxu0
    %v3263 = vadd.f32 %v3189, %v3262
    %v3264 = vpop.f32.mrf.mxu0
    %3265 = vmatprep.mubr.f32.mxu0 0.0
    %3266 = vmatmul.mubr.f32.gmra.mxu0 %v3166
    %v3267 = vpop.f32.mrf.mxu0
    %v3268 = vadd.f32 %v3189, %v3267
    %v3269 = vpop.f32.mrf.mxu0
    %3270 = vmatprep.mubr.f32.mxu0 0.0
    %3271 = vmatmul.mubr.f32.gmra.mxu0 %v3167
    %v3272 = vpop.f32.mrf.mxu0
    %v3273 = vadd.f32 %v3189, %v3272
    %v3274 = vpop.f32.mrf.mxu0
    %3275 = vdwg.mxu0
    %v3276 = vadd.f32 %v152, %v3258
    %v3277 = vadd.f32 %v153, %v3263
    %v3278 = vadd.f32 %v154, %v3268
    %v3279 = vadd.f32 %v155, %v3273
    %3280 = vadd.xlane.f32.xlu0 %v3276
    %v3281 = vpop.xlane.xlu0 %3280
    %3282 = vadd.xlane.f32.xlu0 %v3277
    %v3283 = vpop.xlane.xlu0 %3282
    %3284 = vadd.xlane.f32.xlu0 %v3278
    %v3285 = vpop.xlane.xlu0 %3284
    %3286 = vadd.xlane.f32.xlu0 %v3279
    %v3287 = vpop.xlane.xlu0 %3286
    %v3288 = vrcp.pop 128.0
    %v3289 = vmul.f32 %v3281, %v3288
    %v3290 = vmul.f32 %v3283, %v3288
    %v3291 = vmul.f32 %v3285, %v3288
    %v3292 = vmul.f32 %v3287, %v3288
    %v3293 = vsub.f32 %v3276, %v3289
    %v3294 = vsub.f32 %v3277, %v3290
    %v3295 = vsub.f32 %v3278, %v3291
    %v3296 = vsub.f32 %v3279, %v3292
    %v3297 = vmul.f32 %v3293, %v3293
    %v3298 = vmul.f32 %v3294, %v3294
    %v3299 = vmul.f32 %v3295, %v3295
    %v3300 = vmul.f32 %v3296, %v3296
    %3301 = vadd.xlane.f32.xlu0 %v3297
    %v3302 = vpop.xlane.xlu0 %3301
    %3303 = vadd.xlane.f32.xlu0 %v3298
    %v3304 = vpop.xlane.xlu0 %3303
    %3305 = vadd.xlane.f32.xlu0 %v3299
    %v3306 = vpop.xlane.xlu0 %3305
    %3307 = vadd.xlane.f32.xlu0 %v3300
    %v3308 = vpop.xlane.xlu0 %3307
    %v3309 = vmul.f32 %v3302, %v3288
    %v3310 = vmul.f32 %v3304, %v3288
    %v3311 = vmul.f32 %v3306, %v3288
    %v3312 = vmul.f32 %v3308, %v3288
    %v3313 = vadd.f32 %v3309, 1e-05
    %v3314 = vadd.f32 %v3310, 1e-05
    %v3315 = vadd.f32 %v3311, 1e-05
    %v3316 = vadd.f32 %v3312, 1e-05
    %v3317 = vrsqrt.pop %v3313
    %v3318 = vrsqrt.pop %v3314
    %v3319 = vrsqrt.pop %v3315
    %v3320 = vrsqrt.pop %v3316
    %v3321 = vmul.f32 %v3293, %v3317
    %v3322 = vmul.f32 %v3294, %v3318
    %v3323 = vmul.f32 %v3295, %v3319
    %v3324 = vmul.f32 %v3296, %v3320
    %v3325 = vld [vmem:[%s9] sm:$0x1]
    %v3327 = vlaneseq
    %v3328 = vshrl.u32 %v3327, 7
    %v3329 = vsub.s32 0, %v3328
    %v3330 = vrot.slane %v3325, %v3329
    %v3332 = vmul.f32 %v3321, %v3330
    %v3333 = vmul.f32 %v3322, %v3330
    %v3334 = vmul.f32 %v3323, %v3330
    %v3335 = vmul.f32 %v3324, %v3330
    %v3336 = vld [vmem:[%s10] sm:$0x1]
    %v3338 = vlaneseq
    %v3339 = vshrl.u32 %v3338, 7
    %v3340 = vsub.s32 0, %v3339
    %v3341 = vrot.slane %v3336, %v3340
    %v3343 = vadd.f32 %v3332, %v3341
    %v3344 = vadd.f32 %v3333, %v3341
    %v3345 = vadd.f32 %v3334, %v3341
    %v3346 = vadd.f32 %v3335, %v3341
    %v3347 = vld [vmem:[#allocation11] sm:$0xff]
    %v3348 = vld [vmem:[#allocation11 + $0x8] sm:$0xff]
    %v3349 = vld [vmem:[#allocation11 + $0x10] sm:$0xff]
    %v3350 = vld [vmem:[#allocation11 + $0x18] sm:$0xff]
    %v3351 = vld [vmem:[#allocation11 + $0x20] sm:$0xff]
    %v3352 = vld [vmem:[#allocation11 + $0x28] sm:$0xff]
    %v3353 = vld [vmem:[#allocation11 + $0x30] sm:$0xff]
    %v3354 = vld [vmem:[#allocation11 + $0x38] sm:$0xff]
    %v3355 = vld [vmem:[#allocation11 + $0x40] sm:$0xff]
    %v3356 = vld [vmem:[#allocation11 + $0x48] sm:$0xff]
    %v3357 = vld [vmem:[#allocation11 + $0x50] sm:$0xff]
    %v3358 = vld [vmem:[#allocation11 + $0x58] sm:$0xff]
    %v3359 = vld [vmem:[#allocation11 + $0x60] sm:$0xff]
    %v3360 = vld [vmem:[#allocation11 + $0x68] sm:$0xff]
    %v3361 = vld [vmem:[#allocation11 + $0x70] sm:$0xff]
    %v3362 = vld [vmem:[#allocation11 + $0x78] sm:$0xff]
    %v3363 = vld [vmem:[#allocation11 + $0x80] sm:$0xff]
    %v3364 = vld [vmem:[#allocation11 + $0x88] sm:$0xff]
    %v3365 = vld [vmem:[#allocation11 + $0x90] sm:$0xff]
    %v3366 = vld [vmem:[#allocation11 + $0x98] sm:$0xff]
    %v3367 = vld [vmem:[#allocation11 + $0xa0] sm:$0xff]
    %v3368 = vld [vmem:[#allocation11 + $0xa8] sm:$0xff]
    %v3369 = vld [vmem:[#allocation11 + $0xb0] sm:$0xff]
    %v3370 = vld [vmem:[#allocation11 + $0xb8] sm:$0xff]
    %v3371 = vld [vmem:[#allocation11 + $0xc0] sm:$0xff]
    %v3372 = vld [vmem:[#allocation11 + $0xc8] sm:$0xff]
    %v3373 = vld [vmem:[#allocation11 + $0xd0] sm:$0xff]
    %v3374 = vld [vmem:[#allocation11 + $0xd8] sm:$0xff]
    %v3375 = vld [vmem:[#allocation11 + $0xe0] sm:$0xff]
    %v3376 = vld [vmem:[#allocation11 + $0xe8] sm:$0xff]
    %v3377 = vld [vmem:[#allocation11 + $0xf0] sm:$0xff]
    %v3378 = vld [vmem:[#allocation11 + $0xf8] sm:$0xff]
    %v3379 = vld [vmem:[#allocation11 + $0x100] sm:$0xff]
    %v3380 = vld [vmem:[#allocation11 + $0x108] sm:$0xff]
    %v3381 = vld [vmem:[#allocation11 + $0x110] sm:$0xff]
    %v3382 = vld [vmem:[#allocation11 + $0x118] sm:$0xff]
    %v3383 = vld [vmem:[#allocation11 + $0x120] sm:$0xff]
    %v3384 = vld [vmem:[#allocation11 + $0x128] sm:$0xff]
    %v3385 = vld [vmem:[#allocation11 + $0x130] sm:$0xff]
    %v3386 = vld [vmem:[#allocation11 + $0x138] sm:$0xff]
    %v3387 = vld [vmem:[#allocation11 + $0x140] sm:$0xff]
    %v3388 = vld [vmem:[#allocation11 + $0x148] sm:$0xff]
    %v3389 = vld [vmem:[#allocation11 + $0x150] sm:$0xff]
    %v3390 = vld [vmem:[#allocation11 + $0x158] sm:$0xff]
    %v3391 = vld [vmem:[#allocation11 + $0x160] sm:$0xff]
    %v3392 = vld [vmem:[#allocation11 + $0x168] sm:$0xff]
    %v3393 = vld [vmem:[#allocation11 + $0x170] sm:$0xff]
    %v3394 = vld [vmem:[#allocation11 + $0x178] sm:$0xff]
    %v3395 = vld [vmem:[#allocation11 + $0x180] sm:$0xff]
    %v3396 = vld [vmem:[#allocation11 + $0x188] sm:$0xff]
    %v3397 = vld [vmem:[#allocation11 + $0x190] sm:$0xff]
    %v3398 = vld [vmem:[#allocation11 + $0x198] sm:$0xff]
    %v3399 = vld [vmem:[#allocation11 + $0x1a0] sm:$0xff]
    %v3400 = vld [vmem:[#allocation11 + $0x1a8] sm:$0xff]
    %v3401 = vld [vmem:[#allocation11 + $0x1b0] sm:$0xff]
    %v3402 = vld [vmem:[#allocation11 + $0x1b8] sm:$0xff]
    %v3403 = vld [vmem:[#allocation11 + $0x1c0] sm:$0xff]
    %v3404 = vld [vmem:[#allocation11 + $0x1c8] sm:$0xff]
    %v3405 = vld [vmem:[#allocation11 + $0x1d0] sm:$0xff]
    %v3406 = vld [vmem:[#allocation11 + $0x1d8] sm:$0xff]
    %v3407 = vld [vmem:[#allocation11 + $0x1e0] sm:$0xff]
    %v3408 = vld [vmem:[#allocation11 + $0x1e8] sm:$0xff]
    %v3409 = vld [vmem:[#allocation11 + $0x1f0] sm:$0xff]
    %v3410 = vld [vmem:[#allocation11 + $0x1f8] sm:$0xff]
    %v3411 = vld [vmem:[%s12] sm:$0xf]
    %v3413 = vlaneseq
    %v3414 = vshrl.u32 %v3413, 7
    %v3415 = vsub.s32 0, %v3414
    %v3416 = vrot.slane %v3411, %v3415
    %v3417 = vlaneseq
    %v3418 = vshrl.u32 %v3417, 7
    %v3419 = vsub.s32 1, %v3418
    %v3420 = vrot.slane %v3411, %v3419
    %v3421 = vlaneseq
    %v3422 = vshrl.u32 %v3421, 7
    %v3423 = vsub.s32 2, %v3422
    %v3424 = vrot.slane %v3411, %v3423
    %v3425 = vlaneseq
    %v3426 = vshrl.u32 %v3425, 7
    %v3427 = vsub.s32 3, %v3426
    %v3428 = vrot.slane %v3411, %v3427
    %3433 = vmatprep.subr.mxu0 %v3408
    %3434 = vmatpush1.msra.mxu0 %v3407
    %3435 = vmatprep.subr.mxu0 %v3404
    %3436 = vmatpush1.msra.mxu0 %v3403
    %3437 = vmatprep.subr.mxu0 %v3400
    %3438 = vmatpush1.msra.mxu0 %v3399
    %3439 = vmatprep.subr.mxu0 %v3396
    %3440 = vmatpush1.msra.mxu0 %v3395
    %3441 = vmatprep.subr.mxu0 %v3392
    %3442 = vmatpush1.msra.mxu0 %v3391
    %3443 = vmatprep.subr.mxu0 %v3388
    %3444 = vmatpush1.msra.mxu0 %v3387
    %3445 = vmatprep.subr.mxu0 %v3384
    %3446 = vmatpush1.msra.mxu0 %v3383
    %3447 = vmatprep.subr.mxu0 %v3380
    %3448 = vmatpush1.msra.mxu0 %v3379
    %3449 = vmatprep.subr.mxu0 %v3376
    %3450 = vmatpush1.msra.mxu0 %v3375
    %3451 = vmatprep.subr.mxu0 %v3372
    %3452 = vmatpush1.msra.mxu0 %v3371
    %3453 = vmatprep.subr.mxu0 %v3368
    %3454 = vmatpush1.msra.mxu0 %v3367
    %3455 = vmatprep.subr.mxu0 %v3364
    %3456 = vmatpush1.msra.mxu0 %v3363
    %3457 = vmatprep.subr.mxu0 %v3360
    %3458 = vmatpush1.msra.mxu0 %v3359
    %3459 = vmatprep.subr.mxu0 %v3356
    %3460 = vmatpush1.msra.mxu0 %v3355
    %3461 = vmatprep.subr.mxu0 %v3352
    %3462 = vmatpush1.msra.mxu0 %v3351
    %3463 = vmatprep.subr.mxu0 %v3348
    %3464 = vmatpush1.msra.mxu0 %v3347
    %3465 = vmatprep.subr.mxu0 0.0
    %3466 = vmatpush2.msra.mxu0 0.0
    %3467 = vmatprep.subr.mxu0 0.0
    %3468 = vmatpush2.msra.mxu0 0.0
    %3469 = vmatprep.subr.mxu0 0.0
    %3470 = vmatpush2.msra.mxu0 0.0
    %3471 = vmatprep.subr.mxu0 0.0
    %3472 = vmatpush2.msra.mxu0 0.0
    %3473 = vmatprep.subr.mxu0 0.0
    %3474 = vmatpush2.msra.mxu0 0.0
    %3475 = vmatprep.subr.mxu0 0.0
    %3476 = vmatpush2.msra.mxu0 0.0
    %3477 = vmatprep.subr.mxu0 0.0
    %3478 = vmatpush2.msra.mxu0 0.0
    %3479 = vmatprep.subr.mxu0 0.0
    %3480 = vmatpush2.msra.mxu0 0.0
    %3481 = vmatprep.subr.mxu0 0.0
    %3482 = vmatpush2.msra.mxu0 0.0
    %3483 = vmatprep.subr.mxu0 0.0
    %3484 = vmatpush2.msra.mxu0 0.0
    %3485 = vmatprep.subr.mxu0 0.0
    %3486 = vmatpush2.msra.mxu0 0.0
    %3487 = vmatprep.subr.mxu0 0.0
    %3488 = vmatpush2.msra.mxu0 0.0
    %3489 = vmatprep.subr.mxu0 0.0
    %3490 = vmatpush2.msra.mxu0 0.0
    %3491 = vmatprep.subr.mxu0 0.0
    %3492 = vmatpush2.msra.mxu0 0.0
    %3493 = vmatprep.subr.mxu0 0.0
    %3494 = vmatpush2.msra.mxu0 0.0
    %3495 = vmatprep.subr.mxu0 0.0
    %3496 = vmatpush2.msra.mxu0 0.0
    %3497 = vmatprep.mubr.f32.mxu0 0.0
    %3498 = vmatmul.mubr.f32.gmra.mxu0 %v3343
    %v3499 = vpop.f32.mrf.mxu0
    %v3500 = vadd.f32 %v3416, %v3499
    %v3501 = vpop.f32.mrf.mxu0
    %v3502 = vadd.f32 %v3420, %v3501
    %3503 = vmatprep.mubr.f32.mxu0 0.0
    %3504 = vmatmul.mubr.f32.gmra.mxu0 %v3344
    %v3505 = vpop.f32.mrf.mxu0
    %v3506 = vadd.f32 %v3416, %v3505
    %v3507 = vpop.f32.mrf.mxu0
    %v3508 = vadd.f32 %v3420, %v3507
    %3509 = vmatprep.mubr.f32.mxu0 0.0
    %3510 = vmatmul.mubr.f32.gmra.mxu0 %v3345
    %v3511 = vpop.f32.mrf.mxu0
    %v3512 = vadd.f32 %v3416, %v3511
    %v3513 = vpop.f32.mrf.mxu0
    %v3514 = vadd.f32 %v3420, %v3513
    %3515 = vmatprep.mubr.f32.mxu0 0.0
    %3516 = vmatmul.mubr.f32.gmra.mxu0 %v3346
    %v3517 = vpop.f32.mrf.mxu0
    %v3518 = vadd.f32 %v3416, %v3517
    %v3519 = vpop.f32.mrf.mxu0
    %v3520 = vadd.f32 %v3420, %v3519
    %3521 = vdwg.mxu0
    %3522 = vmatprep.subr.mxu0 %v3410
    %3523 = vmatpush1.msra.mxu0 %v3409
    %3524 = vmatprep.subr.mxu0 %v3406
    %3525 = vmatpush1.msra.mxu0 %v3405
    %3526 = vmatprep.subr.mxu0 %v3402
    %3527 = vmatpush1.msra.mxu0 %v3401
    %3528 = vmatprep.subr.mxu0 %v3398
    %3529 = vmatpush1.msra.mxu0 %v3397
    %3530 = vmatprep.subr.mxu0 %v3394
    %3531 = vmatpush1.msra.mxu0 %v3393
    %3532 = vmatprep.subr.mxu0 %v3390
    %3533 = vmatpush1.msra.mxu0 %v3389
    %3534 = vmatprep.subr.mxu0 %v3386
    %3535 = vmatpush1.msra.mxu0 %v3385
    %3536 = vmatprep.subr.mxu0 %v3382
    %3537 = vmatpush1.msra.mxu0 %v3381
    %3538 = vmatprep.subr.mxu0 %v3378
    %3539 = vmatpush1.msra.mxu0 %v3377
    %3540 = vmatprep.subr.mxu0 %v3374
    %3541 = vmatpush1.msra.mxu0 %v3373
    %3542 = vmatprep.subr.mxu0 %v3370
    %3543 = vmatpush1.msra.mxu0 %v3369
    %3544 = vmatprep.subr.mxu0 %v3366
    %3545 = vmatpush1.msra.mxu0 %v3365
    %3546 = vmatprep.subr.mxu0 %v3362
    %3547 = vmatpush1.msra.mxu0 %v3361
    %3548 = vmatprep.subr.mxu0 %v3358
    %3549 = vmatpush1.msra.mxu0 %v3357
    %3550 = vmatprep.subr.mxu0 %v3354
    %3551 = vmatpush1.msra.mxu0 %v3353
    %3552 = vmatprep.subr.mxu0 %v3350
    %3553 = vmatpush1.msra.mxu0 %v3349
    %3554 = vmatprep.subr.mxu0 0.0
    %3555 = vmatpush2.msra.mxu0 0.0
    %3556 = vmatprep.subr.mxu0 0.0
    %3557 = vmatpush2.msra.mxu0 0.0
    %3558 = vmatprep.subr.mxu0 0.0
    %3559 = vmatpush2.msra.mxu0 0.0
    %3560 = vmatprep.subr.mxu0 0.0
    %3561 = vmatpush2.msra.mxu0 0.0
    %3562 = vmatprep.subr.mxu0 0.0
    %3563 = vmatpush2.msra.mxu0 0.0
    %3564 = vmatprep.subr.mxu0 0.0
    %3565 = vmatpush2.msra.mxu0 0.0
    %3566 = vmatprep.subr.mxu0 0.0
    %3567 = vmatpush2.msra.mxu0 0.0
    %3568 = vmatprep.subr.mxu0 0.0
    %3569 = vmatpush2.msra.mxu0 0.0
    %3570 = vmatprep.subr.mxu0 0.0
    %3571 = vmatpush2.msra.mxu0 0.0
    %3572 = vmatprep.subr.mxu0 0.0
    %3573 = vmatpush2.msra.mxu0 0.0
    %3574 = vmatprep.subr.mxu0 0.0
    %3575 = vmatpush2.msra.mxu0 0.0
    %3576 = vmatprep.subr.mxu0 0.0
    %3577 = vmatpush2.msra.mxu0 0.0
    %3578 = vmatprep.subr.mxu0 0.0
    %3579 = vmatpush2.msra.mxu0 0.0
    %3580 = vmatprep.subr.mxu0 0.0
    %3581 = vmatpush2.msra.mxu0 0.0
    %3582 = vmatprep.subr.mxu0 0.0
    %3583 = vmatpush2.msra.mxu0 0.0
    %3584 = vmatprep.subr.mxu0 0.0
    %3585 = vmatpush2.msra.mxu0 0.0
    %3586 = vmatprep.mubr.f32.mxu0 0.0
    %3587 = vmatmul.mubr.f32.gmra.mxu0 %v3343
    %v3588 = vpop.f32.mrf.mxu0
    %v3589 = vadd.f32 %v3424, %v3588
    %v3590 = vpop.f32.mrf.mxu0
    %v3591 = vadd.f32 %v3428, %v3590
    %3592 = vmatprep.mubr.f32.mxu0 0.0
    %3593 = vmatmul.mubr.f32.gmra.mxu0 %v3344
    %v3594 = vpop.f32.mrf.mxu0
    %v3595 = vadd.f32 %v3424, %v3594
    %v3596 = vpop.f32.mrf.mxu0
    %v3597 = vadd.f32 %v3428, %v3596
    %3598 = vmatprep.mubr.f32.mxu0 0.0
    %3599 = vmatmul.mubr.f32.gmra.mxu0 %v3345
    %v3600 = vpop.f32.mrf.mxu0
    %v3601 = vadd.f32 %v3424, %v3600
    %v3602 = vpop.f32.mrf.mxu0
    %v3603 = vadd.f32 %v3428, %v3602
    %3604 = vmatprep.mubr.f32.mxu0 0.0
    %3605 = vmatmul.mubr.f32.gmra.mxu0 %v3346
    %v3606 = vpop.f32.mrf.mxu0
    %v3607 = vadd.f32 %v3424, %v3606
    %v3608 = vpop.f32.mrf.mxu0
    %v3609 = vadd.f32 %v3428, %v3608
    %3610 = vdwg.mxu0
    %v3611 = vmax.f32 %v3500, 0.0
    %v3612 = vmax.f32 %v3502, 0.0
    %v3613 = vmax.f32 %v3589, 0.0
    %v3614 = vmax.f32 %v3591, 0.0
    %v3615 = vmax.f32 %v3506, 0.0
    %v3616 = vmax.f32 %v3508, 0.0
    %v3617 = vmax.f32 %v3595, 0.0
    %v3618 = vmax.f32 %v3597, 0.0
    %v3619 = vmax.f32 %v3512, 0.0
    %v3620 = vmax.f32 %v3514, 0.0
    %v3621 = vmax.f32 %v3601, 0.0
    %v3622 = vmax.f32 %v3603, 0.0
    %v3623 = vmax.f32 %v3518, 0.0
    %v3624 = vmax.f32 %v3520, 0.0
    %v3625 = vmax.f32 %v3607, 0.0
    %v3626 = vmax.f32 %v3609, 0.0
    %v3627 = vld [vmem:[#allocation13] sm:$0xff]
    %v3628 = vld [vmem:[#allocation13 + $0x8] sm:$0xff]
    %v3629 = vld [vmem:[#allocation13 + $0x10] sm:$0xff]
    %v3630 = vld [vmem:[#allocation13 + $0x18] sm:$0xff]
    %v3631 = vld [vmem:[#allocation13 + $0x20] sm:$0xff]
    %v3632 = vld [vmem:[#allocation13 + $0x28] sm:$0xff]
    %v3633 = vld [vmem:[#allocation13 + $0x30] sm:$0xff]
    %v3634 = vld [vmem:[#allocation13 + $0x38] sm:$0xff]
    %v3635 = vld [vmem:[#allocation13 + $0x40] sm:$0xff]
    %v3636 = vld [vmem:[#allocation13 + $0x48] sm:$0xff]
    %v3637 = vld [vmem:[#allocation13 + $0x50] sm:$0xff]
    %v3638 = vld [vmem:[#allocation13 + $0x58] sm:$0xff]
    %v3639 = vld [vmem:[#allocation13 + $0x60] sm:$0xff]
    %v3640 = vld [vmem:[#allocation13 + $0x68] sm:$0xff]
    %v3641 = vld [vmem:[#allocation13 + $0x70] sm:$0xff]
    %v3642 = vld [vmem:[#allocation13 + $0x78] sm:$0xff]
    %v3643 = vld [vmem:[#allocation13 + $0x80] sm:$0xff]
    %v3644 = vld [vmem:[#allocation13 + $0x88] sm:$0xff]
    %v3645 = vld [vmem:[#allocation13 + $0x90] sm:$0xff]
    %v3646 = vld [vmem:[#allocation13 + $0x98] sm:$0xff]
    %v3647 = vld [vmem:[#allocation13 + $0xa0] sm:$0xff]
    %v3648 = vld [vmem:[#allocation13 + $0xa8] sm:$0xff]
    %v3649 = vld [vmem:[#allocation13 + $0xb0] sm:$0xff]
    %v3650 = vld [vmem:[#allocation13 + $0xb8] sm:$0xff]
    %v3651 = vld [vmem:[#allocation13 + $0xc0] sm:$0xff]
    %v3652 = vld [vmem:[#allocation13 + $0xc8] sm:$0xff]
    %v3653 = vld [vmem:[#allocation13 + $0xd0] sm:$0xff]
    %v3654 = vld [vmem:[#allocation13 + $0xd8] sm:$0xff]
    %v3655 = vld [vmem:[#allocation13 + $0xe0] sm:$0xff]
    %v3656 = vld [vmem:[#allocation13 + $0xe8] sm:$0xff]
    %v3657 = vld [vmem:[#allocation13 + $0xf0] sm:$0xff]
    %v3658 = vld [vmem:[#allocation13 + $0xf8] sm:$0xff]
    %v3659 = vld [vmem:[#allocation13 + $0x100] sm:$0xff]
    %v3660 = vld [vmem:[#allocation13 + $0x108] sm:$0xff]
    %v3661 = vld [vmem:[#allocation13 + $0x110] sm:$0xff]
    %v3662 = vld [vmem:[#allocation13 + $0x118] sm:$0xff]
    %v3663 = vld [vmem:[#allocation13 + $0x120] sm:$0xff]
    %v3664 = vld [vmem:[#allocation13 + $0x128] sm:$0xff]
    %v3665 = vld [vmem:[#allocation13 + $0x130] sm:$0xff]
    %v3666 = vld [vmem:[#allocation13 + $0x138] sm:$0xff]
    %v3667 = vld [vmem:[#allocation13 + $0x140] sm:$0xff]
    %v3668 = vld [vmem:[#allocation13 + $0x148] sm:$0xff]
    %v3669 = vld [vmem:[#allocation13 + $0x150] sm:$0xff]
    %v3670 = vld [vmem:[#allocation13 + $0x158] sm:$0xff]
    %v3671 = vld [vmem:[#allocation13 + $0x160] sm:$0xff]
    %v3672 = vld [vmem:[#allocation13 + $0x168] sm:$0xff]
    %v3673 = vld [vmem:[#allocation13 + $0x170] sm:$0xff]
    %v3674 = vld [vmem:[#allocation13 + $0x178] sm:$0xff]
    %v3675 = vld [vmem:[#allocation13 + $0x180] sm:$0xff]
    %v3676 = vld [vmem:[#allocation13 + $0x188] sm:$0xff]
    %v3677 = vld [vmem:[#allocation13 + $0x190] sm:$0xff]
    %v3678 = vld [vmem:[#allocation13 + $0x198] sm:$0xff]
    %v3679 = vld [vmem:[#allocation13 + $0x1a0] sm:$0xff]
    %v3680 = vld [vmem:[#allocation13 + $0x1a8] sm:$0xff]
    %v3681 = vld [vmem:[#allocation13 + $0x1b0] sm:$0xff]
    %v3682 = vld [vmem:[#allocation13 + $0x1b8] sm:$0xff]
    %v3683 = vld [vmem:[#allocation13 + $0x1c0] sm:$0xff]
    %v3684 = vld [vmem:[#allocation13 + $0x1c8] sm:$0xff]
    %v3685 = vld [vmem:[#allocation13 + $0x1d0] sm:$0xff]
    %v3686 = vld [vmem:[#allocation13 + $0x1d8] sm:$0xff]
    %v3687 = vld [vmem:[#allocation13 + $0x1e0] sm:$0xff]
    %v3688 = vld [vmem:[#allocation13 + $0x1e8] sm:$0xff]
    %v3689 = vld [vmem:[#allocation13 + $0x1f0] sm:$0xff]
    %v3690 = vld [vmem:[#allocation13 + $0x1f8] sm:$0xff]
    %v3691 = vld [vmem:[%s14] sm:$0x1]
    %v3693 = vlaneseq
    %v3694 = vshrl.u32 %v3693, 7
    %v3695 = vsub.s32 0, %v3694
    %v3696 = vrot.slane %v3691, %v3695
    %3698 = vmatprep.subr.mxu0 0.0
    %3699 = vmatpush1.msra.mxu0 %v3642
    %3700 = vmatprep.subr.mxu0 0.0
    %3701 = vmatpush1.msra.mxu0 %v3641
    %3702 = vmatprep.subr.mxu0 0.0
    %3703 = vmatpush1.msra.mxu0 %v3640
    %3704 = vmatprep.subr.mxu0 0.0
    %3705 = vmatpush1.msra.mxu0 %v3639
    %3706 = vmatprep.subr.mxu0 0.0
    %3707 = vmatpush1.msra.mxu0 %v3638
    %3708 = vmatprep.subr.mxu0 0.0
    %3709 = vmatpush1.msra.mxu0 %v3637
    %3710 = vmatprep.subr.mxu0 0.0
    %3711 = vmatpush1.msra.mxu0 %v3636
    %3712 = vmatprep.subr.mxu0 0.0
    %3713 = vmatpush1.msra.mxu0 %v3635
    %3714 = vmatprep.subr.mxu0 0.0
    %3715 = vmatpush1.msra.mxu0 %v3634
    %3716 = vmatprep.subr.mxu0 0.0
    %3717 = vmatpush1.msra.mxu0 %v3633
    %3718 = vmatprep.subr.mxu0 0.0
    %3719 = vmatpush1.msra.mxu0 %v3632
    %3720 = vmatprep.subr.mxu0 0.0
    %3721 = vmatpush1.msra.mxu0 %v3631
    %3722 = vmatprep.subr.mxu0 0.0
    %3723 = vmatpush1.msra.mxu0 %v3630
    %3724 = vmatprep.subr.mxu0 0.0
    %3725 = vmatpush1.msra.mxu0 %v3629
    %3726 = vmatprep.subr.mxu0 0.0
    %3727 = vmatpush1.msra.mxu0 %v3628
    %3728 = vmatprep.subr.mxu0 0.0
    %3729 = vmatpush1.msra.mxu0 %v3627
    %3730 = vmatprep.subr.mxu0 0.0
    %3731 = vmatpush2.msra.mxu0 %v3658
    %3732 = vmatprep.subr.mxu0 0.0
    %3733 = vmatpush2.msra.mxu0 %v3657
    %3734 = vmatprep.subr.mxu0 0.0
    %3735 = vmatpush2.msra.mxu0 %v3656
    %3736 = vmatprep.subr.mxu0 0.0
    %3737 = vmatpush2.msra.mxu0 %v3655
    %3738 = vmatprep.subr.mxu0 0.0
    %3739 = vmatpush2.msra.mxu0 %v3654
    %3740 = vmatprep.subr.mxu0 0.0
    %3741 = vmatpush2.msra.mxu0 %v3653
    %3742 = vmatprep.subr.mxu0 0.0
    %3743 = vmatpush2.msra.mxu0 %v3652
    %3744 = vmatprep.subr.mxu0 0.0
    %3745 = vmatpush2.msra.mxu0 %v3651
    %3746 = vmatprep.subr.mxu0 0.0
    %3747 = vmatpush2.msra.mxu0 %v3650
    %3748 = vmatprep.subr.mxu0 0.0
    %3749 = vmatpush2.msra.mxu0 %v3649
    %3750 = vmatprep.subr.mxu0 0.0
    %3751 = vmatpush2.msra.mxu0 %v3648
    %3752 = vmatprep.subr.mxu0 0.0
    %3753 = vmatpush2.msra.mxu0 %v3647
    %3754 = vmatprep.subr.mxu0 0.0
    %3755 = vmatpush2.msra.mxu0 %v3646
    %3756 = vmatprep.subr.mxu0 0.0
    %3757 = vmatpush2.msra.mxu0 %v3645
    %3758 = vmatprep.subr.mxu0 0.0
    %3759 = vmatpush2.msra.mxu0 %v3644
    %3760 = vmatprep.subr.mxu0 0.0
    %3761 = vmatpush2.msra.mxu0 %v3643
    %3762 = vmatprep.mubr.f32.mxu0 %v3612
    %3763 = vmatmul.mubr.f32.gmra.mxu0 %v3611
    %v3764 = vpop.f32.mrf.mxu0
    %v3765 = vadd.f32 %v3696, %v3764
    %v3766 = vpop.f32.mrf.mxu0
    %3767 = vmatprep.mubr.f32.mxu0 %v3616
    %3768 = vmatmul.mubr.f32.gmra.mxu0 %v3615
    %v3769 = vpop.f32.mrf.mxu0
    %v3770 = vadd.f32 %v3696, %v3769
    %v3771 = vpop.f32.mrf.mxu0
    %3772 = vmatprep.mubr.f32.mxu0 %v3620
    %3773 = vmatmul.mubr.f32.gmra.mxu0 %v3619
    %v3774 = vpop.f32.mrf.mxu0
    %v3775 = vadd.f32 %v3696, %v3774
    %v3776 = vpop.f32.mrf.mxu0
    %3777 = vmatprep.mubr.f32.mxu0 %v3624
    %3778 = vmatmul.mubr.f32.gmra.mxu0 %v3623
    %v3779 = vpop.f32.mrf.mxu0
    %v3780 = vadd.f32 %v3696, %v3779
    %v3781 = vpop.f32.mrf.mxu0
    %3782 = vdwg.mxu0
    %3783 = vmatprep.subr.mxu0 0.0
    %3784 = vmatpush1.msra.mxu0 %v3674
    %3785 = vmatprep.subr.mxu0 0.0
    %3786 = vmatpush1.msra.mxu0 %v3673
    %3787 = vmatprep.subr.mxu0 0.0
    %3788 = vmatpush1.msra.mxu0 %v3672
    %3789 = vmatprep.subr.mxu0 0.0
    %3790 = vmatpush1.msra.mxu0 %v3671
    %3791 = vmatprep.subr.mxu0 0.0
    %3792 = vmatpush1.msra.mxu0 %v3670
    %3793 = vmatprep.subr.mxu0 0.0
    %3794 = vmatpush1.msra.mxu0 %v3669
    %3795 = vmatprep.subr.mxu0 0.0
    %3796 = vmatpush1.msra.mxu0 %v3668
    %3797 = vmatprep.subr.mxu0 0.0
    %3798 = vmatpush1.msra.mxu0 %v3667
    %3799 = vmatprep.subr.mxu0 0.0
    %3800 = vmatpush1.msra.mxu0 %v3666
    %3801 = vmatprep.subr.mxu0 0.0
    %3802 = vmatpush1.msra.mxu0 %v3665
    %3803 = vmatprep.subr.mxu0 0.0
    %3804 = vmatpush1.msra.mxu0 %v3664
    %3805 = vmatprep.subr.mxu0 0.0
    %3806 = vmatpush1.msra.mxu0 %v3663
    %3807 = vmatprep.subr.mxu0 0.0
    %3808 = vmatpush1.msra.mxu0 %v3662
    %3809 = vmatprep.subr.mxu0 0.0
    %3810 = vmatpush1.msra.mxu0 %v3661
    %3811 = vmatprep.subr.mxu0 0.0
    %3812 = vmatpush1.msra.mxu0 %v3660
    %3813 = vmatprep.subr.mxu0 0.0
    %3814 = vmatpush1.msra.mxu0 %v3659
    %3815 = vmatprep.subr.mxu0 0.0
    %3816 = vmatpush2.msra.mxu0 %v3690
    %3817 = vmatprep.subr.mxu0 0.0
    %3818 = vmatpush2.msra.mxu0 %v3689
    %3819 = vmatprep.subr.mxu0 0.0
    %3820 = vmatpush2.msra.mxu0 %v3688
    %3821 = vmatprep.subr.mxu0 0.0
    %3822 = vmatpush2.msra.mxu0 %v3687
    %3823 = vmatprep.subr.mxu0 0.0
    %3824 = vmatpush2.msra.mxu0 %v3686
    %3825 = vmatprep.subr.mxu0 0.0
    %3826 = vmatpush2.msra.mxu0 %v3685
    %3827 = vmatprep.subr.mxu0 0.0
    %3828 = vmatpush2.msra.mxu0 %v3684
    %3829 = vmatprep.subr.mxu0 0.0
    %3830 = vmatpush2.msra.mxu0 %v3683
    %3831 = vmatprep.subr.mxu0 0.0
    %3832 = vmatpush2.msra.mxu0 %v3682
    %3833 = vmatprep.subr.mxu0 0.0
    %3834 = vmatpush2.msra.mxu0 %v3681
    %3835 = vmatprep.subr.mxu0 0.0
    %3836 = vmatpush2.msra.mxu0 %v3680
    %3837 = vmatprep.subr.mxu0 0.0
    %3838 = vmatpush2.msra.mxu0 %v3679
    %3839 = vmatprep.subr.mxu0 0.0
    %3840 = vmatpush2.msra.mxu0 %v3678
    %3841 = vmatprep.subr.mxu0 0.0
    %3842 = vmatpush2.msra.mxu0 %v3677
    %3843 = vmatprep.subr.mxu0 0.0
    %3844 = vmatpush2.msra.mxu0 %v3676
    %3845 = vmatprep.subr.mxu0 0.0
    %3846 = vmatpush2.msra.mxu0 %v3675
    %3847 = vmatprep.mubr.f32.mxu0 %v3614
    %3848 = vmatmul.mubr.f32.gmra.mxu0 %v3613
    %v3849 = vpop.f32.mrf.mxu0
    %v3850 = vadd.f32 %v3765, %v3849
    %v3851 = vpop.f32.mrf.mxu0
    %3852 = vmatprep.mubr.f32.mxu0 %v3618
    %3853 = vmatmul.mubr.f32.gmra.mxu0 %v3617
    %v3854 = vpop.f32.mrf.mxu0
    %v3855 = vadd.f32 %v3770, %v3854
    %v3856 = vpop.f32.mrf.mxu0
    %3857 = vmatprep.mubr.f32.mxu0 %v3622
    %3858 = vmatmul.mubr.f32.gmra.mxu0 %v3621
    %v3859 = vpop.f32.mrf.mxu0
    %v3860 = vadd.f32 %v3775, %v3859
    %v3861 = vpop.f32.mrf.mxu0
    %3862 = vmatprep.mubr.f32.mxu0 %v3626
    %3863 = vmatmul.mubr.f32.gmra.mxu0 %v3625
    %v3864 = vpop.f32.mrf.mxu0
    %v3865 = vadd.f32 %v3780, %v3864
    %v3866 = vpop.f32.mrf.mxu0
    %3867 = vdwg.mxu0
    %v3868 = vadd.f32 %v3343, %v3850
    %v3869 = vadd.f32 %v3344, %v3855
    %v3870 = vadd.f32 %v3345, %v3860
    %v3871 = vadd.f32 %v3346, %v3865
    %3872 = vadd.xlane.f32.xlu0 %v3868
    %v3873 = vpop.xlane.xlu0 %3872
    %3874 = vadd.xlane.f32.xlu0 %v3869
    %v3875 = vpop.xlane.xlu0 %3874
    %3876 = vadd.xlane.f32.xlu0 %v3870
    %v3877 = vpop.xlane.xlu0 %3876
    %3878 = vadd.xlane.f32.xlu0 %v3871
    %v3879 = vpop.xlane.xlu0 %3878
    %v3880 = vmul.f32 %v3873, %v3288
    %v3881 = vmul.f32 %v3875, %v3288
    %v3882 = vmul.f32 %v3877, %v3288
    %v3883 = vmul.f32 %v3879, %v3288
    %v3884 = vsub.f32 %v3868, %v3880
    %v3885 = vsub.f32 %v3869, %v3881
    %v3886 = vsub.f32 %v3870, %v3882
    %v3887 = vsub.f32 %v3871, %v3883
    %v3888 = vmul.f32 %v3884, %v3884
    %v3889 = vmul.f32 %v3885, %v3885
    %v3890 = vmul.f32 %v3886, %v3886
    %v3891 = vmul.f32 %v3887, %v3887
    %3892 = vadd.xlane.f32.xlu0 %v3888
    %v3893 = vpop.xlane.xlu0 %3892
    %3894 = vadd.xlane.f32.xlu0 %v3889
    %v3895 = vpop.xlane.xlu0 %3894
    %3896 = vadd.xlane.f32.xlu0 %v3890
    %v3897 = vpop.xlane.xlu0 %3896
    %3898 = vadd.xlane.f32.xlu0 %v3891
    %v3899 = vpop.xlane.xlu0 %3898
    %v3900 = vmul.f32 %v3893, %v3288
    %v3901 = vmul.f32 %v3895, %v3288
    %v3902 = vmul.f32 %v3897, %v3288
    %v3903 = vmul.f32 %v3899, %v3288
    %v3904 = vadd.f32 %v3900, 1e-05
    %v3905 = vadd.f32 %v3901, 1e-05
    %v3906 = vadd.f32 %v3902, 1e-05
    %v3907 = vadd.f32 %v3903, 1e-05
    %v3908 = vrsqrt.pop %v3904
    %v3909 = vrsqrt.pop %v3905
    %v3910 = vrsqrt.pop %v3906
    %v3911 = vrsqrt.pop %v3907
    %v3912 = vmul.f32 %v3884, %v3908
    %v3913 = vmul.f32 %v3885, %v3909
    %v3914 = vmul.f32 %v3886, %v3910
    %v3915 = vmul.f32 %v3887, %v3911
    %v3916 = vld [vmem:[%s15] sm:$0x1]
    %v3918 = vlaneseq
    %v3919 = vshrl.u32 %v3918, 7
    %v3920 = vsub.s32 0, %v3919
    %v3921 = vrot.slane %v3916, %v3920
    %v3923 = vmul.f32 %v3912, %v3921
    %v3924 = vmul.f32 %v3913, %v3921
    %v3925 = vmul.f32 %v3914, %v3921
    %v3926 = vmul.f32 %v3915, %v3921
    %v3927 = vld [vmem:[%s16] sm:$0x1]
    %v3929 = vlaneseq
    %v3930 = vshrl.u32 %v3929, 7
    %v3931 = vsub.s32 0, %v3930
    %v3932 = vrot.slane %v3927, %v3931
    %v3934 = vadd.f32 %v3923, %v3932
    %v3935 = vadd.f32 %v3924, %v3932
    %v3936 = vadd.f32 %v3925, %v3932
    %v3937 = vadd.f32 %v3926, %v3932
    %3938 = vst [vmem:[#allocation14] sm:$0xff] %v3934
    %3939 = vst [vmem:[#allocation14 + $0x8] sm:$0xff] %v3935
    %3940 = vst [vmem:[#allocation14 + $0x10] sm:$0xff] %v3936
    %3941 = vst [vmem:[#allocation14 + $0x18] sm:$0xff] %v3937
    // Predicated region
    $region98: #{tpu_custom_call.1} parent=1 // pred_check
      _
    $region99: #{tpu_custom_call.1} parent=1 // pred_check_branch
      %3943 = sbr.rel (0) target = $region101
    $region100: #{tpu_custom_call.1} parent=1 // pred_region
      %s3945 = ssub.s32 512, 512
      %3946 = vsyncadd [#allocation4], %s3945
      %s3947 = sshll.u32 [#allocation14], 4
      %s3948 = int_to_ptr.vmem [resolvable:$true] %s3947
      %3953 = dma.vmem_to_hbm [thread:$0]  %s3948, 512, %s17, [#allocation4], 128, 128, 8
    $region101: #{tpu_custom_call.1} parent=1 // pred_fallthru
      _
    // Predicated region
    $region102: #{tpu_custom_call.1} parent=1 // pred_check
      _
    $region103: #{tpu_custom_call.1} parent=1 // pred_check_branch
      %3955 = sbr.rel (0) target = $region105
    $region104: #{tpu_custom_call.1} parent=1 // pred_region
      %3956 = dma.done [#allocation4], 512
    $region105: #{tpu_custom_call.1} parent=1 // pred_fallthru
      _
    %3957 = vsyncpa [#allocation3], 1
    %3958 = vsyncpa [#allocation6], 1
    %3959 = vsyncpa [#allocation9], 1
    %3960 = vsyncpa [#allocation12], 1
    %3961 = vsyncpa [#allocation4], 1

// kernel: tpu_custom_call.1
$region0: #{tpu_custom_call.1}
  #allocation0 [shape = 'u32[]', space=smem, size = 0x4, offset = 0x4, fixed_abs, tag = 'smem constant byte address 0x4 - core index']
  #allocation1 [shape = 'u32[144,128]{1,0:T(1,128)}', space=vmem, size = 0x12000, scoped, tag = 'internal scratch']
  %s0 = inlined_call_operand.hbm [shape: f32[4,8,128], index: 0, kind: input, shape index: {}]
  %s1 = inlined_call_operand.hbm [shape: f32[128,128], index: 1, kind: input, shape index: {}]
  %s2 = inlined_call_operand.hbm [shape: f32[128,128], index: 2, kind: input, shape index: {}]
  %s3 = inlined_call_operand.hbm [shape: f32[128,128], index: 3, kind: input, shape index: {}]
  %s4 = inlined_call_operand.vmem [shape: f32[1,128], index: 4, kind: input, shape index: {}]
  %s5 = inlined_call_operand.vmem [shape: f32[1,128], index: 5, kind: input, shape index: {}]
  %s6 = inlined_call_operand.vmem [shape: f32[1,128], index: 6, kind: input, shape index: {}]
  %s7 = inlined_call_operand.hbm [shape: f32[128,128], index: 7, kind: input, shape index: {}]
  %s8 = inlined_call_operand.vmem [shape: f32[1,128], index: 8, kind: input, shape index: {}]
  %s9 = inlined_call_operand.vmem [shape: f32[1,128], index: 9, kind: input, shape index: {}]
  %s10 = inlined_call_operand.vmem [shape: f32[1,128], index: 10, kind: input, shape index: {}]
  %s11 = inlined_call_operand.hbm [shape: f32[128,512], index: 11, kind: input, shape index: {}]
  %s12 = inlined_call_operand.vmem [shape: f32[1,512], index: 12, kind: input, shape index: {}]
  %s13 = inlined_call_operand.hbm [shape: f32[512,128], index: 13, kind: input, shape index: {}]
  %s14 = inlined_call_operand.vmem [shape: f32[1,128], index: 14, kind: input, shape index: {}]
  %s15 = inlined_call_operand.vmem [shape: f32[1,128], index: 15, kind: input, shape index: {}]
  %s16 = inlined_call_operand.vmem [shape: f32[1,128], index: 16, kind: input, shape index: {}]
  %s17 = inlined_call_operand.hbm [shape: f32[4,8,128], index: 17, kind: output, shape index: {}]
  %s18 = sld [smem:[#allocation0]]
  $region106: #{tpu_custom_call.1} parent=0
    _
  %s20 = ssub.s32 1, %s18
  %s21 = scalar_select 0, %s20, %s18
  $region1: #{tpu_custom_call.1} parent=0
    #allocation2 [shape = 'u8[16384]{0}', space=vmem, size = 0x4000, scoped, tag = 'input window, operand 0, single buffered']
    #allocation3 [shape = 's32[1]{0}', space=sflag, size = 0x4, scoped, tag = 'scoped memory for tpu_custom_call.1']
    #allocation4 [shape = 's32[1]{0}', space=sflag, size = 0x4, scoped, tag = 'scoped memory for tpu_custom_call.1']
    #allocation5 [shape = 'u8[65536]{0}', space=vmem, size = 0x10000, scoped, tag = 'input window, operand 1, single buffered']
    #allocation6 [shape = 's32[1]{0}', space=sflag, size = 0x4, scoped, tag = 'scoped memory for tpu_custom_call.1']
    #allocation7 [shape = 'u8[65536]{0}', space=vmem, size = 0x10000, scoped, tag = 'input window, operand 2, single buffered']
    #allocation8 [shape = 'u8[65536]{0}', space=vmem, size = 0x10000, scoped, tag = 'input window, operand 3, single buffered']
    #allocation9 [shape = 's32[1]{0}', space=sflag, size = 0x4, scoped, tag = 'scoped memory for tpu_custom_call.1']
    #allocation10 [shape = 'u8[65536]{0}', space=vmem, size = 0x10000, scoped, tag = 'input window, operand 7, single buffered']
    #allocation11 [shape = 'u8[262144]{0}', space=vmem, size = 0x40000, scoped, tag = 'input window, operand 11, single buffered']
    #allocation12 [shape = 's32[1]{0}', space=sflag, size = 0x4, scoped, tag = 'scoped memory for tpu_custom_call.1']
    #allocation13 [shape = 'u8[262144]{0}', space=vmem, size = 0x40000, scoped, tag = 'input window, operand 13, single buffered']
    #allocation14 [shape = 'u8[16384]{0}', space=vmem, size = 0x4000, scoped, tag = 'output window, operand 0, single buffered']
    %22 = vsyncpa [#allocation3], 0
    %23 = vsyncpa [#allocation6], 0
    %24 = vsyncpa [#allocation9], 0
    %25 = vsyncpa [#allocation12], 0
    %26 = vsyncpa [#allocation4], 0
    // Predicated region
    $region2: #{tpu_custom_call.1} parent=1 // pred_check
      _
    $region3: #{tpu_custom_call.1} parent=1 // pred_check_branch
      %28 = sbr.rel (0) target = $region5
    $region4: #{tpu_custom_call.1} parent=1 // pred_region
      %s30 = ssub.s32 512, 512
      %31 = vsyncadd [#allocation3], %s30
      %s32 = sshll.u32 [#allocation2], 4
      %s33 = int_to_ptr.vmem [resolvable:$true] %s32
      %38 = dma.hbm_to_vmem [thread:$0]  %s0, 512, %s33, [#allocation3], 128, 128, 8
    $region5: #{tpu_custom_call.1} parent=1 // pred_fallthru
      _
    // Predicated region
    $region6: #{tpu_custom_call.1} parent=1 // pred_check
      _
    $region7: #{tpu_custom_call.1} parent=1 // pred_check_branch
      %40 = sbr.rel (0) target = $region9
    $region8: #{tpu_custom_call.1} parent=1 // pred_region
      %s42 = ssub.s32 2048, 2048
      %43 = vsyncadd [#allocation6], %s42
      %s44 = sshll.u32 [#allocation5], 4
      %s45 = int_to_ptr.vmem [resolvable:$true] %s44
      %50 = dma.hbm_to_vmem [thread:$0]  %s1, 2048, %s45, [#allocation6], 128, 128, 8
    $region9: #{tpu_custom_call.1} parent=1 // pred_fallthru
      _
    // Predicated region
    $region10: #{tpu_custom_call.1} parent=1 // pred_check
      _
    $region11: #{tpu_custom_call.1} parent=1 // pred_check_branch
      %52 = sbr.rel (0) target = $region13
    $region12: #{tpu_custom_call.1} parent=1 // pred_region
      %s54 = ssub.s32 2048, 2048
      %55 = vsyncadd [#allocation6], %s54
      %s56 = sshll.u32 [#allocation7], 4
      %s57 = int_to_ptr.vmem [resolvable:$true] %s56
      %62 = dma.hbm_to_vmem [thread:$0]  %s2, 2048, %s57, [#allocation6], 128, 128, 8
    $region13: #{tpu_custom_call.1} parent=1 // pred_fallthru
      _
    // Predicated region
    $region14: #{tpu_custom_call.1} parent=1 // pred_check
      _
    $region15: #{tpu_custom_call.1} parent=1 // pred_check_branch
      %64 = sbr.rel (0) target = $region17
    $region16: #{tpu_custom_call.1} parent=1 // pred_region
      %s66 = ssub.s32 2048, 2048
      %67 = vsyncadd [#allocation9], %s66
      %s68 = sshll.u32 [#allocation8], 4
      %s69 = int_to_ptr.vmem [resolvable:$true] %s68
      %74 = dma.hbm_to_vmem [thread:$0]  %s3, 2048, %s69, [#allocation9], 128, 128, 8
    $region17: #{tpu_custom_call.1} parent=1 // pred_fallthru
      _
    // Predicated region
    $region18: #{tpu_custom_call.1} parent=1 // pred_check
      _
    $region19: #{tpu_custom_call.1} parent=1 // pred_check_branch
      %76 = sbr.rel (0) target = $region21
    $region20: #{tpu_custom_call.1} parent=1 // pred_region
      _
    $region21: #{tpu_custom_call.1} parent=1 // pred_fallthru
      _
    // Predicated region
    $region22: #{tpu_custom_call.1} parent=1 // pred_check
      _
    $region23: #{tpu_custom_call.1} parent=1 // pred_check_branch
      %78 = sbr.rel (0) target = $region25
    $region24: #{tpu_custom_call.1} parent=1 // pred_region
      _
    $region25: #{tpu_custom_call.1} parent=1 // pred_fallthru
      _
    // Predicated region
    $region26: #{tpu_custom_call.1} parent=1 // pred_check
      _
    $region27: #{tpu_custom_call.1} parent=1 // pred_check_branch
      %80 = sbr.rel (0) target = $region29
    $region28: #{tpu_custom_call.1} parent=1 // pred_region
      _
    $region29: #{tpu_custom_call.1} parent=1 // pred_fallthru
      _
    // Predicated region
    $region30: #{tpu_custom_call.1} parent=1 // pred_check
      _
    $region31: #{tpu_custom_call.1} parent=1 // pred_check_branch
      %82 = sbr.rel (0) target = $region33
    $region32: #{tpu_custom_call.1} parent=1 // pred_region
      %s84 = ssub.s32 2048, 2048
      %85 = vsyncadd [#allocation9], %s84
      %s86 = sshll.u32 [#allocation10], 4
      %s87 = int_to_ptr.vmem [resolvable:$true] %s86
      %92 = dma.hbm_to_vmem [thread:$0]  %s7, 2048, %s87, [#allocation9], 128, 128, 8
    $region33: #{tpu_custom_call.1} parent=1 // pred_fallthru
      _
    // Predicated region
    $region34: #{tpu_custom_call.1} parent=1 // pred_check
      _
    $region35: #{tpu_custom_call.1} parent=1 // pred_check_branch
      %94 = sbr.rel (0) target = $region37
    $region36: #{tpu_custom_call.1} parent=1 // pred_region
      _
    $region37: #{tpu_custom_call.1} parent=1 // pred_fallthru
      _
    // Predicated region
    $region38: #{tpu_custom_call.1} parent=1 // pred_check
      _
    $region39: #{tpu_custom_call.1} parent=1 // pred_check_branch
      %96 = sbr.rel (0) target = $region41
    $region40: #{tpu_custom_call.1} parent=1 // pred_region
      _
    $region41: #{tpu_custom_call.1} parent=1 // pred_fallthru
      _
    // Predicated region
    $region42: #{tpu_custom_call.1} parent=1 // pred_check
      _
    $region43: #{tpu_custom_call.1} parent=1 // pred_check_branch
      %98 = sbr.rel (0) target = $region45
    $region44: #{tpu_custom_call.1} parent=1 // pred_region
      _
    $region45: #{tpu_custom_call.1} parent=1 // pred_fallthru
      _
    // Predicated region
    $region46: #{tpu_custom_call.1} parent=1 // pred_check
      _
    $region47: #{tpu_custom_call.1} parent=1 // pred_check_branch
      %100 = sbr.rel (0) target = $region49
    $region48: #{tpu_custom_call.1} parent=1 // pred_region
      %s102 = ssub.s32 8192, 8192
      %103 = vsyncadd [#allocation12], %s102
      %s104 = sshll.u32 [#allocation11], 4
      %s105 = int_to_ptr.vmem [resolvable:$true] %s104
      %110 = dma.hbm_to_vmem [thread:$0]  %s11, 8192, %s105, [#allocation12], 512, 512, 32
    $region49: #{tpu_custom_call.1} parent=1 // pred_fallthru
      _
    // Predicated region
    $region50: #{tpu_custom_call.1} parent=1 // pred_check
      _
    $region51: #{tpu_custom_call.1} parent=1 // pred_check_branch
      %112 = sbr.rel (0) target = $region53
    $region52: #{tpu_custom_call.1} parent=1 // pred_region
      _
    $region53: #{tpu_custom_call.1} parent=1 // pred_fallthru
      _
    // Predicated region
    $region54: #{tpu_custom_call.1} parent=1 // pred_check
      _
    $region55: #{tpu_custom_call.1} parent=1 // pred_check_branch
      %114 = sbr.rel (0) target = $region57
    $region56: #{tpu_custom_call.1} parent=1 // pred_region
      %s116 = ssub.s32 8192, 8192
      %117 = vsyncadd [#allocation12], %s116
      %s118 = sshll.u32 [#allocation13], 4
      %s119 = int_to_ptr.vmem [resolvable:$true] %s118
      %124 = dma.hbm_to_vmem [thread:$0]  %s13, 8192, %s119, [#allocation12], 128, 128, 8
    $region57: #{tpu_custom_call.1} parent=1 // pred_fallthru
      _
    // Predicated region
    $region58: #{tpu_custom_call.1} parent=1 // pred_check
      _
    $region59: #{tpu_custom_call.1} parent=1 // pred_check_branch
      %126 = sbr.rel (0) target = $region61
    $region60: #{tpu_custom_call.1} parent=1 // pred_region
      _
    $region61: #{tpu_custom_call.1} parent=1 // pred_fallthru
      _
    // Predicated region
    $region62: #{tpu_custom_call.1} parent=1 // pred_check
      _
    $region63: #{tpu_custom_call.1} parent=1 // pred_check_branch
      %128 = sbr.rel (0) target = $region65
    $region64: #{tpu_custom_call.1} parent=1 // pred_region
      _
    $region65: #{tpu_custom_call.1} parent=1 // pred_fallthru
      _
    // Predicated region
    $region66: #{tpu_custom_call.1} parent=1 // pred_check
      _
    $region67: #{tpu_custom_call.1} parent=1 // pred_check_branch
      %130 = sbr.rel (0) target = $region69
    $region68: #{tpu_custom_call.1} parent=1 // pred_region
      _
    $region69: #{tpu_custom_call.1} parent=1 // pred_fallthru
      _
    // Predicated region
    $region70: #{tpu_custom_call.1} parent=1 // pred_check
      _
    $region71: #{tpu_custom_call.1} parent=1 // pred_check_branch
      %132 = sbr.rel (0) target = $region73
    $region72: #{tpu_custom_call.1} parent=1 // pred_region
      %133 = dma.done [#allocation3], 512
    $region73: #{tpu_custom_call.1} parent=1 // pred_fallthru
      _
    // Predicated region
    $region74: #{tpu_custom_call.1} parent=1 // pred_check
      _
    $region75: #{tpu_custom_call.1} parent=1 // pred_check_branch
      %135 = sbr.rel (0) target = $region77
    $region76: #{tpu_custom_call.1} parent=1 // pred_region
      %136 = dma.done [#allocation6], 2048
    $region77: #{tpu_custom_call.1} parent=1 // pred_fallthru
      _
    // Predicated region
    $region78: #{tpu_custom_call.1} parent=1 // pred_check
      _
    $region79: #{tpu_custom_call.1} parent=1 // pred_check_branch
      %138 = sbr.rel (0) target = $region81
    $region80: #{tpu_custom_call.1} parent=1 // pred_region
      %139 = dma.done [#allocation6], 2048
    $region81: #{tpu_custom_call.1} parent=1 // pred_fallthru
      _
    // Predicated region
    $region82: #{tpu_custom_call.1} parent=1 // pred_check
      _
    $region83: #{tpu_custom_call.1} parent=1 // pred_check_branch
      %141 = sbr.rel (0) target = $region85
    $region84: #{tpu_custom_call.1} parent=1 // pred_region
      %142 = dma.done [#allocation9], 2048
    $region85: #{tpu_custom_call.1} parent=1 // pred_fallthru
      _
    // Predicated region
    $region86: #{tpu_custom_call.1} parent=1 // pred_check
      _
    $region87: #{tpu_custom_call.1} parent=1 // pred_check_branch
      %144 = sbr.rel (0) target = $region89
    $region88: #{tpu_custom_call.1} parent=1 // pred_region
      %145 = dma.done [#allocation9], 2048
    $region89: #{tpu_custom_call.1} parent=1 // pred_fallthru
      _
    // Predicated region
    $region90: #{tpu_custom_call.1} parent=1 // pred_check
      _
    $region91: #{tpu_custom_call.1} parent=1 // pred_check_branch
      %147 = sbr.rel (0) target = $region93
    $region92: #{tpu_custom_call.1} parent=1 // pred_region
      %148 = dma.done [#allocation12], 8192
    $region93: #{tpu_custom_call.1} parent=1 // pred_fallthru
      _
    // Predicated region
    $region94: #{tpu_custom_call.1} parent=1 // pred_check
      _
    $region95: #{tpu_custom_call.1} parent=1 // pred_check_branch
      %150 = sbr.rel (0) target = $region97
    $region96: #{tpu_custom_call.1} parent=1 // pred_region
      %151 = dma.done [#allocation12], 8192
    $region97: #{tpu_custom_call.1} parent=1 // pred_fallthru
      _
    %v152 = vld [vmem:[#allocation2] sm:$0xff]
    %v153 = vld [vmem:[#allocation2 + $0x8] sm:$0xff]
    %v154 = vld [vmem:[#allocation2 + $0x10] sm:$0xff]
    %v155 = vld [vmem:[#allocation2 + $0x18] sm:$0xff]
    %v156 = vld [vmem:[#allocation5] sm:$0xff]
    %v157 = vld [vmem:[#allocation5 + $0x8] sm:$0xff]
    %v158 = vld [vmem:[#allocation5 + $0x10] sm:$0xff]
    %v159 = vld [vmem:[#allocation5 + $0x18] sm:$0xff]
    %v160 = vld [vmem:[#allocation5 + $0x20] sm:$0xff]
    %v161 = vld [vmem:[#allocation5 + $0x28] sm:$0xff]
    %v162 = vld [vmem:[#allocation5 + $0x30] sm:$0xff]
    %v163 = vld [vmem:[#allocation5 + $0x38] sm:$0xff]
    %v164 = vld [vmem:[#allocation5 + $0x40] sm:$0xff]
    %v165 = vld [vmem:[#allocation5 + $0x48] sm:$0xff]
    %v166 = vld [vmem:[#allocation5 + $0x50] sm:$0xff]
    %v167 = vld [vmem:[#allocation5 + $0x58] sm:$0xff]
    %v168 = vld [vmem:[#allocation5 + $0x60] sm:$0xff]
    %v169 = vld [vmem:[#allocation5 + $0x68] sm:$0xff]
    %v170 = vld [vmem:[#allocation5 + $0x70] sm:$0xff]
    %v171 = vld [vmem:[#allocation5 + $0x78] sm:$0xff]
    %v172 = vld [vmem:[%s4] sm:$0x1]
    %v174 = vlaneseq
    %v175 = vshrl.u32 %v174, 7
    %v176 = vsub.s32 0, %v175
    %v177 = vrot.slane %v172, %v176
    %179 = vmatprep.subr.mxu0 0.0
    %180 = vmatpush1.msra.mxu0 %v171
    %181 = vmatprep.subr.mxu0 0.0
    %182 = vmatpush1.msra.mxu0 %v170
    %183 = vmatprep.subr.mxu0 0.0
    %184 = vmatpush1.msra.mxu0 %v169
    %185 = vmatprep.subr.mxu0 0.0
    %186 = vmatpush1.msra.mxu0 %v168
    %187 = vmatprep.subr.mxu0 0.0
    %188 = vmatpush1.msra.mxu0 %v167
    %189 = vmatprep.subr.mxu0 0.0
    %190 = vmatpush1.msra.mxu0 %v166
    %191 = vmatprep.subr.mxu0 0.0
    %192 = vmatpush1.msra.mxu0 %v165
    %193 = vmatprep.subr.mxu0 0.0
    %194 = vmatpush1.msra.mxu0 %v164
    %195 = vmatprep.subr.mxu0 0.0
    %196 = vmatpush1.msra.mxu0 %v163
    %197 = vmatprep.subr.mxu0 0.0
    %198 = vmatpush1.msra.mxu0 %v162
    %199 = vmatprep.subr.mxu0 0.0
    %200 = vmatpush1.msra.mxu0 %v161
    %201 = vmatprep.subr.mxu0 0.0
    %202 = vmatpush1.msra.mxu0 %v160
    %203 = vmatprep.subr.mxu0 0.0
    %204 = vmatpush1.msra.mxu0 %v159
    %205 = vmatprep.subr.mxu0 0.0
    %206 = vmatpush1.msra.mxu0 %v158
    %207 = vmatprep.subr.mxu0 0.0
    %208 = vmatpush1.msra.mxu0 %v157
    %209 = vmatprep.subr.mxu0 0.0
    %210 = vmatpush1.msra.mxu0 %v156
    %211 = vmatprep.subr.mxu0 0.0
    %212 = vmatpush2.msra.mxu0 0.0
    %213 = vmatprep.subr.mxu0 0.0
    %214 = vmatpush2.msra.mxu0 0.0
    %215 = vmatprep.subr.mxu0 0.0
    %216 = vmatpush2.msra.mxu0 0.0
    %217 = vmatprep.subr.mxu0 0.0
    %218 = vmatpush2.msra.mxu0 0.0
    %219 = vmatprep.subr.mxu0 0.0
    %220 = vmatpush2.msra.mxu0 0.0
    %221 = vmatprep.subr.mxu0 0.0
    %222 = vmatpush2.msra.mxu0 0.0
    %223 = vmatprep.subr.mxu0 0.0
    %224 = vmatpush2.msra.mxu0 0.0
    %225 = vmatprep.subr.mxu0 0.0
    %226 = vmatpush2.msra.mxu0 0.0
    %227 = vmatprep.subr.mxu0 0.0
    %228 = vmatpush2.msra.mxu0 0.0
    %229 = vmatprep.subr.mxu0 0.0
    %230 = vmatpush2.msra.mxu0 0.0
    %231 = vmatprep.subr.mxu0 0.0
    %232 = vmatpush2.msra.mxu0 0.0
    %233 = vmatprep.subr.mxu0 0.0
    %234 = vmatpush2.msra.mxu0 0.0
    %235 = vmatprep.subr.mxu0 0.0
    %236 = vmatpush2.msra.mxu0 0.0
    %237 = vmatprep.subr.mxu0 0.0
    %238 = vmatpush2.msra.mxu0 0.0
    %239 = vmatprep.subr.mxu0 0.0
    %240 = vmatpush2.msra.mxu0 0.0
    %241 = vmatprep.subr.mxu0 0.0
    %242 = vmatpush2.msra.mxu0 0.0
    %243 = vmatprep.mubr.f32.mxu0 0.0
    %244 = vmatmul.mubr.f32.gmra.mxu0 %v152
    %v245 = vpop.f32.mrf.mxu0
    %v246 = vadd.f32 %v177, %v245
    %v247 = vpop.f32.mrf.mxu0
    %248 = vmatprep.mubr.f32.mxu0 0.0
    %249 = vmatmul.mubr.f32.gmra.mxu0 %v153
    %v250 = vpop.f32.mrf.mxu0
    %v251 = vadd.f32 %v177, %v250
    %v252 = vpop.f32.mrf.mxu0
    %253 = vmatprep.mubr.f32.mxu0 0.0
    %254 = vmatmul.mubr.f32.gmra.mxu0 %v154
    %v255 = vpop.f32.mrf.mxu0
    %v256 = vadd.f32 %v177, %v255
    %v257 = vpop.f32.mrf.mxu0
    %258 = vmatprep.mubr.f32.mxu0 0.0
    %259 = vmatmul.mubr.f32.gmra.mxu0 %v155
    %v260 = vpop.f32.mrf.mxu0
    %v261 = vadd.f32 %v177, %v260
    %v262 = vpop.f32.mrf.mxu0
    %263 = vdwg.mxu0
    %v264 = vld [vmem:[#allocation7] sm:$0xff]
    %v265 = vld [vmem:[#allocation7 + $0x8] sm:$0xff]
    %v266 = vld [vmem:[#allocation7 + $0x10] sm:$0xff]
    %v267 = vld [vmem:[#allocation7 + $0x18] sm:$0xff]
    %v268 = vld [vmem:[#allocation7 + $0x20] sm:$0xff]
    %v269 = vld [vmem:[#allocation7 + $0x28] sm:$0xff]
    %v270 = vld [vmem:[#allocation7 + $0x30] sm:$0xff]
    %v271 = vld [vmem:[#allocation7 + $0x38] sm:$0xff]
    %v272 = vld [vmem:[#allocation7 + $0x40] sm:$0xff]
    %v273 = vld [vmem:[#allocation7 + $0x48] sm:$0xff]
    %v274 = vld [vmem:[#allocation7 + $0x50] sm:$0xff]
    %v275 = vld [vmem:[#allocation7 + $0x58] sm:$0xff]
    %v276 = vld [vmem:[#allocation7 + $0x60] sm:$0xff]
    %v277 = vld [vmem:[#allocation7 + $0x68] sm:$0xff]
    %v278 = vld [vmem:[#allocation7 + $0x70] sm:$0xff]
    %v279 = vld [vmem:[#allocation7 + $0x78] sm:$0xff]
    %v280 = vld [vmem:[%s5] sm:$0x1]
    %v282 = vlaneseq
    %v283 = vshrl.u32 %v282, 7
    %v284 = vsub.s32 0, %v283
    %v285 = vrot.slane %v280, %v284
    %287 = vmatprep.subr.mxu0 0.0
    %288 = vmatpush1.msra.mxu0 %v279
    %289 = vmatprep.subr.mxu0 0.0
    %290 = vmatpush1.msra.mxu0 %v278
    %291 = vmatprep.subr.mxu0 0.0
    %292 = vmatpush1.msra.mxu0 %v277
    %293 = vmatprep.subr.mxu0 0.0
    %294 = vmatpush1.msra.mxu0 %v276
    %295 = vmatprep.subr.mxu0 0.0
    %296 = vmatpush1.msra.mxu0 %v275
    %297 = vmatprep.subr.mxu0 0.0
    %298 = vmatpush1.msra.mxu0 %v274
    %299 = vmatprep.subr.mxu0 0.0
    %300 = vmatpush1.msra.mxu0 %v273
    %301 = vmatprep.subr.mxu0 0.0
    %302 = vmatpush1.msra.mxu0 %v272
    %303 = vmatprep.subr.mxu0 0.0
    %304 = vmatpush1.msra.mxu0 %v271
    %305 = vmatprep.subr.mxu0 0.0
    %306 = vmatpush1.msra.mxu0 %v270
    %307 = vmatprep.subr.mxu0 0.0
    %308 = vmatpush1.msra.mxu0 %v269
    %309 = vmatprep.subr.mxu0 0.0
    %310 = vmatpush1.msra.mxu0 %v268
    %311 = vmatprep.subr.mxu0 0.0
    %312 = vmatpush1.msra.mxu0 %v267
    %313 = vmatprep.subr.mxu0 0.0
    %314 = vmatpush1.msra.mxu0 %v266
    %315 = vmatprep.subr.mxu0 0.0
    %316 = vmatpush1.msra.mxu0 %v265
    %317 = vmatprep.subr.mxu0 0.0
    %318 = vmatpush1.msra.mxu0 %v264
    %319 = vmatprep.subr.mxu0 0.0
    %320 = vmatpush2.msra.mxu0 0.0
    %321 = vmatprep.subr.mxu0 0.0
    %322 = vmatpush2.msra.mxu0 0.0
    %323 = vmatprep.subr.mxu0 0.0
    %324 = vmatpush2.msra.mxu0 0.0
    %325 = vmatprep.subr.mxu0 0.0
    %326 = vmatpush2.msra.mxu0 0.0
    %327 = vmatprep.subr.mxu0 0.0
    %328 = vmatpush2.msra.mxu0 0.0
    %329 = vmatprep.subr.mxu0 0.0
    %330 = vmatpush2.msra.mxu0 0.0
    %331 = vmatprep.subr.mxu0 0.0
    %332 = vmatpush2.msra.mxu0 0.0
    %333 = vmatprep.subr.mxu0 0.0
    %334 = vmatpush2.msra.mxu0 0.0
    %335 = vmatprep.subr.mxu0 0.0
    %336 = vmatpush2.msra.mxu0 0.0
    %337 = vmatprep.subr.mxu0 0.0
    %338 = vmatpush2.msra.mxu0 0.0
    %339 = vmatprep.subr.mxu0 0.0
    %340 = vmatpush2.msra.mxu0 0.0
    %341 = vmatprep.subr.mxu0 0.0
    %342 = vmatpush2.msra.mxu0 0.0
    %343 = vmatprep.subr.mxu0 0.0
    %344 = vmatpush2.msra.mxu0 0.0
    %345 = vmatprep.subr.mxu0 0.0
    %346 = vmatpush2.msra.mxu0 0.0
    %347 = vmatprep.subr.mxu0 0.0
    %348 = vmatpush2.msra.mxu0 0.0
    %349 = vmatprep.subr.mxu0 0.0
    %350 = vmatpush2.msra.mxu0 0.0
    %351 = vmatprep.mubr.f32.mxu0 0.0
    %352 = vmatmul.mubr.f32.gmra.mxu0 %v152
    %v353 = vpop.f32.mrf.mxu0
    %v354 = vadd.f32 %v285, %v353
    %v355 = vpop.f32.mrf.mxu0
    %356 = vmatprep.mubr.f32.mxu0 0.0
    %357 = vmatmul.mubr.f32.gmra.mxu0 %v153
    %v358 = vpop.f32.mrf.mxu0
    %v359 = vadd.f32 %v285, %v358
    %v360 = vpop.f32.mrf.mxu0
    %361 = vmatprep.mubr.f32.mxu0 0.0
    %362 = vmatmul.mubr.f32.gmra.mxu0 %v154
    %v363 = vpop.f32.mrf.mxu0
    %v364 = vadd.f32 %v285, %v363
    %v365 = vpop.f32.mrf.mxu0
    %366 = vmatprep.mubr.f32.mxu0 0.0
    %367 = vmatmul.mubr.f32.gmra.mxu0 %v155
    %v368 = vpop.f32.mrf.mxu0
    %v369 = vadd.f32 %v285, %v368
    %v370 = vpop.f32.mrf.mxu0
    %371 = vdwg.mxu0
    %v372 = vld [vmem:[#allocation8] sm:$0xff]
    %v373 = vld [vmem:[#allocation8 + $0x8] sm:$0xff]
    %v374 = vld [vmem:[#allocation8 + $0x10] sm:$0xff]
    %v375 = vld [vmem:[#allocation8 + $0x18] sm:$0xff]
    %v376 = vld [vmem:[#allocation8 + $0x20] sm:$0xff]
    %v377 = vld [vmem:[#allocation8 + $0x28] sm:$0xff]
    %v378 = vld [vmem:[#allocation8 + $0x30] sm:$0xff]
    %v379 = vld [vmem:[#allocation8 + $0x38] sm:$0xff]
    %v380 = vld [vmem:[#allocation8 + $0x40] sm:$0xff]
    %v381 = vld [vmem:[#allocation8 + $0x48] sm:$0xff]
    %v382 = vld [vmem:[#allocation8 + $0x50] sm:$0xff]
    %v383 = vld [vmem:[#allocation8 + $0x58] sm:$0xff]
    %v384 = vld [vmem:[#allocation8 + $0x60] sm:$0xff]
    %v385 = vld [vmem:[#allocation8 + $0x68] sm:$0xff]
    %v386 = vld [vmem:[#allocation8 + $0x70] sm:$0xff]
    %v387 = vld [vmem:[#allocation8 + $0x78] sm:$0xff]
    %v388 = vld [vmem:[%s6] sm:$0x1]
    %v390 = vlaneseq
    %v391 = vshrl.u32 %v390, 7
    %v392 = vsub.s32 0, %v391
    %v393 = vrot.slane %v388, %v392
    %395 = vmatprep.subr.mxu0 0.0
    %396 = vmatpush1.msra.mxu0 %v387
    %397 = vmatprep.subr.mxu0 0.0
    %398 = vmatpush1.msra.mxu0 %v386
    %399 = vmatprep.subr.mxu0 0.0
    %400 = vmatpush1.msra.mxu0 %v385
    %401 = vmatprep.subr.mxu0 0.0
    %402 = vmatpush1.msra.mxu0 %v384
    %403 = vmatprep.subr.mxu0 0.0
    %404 = vmatpush1.msra.mxu0 %v383
    %405 = vmatprep.subr.mxu0 0.0
    %406 = vmatpush1.msra.mxu0 %v382
    %407 = vmatprep.subr.mxu0 0.0
    %408 = vmatpush1.msra.mxu0 %v381
    %409 = vmatprep.subr.mxu0 0.0
    %410 = vmatpush1.msra.mxu0 %v380
    %411 = vmatprep.subr.mxu0 0.0
    %412 = vmatpush1.msra.mxu0 %v379
    %413 = vmatprep.subr.mxu0 0.0
    %414 = vmatpush1.msra.mxu0 %v378
    %415 = vmatprep.subr.mxu0 0.0
    %416 = vmatpush1.msra.mxu0 %v377
    %417 = vmatprep.subr.mxu0 0.0
    %418 = vmatpush1.msra.mxu0 %v376
    %419 = vmatprep.subr.mxu0 0.0
    %420 = vmatpush1.msra.mxu0 %v375
    %421 = vmatprep.subr.mxu0 0.0
    %422 = vmatpush1.msra.mxu0 %v374
    %423 = vmatprep.subr.mxu0 0.0
    %424 = vmatpush1.msra.mxu0 %v373
    %425 = vmatprep.subr.mxu0 0.0
    %426 = vmatpush1.msra.mxu0 %v372
    %427 = vmatprep.subr.mxu0 0.0
    %428 = vmatpush2.msra.mxu0 0.0
    %429 = vmatprep.subr.mxu0 0.0
    %430 = vmatpush2.msra.mxu0 0.0
    %431 = vmatprep.subr.mxu0 0.0
    %432 = vmatpush2.msra.mxu0 0.0
    %433 = vmatprep.subr.mxu0 0.0
    %434 = vmatpush2.msra.mxu0 0.0
    %435 = vmatprep.subr.mxu0 0.0
    %436 = vmatpush2.msra.mxu0 0.0
    %437 = vmatprep.subr.mxu0 0.0
    %438 = vmatpush2.msra.mxu0 0.0
    %439 = vmatprep.subr.mxu0 0.0
    %440 = vmatpush2.msra.mxu0 0.0
    %441 = vmatprep.subr.mxu0 0.0
    %442 = vmatpush2.msra.mxu0 0.0
    %443 = vmatprep.subr.mxu0 0.0
    %444 = vmatpush2.msra.mxu0 0.0
    %445 = vmatprep.subr.mxu0 0.0
    %446 = vmatpush2.msra.mxu0 0.0
    %447 = vmatprep.subr.mxu0 0.0
    %448 = vmatpush2.msra.mxu0 0.0
    %449 = vmatprep.subr.mxu0 0.0
    %450 = vmatpush2.msra.mxu0 0.0
    %451 = vmatprep.subr.mxu0 0.0
    %452 = vmatpush2.msra.mxu0 0.0
    %453 = vmatprep.subr.mxu0 0.0
    %454 = vmatpush2.msra.mxu0 0.0
    %455 = vmatprep.subr.mxu0 0.0
    %456 = vmatpush2.msra.mxu0 0.0
    %457 = vmatprep.subr.mxu0 0.0
    %458 = vmatpush2.msra.mxu0 0.0
    %459 = vmatprep.mubr.f32.mxu0 0.0
    %460 = vmatmul.mubr.f32.gmra.mxu0 %v152
    %v461 = vpop.f32.mrf.mxu0
    %v462 = vadd.f32 %v393, %v461
    %v463 = vpop.f32.mrf.mxu0
    %464 = vmatprep.mubr.f32.mxu0 0.0
    %465 = vmatmul.mubr.f32.gmra.mxu0 %v153
    %v466 = vpop.f32.mrf.mxu0
    %v467 = vadd.f32 %v393, %v466
    %v468 = vpop.f32.mrf.mxu0
    %469 = vmatprep.mubr.f32.mxu0 0.0
    %470 = vmatmul.mubr.f32.gmra.mxu0 %v154
    %v471 = vpop.f32.mrf.mxu0
    %v472 = vadd.f32 %v393, %v471
    %v473 = vpop.f32.mrf.mxu0
    %474 = vmatprep.mubr.f32.mxu0 0.0
    %475 = vmatmul.mubr.f32.gmra.mxu0 %v155
    %v476 = vpop.f32.mrf.mxu0
    %v477 = vadd.f32 %v393, %v476
    %v478 = vpop.f32.mrf.mxu0
    %479 = vdwg.mxu0
    %vm480 = vcmask 261120
    %v482 = vsel %vm480, %v246, 0
    %v485 = vsel %vm480, %v354, 0
    %487 = vmatprep.subr.mxu0 0.0
    %488 = vmatpush1.xpose.msra.mxu0 0.0
    %489 = vmatprep.subr.mxu0 0.0
    %490 = vmatpush1.xpose.msra.mxu0 0.0
    %491 = vmatprep.subr.mxu0 0.0
    %492 = vmatpush1.xpose.msra.mxu0 0.0
    %493 = vmatprep.subr.mxu0 0.0
    %494 = vmatpush1.xpose.msra.mxu0 0.0
    %495 = vmatprep.subr.mxu0 0.0
    %496 = vmatpush1.xpose.msra.mxu0 0.0
    %497 = vmatprep.subr.mxu0 0.0
    %498 = vmatpush1.xpose.msra.mxu0 0.0
    %499 = vmatprep.subr.mxu0 0.0
    %500 = vmatpush1.xpose.msra.mxu0 0.0
    %501 = vmatprep.subr.mxu0 0.0
    %502 = vmatpush1.xpose.msra.mxu0 0.0
    %503 = vmatprep.subr.mxu0 0.0
    %504 = vmatpush1.xpose.msra.mxu0 0.0
    %505 = vmatprep.subr.mxu0 0.0
    %506 = vmatpush1.xpose.msra.mxu0 0.0
    %507 = vmatprep.subr.mxu0 0.0
    %508 = vmatpush1.xpose.msra.mxu0 0.0
    %509 = vmatprep.subr.mxu0 0.0
    %510 = vmatpush1.xpose.msra.mxu0 0.0
    %511 = vmatprep.subr.mxu0 0.0
    %512 = vmatpush1.xpose.msra.mxu0 0.0
    %513 = vmatprep.subr.mxu0 0.0
    %514 = vmatpush1.xpose.msra.mxu0 0.0
    %515 = vmatprep.subr.mxu0 0.0
    %516 = vmatpush1.xpose.msra.mxu0 0.0
    %517 = vmatprep.subr.mxu0 0.0
    %518 = vmatpush1.xpose.msra.mxu0 %v485
    %519 = vmatprep.subr.mxu0 0.0
    %520 = vmatpush2.xpose.msra.mxu0 0.0
    %521 = vmatprep.subr.mxu0 0.0
    %522 = vmatpush2.xpose.msra.mxu0 0.0
    %523 = vmatprep.subr.mxu0 0.0
    %524 = vmatpush2.xpose.msra.mxu0 0.0
    %525 = vmatprep.subr.mxu0 0.0
    %526 = vmatpush2.xpose.msra.mxu0 0.0
    %527 = vmatprep.subr.mxu0 0.0
    %528 = vmatpush2.xpose.msra.mxu0 0.0
    %529 = vmatprep.subr.mxu0 0.0
    %530 = vmatpush2.xpose.msra.mxu0 0.0
    %531 = vmatprep.subr.mxu0 0.0
    %532 = vmatpush2.xpose.msra.mxu0 0.0
    %533 = vmatprep.subr.mxu0 0.0
    %534 = vmatpush2.xpose.msra.mxu0 0.0
    %535 = vmatprep.subr.mxu0 0.0
    %536 = vmatpush2.xpose.msra.mxu0 0.0
    %537 = vmatprep.subr.mxu0 0.0
    %538 = vmatpush2.xpose.msra.mxu0 0.0
    %539 = vmatprep.subr.mxu0 0.0
    %540 = vmatpush2.xpose.msra.mxu0 0.0
    %541 = vmatprep.subr.mxu0 0.0
    %542 = vmatpush2.xpose.msra.mxu0 0.0
    %543 = vmatprep.subr.mxu0 0.0
    %544 = vmatpush2.xpose.msra.mxu0 0.0
    %545 = vmatprep.subr.mxu0 0.0
    %546 = vmatpush2.xpose.msra.mxu0 0.0
    %547 = vmatprep.subr.mxu0 0.0
    %548 = vmatpush2.xpose.msra.mxu0 0.0
    %549 = vmatprep.subr.mxu0 0.0
    %550 = vmatpush2.xpose.msra.mxu0 0.0
    %551 = vmatprep.mubr.f32.mxu0 0.0
    %552 = vmatmul.mubr.f32.gmra.mxu0 %v482
    %v553 = vpop.f32.mrf.mxu0
    %v554 = vadd.f32 0.0, %v553
    %v555 = vpop.f32.mrf.mxu0
    %556 = vdwg.mxu0
    %v558 = vsel %vm480, %v251, 0
    %v561 = vsel %vm480, %v359, 0
    %563 = vmatprep.subr.mxu0 0.0
    %564 = vmatpush1.xpose.msra.mxu0 0.0
    %565 = vmatprep.subr.mxu0 0.0
    %566 = vmatpush1.xpose.msra.mxu0 0.0
    %567 = vmatprep.subr.mxu0 0.0
    %568 = vmatpush1.xpose.msra.mxu0 0.0
    %569 = vmatprep.subr.mxu0 0.0
    %570 = vmatpush1.xpose.msra.mxu0 0.0
    %571 = vmatprep.subr.mxu0 0.0
    %572 = vmatpush1.xpose.msra.mxu0 0.0
    %573 = vmatprep.subr.mxu0 0.0
    %574 = vmatpush1.xpose.msra.mxu0 0.0
    %575 = vmatprep.subr.mxu0 0.0
    %576 = vmatpush1.xpose.msra.mxu0 0.0
    %577 = vmatprep.subr.mxu0 0.0
    %578 = vmatpush1.xpose.msra.mxu0 0.0
    %579 = vmatprep.subr.mxu0 0.0
    %580 = vmatpush1.xpose.msra.mxu0 0.0
    %581 = vmatprep.subr.mxu0 0.0
    %582 = vmatpush1.xpose.msra.mxu0 0.0
    %583 = vmatprep.subr.mxu0 0.0
    %584 = vmatpush1.xpose.msra.mxu0 0.0
    %585 = vmatprep.subr.mxu0 0.0
    %586 = vmatpush1.xpose.msra.mxu0 0.0
    %587 = vmatprep.subr.mxu0 0.0
    %588 = vmatpush1.xpose.msra.mxu0 0.0
    %589 = vmatprep.subr.mxu0 0.0
    %590 = vmatpush1.xpose.msra.mxu0 0.0
    %591 = vmatprep.subr.mxu0 0.0
    %592 = vmatpush1.xpose.msra.mxu0 0.0
    %593 = vmatprep.subr.mxu0 0.0
    %594 = vmatpush1.xpose.msra.mxu0 %v561
    %595 = vmatprep.subr.mxu0 0.0
    %596 = vmatpush2.xpose.msra.mxu0 0.0
    %597 = vmatprep.subr.mxu0 0.0
    %598 = vmatpush2.xpose.msra.mxu0 0.0
    %599 = vmatprep.subr.mxu0 0.0
    %600 = vmatpush2.xpose.msra.mxu0 0.0
    %601 = vmatprep.subr.mxu0 0.0
    %602 = vmatpush2.xpose.msra.mxu0 0.0
    %603 = vmatprep.subr.mxu0 0.0
    %604 = vmatpush2.xpose.msra.mxu0 0.0
    %605 = vmatprep.subr.mxu0 0.0
    %606 = vmatpush2.xpose.msra.mxu0 0.0
    %607 = vmatprep.subr.mxu0 0.0
    %608 = vmatpush2.xpose.msra.mxu0 0.0
    %609 = vmatprep.subr.mxu0 0.0
    %610 = vmatpush2.xpose.msra.mxu0 0.0
    %611 = vmatprep.subr.mxu0 0.0
    %612 = vmatpush2.xpose.msra.mxu0 0.0
    %613 = vmatprep.subr.mxu0 0.0
    %614 = vmatpush2.xpose.msra.mxu0 0.0
    %615 = vmatprep.subr.mxu0 0.0
    %616 = vmatpush2.xpose.msra.mxu0 0.0
    %617 = vmatprep.subr.mxu0 0.0
    %618 = vmatpush2.xpose.msra.mxu0 0.0
    %619 = vmatprep.subr.mxu0 0.0
    %620 = vmatpush2.xpose.msra.mxu0 0.0
    %621 = vmatprep.subr.mxu0 0.0
    %622 = vmatpush2.xpose.msra.mxu0 0.0
    %623 = vmatprep.subr.mxu0 0.0
    %624 = vmatpush2.xpose.msra.mxu0 0.0
    %625 = vmatprep.subr.mxu0 0.0
    %626 = vmatpush2.xpose.msra.mxu0 0.0
    %627 = vmatprep.mubr.f32.mxu0 0.0
    %628 = vmatmul.mubr.f32.gmra.mxu0 %v558
    %v629 = vpop.f32.mrf.mxu0
    %v630 = vadd.f32 0.0, %v629
    %v631 = vpop.f32.mrf.mxu0
    %632 = vdwg.mxu0
    %v634 = vsel %vm480, %v256, 0
    %v637 = vsel %vm480, %v364, 0
    %639 = vmatprep.subr.mxu0 0.0
    %640 = vmatpush1.xpose.msra.mxu0 0.0
    %641 = vmatprep.subr.mxu0 0.0
    %642 = vmatpush1.xpose.msra.mxu0 0.0
    %643 = vmatprep.subr.mxu0 0.0
    %644 = vmatpush1.xpose.msra.mxu0 0.0
    %645 = vmatprep.subr.mxu0 0.0
    %646 = vmatpush1.xpose.msra.mxu0 0.0
    %647 = vmatprep.subr.mxu0 0.0
    %648 = vmatpush1.xpose.msra.mxu0 0.0
    %649 = vmatprep.subr.mxu0 0.0
    %650 = vmatpush1.xpose.msra.mxu0 0.0
    %651 = vmatprep.subr.mxu0 0.0
    %652 = vmatpush1.xpose.msra.mxu0 0.0
    %653 = vmatprep.subr.mxu0 0.0
    %654 = vmatpush1.xpose.msra.mxu0 0.0
    %655 = vmatprep.subr.mxu0 0.0
    %656 = vmatpush1.xpose.msra.mxu0 0.0
    %657 = vmatprep.subr.mxu0 0.0
    %658 = vmatpush1.xpose.msra.mxu0 0.0
    %659 = vmatprep.subr.mxu0 0.0
    %660 = vmatpush1.xpose.msra.mxu0 0.0
    %661 = vmatprep.subr.mxu0 0.0
    %662 = vmatpush1.xpose.msra.mxu0 0.0
    %663 = vmatprep.subr.mxu0 0.0
    %664 = vmatpush1.xpose.msra.mxu0 0.0
    %665 = vmatprep.subr.mxu0 0.0
    %666 = vmatpush1.xpose.msra.mxu0 0.0
    %667 = vmatprep.subr.mxu0 0.0
    %668 = vmatpush1.xpose.msra.mxu0 0.0
    %669 = vmatprep.subr.mxu0 0.0
    %670 = vmatpush1.xpose.msra.mxu0 %v637
    %671 = vmatprep.subr.mxu0 0.0
    %672 = vmatpush2.xpose.msra.mxu0 0.0
    %673 = vmatprep.subr.mxu0 0.0
    %674 = vmatpush2.xpose.msra.mxu0 0.0
    %675 = vmatprep.subr.mxu0 0.0
    %676 = vmatpush2.xpose.msra.mxu0 0.0
    %677 = vmatprep.subr.mxu0 0.0
    %678 = vmatpush2.xpose.msra.mxu0 0.0
    %679 = vmatprep.subr.mxu0 0.0
    %680 = vmatpush2.xpose.msra.mxu0 0.0
    %681 = vmatprep.subr.mxu0 0.0
    %682 = vmatpush2.xpose.msra.mxu0 0.0
    %683 = vmatprep.subr.mxu0 0.0
    %684 = vmatpush2.xpose.msra.mxu0 0.0
    %685 = vmatprep.subr.mxu0 0.0
    %686 = vmatpush2.xpose.msra.mxu0 0.0
    %687 = vmatprep.subr.mxu0 0.0
    %688 = vmatpush2.xpose.msra.mxu0 0.0
    %689 = vmatprep.subr.mxu0 0.0
    %690 = vmatpush2.xpose.msra.mxu0 0.0
    %691 = vmatprep.subr.mxu0 0.0
    %692 = vmatpush2.xpose.msra.mxu0 0.0
    %693 = vmatprep.subr.mxu0 0.0
    %694 = vmatpush2.xpose.msra.mxu0 0.0
    %695 = vmatprep.subr.mxu0 0.0
    %696 = vmatpush2.xpose.msra.mxu0 0.0
    %697 = vmatprep.subr.mxu0 0.0
    %698 = vmatpush2.xpose.msra.mxu0 0.0
    %699 = vmatprep.subr.mxu0 0.0
    %700 = vmatpush2.xpose.msra.mxu0 0.0
    %701 = vmatprep.subr.mxu0 0.0
    %702 = vmatpush2.xpose.msra.mxu0 0.0
    %703 = vmatprep.mubr.f32.mxu0 0.0
    %704 = vmatmul.mubr.f32.gmra.mxu0 %v634
    %v705 = vpop.f32.mrf.mxu0
    %v706 = vadd.f32 0.0, %v705
    %v707 = vpop.f32.mrf.mxu0
    %708 = vdwg.mxu0
    %v710 = vsel %vm480, %v261, 0
    %v713 = vsel %vm480, %v369, 0
    %715 = vmatprep.subr.mxu0 0.0
    %716 = vmatpush1.xpose.msra.mxu0 0.0
    %717 = vmatprep.subr.mxu0 0.0
    %718 = vmatpush1.xpose.msra.mxu0 0.0
    %719 = vmatprep.subr.mxu0 0.0
    %720 = vmatpush1.xpose.msra.mxu0 0.0
    %721 = vmatprep.subr.mxu0 0.0
    %722 = vmatpush1.xpose.msra.mxu0 0.0
    %723 = vmatprep.subr.mxu0 0.0
    %724 = vmatpush1.xpose.msra.mxu0 0.0
    %725 = vmatprep.subr.mxu0 0.0
    %726 = vmatpush1.xpose.msra.mxu0 0.0
    %727 = vmatprep.subr.mxu0 0.0
    %728 = vmatpush1.xpose.msra.mxu0 0.0
    %729 = vmatprep.subr.mxu0 0.0
    %730 = vmatpush1.xpose.msra.mxu0 0.0
    %731 = vmatprep.subr.mxu0 0.0
    %732 = vmatpush1.xpose.msra.mxu0 0.0
    %733 = vmatprep.subr.mxu0 0.0
    %734 = vmatpush1.xpose.msra.mxu0 0.0
    %735 = vmatprep.subr.mxu0 0.0
    %736 = vmatpush1.xpose.msra.mxu0 0.0
    %737 = vmatprep.subr.mxu0 0.0
    %738 = vmatpush1.xpose.msra.mxu0 0.0
    %739 = vmatprep.subr.mxu0 0.0
    %740 = vmatpush1.xpose.msra.mxu0 0.0
    %741 = vmatprep.subr.mxu0 0.0
    %742 = vmatpush1.xpose.msra.mxu0 0.0
    %743 = vmatprep.subr.mxu0 0.0
    %744 = vmatpush1.xpose.msra.mxu0 0.0
    %745 = vmatprep.subr.mxu0 0.0
    %746 = vmatpush1.xpose.msra.mxu0 %v713
    %747 = vmatprep.subr.mxu0 0.0
    %748 = vmatpush2.xpose.msra.mxu0 0.0
    %749 = vmatprep.subr.mxu0 0.0
    %750 = vmatpush2.xpose.msra.mxu0 0.0
    %751 = vmatprep.subr.mxu0 0.0
    %752 = vmatpush2.xpose.msra.mxu0 0.0
    %753 = vmatprep.subr.mxu0 0.0
    %754 = vmatpush2.xpose.msra.mxu0 0.0
    %755 = vmatprep.subr.mxu0 0.0
    %756 = vmatpush2.xpose.msra.mxu0 0.0
    %757 = vmatprep.subr.mxu0 0.0
    %758 = vmatpush2.xpose.msra.mxu0 0.0
    %759 = vmatprep.subr.mxu0 0.0
    %760 = vmatpush2.xpose.msra.mxu0 0.0
    %761 = vmatprep.subr.mxu0 0.0
    %762 = vmatpush2.xpose.msra.mxu0 0.0
    %763 = vmatprep.subr.mxu0 0.0
    %764 = vmatpush2.xpose.msra.mxu0 0.0
    %765 = vmatprep.subr.mxu0 0.0
    %766 = vmatpush2.xpose.msra.mxu0 0.0
    %767 = vmatprep.subr.mxu0 0.0
    %768 = vmatpush2.xpose.msra.mxu0 0.0
    %769 = vmatprep.subr.mxu0 0.0
    %770 = vmatpush2.xpose.msra.mxu0 0.0
    %771 = vmatprep.subr.mxu0 0.0
    %772 = vmatpush2.xpose.msra.mxu0 0.0
    %773 = vmatprep.subr.mxu0 0.0
    %774 = vmatpush2.xpose.msra.mxu0 0.0
    %775 = vmatprep.subr.mxu0 0.0
    %776 = vmatpush2.xpose.msra.mxu0 0.0
    %777 = vmatprep.subr.mxu0 0.0
    %778 = vmatpush2.xpose.msra.mxu0 0.0
    %779 = vmatprep.mubr.f32.mxu0 0.0
    %780 = vmatmul.mubr.f32.gmra.mxu0 %v710
    %v781 = vpop.f32.mrf.mxu0
    %v782 = vadd.f32 0.0, %v781
    %v783 = vpop.f32.mrf.mxu0
    %784 = vdwg.mxu0
    %vm785 = vcmask 64512
    %v786 = vsel %vm785, %v554, -inf
    %787 = vmax.xlane.f32.xlu0 %v786
    %v788 = vpop.xlane.xlu0 %787
    %v789 = vsel %vm785, %v630, -inf
    %790 = vmax.xlane.f32.xlu0 %v789
    %v791 = vpop.xlane.xlu0 %790
    %v792 = vsel %vm785, %v706, -inf
    %793 = vmax.xlane.f32.xlu0 %v792
    %v794 = vpop.xlane.xlu0 %793
    %v795 = vsel %vm785, %v782, -inf
    %796 = vmax.xlane.f32.xlu0 %v795
    %v797 = vpop.xlane.xlu0 %796
    %v798 = vsub.f32 %v554, %v788
    %v799 = vsub.f32 %v630, %v791
    %v800 = vsub.f32 %v706, %v794
    %v801 = vsub.f32 %v782, %v797
    %v802 = vmul.f32 %v798, 1.442695
    %v803 = vpow.pop %v802
    %v804 = vmul.f32 %v799, 1.442695
    %v805 = vpow.pop %v804
    %v806 = vmul.f32 %v800, 1.442695
    %v807 = vpow.pop %v806
    %v808 = vmul.f32 %v801, 1.442695
    %v809 = vpow.pop %v808
    %v810 = vsel %vm785, %v803, 0.0
    %811 = vadd.xlane.f32.xlu0 %v810
    %v812 = vpop.xlane.xlu0 %811
    %v813 = vsel %vm785, %v805, 0.0
    %814 = vadd.xlane.f32.xlu0 %v813
    %v815 = vpop.xlane.xlu0 %814
    %v816 = vsel %vm785, %v807, 0.0
    %817 = vadd.xlane.f32.xlu0 %v816
    %v818 = vpop.xlane.xlu0 %817
    %v819 = vsel %vm785, %v809, 0.0
    %820 = vadd.xlane.f32.xlu0 %v819
    %v821 = vpop.xlane.xlu0 %820
    %v822 = vrcp.pop %v812
    %v823 = vrcp.pop %v815
    %v824 = vrcp.pop %v818
    %v825 = vrcp.pop %v821
    %v826 = vmul.f32 %v803, %v822
    %v827 = vmul.f32 %v805, %v823
    %v828 = vmul.f32 %v807, %v824
    %v829 = vmul.f32 %v809, %v825
    %v831 = vsel %vm785, %v826, 0
    %833 = vmatprep.subr.mxu0 0.0
    %834 = vmatpush1.msra.mxu0 0.0
    %835 = vmatprep.subr.mxu0 0.0
    %836 = vmatpush1.msra.mxu0 0.0
    %837 = vmatprep.subr.mxu0 0.0
    %838 = vmatpush1.msra.mxu0 0.0
    %839 = vmatprep.subr.mxu0 0.0
    %840 = vmatpush1.msra.mxu0 0.0
    %841 = vmatprep.subr.mxu0 0.0
    %842 = vmatpush1.msra.mxu0 0.0
    %843 = vmatprep.subr.mxu0 0.0
    %844 = vmatpush1.msra.mxu0 0.0
    %845 = vmatprep.subr.mxu0 0.0
    %846 = vmatpush1.msra.mxu0 0.0
    %847 = vmatprep.subr.mxu0 0.0
    %848 = vmatpush1.msra.mxu0 0.0
    %849 = vmatprep.subr.mxu0 0.0
    %850 = vmatpush1.msra.mxu0 0.0
    %851 = vmatprep.subr.mxu0 0.0
    %852 = vmatpush1.msra.mxu0 0.0
    %853 = vmatprep.subr.mxu0 0.0
    %854 = vmatpush1.msra.mxu0 0.0
    %855 = vmatprep.subr.mxu0 0.0
    %856 = vmatpush1.msra.mxu0 0.0
    %857 = vmatprep.subr.mxu0 0.0
    %858 = vmatpush1.msra.mxu0 0.0
    %859 = vmatprep.subr.mxu0 0.0
    %860 = vmatpush1.msra.mxu0 0.0
    %861 = vmatprep.subr.mxu0 0.0
    %862 = vmatpush1.msra.mxu0 0.0
    %863 = vmatprep.subr.mxu0 0.0
    %864 = vmatpush1.msra.mxu0 %v462
    %865 = vmatprep.subr.mxu0 0.0
    %866 = vmatpush2.msra.mxu0 0.0
    %867 = vmatprep.subr.mxu0 0.0
    %868 = vmatpush2.msra.mxu0 0.0
    %869 = vmatprep.subr.mxu0 0.0
    %870 = vmatpush2.msra.mxu0 0.0
    %871 = vmatprep.subr.mxu0 0.0
    %872 = vmatpush2.msra.mxu0 0.0
    %873 = vmatprep.subr.mxu0 0.0
    %874 = vmatpush2.msra.mxu0 0.0
    %875 = vmatprep.subr.mxu0 0.0
    %876 = vmatpush2.msra.mxu0 0.0
    %877 = vmatprep.subr.mxu0 0.0
    %878 = vmatpush2.msra.mxu0 0.0
    %879 = vmatprep.subr.mxu0 0.0
    %880 = vmatpush2.msra.mxu0 0.0
    %881 = vmatprep.subr.mxu0 0.0
    %882 = vmatpush2.msra.mxu0 0.0
    %883 = vmatprep.subr.mxu0 0.0
    %884 = vmatpush2.msra.mxu0 0.0
    %885 = vmatprep.subr.mxu0 0.0
    %886 = vmatpush2.msra.mxu0 0.0
    %887 = vmatprep.subr.mxu0 0.0
    %888 = vmatpush2.msra.mxu0 0.0
    %889 = vmatprep.subr.mxu0 0.0
    %890 = vmatpush2.msra.mxu0 0.0
    %891 = vmatprep.subr.mxu0 0.0
    %892 = vmatpush2.msra.mxu0 0.0
    %893 = vmatprep.subr.mxu0 0.0
    %894 = vmatpush2.msra.mxu0 0.0
    %895 = vmatprep.subr.mxu0 0.0
    %896 = vmatpush2.msra.mxu0 0.0
    %897 = vmatprep.mubr.f32.mxu0 0.0
    %898 = vmatmul.mubr.f32.gmra.mxu0 %v831
    %v899 = vpop.f32.mrf.mxu0
    %v900 = vadd.f32 0.0, %v899
    %v901 = vpop.f32.mrf.mxu0
    %902 = vdwg.mxu0
    %v904 = vsel %vm785, %v827, 0
    %906 = vmatprep.subr.mxu0 0.0
    %907 = vmatpush1.msra.mxu0 0.0
    %908 = vmatprep.subr.mxu0 0.0
    %909 = vmatpush1.msra.mxu0 0.0
    %910 = vmatprep.subr.mxu0 0.0
    %911 = vmatpush1.msra.mxu0 0.0
    %912 = vmatprep.subr.mxu0 0.0
    %913 = vmatpush1.msra.mxu0 0.0
    %914 = vmatprep.subr.mxu0 0.0
    %915 = vmatpush1.msra.mxu0 0.0
    %916 = vmatprep.subr.mxu0 0.0
    %917 = vmatpush1.msra.mxu0 0.0
    %918 = vmatprep.subr.mxu0 0.0
    %919 = vmatpush1.msra.mxu0 0.0
    %920 = vmatprep.subr.mxu0 0.0
    %921 = vmatpush1.msra.mxu0 0.0
    %922 = vmatprep.subr.mxu0 0.0
    %923 = vmatpush1.msra.mxu0 0.0
    %924 = vmatprep.subr.mxu0 0.0
    %925 = vmatpush1.msra.mxu0 0.0
    %926 = vmatprep.subr.mxu0 0.0
    %927 = vmatpush1.msra.mxu0 0.0
    %928 = vmatprep.subr.mxu0 0.0
    %929 = vmatpush1.msra.mxu0 0.0
    %930 = vmatprep.subr.mxu0 0.0
    %931 = vmatpush1.msra.mxu0 0.0
    %932 = vmatprep.subr.mxu0 0.0
    %933 = vmatpush1.msra.mxu0 0.0
    %934 = vmatprep.subr.mxu0 0.0
    %935 = vmatpush1.msra.mxu0 0.0
    %936 = vmatprep.subr.mxu0 0.0
    %937 = vmatpush1.msra.mxu0 %v467
    %938 = vmatprep.subr.mxu0 0.0
    %939 = vmatpush2.msra.mxu0 0.0
    %940 = vmatprep.subr.mxu0 0.0
    %941 = vmatpush2.msra.mxu0 0.0
    %942 = vmatprep.subr.mxu0 0.0
    %943 = vmatpush2.msra.mxu0 0.0
    %944 = vmatprep.subr.mxu0 0.0
    %945 = vmatpush2.msra.mxu0 0.0
    %946 = vmatprep.subr.mxu0 0.0
    %947 = vmatpush2.msra.mxu0 0.0
    %948 = vmatprep.subr.mxu0 0.0
    %949 = vmatpush2.msra.mxu0 0.0
    %950 = vmatprep.subr.mxu0 0.0
    %951 = vmatpush2.msra.mxu0 0.0
    %952 = vmatprep.subr.mxu0 0.0
    %953 = vmatpush2.msra.mxu0 0.0
    %954 = vmatprep.subr.mxu0 0.0
    %955 = vmatpush2.msra.mxu0 0.0
    %956 = vmatprep.subr.mxu0 0.0
    %957 = vmatpush2.msra.mxu0 0.0
    %958 = vmatprep.subr.mxu0 0.0
    %959 = vmatpush2.msra.mxu0 0.0
    %960 = vmatprep.subr.mxu0 0.0
    %961 = vmatpush2.msra.mxu0 0.0
    %962 = vmatprep.subr.mxu0 0.0
    %963 = vmatpush2.msra.mxu0 0.0
    %964 = vmatprep.subr.mxu0 0.0
    %965 = vmatpush2.msra.mxu0 0.0
    %966 = vmatprep.subr.mxu0 0.0
    %967 = vmatpush2.msra.mxu0 0.0
    %968 = vmatprep.subr.mxu0 0.0
    %969 = vmatpush2.msra.mxu0 0.0
    %970 = vmatprep.mubr.f32.mxu0 0.0
    %971 = vmatmul.mubr.f32.gmra.mxu0 %v904
    %v972 = vpop.f32.mrf.mxu0
    %v973 = vadd.f32 0.0, %v972
    %v974 = vpop.f32.mrf.mxu0
    %975 = vdwg.mxu0
    %v977 = vsel %vm785, %v828, 0
    %979 = vmatprep.subr.mxu0 0.0
    %980 = vmatpush1.msra.mxu0 0.0
    %981 = vmatprep.subr.mxu0 0.0
    %982 = vmatpush1.msra.mxu0 0.0
    %983 = vmatprep.subr.mxu0 0.0
    %984 = vmatpush1.msra.mxu0 0.0
    %985 = vmatprep.subr.mxu0 0.0
    %986 = vmatpush1.msra.mxu0 0.0
    %987 = vmatprep.subr.mxu0 0.0
    %988 = vmatpush1.msra.mxu0 0.0
    %989 = vmatprep.subr.mxu0 0.0
    %990 = vmatpush1.msra.mxu0 0.0
    %991 = vmatprep.subr.mxu0 0.0
    %992 = vmatpush1.msra.mxu0 0.0
    %993 = vmatprep.subr.mxu0 0.0
    %994 = vmatpush1.msra.mxu0 0.0
    %995 = vmatprep.subr.mxu0 0.0
    %996 = vmatpush1.msra.mxu0 0.0
    %997 = vmatprep.subr.mxu0 0.0
    %998 = vmatpush1.msra.mxu0 0.0
    %999 = vmatprep.subr.mxu0 0.0
    %1000 = vmatpush1.msra.mxu0 0.0
    %1001 = vmatprep.subr.mxu0 0.0
    %1002 = vmatpush1.msra.mxu0 0.0
    %1003 = vmatprep.subr.mxu0 0.0
    %1004 = vmatpush1.msra.mxu0 0.0
    %1005 = vmatprep.subr.mxu0 0.0
    %1006 = vmatpush1.msra.mxu0 0.0
    %1007 = vmatprep.subr.mxu0 0.0
    %1008 = vmatpush1.msra.mxu0 0.0
    %1009 = vmatprep.subr.mxu0 0.0
    %1010 = vmatpush1.msra.mxu0 %v472
    %1011 = vmatprep.subr.mxu0 0.0
    %1012 = vmatpush2.msra.mxu0 0.0
    %1013 = vmatprep.subr.mxu0 0.0
    %1014 = vmatpush2.msra.mxu0 0.0
    %1015 = vmatprep.subr.mxu0 0.0
    %1016 = vmatpush2.msra.mxu0 0.0
    %1017 = vmatprep.subr.mxu0 0.0
    %1018 = vmatpush2.msra.mxu0 0.0
    %1019 = vmatprep.subr.mxu0 0.0
    %1020 = vmatpush2.msra.mxu0 0.0
    %1021 = vmatprep.subr.mxu0 0.0
    %1022 = vmatpush2.msra.mxu0 0.0
    %1023 = vmatprep.subr.mxu0 0.0
    %1024 = vmatpush2.msra.mxu0 0.0
    %1025 = vmatprep.subr.mxu0 0.0
    %1026 = vmatpush2.msra.mxu0 0.0
    %1027 = vmatprep.subr.mxu0 0.0
    %1028 = vmatpush2.msra.mxu0 0.0
    %1029 = vmatprep.subr.mxu0 0.0
    %1030 = vmatpush2.msra.mxu0 0.0
    %1031 = vmatprep.subr.mxu0 0.0
    %1032 = vmatpush2.msra.mxu0 0.0
    %1033 = vmatprep.subr.mxu0 0.0
    %1034 = vmatpush2.msra.mxu0 0.0
    %1035 = vmatprep.subr.mxu0 0.0
    %1036 = vmatpush2.msra.mxu0 0.0
    %1037 = vmatprep.subr.mxu0 0.0
    %1038 = vmatpush2.msra.mxu0 0.0
    %1039 = vmatprep.subr.mxu0 0.0
    %1040 = vmatpush2.msra.mxu0 0.0
    %1041 = vmatprep.subr.mxu0 0.0
    %1042 = vmatpush2.msra.mxu0 0.0
    %1043 = vmatprep.mubr.f32.mxu0 0.0
    %1044 = vmatmul.mubr.f32.gmra.mxu0 %v977
    %v1045 = vpop.f32.mrf.mxu0
    %v1046 = vadd.f32 0.0, %v1045
    %v1047 = vpop.f32.mrf.mxu0
    %1048 = vdwg.mxu0
    %v1050 = vsel %vm785, %v829, 0
    %1052 = vmatprep.subr.mxu0 0.0
    %1053 = vmatpush1.msra.mxu0 0.0
    %1054 = vmatprep.subr.mxu0 0.0
    %1055 = vmatpush1.msra.mxu0 0.0
    %1056 = vmatprep.subr.mxu0 0.0
    %1057 = vmatpush1.msra.mxu0 0.0
    %1058 = vmatprep.subr.mxu0 0.0
    %1059 = vmatpush1.msra.mxu0 0.0
    %1060 = vmatprep.subr.mxu0 0.0
    %1061 = vmatpush1.msra.mxu0 0.0
    %1062 = vmatprep.subr.mxu0 0.0
    %1063 = vmatpush1.msra.mxu0 0.0
    %1064 = vmatprep.subr.mxu0 0.0
    %1065 = vmatpush1.msra.mxu0 0.0
    %1066 = vmatprep.subr.mxu0 0.0
    %1067 = vmatpush1.msra.mxu0 0.0
    %1068 = vmatprep.subr.mxu0 0.0
    %1069 = vmatpush1.msra.mxu0 0.0
    %1070 = vmatprep.subr.mxu0 0.0
    %1071 = vmatpush1.msra.mxu0 0.0
    %1072 = vmatprep.subr.mxu0 0.0
    %1073 = vmatpush1.msra.mxu0 0.0
    %1074 = vmatprep.subr.mxu0 0.0
    %1075 = vmatpush1.msra.mxu0 0.0
    %1076 = vmatprep.subr.mxu0 0.0
    %1077 = vmatpush1.msra.mxu0 0.0
    %1078 = vmatprep.subr.mxu0 0.0
    %1079 = vmatpush1.msra.mxu0 0.0
    %1080 = vmatprep.subr.mxu0 0.0
    %1081 = vmatpush1.msra.mxu0 0.0
    %1082 = vmatprep.subr.mxu0 0.0
    %1083 = vmatpush1.msra.mxu0 %v477
    %1084 = vmatprep.subr.mxu0 0.0
    %1085 = vmatpush2.msra.mxu0 0.0
    %1086 = vmatprep.subr.mxu0 0.0
    %1087 = vmatpush2.msra.mxu0 0.0
    %1088 = vmatprep.subr.mxu0 0.0
    %1089 = vmatpush2.msra.mxu0 0.0
    %1090 = vmatprep.subr.mxu0 0.0
    %1091 = vmatpush2.msra.mxu0 0.0
    %1092 = vmatprep.subr.mxu0 0.0
    %1093 = vmatpush2.msra.mxu0 0.0
    %1094 = vmatprep.subr.mxu0 0.0
    %1095 = vmatpush2.msra.mxu0 0.0
    %1096 = vmatprep.subr.mxu0 0.0
    %1097 = vmatpush2.msra.mxu0 0.0
    %1098 = vmatprep.subr.mxu0 0.0
    %1099 = vmatpush2.msra.mxu0 0.0
    %1100 = vmatprep.subr.mxu0 0.0
    %1101 = vmatpush2.msra.mxu0 0.0
    %1102 = vmatprep.subr.mxu0 0.0
    %1103 = vmatpush2.msra.mxu0 0.0
    %1104 = vmatprep.subr.mxu0 0.0
    %1105 = vmatpush2.msra.mxu0 0.0
    %1106 = vmatprep.subr.mxu0 0.0
    %1107 = vmatpush2.msra.mxu0 0.0
    %1108 = vmatprep.subr.mxu0 0.0
    %1109 = vmatpush2.msra.mxu0 0.0
    %1110 = vmatprep.subr.mxu0 0.0
    %1111 = vmatpush2.msra.mxu0 0.0
    %1112 = vmatprep.subr.mxu0 0.0
    %1113 = vmatpush2.msra.mxu0 0.0
    %1114 = vmatprep.subr.mxu0 0.0
    %1115 = vmatpush2.msra.mxu0 0.0
    %1116 = vmatprep.mubr.f32.mxu0 0.0
    %1117 = vmatmul.mubr.f32.gmra.mxu0 %v1050
    %v1118 = vpop.f32.mrf.mxu0
    %v1119 = vadd.f32 0.0, %v1118
    %v1120 = vpop.f32.mrf.mxu0
    %1121 = vdwg.mxu0
    %1122 = vrot.lane.b32.xlu0 %v246, 96
    %v1123 = vpop.permute.xlu0 %1122
    %1124 = vrot.lane.b32.xlu0 %v354, 96
    %v1125 = vpop.permute.xlu0 %1124
    %v1126 = vsel %vm480, %v1123, 0
    %v1128 = vsel %vm480, %v1125, 0
    %1130 = vmatprep.subr.mxu0 0.0
    %1131 = vmatpush1.xpose.msra.mxu0 0.0
    %1132 = vmatprep.subr.mxu0 0.0
    %1133 = vmatpush1.xpose.msra.mxu0 0.0
    %1134 = vmatprep.subr.mxu0 0.0
    %1135 = vmatpush1.xpose.msra.mxu0 0.0
    %1136 = vmatprep.subr.mxu0 0.0
    %1137 = vmatpush1.xpose.msra.mxu0 0.0
    %1138 = vmatprep.subr.mxu0 0.0
    %1139 = vmatpush1.xpose.msra.mxu0 0.0
    %1140 = vmatprep.subr.mxu0 0.0
    %1141 = vmatpush1.xpose.msra.mxu0 0.0
    %1142 = vmatprep.subr.mxu0 0.0
    %1143 = vmatpush1.xpose.msra.mxu0 0.0
    %1144 = vmatprep.subr.mxu0 0.0
    %1145 = vmatpush1.xpose.msra.mxu0 0.0
    %1146 = vmatprep.subr.mxu0 0.0
    %1147 = vmatpush1.xpose.msra.mxu0 0.0
    %1148 = vmatprep.subr.mxu0 0.0
    %1149 = vmatpush1.xpose.msra.mxu0 0.0
    %1150 = vmatprep.subr.mxu0 0.0
    %1151 = vmatpush1.xpose.msra.mxu0 0.0
    %1152 = vmatprep.subr.mxu0 0.0
    %1153 = vmatpush1.xpose.msra.mxu0 0.0
    %1154 = vmatprep.subr.mxu0 0.0
    %1155 = vmatpush1.xpose.msra.mxu0 0.0
    %1156 = vmatprep.subr.mxu0 0.0
    %1157 = vmatpush1.xpose.msra.mxu0 0.0
    %1158 = vmatprep.subr.mxu0 0.0
    %1159 = vmatpush1.xpose.msra.mxu0 0.0
    %1160 = vmatprep.subr.mxu0 0.0
    %1161 = vmatpush1.xpose.msra.mxu0 %v1128
    %1162 = vmatprep.subr.mxu0 0.0
    %1163 = vmatpush2.xpose.msra.mxu0 0.0
    %1164 = vmatprep.subr.mxu0 0.0
    %1165 = vmatpush2.xpose.msra.mxu0 0.0
    %1166 = vmatprep.subr.mxu0 0.0
    %1167 = vmatpush2.xpose.msra.mxu0 0.0
    %1168 = vmatprep.subr.mxu0 0.0
    %1169 = vmatpush2.xpose.msra.mxu0 0.0
    %1170 = vmatprep.subr.mxu0 0.0
    %1171 = vmatpush2.xpose.msra.mxu0 0.0
    %1172 = vmatprep.subr.mxu0 0.0
    %1173 = vmatpush2.xpose.msra.mxu0 0.0
    %1174 = vmatprep.subr.mxu0 0.0
    %1175 = vmatpush2.xpose.msra.mxu0 0.0
    %1176 = vmatprep.subr.mxu0 0.0
    %1177 = vmatpush2.xpose.msra.mxu0 0.0
    %1178 = vmatprep.subr.mxu0 0.0
    %1179 = vmatpush2.xpose.msra.mxu0 0.0
    %1180 = vmatprep.subr.mxu0 0.0
    %1181 = vmatpush2.xpose.msra.mxu0 0.0
    %1182 = vmatprep.subr.mxu0 0.0
    %1183 = vmatpush2.xpose.msra.mxu0 0.0
    %1184 = vmatprep.subr.mxu0 0.0
    %1185 = vmatpush2.xpose.msra.mxu0 0.0
    %1186 = vmatprep.subr.mxu0 0.0
    %1187 = vmatpush2.xpose.msra.mxu0 0.0
    %1188 = vmatprep.subr.mxu0 0.0
    %1189 = vmatpush2.xpose.msra.mxu0 0.0
    %1190 = vmatprep.subr.mxu0 0.0
    %1191 = vmatpush2.xpose.msra.mxu0 0.0
    %1192 = vmatprep.subr.mxu0 0.0
    %1193 = vmatpush2.xpose.msra.mxu0 0.0
    %1194 = vmatprep.mubr.f32.mxu0 0.0
    %1195 = vmatmul.mubr.f32.gmra.mxu0 %v1126
    %v1196 = vpop.f32.mrf.mxu0
    %v1197 = vadd.f32 0.0, %v1196
    %v1198 = vpop.f32.mrf.mxu0
    %1199 = vdwg.mxu0
    %1200 = vrot.lane.b32.xlu0 %v251, 96
    %v1201 = vpop.permute.xlu0 %1200
    %1202 = vrot.lane.b32.xlu0 %v359, 96
    %v1203 = vpop.permute.xlu0 %1202
    %v1204 = vsel %vm480, %v1201, 0
    %v1206 = vsel %vm480, %v1203, 0
    %1208 = vmatprep.subr.mxu0 0.0
    %1209 = vmatpush1.xpose.msra.mxu0 0.0
    %1210 = vmatprep.subr.mxu0 0.0
    %1211 = vmatpush1.xpose.msra.mxu0 0.0
    %1212 = vmatprep.subr.mxu0 0.0
    %1213 = vmatpush1.xpose.msra.mxu0 0.0
    %1214 = vmatprep.subr.mxu0 0.0
    %1215 = vmatpush1.xpose.msra.mxu0 0.0
    %1216 = vmatprep.subr.mxu0 0.0
    %1217 = vmatpush1.xpose.msra.mxu0 0.0
    %1218 = vmatprep.subr.mxu0 0.0
    %1219 = vmatpush1.xpose.msra.mxu0 0.0
    %1220 = vmatprep.subr.mxu0 0.0
    %1221 = vmatpush1.xpose.msra.mxu0 0.0
    %1222 = vmatprep.subr.mxu0 0.0
    %1223 = vmatpush1.xpose.msra.mxu0 0.0
    %1224 = vmatprep.subr.mxu0 0.0
    %1225 = vmatpush1.xpose.msra.mxu0 0.0
    %1226 = vmatprep.subr.mxu0 0.0
    %1227 = vmatpush1.xpose.msra.mxu0 0.0
    %1228 = vmatprep.subr.mxu0 0.0
    %1229 = vmatpush1.xpose.msra.mxu0 0.0
    %1230 = vmatprep.subr.mxu0 0.0
    %1231 = vmatpush1.xpose.msra.mxu0 0.0
    %1232 = vmatprep.subr.mxu0 0.0
    %1233 = vmatpush1.xpose.msra.mxu0 0.0
    %1234 = vmatprep.subr.mxu0 0.0
    %1235 = vmatpush1.xpose.msra.mxu0 0.0
    %1236 = vmatprep.subr.mxu0 0.0
    %1237 = vmatpush1.xpose.msra.mxu0 0.0
    %1238 = vmatprep.subr.mxu0 0.0
    %1239 = vmatpush1.xpose.msra.mxu0 %v1206
    %1240 = vmatprep.subr.mxu0 0.0
    %1241 = vmatpush2.xpose.msra.mxu0 0.0
    %1242 = vmatprep.subr.mxu0 0.0
    %1243 = vmatpush2.xpose.msra.mxu0 0.0
    %1244 = vmatprep.subr.mxu0 0.0
    %1245 = vmatpush2.xpose.msra.mxu0 0.0
    %1246 = vmatprep.subr.mxu0 0.0
    %1247 = vmatpush2.xpose.msra.mxu0 0.0
    %1248 = vmatprep.subr.mxu0 0.0
    %1249 = vmatpush2.xpose.msra.mxu0 0.0
    %1250 = vmatprep.subr.mxu0 0.0
    %1251 = vmatpush2.xpose.msra.mxu0 0.0
    %1252 = vmatprep.subr.mxu0 0.0
    %1253 = vmatpush2.xpose.msra.mxu0 0.0
    %1254 = vmatprep.subr.mxu0 0.0
    %1255 = vmatpush2.xpose.msra.mxu0 0.0
    %1256 = vmatprep.subr.mxu0 0.0
    %1257 = vmatpush2.xpose.msra.mxu0 0.0
    %1258 = vmatprep.subr.mxu0 0.0
    %1259 = vmatpush2.xpose.msra.mxu0 0.0
    %1260 = vmatprep.subr.mxu0 0.0
    %1261 = vmatpush2.xpose.msra.mxu0 0.0
    %1262 = vmatprep.subr.mxu0 0.0
    %1263 = vmatpush2.xpose.msra.mxu0 0.0
    %1264 = vmatprep.subr.mxu0 0.0
    %1265 = vmatpush2.xpose.msra.mxu0 0.0
    %1266 = vmatprep.subr.mxu0 0.0
    %1267 = vmatpush2.xpose.msra.mxu0 0.0
    %1268 = vmatprep.subr.mxu0 0.0
    %1269 = vmatpush2.xpose.msra.mxu0 0.0
    %1270 = vmatprep.subr.mxu0 0.0
    %1271 = vmatpush2.xpose.msra.mxu0 0.0
    %1272 = vmatprep.mubr.f32.mxu0 0.0
    %1273 = vmatmul.mubr.f32.gmra.mxu0 %v1204
    %v1274 = vpop.f32.mrf.mxu0
    %v1275 = vadd.f32 0.0, %v1274
    %v1276 = vpop.f32.mrf.mxu0
    %1277 = vdwg.mxu0
    %1278 = vrot.lane.b32.xlu0 %v256, 96
    %v1279 = vpop.permute.xlu0 %1278
    %1280 = vrot.lane.b32.xlu0 %v364, 96
    %v1281 = vpop.permute.xlu0 %1280
    %v1282 = vsel %vm480, %v1279, 0
    %v1284 = vsel %vm480, %v1281, 0
    %1286 = vmatprep.subr.mxu0 0.0
    %1287 = vmatpush1.xpose.msra.mxu0 0.0
    %1288 = vmatprep.subr.mxu0 0.0
    %1289 = vmatpush1.xpose.msra.mxu0 0.0
    %1290 = vmatprep.subr.mxu0 0.0
    %1291 = vmatpush1.xpose.msra.mxu0 0.0
    %1292 = vmatprep.subr.mxu0 0.0
    %1293 = vmatpush1.xpose.msra.mxu0 0.0
    %1294 = vmatprep.subr.mxu0 0.0
    %1295 = vmatpush1.xpose.msra.mxu0 0.0
    %1296 = vmatprep.subr.mxu0 0.0
    %1297 = vmatpush1.xpose.msra.mxu0 0.0
    %1298 = vmatprep.subr.mxu0 0.0
    %1299 = vmatpush1.xpose.msra.mxu0 0.0
    %1300 = vmatprep.subr.mxu0 0.0
    %1301 = vmatpush1.xpose.msra.mxu0 0.0
    %1302 = vmatprep.subr.mxu0 0.0
    %1303 = vmatpush1.xpose.msra.mxu0 0.0
    %1304 = vmatprep.subr.mxu0 0.0
    %1305 = vmatpush1.xpose.msra.mxu0 0.0
    %1306 = vmatprep.subr.mxu0 0.0
    %1307 = vmatpush1.xpose.msra.mxu0 0.0
    %1308 = vmatprep.subr.mxu0 0.0
    %1309 = vmatpush1.xpose.msra.mxu0 0.0
    %1310 = vmatprep.subr.mxu0 0.0
    %1311 = vmatpush1.xpose.msra.mxu0 0.0
    %1312 = vmatprep.subr.mxu0 0.0
    %1313 = vmatpush1.xpose.msra.mxu0 0.0
    %1314 = vmatprep.subr.mxu0 0.0
    %1315 = vmatpush1.xpose.msra.mxu0 0.0
    %1316 = vmatprep.subr.mxu0 0.0
    %1317 = vmatpush1.xpose.msra.mxu0 %v1284
    %1318 = vmatprep.subr.mxu0 0.0
    %1319 = vmatpush2.xpose.msra.mxu0 0.0
    %1320 = vmatprep.subr.mxu0 0.0
    %1321 = vmatpush2.xpose.msra.mxu0 0.0
    %1322 = vmatprep.subr.mxu0 0.0
    %1323 = vmatpush2.xpose.msra.mxu0 0.0
    %1324 = vmatprep.subr.mxu0 0.0
    %1325 = vmatpush2.xpose.msra.mxu0 0.0
    %1326 = vmatprep.subr.mxu0 0.0
    %1327 = vmatpush2.xpose.msra.mxu0 0.0
    %1328 = vmatprep.subr.mxu0 0.0
    %1329 = vmatpush2.xpose.msra.mxu0 0.0
    %1330 = vmatprep.subr.mxu0 0.0
    %1331 = vmatpush2.xpose.msra.mxu0 0.0
    %1332 = vmatprep.subr.mxu0 0.0
    %1333 = vmatpush2.xpose.msra.mxu0 0.0
    %1334 = vmatprep.subr.mxu0 0.0
    %1335 = vmatpush2.xpose.msra.mxu0 0.0
    %1336 = vmatprep.subr.mxu0 0.0
    %1337 = vmatpush2.xpose.msra.mxu0 0.0
    %1338 = vmatprep.subr.mxu0 0.0
    %1339 = vmatpush2.xpose.msra.mxu0 0.0
    %1340 = vmatprep.subr.mxu0 0.0
    %1341 = vmatpush2.xpose.msra.mxu0 0.0
    %1342 = vmatprep.subr.mxu0 0.0
    %1343 = vmatpush2.xpose.msra.mxu0 0.0
    %1344 = vmatprep.subr.mxu0 0.0
    %1345 = vmatpush2.xpose.msra.mxu0 0.0
    %1346 = vmatprep.subr.mxu0 0.0
    %1347 = vmatpush2.xpose.msra.mxu0 0.0
    %1348 = vmatprep.subr.mxu0 0.0
    %1349 = vmatpush2.xpose.msra.mxu0 0.0
    %1350 = vmatprep.mubr.f32.mxu0 0.0
    %1351 = vmatmul.mubr.f32.gmra.mxu0 %v1282
    %v1352 = vpop.f32.mrf.mxu0
    %v1353 = vadd.f32 0.0, %v1352
    %v1354 = vpop.f32.mrf.mxu0
    %1355 = vdwg.mxu0
    %1356 = vrot.lane.b32.xlu0 %v261, 96
    %v1357 = vpop.permute.xlu0 %1356
    %1358 = vrot.lane.b32.xlu0 %v369, 96
    %v1359 = vpop.permute.xlu0 %1358
    %v1360 = vsel %vm480, %v1357, 0
    %v1362 = vsel %vm480, %v1359, 0
    %1364 = vmatprep.subr.mxu0 0.0
    %1365 = vmatpush1.xpose.msra.mxu0 0.0
    %1366 = vmatprep.subr.mxu0 0.0
    %1367 = vmatpush1.xpose.msra.mxu0 0.0
    %1368 = vmatprep.subr.mxu0 0.0
    %1369 = vmatpush1.xpose.msra.mxu0 0.0
    %1370 = vmatprep.subr.mxu0 0.0
    %1371 = vmatpush1.xpose.msra.mxu0 0.0
    %1372 = vmatprep.subr.mxu0 0.0
    %1373 = vmatpush1.xpose.msra.mxu0 0.0
    %1374 = vmatprep.subr.mxu0 0.0
    %1375 = vmatpush1.xpose.msra.mxu0 0.0
    %1376 = vmatprep.subr.mxu0 0.0
    %1377 = vmatpush1.xpose.msra.mxu0 0.0
    %1378 = vmatprep.subr.mxu0 0.0
    %1379 = vmatpush1.xpose.msra.mxu0 0.0
    %1380 = vmatprep.subr.mxu0 0.0
    %1381 = vmatpush1.xpose.msra.mxu0 0.0
    %1382 = vmatprep.subr.mxu0 0.0
    %1383 = vmatpush1.xpose.msra.mxu0 0.0
    %1384 = vmatprep.subr.mxu0 0.0
    %1385 = vmatpush1.xpose.msra.mxu0 0.0
    %1386 = vmatprep.subr.mxu0 0.0
    %1387 = vmatpush1.xpose.msra.mxu0 0.0
    %1388 = vmatprep.subr.mxu0 0.0
    %1389 = vmatpush1.xpose.msra.mxu0 0.0
    %1390 = vmatprep.subr.mxu0 0.0
    %1391 = vmatpush1.xpose.msra.mxu0 0.0
    %1392 = vmatprep.subr.mxu0 0.0
    %1393 = vmatpush1.xpose.msra.mxu0 0.0
    %1394 = vmatprep.subr.mxu0 0.0
    %1395 = vmatpush1.xpose.msra.mxu0 %v1362
    %1396 = vmatprep.subr.mxu0 0.0
    %1397 = vmatpush2.xpose.msra.mxu0 0.0
    %1398 = vmatprep.subr.mxu0 0.0
    %1399 = vmatpush2.xpose.msra.mxu0 0.0
    %1400 = vmatprep.subr.mxu0 0.0
    %1401 = vmatpush2.xpose.msra.mxu0 0.0
    %1402 = vmatprep.subr.mxu0 0.0
    %1403 = vmatpush2.xpose.msra.mxu0 0.0
    %1404 = vmatprep.subr.mxu0 0.0
    %1405 = vmatpush2.xpose.msra.mxu0 0.0
    %1406 = vmatprep.subr.mxu0 0.0
    %1407 = vmatpush2.xpose.msra.mxu0 0.0
    %1408 = vmatprep.subr.mxu0 0.0
    %1409 = vmatpush2.xpose.msra.mxu0 0.0
    %1410 = vmatprep.subr.mxu0 0.0
    %1411 = vmatpush2.xpose.msra.mxu0 0.0
    %1412 = vmatprep.subr.mxu0 0.0
    %1413 = vmatpush2.xpose.msra.mxu0 0.0
    %1414 = vmatprep.subr.mxu0 0.0
    %1415 = vmatpush2.xpose.msra.mxu0 0.0
    %1416 = vmatprep.subr.mxu0 0.0
    %1417 = vmatpush2.xpose.msra.mxu0 0.0
    %1418 = vmatprep.subr.mxu0 0.0
    %1419 = vmatpush2.xpose.msra.mxu0 0.0
    %1420 = vmatprep.subr.mxu0 0.0
    %1421 = vmatpush2.xpose.msra.mxu0 0.0
    %1422 = vmatprep.subr.mxu0 0.0
    %1423 = vmatpush2.xpose.msra.mxu0 0.0
    %1424 = vmatprep.subr.mxu0 0.0
    %1425 = vmatpush2.xpose.msra.mxu0 0.0
    %1426 = vmatprep.subr.mxu0 0.0
    %1427 = vmatpush2.xpose.msra.mxu0 0.0
    %1428 = vmatprep.mubr.f32.mxu0 0.0
    %1429 = vmatmul.mubr.f32.gmra.mxu0 %v1360
    %v1430 = vpop.f32.mrf.mxu0
    %v1431 = vadd.f32 0.0, %v1430
    %v1432 = vpop.f32.mrf.mxu0
    %1433 = vdwg.mxu0
    %v1434 = vsel %vm785, %v1197, -inf
    %1435 = vmax.xlane.f32.xlu0 %v1434
    %v1436 = vpop.xlane.xlu0 %1435
    %v1437 = vsel %vm785, %v1275, -inf
    %1438 = vmax.xlane.f32.xlu0 %v1437
    %v1439 = vpop.xlane.xlu0 %1438
    %v1440 = vsel %vm785, %v1353, -inf
    %1441 = vmax.xlane.f32.xlu0 %v1440
    %v1442 = vpop.xlane.xlu0 %1441
    %v1443 = vsel %vm785, %v1431, -inf
    %1444 = vmax.xlane.f32.xlu0 %v1443
    %v1445 = vpop.xlane.xlu0 %1444
    %v1446 = vsub.f32 %v1197, %v1436
    %v1447 = vsub.f32 %v1275, %v1439
    %v1448 = vsub.f32 %v1353, %v1442
    %v1449 = vsub.f32 %v1431, %v1445
    %v1450 = vmul.f32 %v1446, 1.442695
    %v1451 = vpow.pop %v1450
    %v1452 = vmul.f32 %v1447, 1.442695
    %v1453 = vpow.pop %v1452
    %v1454 = vmul.f32 %v1448, 1.442695
    %v1455 = vpow.pop %v1454
    %v1456 = vmul.f32 %v1449, 1.442695
    %v1457 = vpow.pop %v1456
    %v1458 = vsel %vm785, %v1451, 0.0
    %1459 = vadd.xlane.f32.xlu0 %v1458
    %v1460 = vpop.xlane.xlu0 %1459
    %v1461 = vsel %vm785, %v1453, 0.0
    %1462 = vadd.xlane.f32.xlu0 %v1461
    %v1463 = vpop.xlane.xlu0 %1462
    %v1464 = vsel %vm785, %v1455, 0.0
    %1465 = vadd.xlane.f32.xlu0 %v1464
    %v1466 = vpop.xlane.xlu0 %1465
    %v1467 = vsel %vm785, %v1457, 0.0
    %1468 = vadd.xlane.f32.xlu0 %v1467
    %v1469 = vpop.xlane.xlu0 %1468
    %v1470 = vrcp.pop %v1460
    %v1471 = vrcp.pop %v1463
    %v1472 = vrcp.pop %v1466
    %v1473 = vrcp.pop %v1469
    %v1474 = vmul.f32 %v1451, %v1470
    %v1475 = vmul.f32 %v1453, %v1471
    %v1476 = vmul.f32 %v1455, %v1472
    %v1477 = vmul.f32 %v1457, %v1473
    %1479 = vrot.lane.b32.xlu0 %v462, 96
    %v1480 = vpop.permute.xlu0 %1479
    %v1483 = vsel %vm785, %v1474, 0
    %1485 = vmatprep.subr.mxu0 0.0
    %1486 = vmatpush1.msra.mxu0 0.0
    %1487 = vmatprep.subr.mxu0 0.0
    %1488 = vmatpush1.msra.mxu0 0.0
    %1489 = vmatprep.subr.mxu0 0.0
    %1490 = vmatpush1.msra.mxu0 0.0
    %1491 = vmatprep.subr.mxu0 0.0
    %1492 = vmatpush1.msra.mxu0 0.0
    %1493 = vmatprep.subr.mxu0 0.0
    %1494 = vmatpush1.msra.mxu0 0.0
    %1495 = vmatprep.subr.mxu0 0.0
    %1496 = vmatpush1.msra.mxu0 0.0
    %1497 = vmatprep.subr.mxu0 0.0
    %1498 = vmatpush1.msra.mxu0 0.0
    %1499 = vmatprep.subr.mxu0 0.0
    %1500 = vmatpush1.msra.mxu0 0.0
    %1501 = vmatprep.subr.mxu0 0.0
    %1502 = vmatpush1.msra.mxu0 0.0
    %1503 = vmatprep.subr.mxu0 0.0
    %1504 = vmatpush1.msra.mxu0 0.0
    %1505 = vmatprep.subr.mxu0 0.0
    %1506 = vmatpush1.msra.mxu0 0.0
    %1507 = vmatprep.subr.mxu0 0.0
    %1508 = vmatpush1.msra.mxu0 0.0
    %1509 = vmatprep.subr.mxu0 0.0
    %1510 = vmatpush1.msra.mxu0 0.0
    %1511 = vmatprep.subr.mxu0 0.0
    %1512 = vmatpush1.msra.mxu0 0.0
    %1513 = vmatprep.subr.mxu0 0.0
    %1514 = vmatpush1.msra.mxu0 0.0
    %1515 = vmatprep.subr.mxu0 0.0
    %1516 = vmatpush1.msra.mxu0 %v1480
    %1517 = vmatprep.subr.mxu0 0.0
    %1518 = vmatpush2.msra.mxu0 0.0
    %1519 = vmatprep.subr.mxu0 0.0
    %1520 = vmatpush2.msra.mxu0 0.0
    %1521 = vmatprep.subr.mxu0 0.0
    %1522 = vmatpush2.msra.mxu0 0.0
    %1523 = vmatprep.subr.mxu0 0.0
    %1524 = vmatpush2.msra.mxu0 0.0
    %1525 = vmatprep.subr.mxu0 0.0
    %1526 = vmatpush2.msra.mxu0 0.0
    %1527 = vmatprep.subr.mxu0 0.0
    %1528 = vmatpush2.msra.mxu0 0.0
    %1529 = vmatprep.subr.mxu0 0.0
    %1530 = vmatpush2.msra.mxu0 0.0
    %1531 = vmatprep.subr.mxu0 0.0
    %1532 = vmatpush2.msra.mxu0 0.0
    %1533 = vmatprep.subr.mxu0 0.0
    %1534 = vmatpush2.msra.mxu0 0.0
    %1535 = vmatprep.subr.mxu0 0.0
    %1536 = vmatpush2.msra.mxu0 0.0
    %1537 = vmatprep.subr.mxu0 0.0
    %1538 = vmatpush2.msra.mxu0 0.0
    %1539 = vmatprep.subr.mxu0 0.0
    %1540 = vmatpush2.msra.mxu0 0.0
    %1541 = vmatprep.subr.mxu0 0.0
    %1542 = vmatpush2.msra.mxu0 0.0
    %1543 = vmatprep.subr.mxu0 0.0
    %1544 = vmatpush2.msra.mxu0 0.0
    %1545 = vmatprep.subr.mxu0 0.0
    %1546 = vmatpush2.msra.mxu0 0.0
    %1547 = vmatprep.subr.mxu0 0.0
    %1548 = vmatpush2.msra.mxu0 0.0
    %1549 = vmatprep.mubr.f32.mxu0 0.0
    %1550 = vmatmul.mubr.f32.gmra.mxu0 %v1483
    %v1551 = vpop.f32.mrf.mxu0
    %v1552 = vadd.f32 0.0, %v1551
    %v1553 = vpop.f32.mrf.mxu0
    %1554 = vdwg.mxu0
    %1556 = vrot.lane.b32.xlu0 %v467, 96
    %v1557 = vpop.permute.xlu0 %1556
    %v1560 = vsel %vm785, %v1475, 0
    %1562 = vmatprep.subr.mxu0 0.0
    %1563 = vmatpush1.msra.mxu0 0.0
    %1564 = vmatprep.subr.mxu0 0.0
    %1565 = vmatpush1.msra.mxu0 0.0
    %1566 = vmatprep.subr.mxu0 0.0
    %1567 = vmatpush1.msra.mxu0 0.0
    %1568 = vmatprep.subr.mxu0 0.0
    %1569 = vmatpush1.msra.mxu0 0.0
    %1570 = vmatprep.subr.mxu0 0.0
    %1571 = vmatpush1.msra.mxu0 0.0
    %1572 = vmatprep.subr.mxu0 0.0
    %1573 = vmatpush1.msra.mxu0 0.0
    %1574 = vmatprep.subr.mxu0 0.0
    %1575 = vmatpush1.msra.mxu0 0.0
    %1576 = vmatprep.subr.mxu0 0.0
    %1577 = vmatpush1.msra.mxu0 0.0
    %1578 = vmatprep.subr.mxu0 0.0
    %1579 = vmatpush1.msra.mxu0 0.0
    %1580 = vmatprep.subr.mxu0 0.0
    %1581 = vmatpush1.msra.mxu0 0.0
    %1582 = vmatprep.subr.mxu0 0.0
    %1583 = vmatpush1.msra.mxu0 0.0
    %1584 = vmatprep.subr.mxu0 0.0
    %1585 = vmatpush1.msra.mxu0 0.0
    %1586 = vmatprep.subr.mxu0 0.0
    %1587 = vmatpush1.msra.mxu0 0.0
    %1588 = vmatprep.subr.mxu0 0.0
    %1589 = vmatpush1.msra.mxu0 0.0
    %1590 = vmatprep.subr.mxu0 0.0
    %1591 = vmatpush1.msra.mxu0 0.0
    %1592 = vmatprep.subr.mxu0 0.0
    %1593 = vmatpush1.msra.mxu0 %v1557
    %1594 = vmatprep.subr.mxu0 0.0
    %1595 = vmatpush2.msra.mxu0 0.0
    %1596 = vmatprep.subr.mxu0 0.0
    %1597 = vmatpush2.msra.mxu0 0.0
    %1598 = vmatprep.subr.mxu0 0.0
    %1599 = vmatpush2.msra.mxu0 0.0
    %1600 = vmatprep.subr.mxu0 0.0
    %1601 = vmatpush2.msra.mxu0 0.0
    %1602 = vmatprep.subr.mxu0 0.0
    %1603 = vmatpush2.msra.mxu0 0.0
    %1604 = vmatprep.subr.mxu0 0.0
    %1605 = vmatpush2.msra.mxu0 0.0
    %1606 = vmatprep.subr.mxu0 0.0
    %1607 = vmatpush2.msra.mxu0 0.0
    %1608 = vmatprep.subr.mxu0 0.0
    %1609 = vmatpush2.msra.mxu0 0.0
    %1610 = vmatprep.subr.mxu0 0.0
    %1611 = vmatpush2.msra.mxu0 0.0
    %1612 = vmatprep.subr.mxu0 0.0
    %1613 = vmatpush2.msra.mxu0 0.0
    %1614 = vmatprep.subr.mxu0 0.0
    %1615 = vmatpush2.msra.mxu0 0.0
    %1616 = vmatprep.subr.mxu0 0.0
    %1617 = vmatpush2.msra.mxu0 0.0
    %1618 = vmatprep.subr.mxu0 0.0
    %1619 = vmatpush2.msra.mxu0 0.0
    %1620 = vmatprep.subr.mxu0 0.0
    %1621 = vmatpush2.msra.mxu0 0.0
    %1622 = vmatprep.subr.mxu0 0.0
    %1623 = vmatpush2.msra.mxu0 0.0
    %1624 = vmatprep.subr.mxu0 0.0
    %1625 = vmatpush2.msra.mxu0 0.0
    %1626 = vmatprep.mubr.f32.mxu0 0.0
    %1627 = vmatmul.mubr.f32.gmra.mxu0 %v1560
    %v1628 = vpop.f32.mrf.mxu0
    %v1629 = vadd.f32 0.0, %v1628
    %v1630 = vpop.f32.mrf.mxu0
    %1631 = vdwg.mxu0
    %1633 = vrot.lane.b32.xlu0 %v472, 96
    %v1634 = vpop.permute.xlu0 %1633
    %v1637 = vsel %vm785, %v1476, 0
    %1639 = vmatprep.subr.mxu0 0.0
    %1640 = vmatpush1.msra.mxu0 0.0
    %1641 = vmatprep.subr.mxu0 0.0
    %1642 = vmatpush1.msra.mxu0 0.0
    %1643 = vmatprep.subr.mxu0 0.0
    %1644 = vmatpush1.msra.mxu0 0.0
    %1645 = vmatprep.subr.mxu0 0.0
    %1646 = vmatpush1.msra.mxu0 0.0
    %1647 = vmatprep.subr.mxu0 0.0
    %1648 = vmatpush1.msra.mxu0 0.0
    %1649 = vmatprep.subr.mxu0 0.0
    %1650 = vmatpush1.msra.mxu0 0.0
    %1651 = vmatprep.subr.mxu0 0.0
    %1652 = vmatpush1.msra.mxu0 0.0
    %1653 = vmatprep.subr.mxu0 0.0
    %1654 = vmatpush1.msra.mxu0 0.0
    %1655 = vmatprep.subr.mxu0 0.0
    %1656 = vmatpush1.msra.mxu0 0.0
    %1657 = vmatprep.subr.mxu0 0.0
    %1658 = vmatpush1.msra.mxu0 0.0
    %1659 = vmatprep.subr.mxu0 0.0
    %1660 = vmatpush1.msra.mxu0 0.0
    %1661 = vmatprep.subr.mxu0 0.0
    %1662 = vmatpush1.msra.mxu0 0.0
    %1663 = vmatprep.subr.mxu0 0.0
    %1664 = vmatpush1.msra.mxu0 0.0
    %1665 = vmatprep.subr.mxu0 0.0
    %1666 = vmatpush1.msra.mxu0 0.0
    %1667 = vmatprep.subr.mxu0 0.0
    %1668 = vmatpush1.msra.mxu0 0.0
    %1669 = vmatprep.subr.mxu0 0.0
    %1670 = vmatpush1.msra.mxu0 %v1634
    %1671 = vmatprep.subr.mxu0 0.0
    %1672 = vmatpush2.msra.mxu0 0.0
    %1673 = vmatprep.subr.mxu0 0.0
    %1674 = vmatpush2.msra.mxu0 0.0
    %1675 = vmatprep.subr.mxu0 0.0
    %1676 = vmatpush2.msra.mxu0 0.0
    %1677 = vmatprep.subr.mxu0 0.0
    %1678 = vmatpush2.msra.mxu0 0.0
    %1679 = vmatprep.subr.mxu0 0.0
    %1680 = vmatpush2.msra.mxu0 0.0
    %1681 = vmatprep.subr.mxu0 0.0
    %1682 = vmatpush2.msra.mxu0 0.0
    %1683 = vmatprep.subr.mxu0 0.0
    %1684 = vmatpush2.msra.mxu0 0.0
    %1685 = vmatprep.subr.mxu0 0.0
    %1686 = vmatpush2.msra.mxu0 0.0
    %1687 = vmatprep.subr.mxu0 0.0
    %1688 = vmatpush2.msra.mxu0 0.0
    %1689 = vmatprep.subr.mxu0 0.0
    %1690 = vmatpush2.msra.mxu0 0.0
    %1691 = vmatprep.subr.mxu0 0.0
    %1692 = vmatpush2.msra.mxu0 0.0
    %1693 = vmatprep.subr.mxu0 0.0
    %1694 = vmatpush2.msra.mxu0 0.0
    %1695 = vmatprep.subr.mxu0 0.0
    %1696 = vmatpush2.msra.mxu0 0.0
    %1697 = vmatprep.subr.mxu0 0.0
    %1698 = vmatpush2.msra.mxu0 0.0
    %1699 = vmatprep.subr.mxu0 0.0
    %1700 = vmatpush2.msra.mxu0 0.0
    %1701 = vmatprep.subr.mxu0 0.0
    %1702 = vmatpush2.msra.mxu0 0.0
    %1703 = vmatprep.mubr.f32.mxu0 0.0
    %1704 = vmatmul.mubr.f32.gmra.mxu0 %v1637
    %v1705 = vpop.f32.mrf.mxu0
    %v1706 = vadd.f32 0.0, %v1705
    %v1707 = vpop.f32.mrf.mxu0
    %1708 = vdwg.mxu0
    %1710 = vrot.lane.b32.xlu0 %v477, 96
    %v1711 = vpop.permute.xlu0 %1710
    %v1714 = vsel %vm785, %v1477, 0
    %1716 = vmatprep.subr.mxu0 0.0
    %1717 = vmatpush1.msra.mxu0 0.0
    %1718 = vmatprep.subr.mxu0 0.0
    %1719 = vmatpush1.msra.mxu0 0.0
    %1720 = vmatprep.subr.mxu0 0.0
    %1721 = vmatpush1.msra.mxu0 0.0
    %1722 = vmatprep.subr.mxu0 0.0
    %1723 = vmatpush1.msra.mxu0 0.0
    %1724 = vmatprep.subr.mxu0 0.0
    %1725 = vmatpush1.msra.mxu0 0.0
    %1726 = vmatprep.subr.mxu0 0.0
    %1727 = vmatpush1.msra.mxu0 0.0
    %1728 = vmatprep.subr.mxu0 0.0
    %1729 = vmatpush1.msra.mxu0 0.0
    %1730 = vmatprep.subr.mxu0 0.0
    %1731 = vmatpush1.msra.mxu0 0.0
    %1732 = vmatprep.subr.mxu0 0.0
    %1733 = vmatpush1.msra.mxu0 0.0
    %1734 = vmatprep.subr.mxu0 0.0
    %1735 = vmatpush1.msra.mxu0 0.0
    %1736 = vmatprep.subr.mxu0 0.0
    %1737 = vmatpush1.msra.mxu0 0.0
    %1738 = vmatprep.subr.mxu0 0.0
    %1739 = vmatpush1.msra.mxu0 0.0
    %1740 = vmatprep.subr.mxu0 0.0
    %1741 = vmatpush1.msra.mxu0 0.0
    %1742 = vmatprep.subr.mxu0 0.0
    %1743 = vmatpush1.msra.mxu0 0.0
    %1744 = vmatprep.subr.mxu0 0.0
    %1745 = vmatpush1.msra.mxu0 0.0
    %1746 = vmatprep.subr.mxu0 0.0
    %1747 = vmatpush1.msra.mxu0 %v1711
    %1748 = vmatprep.subr.mxu0 0.0
    %1749 = vmatpush2.msra.mxu0 0.0
    %1750 = vmatprep.subr.mxu0 0.0
    %1751 = vmatpush2.msra.mxu0 0.0
    %1752 = vmatprep.subr.mxu0 0.0
    %1753 = vmatpush2.msra.mxu0 0.0
    %1754 = vmatprep.subr.mxu0 0.0
    %1755 = vmatpush2.msra.mxu0 0.0
    %1756 = vmatprep.subr.mxu0 0.0
    %1757 = vmatpush2.msra.mxu0 0.0
    %1758 = vmatprep.subr.mxu0 0.0
    %1759 = vmatpush2.msra.mxu0 0.0
    %1760 = vmatprep.subr.mxu0 0.0
    %1761 = vmatpush2.msra.mxu0 0.0
    %1762 = vmatprep.subr.mxu0 0.0
    %1763 = vmatpush2.msra.mxu0 0.0
    %1764 = vmatprep.subr.mxu0 0.0
    %1765 = vmatpush2.msra.mxu0 0.0
    %1766 = vmatprep.subr.mxu0 0.0
    %1767 = vmatpush2.msra.mxu0 0.0
    %1768 = vmatprep.subr.mxu0 0.0
    %1769 = vmatpush2.msra.mxu0 0.0
    %1770 = vmatprep.subr.mxu0 0.0
    %1771 = vmatpush2.msra.mxu0 0.0
    %1772 = vmatprep.subr.mxu0 0.0
    %1773 = vmatpush2.msra.mxu0 0.0
    %1774 = vmatprep.subr.mxu0 0.0
    %1775 = vmatpush2.msra.mxu0 0.0
    %1776 = vmatprep.subr.mxu0 0.0
    %1777 = vmatpush2.msra.mxu0 0.0
    %1778 = vmatprep.subr.mxu0 0.0
    %1779 = vmatpush2.msra.mxu0 0.0
    %1780 = vmatprep.mubr.f32.mxu0 0.0
    %1781 = vmatmul.mubr.f32.gmra.mxu0 %v1714
    %v1782 = vpop.f32.mrf.mxu0
    %v1783 = vadd.f32 0.0, %v1782
    %v1784 = vpop.f32.mrf.mxu0
    %1785 = vdwg.mxu0
    %1786 = vrot.lane.b32.xlu0 %v246, 64
    %v1787 = vpop.permute.xlu0 %1786
    %1788 = vrot.lane.b32.xlu0 %v354, 64
    %v1789 = vpop.permute.xlu0 %1788
    %v1790 = vsel %vm480, %v1787, 0
    %v1792 = vsel %vm480, %v1789, 0
    %1794 = vmatprep.subr.mxu0 0.0
    %1795 = vmatpush1.xpose.msra.mxu0 0.0
    %1796 = vmatprep.subr.mxu0 0.0
    %1797 = vmatpush1.xpose.msra.mxu0 0.0
    %1798 = vmatprep.subr.mxu0 0.0
    %1799 = vmatpush1.xpose.msra.mxu0 0.0
    %1800 = vmatprep.subr.mxu0 0.0
    %1801 = vmatpush1.xpose.msra.mxu0 0.0
    %1802 = vmatprep.subr.mxu0 0.0
    %1803 = vmatpush1.xpose.msra.mxu0 0.0
    %1804 = vmatprep.subr.mxu0 0.0
    %1805 = vmatpush1.xpose.msra.mxu0 0.0
    %1806 = vmatprep.subr.mxu0 0.0
    %1807 = vmatpush1.xpose.msra.mxu0 0.0
    %1808 = vmatprep.subr.mxu0 0.0
    %1809 = vmatpush1.xpose.msra.mxu0 0.0
    %1810 = vmatprep.subr.mxu0 0.0
    %1811 = vmatpush1.xpose.msra.mxu0 0.0
    %1812 = vmatprep.subr.mxu0 0.0
    %1813 = vmatpush1.xpose.msra.mxu0 0.0
    %1814 = vmatprep.subr.mxu0 0.0
    %1815 = vmatpush1.xpose.msra.mxu0 0.0
    %1816 = vmatprep.subr.mxu0 0.0
    %1817 = vmatpush1.xpose.msra.mxu0 0.0
    %1818 = vmatprep.subr.mxu0 0.0
    %1819 = vmatpush1.xpose.msra.mxu0 0.0
    %1820 = vmatprep.subr.mxu0 0.0
    %1821 = vmatpush1.xpose.msra.mxu0 0.0
    %1822 = vmatprep.subr.mxu0 0.0
    %1823 = vmatpush1.xpose.msra.mxu0 0.0
    %1824 = vmatprep.subr.mxu0 0.0
    %1825 = vmatpush1.xpose.msra.mxu0 %v1792
    %1826 = vmatprep.subr.mxu0 0.0
    %1827 = vmatpush2.xpose.msra.mxu0 0.0
    %1828 = vmatprep.subr.mxu0 0.0
    %1829 = vmatpush2.xpose.msra.mxu0 0.0
    %1830 = vmatprep.subr.mxu0 0.0
    %1831 = vmatpush2.xpose.msra.mxu0 0.0
    %1832 = vmatprep.subr.mxu0 0.0
    %1833 = vmatpush2.xpose.msra.mxu0 0.0
    %1834 = vmatprep.subr.mxu0 0.0
    %1835 = vmatpush2.xpose.msra.mxu0 0.0
    %1836 = vmatprep.subr.mxu0 0.0
    %1837 = vmatpush2.xpose.msra.mxu0 0.0
    %1838 = vmatprep.subr.mxu0 0.0
    %1839 = vmatpush2.xpose.msra.mxu0 0.0
    %1840 = vmatprep.subr.mxu0 0.0
    %1841 = vmatpush2.xpose.msra.mxu0 0.0
    %1842 = vmatprep.subr.mxu0 0.0
    %1843 = vmatpush2.xpose.msra.mxu0 0.0
    %1844 = vmatprep.subr.mxu0 0.0
    %1845 = vmatpush2.xpose.msra.mxu0 0.0
    %1846 = vmatprep.subr.mxu0 0.0
    %1847 = vmatpush2.xpose.msra.mxu0 0.0
    %1848 = vmatprep.subr.mxu0 0.0
    %1849 = vmatpush2.xpose.msra.mxu0 0.0
    %1850 = vmatprep.subr.mxu0 0.0
    %1851 = vmatpush2.xpose.msra.mxu0 0.0
    %1852 = vmatprep.subr.mxu0 0.0
    %1853 = vmatpush2.xpose.msra.mxu0 0.0
    %1854 = vmatprep.subr.mxu0 0.0
    %1855 = vmatpush2.xpose.msra.mxu0 0.0
    %1856 = vmatprep.subr.mxu0 0.0
    %1857 = vmatpush2.xpose.msra.mxu0 0.0
    %1858 = vmatprep.mubr.f32.mxu0 0.0
    %1859 = vmatmul.mubr.f32.gmra.mxu0 %v1790
    %v1860 = vpop.f32.mrf.mxu0
    %v1861 = vadd.f32 0.0, %v1860
    %v1862 = vpop.f32.mrf.mxu0
    %1863 = vdwg.mxu0
    %1864 = vrot.lane.b32.xlu0 %v251, 64
    %v1865 = vpop.permute.xlu0 %1864
    %1866 = vrot.lane.b32.xlu0 %v359, 64
    %v1867 = vpop.permute.xlu0 %1866
    %v1868 = vsel %vm480, %v1865, 0
    %v1870 = vsel %vm480, %v1867, 0
    %1872 = vmatprep.subr.mxu0 0.0
    %1873 = vmatpush1.xpose.msra.mxu0 0.0
    %1874 = vmatprep.subr.mxu0 0.0
    %1875 = vmatpush1.xpose.msra.mxu0 0.0
    %1876 = vmatprep.subr.mxu0 0.0
    %1877 = vmatpush1.xpose.msra.mxu0 0.0
    %1878 = vmatprep.subr.mxu0 0.0
    %1879 = vmatpush1.xpose.msra.mxu0 0.0
    %1880 = vmatprep.subr.mxu0 0.0
    %1881 = vmatpush1.xpose.msra.mxu0 0.0
    %1882 = vmatprep.subr.mxu0 0.0
    %1883 = vmatpush1.xpose.msra.mxu0 0.0
    %1884 = vmatprep.subr.mxu0 0.0
    %1885 = vmatpush1.xpose.msra.mxu0 0.0
    %1886 = vmatprep.subr.mxu0 0.0
    %1887 = vmatpush1.xpose.msra.mxu0 0.0
    %1888 = vmatprep.subr.mxu0 0.0
    %1889 = vmatpush1.xpose.msra.mxu0 0.0
    %1890 = vmatprep.subr.mxu0 0.0
    %1891 = vmatpush1.xpose.msra.mxu0 0.0
    %1892 = vmatprep.subr.mxu0 0.0
    %1893 = vmatpush1.xpose.msra.mxu0 0.0
    %1894 = vmatprep.subr.mxu0 0.0
    %1895 = vmatpush1.xpose.msra.mxu0 0.0
    %1896 = vmatprep.subr.mxu0 0.0
    %1897 = vmatpush1.xpose.msra.mxu0 0.0
    %1898 = vmatprep.subr.mxu0 0.0
    %1899 = vmatpush1.xpose.msra.mxu0 0.0
    %1900 = vmatprep.subr.mxu0 0.0
    %1901 = vmatpush1.xpose.msra.mxu0 0.0
    %1902 = vmatprep.subr.mxu0 0.0
    %1903 = vmatpush1.xpose.msra.mxu0 %v1870
    %1904 = vmatprep.subr.mxu0 0.0
    %1905 = vmatpush2.xpose.msra.mxu0 0.0
    %1906 = vmatprep.subr.mxu0 0.0
    %1907 = vmatpush2.xpose.msra.mxu0 0.0
    %1908 = vmatprep.subr.mxu0 0.0
    %1909 = vmatpush2.xpose.msra.mxu0 0.0
    %1910 = vmatprep.subr.mxu0 0.0
    %1911 = vmatpush2.xpose.msra.mxu0 0.0
    %1912 = vmatprep.subr.mxu0 0.0
    %1913 = vmatpush2.xpose.msra.mxu0 0.0
    %1914 = vmatprep.subr.mxu0 0.0
    %1915 = vmatpush2.xpose.msra.mxu0 0.0
    %1916 = vmatprep.subr.mxu0 0.0
    %1917 = vmatpush2.xpose.msra.mxu0 0.0
    %1918 = vmatprep.subr.mxu0 0.0
    %1919 = vmatpush2.xpose.msra.mxu0 0.0
    %1920 = vmatprep.subr.mxu0 0.0
    %1921 = vmatpush2.xpose.msra.mxu0 0.0
    %1922 = vmatprep.subr.mxu0 0.0
    %1923 = vmatpush2.xpose.msra.mxu0 0.0
    %1924 = vmatprep.subr.mxu0 0.0
    %1925 = vmatpush2.xpose.msra.mxu0 0.0
    %1926 = vmatprep.subr.mxu0 0.0
    %1927 = vmatpush2.xpose.msra.mxu0 0.0
    %1928 = vmatprep.subr.mxu0 0.0
    %1929 = vmatpush2.xpose.msra.mxu0 0.0
    %1930 = vmatprep.subr.mxu0 0.0
    %1931 = vmatpush2.xpose.msra.mxu0 0.0
    %1932 = vmatprep.subr.mxu0 0.0
    %1933 = vmatpush2.xpose.msra.mxu0 0.0
    %1934 = vmatprep.subr.mxu0 0.0
    %1935 = vmatpush2.xpose.msra.mxu0 0.0
    %1936 = vmatprep.mubr.f32.mxu0 0.0
    %1937 = vmatmul.mubr.f32.gmra.mxu0 %v1868
    %v1938 = vpop.f32.mrf.mxu0
    %v1939 = vadd.f32 0.0, %v1938
    %v1940 = vpop.f32.mrf.mxu0
    %1941 = vdwg.mxu0
    %1942 = vrot.lane.b32.xlu0 %v256, 64
    %v1943 = vpop.permute.xlu0 %1942
    %1944 = vrot.lane.b32.xlu0 %v364, 64
    %v1945 = vpop.permute.xlu0 %1944
    %v1946 = vsel %vm480, %v1943, 0
    %v1948 = vsel %vm480, %v1945, 0
    %1950 = vmatprep.subr.mxu0 0.0
    %1951 = vmatpush1.xpose.msra.mxu0 0.0
    %1952 = vmatprep.subr.mxu0 0.0
    %1953 = vmatpush1.xpose.msra.mxu0 0.0
    %1954 = vmatprep.subr.mxu0 0.0
    %1955 = vmatpush1.xpose.msra.mxu0 0.0
    %1956 = vmatprep.subr.mxu0 0.0
    %1957 = vmatpush1.xpose.msra.mxu0 0.0
    %1958 = vmatprep.subr.mxu0 0.0
    %1959 = vmatpush1.xpose.msra.mxu0 0.0
    %1960 = vmatprep.subr.mxu0 0.0
    %1961 = vmatpush1.xpose.msra.mxu0 0.0
    %1962 = vmatprep.subr.mxu0 0.0
    %1963 = vmatpush1.xpose.msra.mxu0 0.0
    %1964 = vmatprep.subr.mxu0 0.0
    %1965 = vmatpush1.xpose.msra.mxu0 0.0
    %1966 = vmatprep.subr.mxu0 0.0
    %1967 = vmatpush1.xpose.msra.mxu0 0.0
    %1968 = vmatprep.subr.mxu0 0.0
    %1969 = vmatpush1.xpose.msra.mxu0 0.0
    %1970 = vmatprep.subr.mxu0 0.0
    %1971 = vmatpush1.xpose.msra.mxu0 0.0
    %1972 = vmatprep.subr.mxu0 0.0
    %1973 = vmatpush1.xpose.msra.mxu0 0.0
    %1974 = vmatprep.subr.mxu0 0.0
    %1975 = vmatpush1.xpose.msra.mxu0 0.0
    %1976 = vmatprep.subr.mxu0 0.0
    %1977 = vmatpush1.xpose.msra.mxu0 0.0
    %1978 = vmatprep.subr.mxu0 0.0
    %1979 = vmatpush1.xpose.msra.mxu0 0.0
    %1980 = vmatprep.subr.mxu0 0.0
    %1981 = vmatpush1.xpose.msra.mxu0 %v1948
    %1982 = vmatprep.subr.mxu0 0.0
    %1983 = vmatpush2.xpose.msra.mxu0 0.0
    %1984 = vmatprep.subr.mxu0 0.0
    %1985 = vmatpush2.xpose.msra.mxu0 0.0
    %1986 = vmatprep.subr.mxu0 0.0
    %1987 = vmatpush2.xpose.msra.mxu0 0.0
    %1988 = vmatprep.subr.mxu0 0.0
    %1989 = vmatpush2.xpose.msra.mxu0 0.0
    %1990 = vmatprep.subr.mxu0 0.0
    %1991 = vmatpush2.xpose.msra.mxu0 0.0
    %1992 = vmatprep.subr.mxu0 0.0
    %1993 = vmatpush2.xpose.msra.mxu0 0.0
    %1994 = vmatprep.subr.mxu0 0.0
    %1995 = vmatpush2.xpose.msra.mxu0 0.0
    %1996 = vmatprep.subr.mxu0 0.0
    %1997 = vmatpush2.xpose.msra.mxu0 0.0
    %1998 = vmatprep.subr.mxu0 0.0
    %1999 = vmatpush2.xpose.msra.mxu0 0.0
    %2000 = vmatprep.subr.mxu0 0.0
    %2001 = vmatpush2.xpose.msra.mxu0 0.0
    %2002 = vmatprep.subr.mxu0 0.0
    %2003 = vmatpush2.xpose.msra.mxu0 0.0
    %2004 = vmatprep.subr.mxu0 0.0
    %2005 = vmatpush2.xpose.msra.mxu0 0.0
    %2006 = vmatprep.subr.mxu0 0.0
    %2007 = vmatpush2.xpose.msra.mxu0 0.0
    %2008 = vmatprep.subr.mxu0 0.0
    %2009 = vmatpush2.xpose.msra.mxu0 0.0
    %2010 = vmatprep.subr.mxu0 0.0
    %2011 = vmatpush2.xpose.msra.mxu0 0.0
    %2012 = vmatprep.subr.mxu0 0.0
    %2013 = vmatpush2.xpose.msra.mxu0 0.0
    %2014 = vmatprep.mubr.f32.mxu0 0.0
    %2015 = vmatmul.mubr.f32.gmra.mxu0 %v1946
    %v2016 = vpop.f32.mrf.mxu0
    %v2017 = vadd.f32 0.0, %v2016
    %v2018 = vpop.f32.mrf.mxu0
    %2019 = vdwg.mxu0
    %2020 = vrot.lane.b32.xlu0 %v261, 64
    %v2021 = vpop.permute.xlu0 %2020
    %2022 = vrot.lane.b32.xlu0 %v369, 64
    %v2023 = vpop.permute.xlu0 %2022
    %v2024 = vsel %vm480, %v2021, 0
    %v2026 = vsel %vm480, %v2023, 0
    %2028 = vmatprep.subr.mxu0 0.0
    %2029 = vmatpush1.xpose.msra.mxu0 0.0
    %2030 = vmatprep.subr.mxu0 0.0
    %2031 = vmatpush1.xpose.msra.mxu0 0.0
    %2032 = vmatprep.subr.mxu0 0.0
    %2033 = vmatpush1.xpose.msra.mxu0 0.0
    %2034 = vmatprep.subr.mxu0 0.0
    %2035 = vmatpush1.xpose.msra.mxu0 0.0
    %2036 = vmatprep.subr.mxu0 0.0
    %2037 = vmatpush1.xpose.msra.mxu0 0.0
    %2038 = vmatprep.subr.mxu0 0.0
    %2039 = vmatpush1.xpose.msra.mxu0 0.0
    %2040 = vmatprep.subr.mxu0 0.0
    %2041 = vmatpush1.xpose.msra.mxu0 0.0
    %2042 = vmatprep.subr.mxu0 0.0
    %2043 = vmatpush1.xpose.msra.mxu0 0.0
    %2044 = vmatprep.subr.mxu0 0.0
    %2045 = vmatpush1.xpose.msra.mxu0 0.0
    %2046 = vmatprep.subr.mxu0 0.0
    %2047 = vmatpush1.xpose.msra.mxu0 0.0
    %2048 = vmatprep.subr.mxu0 0.0
    %2049 = vmatpush1.xpose.msra.mxu0 0.0
    %2050 = vmatprep.subr.mxu0 0.0
    %2051 = vmatpush1.xpose.msra.mxu0 0.0
    %2052 = vmatprep.subr.mxu0 0.0
    %2053 = vmatpush1.xpose.msra.mxu0 0.0
    %2054 = vmatprep.subr.mxu0 0.0
    %2055 = vmatpush1.xpose.msra.mxu0 0.0
    %2056 = vmatprep.subr.mxu0 0.0
    %2057 = vmatpush1.xpose.msra.mxu0 0.0
    %2058 = vmatprep.subr.mxu0 0.0
    %2059 = vmatpush1.xpose.msra.mxu0 %v2026
    %2060 = vmatprep.subr.mxu0 0.0
    %2061 = vmatpush2.xpose.msra.mxu0 0.0
    %2062 = vmatprep.subr.mxu0 0.0
    %2063 = vmatpush2.xpose.msra.mxu0 0.0
    %2064 = vmatprep.subr.mxu0 0.0
    %2065 = vmatpush2.xpose.msra.mxu0 0.0
    %2066 = vmatprep.subr.mxu0 0.0
    %2067 = vmatpush2.xpose.msra.mxu0 0.0
    %2068 = vmatprep.subr.mxu0 0.0
    %2069 = vmatpush2.xpose.msra.mxu0 0.0
    %2070 = vmatprep.subr.mxu0 0.0
    %2071 = vmatpush2.xpose.msra.mxu0 0.0
    %2072 = vmatprep.subr.mxu0 0.0
    %2073 = vmatpush2.xpose.msra.mxu0 0.0
    %2074 = vmatprep.subr.mxu0 0.0
    %2075 = vmatpush2.xpose.msra.mxu0 0.0
    %2076 = vmatprep.subr.mxu0 0.0
    %2077 = vmatpush2.xpose.msra.mxu0 0.0
    %2078 = vmatprep.subr.mxu0 0.0
    %2079 = vmatpush2.xpose.msra.mxu0 0.0
    %2080 = vmatprep.subr.mxu0 0.0
    %2081 = vmatpush2.xpose.msra.mxu0 0.0
    %2082 = vmatprep.subr.mxu0 0.0
    %2083 = vmatpush2.xpose.msra.mxu0 0.0
    %2084 = vmatprep.subr.mxu0 0.0
    %2085 = vmatpush2.xpose.msra.mxu0 0.0
    %2086 = vmatprep.subr.mxu0 0.0
    %2087 = vmatpush2.xpose.msra.mxu0 0.0
    %2088 = vmatprep.subr.mxu0 0.0
    %2089 = vmatpush2.xpose.msra.mxu0 0.0
    %2090 = vmatprep.subr.mxu0 0.0
    %2091 = vmatpush2.xpose.msra.mxu0 0.0
    %2092 = vmatprep.mubr.f32.mxu0 0.0
    %2093 = vmatmul.mubr.f32.gmra.mxu0 %v2024
    %v2094 = vpop.f32.mrf.mxu0
    %v2095 = vadd.f32 0.0, %v2094
    %v2096 = vpop.f32.mrf.mxu0
    %2097 = vdwg.mxu0
    %v2098 = vsel %vm785, %v1861, -inf
    %2099 = vmax.xlane.f32.xlu0 %v2098
    %v2100 = vpop.xlane.xlu0 %2099
    %v2101 = vsel %vm785, %v1939, -inf
    %2102 = vmax.xlane.f32.xlu0 %v2101
    %v2103 = vpop.xlane.xlu0 %2102
    %v2104 = vsel %vm785, %v2017, -inf
    %2105 = vmax.xlane.f32.xlu0 %v2104
    %v2106 = vpop.xlane.xlu0 %2105
    %v2107 = vsel %vm785, %v2095, -inf
    %2108 = vmax.xlane.f32.xlu0 %v2107
    %v2109 = vpop.xlane.xlu0 %2108
    %v2110 = vsub.f32 %v1861, %v2100
    %v2111 = vsub.f32 %v1939, %v2103
    %v2112 = vsub.f32 %v2017, %v2106
    %v2113 = vsub.f32 %v2095, %v2109
    %v2114 = vmul.f32 %v2110, 1.442695
    %v2115 = vpow.pop %v2114
    %v2116 = vmul.f32 %v2111, 1.442695
    %v2117 = vpow.pop %v2116
    %v2118 = vmul.f32 %v2112, 1.442695
    %v2119 = vpow.pop %v2118
    %v2120 = vmul.f32 %v2113, 1.442695
    %v2121 = vpow.pop %v2120
    %v2122 = vsel %vm785, %v2115, 0.0
    %2123 = vadd.xlane.f32.xlu0 %v2122
    %v2124 = vpop.xlane.xlu0 %2123
    %v2125 = vsel %vm785, %v2117, 0.0
    %2126 = vadd.xlane.f32.xlu0 %v2125
    %v2127 = vpop.xlane.xlu0 %2126
    %v2128 = vsel %vm785, %v2119, 0.0
    %2129 = vadd.xlane.f32.xlu0 %v2128
    %v2130 = vpop.xlane.xlu0 %2129
    %v2131 = vsel %vm785, %v2121, 0.0
    %2132 = vadd.xlane.f32.xlu0 %v2131
    %v2133 = vpop.xlane.xlu0 %2132
    %v2134 = vrcp.pop %v2124
    %v2135 = vrcp.pop %v2127
    %v2136 = vrcp.pop %v2130
    %v2137 = vrcp.pop %v2133
    %v2138 = vmul.f32 %v2115, %v2134
    %v2139 = vmul.f32 %v2117, %v2135
    %v2140 = vmul.f32 %v2119, %v2136
    %v2141 = vmul.f32 %v2121, %v2137
    %2142 = vrot.lane.b32.xlu0 %v462, 64
    %v2143 = vpop.permute.xlu0 %2142
    %v2146 = vsel %vm785, %v2138, 0
    %2148 = vmatprep.subr.mxu0 0.0
    %2149 = vmatpush1.msra.mxu0 0.0
    %2150 = vmatprep.subr.mxu0 0.0
    %2151 = vmatpush1.msra.mxu0 0.0
    %2152 = vmatprep.subr.mxu0 0.0
    %2153 = vmatpush1.msra.mxu0 0.0
    %2154 = vmatprep.subr.mxu0 0.0
    %2155 = vmatpush1.msra.mxu0 0.0
    %2156 = vmatprep.subr.mxu0 0.0
    %2157 = vmatpush1.msra.mxu0 0.0
    %2158 = vmatprep.subr.mxu0 0.0
    %2159 = vmatpush1.msra.mxu0 0.0
    %2160 = vmatprep.subr.mxu0 0.0
    %2161 = vmatpush1.msra.mxu0 0.0
    %2162 = vmatprep.subr.mxu0 0.0
    %2163 = vmatpush1.msra.mxu0 0.0
    %2164 = vmatprep.subr.mxu0 0.0
    %2165 = vmatpush1.msra.mxu0 0.0
    %2166 = vmatprep.subr.mxu0 0.0
    %2167 = vmatpush1.msra.mxu0 0.0
    %2168 = vmatprep.subr.mxu0 0.0
    %2169 = vmatpush1.msra.mxu0 0.0
    %2170 = vmatprep.subr.mxu0 0.0
    %2171 = vmatpush1.msra.mxu0 0.0
    %2172 = vmatprep.subr.mxu0 0.0
    %2173 = vmatpush1.msra.mxu0 0.0
    %2174 = vmatprep.subr.mxu0 0.0
    %2175 = vmatpush1.msra.mxu0 0.0
    %2176 = vmatprep.subr.mxu0 0.0
    %2177 = vmatpush1.msra.mxu0 0.0
    %2178 = vmatprep.subr.mxu0 0.0
    %2179 = vmatpush1.msra.mxu0 %v2143
    %2180 = vmatprep.subr.mxu0 0.0
    %2181 = vmatpush2.msra.mxu0 0.0
    %2182 = vmatprep.subr.mxu0 0.0
    %2183 = vmatpush2.msra.mxu0 0.0
    %2184 = vmatprep.subr.mxu0 0.0
    %2185 = vmatpush2.msra.mxu0 0.0
    %2186 = vmatprep.subr.mxu0 0.0
    %2187 = vmatpush2.msra.mxu0 0.0
    %2188 = vmatprep.subr.mxu0 0.0
    %2189 = vmatpush2.msra.mxu0 0.0
    %2190 = vmatprep.subr.mxu0 0.0
    %2191 = vmatpush2.msra.mxu0 0.0
    %2192 = vmatprep.subr.mxu0 0.0
    %2193 = vmatpush2.msra.mxu0 0.0
    %2194 = vmatprep.subr.mxu0 0.0
    %2195 = vmatpush2.msra.mxu0 0.0
    %2196 = vmatprep.subr.mxu0 0.0
    %2197 = vmatpush2.msra.mxu0 0.0
    %2198 = vmatprep.subr.mxu0 0.0
    %2199 = vmatpush2.msra.mxu0 0.0
    %2200 = vmatprep.subr.mxu0 0.0
    %2201 = vmatpush2.msra.mxu0 0.0
    %2202 = vmatprep.subr.mxu0 0.0
    %2203 = vmatpush2.msra.mxu0 0.0
    %2204 = vmatprep.subr.mxu0 0.0
    %2205 = vmatpush2.msra.mxu0 0.0
    %2206 = vmatprep.subr.mxu0 0.0
    %2207 = vmatpush2.msra.mxu0 0.0
    %2208 = vmatprep.subr.mxu0 0.0
    %2209 = vmatpush2.msra.mxu0 0.0
    %2210 = vmatprep.subr.mxu0 0.0
    %2211 = vmatpush2.msra.mxu0 0.0
    %2212 = vmatprep.mubr.f32.mxu0 0.0
    %2213 = vmatmul.mubr.f32.gmra.mxu0 %v2146
    %v2214 = vpop.f32.mrf.mxu0
    %v2215 = vadd.f32 0.0, %v2214
    %v2216 = vpop.f32.mrf.mxu0
    %2217 = vdwg.mxu0
    %2218 = vrot.lane.b32.xlu0 %v467, 64
    %v2219 = vpop.permute.xlu0 %2218
    %v2222 = vsel %vm785, %v2139, 0
    %2224 = vmatprep.subr.mxu0 0.0
    %2225 = vmatpush1.msra.mxu0 0.0
    %2226 = vmatprep.subr.mxu0 0.0
    %2227 = vmatpush1.msra.mxu0 0.0
    %2228 = vmatprep.subr.mxu0 0.0
    %2229 = vmatpush1.msra.mxu0 0.0
    %2230 = vmatprep.subr.mxu0 0.0
    %2231 = vmatpush1.msra.mxu0 0.0
    %2232 = vmatprep.subr.mxu0 0.0
    %2233 = vmatpush1.msra.mxu0 0.0
    %2234 = vmatprep.subr.mxu0 0.0
    %2235 = vmatpush1.msra.mxu0 0.0
    %2236 = vmatprep.subr.mxu0 0.0
    %2237 = vmatpush1.msra.mxu0 0.0
    %2238 = vmatprep.subr.mxu0 0.0
    %2239 = vmatpush1.msra.mxu0 0.0
    %2240 = vmatprep.subr.mxu0 0.0
    %2241 = vmatpush1.msra.mxu0 0.0
    %2242 = vmatprep.subr.mxu0 0.0
    %2243 = vmatpush1.msra.mxu0 0.0
    %2244 = vmatprep.subr.mxu0 0.0
    %2245 = vmatpush1.msra.mxu0 0.0
    %2246 = vmatprep.subr.mxu0 0.0
    %2247 = vmatpush1.msra.mxu0 0.0
    %2248 = vmatprep.subr.mxu0 0.0
    %2249 = vmatpush1.msra.mxu0 0.0
    %2250 = vmatprep.subr.mxu0 0.0
    %2251 = vmatpush1.msra.mxu0 0.0
    %2252 = vmatprep.subr.mxu0 0.0
    %2253 = vmatpush1.msra.mxu0 0.0
    %2254 = vmatprep.subr.mxu0 0.0
    %2255 = vmatpush1.msra.mxu0 %v2219
    %2256 = vmatprep.subr.mxu0 0.0
    %2257 = vmatpush2.msra.mxu0 0.0
    %2258 = vmatprep.subr.mxu0 0.0
    %2259 = vmatpush2.msra.mxu0 0.0
    %2260 = vmatprep.subr.mxu0 0.0
    %2261 = vmatpush2.msra.mxu0 0.0
    %2262 = vmatprep.subr.mxu0 0.0
    %2263 = vmatpush2.msra.mxu0 0.0
    %2264 = vmatprep.subr.mxu0 0.0
    %2265 = vmatpush2.msra.mxu0 0.0
    %2266 = vmatprep.subr.mxu0 0.0
    %2267 = vmatpush2.msra.mxu0 0.0
    %2268 = vmatprep.subr.mxu0 0.0
    %2269 = vmatpush2.msra.mxu0 0.0
    %2270 = vmatprep.subr.mxu0 0.0
    %2271 = vmatpush2.msra.mxu0 0.0
    %2272 = vmatprep.subr.mxu0 0.0
    %2273 = vmatpush2.msra.mxu0 0.0
    %2274 = vmatprep.subr.mxu0 0.0
    %2275 = vmatpush2.msra.mxu0 0.0
    %2276 = vmatprep.subr.mxu0 0.0
    %2277 = vmatpush2.msra.mxu0 0.0
    %2278 = vmatprep.subr.mxu0 0.0
    %2279 = vmatpush2.msra.mxu0 0.0
    %2280 = vmatprep.subr.mxu0 0.0
    %2281 = vmatpush2.msra.mxu0 0.0
    %2282 = vmatprep.subr.mxu0 0.0
    %2283 = vmatpush2.msra.mxu0 0.0
    %2284 = vmatprep.subr.mxu0 0.0
    %2285 = vmatpush2.msra.mxu0 0.0
    %2286 = vmatprep.subr.mxu0 0.0
    %2287 = vmatpush2.msra.mxu0 0.0
    %2288 = vmatprep.mubr.f32.mxu0 0.0
    %2289 = vmatmul.mubr.f32.gmra.mxu0 %v2222
    %v2290 = vpop.f32.mrf.mxu0
    %v2291 = vadd.f32 0.0, %v2290
    %v2292 = vpop.f32.mrf.mxu0
    %2293 = vdwg.mxu0
    %2294 = vrot.lane.b32.xlu0 %v472, 64
    %v2295 = vpop.permute.xlu0 %2294
    %v2298 = vsel %vm785, %v2140, 0
    %2300 = vmatprep.subr.mxu0 0.0
    %2301 = vmatpush1.msra.mxu0 0.0
    %2302 = vmatprep.subr.mxu0 0.0
    %2303 = vmatpush1.msra.mxu0 0.0
    %2304 = vmatprep.subr.mxu0 0.0
    %2305 = vmatpush1.msra.mxu0 0.0
    %2306 = vmatprep.subr.mxu0 0.0
    %2307 = vmatpush1.msra.mxu0 0.0
    %2308 = vmatprep.subr.mxu0 0.0
    %2309 = vmatpush1.msra.mxu0 0.0
    %2310 = vmatprep.subr.mxu0 0.0
    %2311 = vmatpush1.msra.mxu0 0.0
    %2312 = vmatprep.subr.mxu0 0.0
    %2313 = vmatpush1.msra.mxu0 0.0
    %2314 = vmatprep.subr.mxu0 0.0
    %2315 = vmatpush1.msra.mxu0 0.0
    %2316 = vmatprep.subr.mxu0 0.0
    %2317 = vmatpush1.msra.mxu0 0.0
    %2318 = vmatprep.subr.mxu0 0.0
    %2319 = vmatpush1.msra.mxu0 0.0
    %2320 = vmatprep.subr.mxu0 0.0
    %2321 = vmatpush1.msra.mxu0 0.0
    %2322 = vmatprep.subr.mxu0 0.0
    %2323 = vmatpush1.msra.mxu0 0.0
    %2324 = vmatprep.subr.mxu0 0.0
    %2325 = vmatpush1.msra.mxu0 0.0
    %2326 = vmatprep.subr.mxu0 0.0
    %2327 = vmatpush1.msra.mxu0 0.0
    %2328 = vmatprep.subr.mxu0 0.0
    %2329 = vmatpush1.msra.mxu0 0.0
    %2330 = vmatprep.subr.mxu0 0.0
    %2331 = vmatpush1.msra.mxu0 %v2295
    %2332 = vmatprep.subr.mxu0 0.0
    %2333 = vmatpush2.msra.mxu0 0.0
    %2334 = vmatprep.subr.mxu0 0.0
    %2335 = vmatpush2.msra.mxu0 0.0
    %2336 = vmatprep.subr.mxu0 0.0
    %2337 = vmatpush2.msra.mxu0 0.0
    %2338 = vmatprep.subr.mxu0 0.0
    %2339 = vmatpush2.msra.mxu0 0.0
    %2340 = vmatprep.subr.mxu0 0.0
    %2341 = vmatpush2.msra.mxu0 0.0
    %2342 = vmatprep.subr.mxu0 0.0
    %2343 = vmatpush2.msra.mxu0 0.0
    %2344 = vmatprep.subr.mxu0 0.0
    %2345 = vmatpush2.msra.mxu0 0.0
    %2346 = vmatprep.subr.mxu0 0.0
    %2347 = vmatpush2.msra.mxu0 0.0
    %2348 = vmatprep.subr.mxu0 0.0
    %2349 = vmatpush2.msra.mxu0 0.0
    %2350 = vmatprep.subr.mxu0 0.0
    %2351 = vmatpush2.msra.mxu0 0.0
    %2352 = vmatprep.subr.mxu0 0.0
    %2353 = vmatpush2.msra.mxu0 0.0
    %2354 = vmatprep.subr.mxu0 0.0
    %2355 = vmatpush2.msra.mxu0 0.0
    %2356 = vmatprep.subr.mxu0 0.0
    %2357 = vmatpush2.msra.mxu0 0.0
    %2358 = vmatprep.subr.mxu0 0.0
    %2359 = vmatpush2.msra.mxu0 0.0
    %2360 = vmatprep.subr.mxu0 0.0
    %2361 = vmatpush2.msra.mxu0 0.0
    %2362 = vmatprep.subr.mxu0 0.0
    %2363 = vmatpush2.msra.mxu0 0.0
    %2364 = vmatprep.mubr.f32.mxu0 0.0
    %2365 = vmatmul.mubr.f32.gmra.mxu0 %v2298
    %v2366 = vpop.f32.mrf.mxu0
    %v2367 = vadd.f32 0.0, %v2366
    %v2368 = vpop.f32.mrf.mxu0
    %2369 = vdwg.mxu0
    %2370 = vrot.lane.b32.xlu0 %v477, 64
    %v2371 = vpop.permute.xlu0 %2370
    %v2374 = vsel %vm785, %v2141, 0
    %2376 = vmatprep.subr.mxu0 0.0
    %2377 = vmatpush1.msra.mxu0 0.0
    %2378 = vmatprep.subr.mxu0 0.0
    %2379 = vmatpush1.msra.mxu0 0.0
    %2380 = vmatprep.subr.mxu0 0.0
    %2381 = vmatpush1.msra.mxu0 0.0
    %2382 = vmatprep.subr.mxu0 0.0
    %2383 = vmatpush1.msra.mxu0 0.0
    %2384 = vmatprep.subr.mxu0 0.0
    %2385 = vmatpush1.msra.mxu0 0.0
    %2386 = vmatprep.subr.mxu0 0.0
    %2387 = vmatpush1.msra.mxu0 0.0
    %2388 = vmatprep.subr.mxu0 0.0
    %2389 = vmatpush1.msra.mxu0 0.0
    %2390 = vmatprep.subr.mxu0 0.0
    %2391 = vmatpush1.msra.mxu0 0.0
    %2392 = vmatprep.subr.mxu0 0.0
    %2393 = vmatpush1.msra.mxu0 0.0
    %2394 = vmatprep.subr.mxu0 0.0
    %2395 = vmatpush1.msra.mxu0 0.0
    %2396 = vmatprep.subr.mxu0 0.0
    %2397 = vmatpush1.msra.mxu0 0.0
    %2398 = vmatprep.subr.mxu0 0.0
    %2399 = vmatpush1.msra.mxu0 0.0
    %2400 = vmatprep.subr.mxu0 0.0
    %2401 = vmatpush1.msra.mxu0 0.0
    %2402 = vmatprep.subr.mxu0 0.0
    %2403 = vmatpush1.msra.mxu0 0.0
    %2404 = vmatprep.subr.mxu0 0.0
    %2405 = vmatpush1.msra.mxu0 0.0
    %2406 = vmatprep.subr.mxu0 0.0
    %2407 = vmatpush1.msra.mxu0 %v2371
    %2408 = vmatprep.subr.mxu0 0.0
    %2409 = vmatpush2.msra.mxu0 0.0
    %2410 = vmatprep.subr.mxu0 0.0
    %2411 = vmatpush2.msra.mxu0 0.0
    %2412 = vmatprep.subr.mxu0 0.0
    %2413 = vmatpush2.msra.mxu0 0.0
    %2414 = vmatprep.subr.mxu0 0.0
    %2415 = vmatpush2.msra.mxu0 0.0
    %2416 = vmatprep.subr.mxu0 0.0
    %2417 = vmatpush2.msra.mxu0 0.0
    %2418 = vmatprep.subr.mxu0 0.0
    %2419 = vmatpush2.msra.mxu0 0.0
    %2420 = vmatprep.subr.mxu0 0.0
    %2421 = vmatpush2.msra.mxu0 0.0
    %2422 = vmatprep.subr.mxu0 0.0
    %2423 = vmatpush2.msra.mxu0 0.0
    %2424 = vmatprep.subr.mxu0 0.0
    %2425 = vmatpush2.msra.mxu0 0.0
    %2426 = vmatprep.subr.mxu0 0.0
    %2427 = vmatpush2.msra.mxu0 0.0
    %2428 = vmatprep.subr.mxu0 0.0
    %2429 = vmatpush2.msra.mxu0 0.0
    %2430 = vmatprep.subr.mxu0 0.0
    %2431 = vmatpush2.msra.mxu0 0.0
    %2432 = vmatprep.subr.mxu0 0.0
    %2433 = vmatpush2.msra.mxu0 0.0
    %2434 = vmatprep.subr.mxu0 0.0
    %2435 = vmatpush2.msra.mxu0 0.0
    %2436 = vmatprep.subr.mxu0 0.0
    %2437 = vmatpush2.msra.mxu0 0.0
    %2438 = vmatprep.subr.mxu0 0.0
    %2439 = vmatpush2.msra.mxu0 0.0
    %2440 = vmatprep.mubr.f32.mxu0 0.0
    %2441 = vmatmul.mubr.f32.gmra.mxu0 %v2374
    %v2442 = vpop.f32.mrf.mxu0
    %v2443 = vadd.f32 0.0, %v2442
    %v2444 = vpop.f32.mrf.mxu0
    %2445 = vdwg.mxu0
    %2446 = vrot.lane.b32.xlu0 %v246, 32
    %v2447 = vpop.permute.xlu0 %2446
    %2448 = vrot.lane.b32.xlu0 %v354, 32
    %v2449 = vpop.permute.xlu0 %2448
    %v2450 = vsel %vm480, %v2447, 0
    %v2452 = vsel %vm480, %v2449, 0
    %2454 = vmatprep.subr.mxu0 0.0
    %2455 = vmatpush1.xpose.msra.mxu0 0.0
    %2456 = vmatprep.subr.mxu0 0.0
    %2457 = vmatpush1.xpose.msra.mxu0 0.0
    %2458 = vmatprep.subr.mxu0 0.0
    %2459 = vmatpush1.xpose.msra.mxu0 0.0
    %2460 = vmatprep.subr.mxu0 0.0
    %2461 = vmatpush1.xpose.msra.mxu0 0.0
    %2462 = vmatprep.subr.mxu0 0.0
    %2463 = vmatpush1.xpose.msra.mxu0 0.0
    %2464 = vmatprep.subr.mxu0 0.0
    %2465 = vmatpush1.xpose.msra.mxu0 0.0
    %2466 = vmatprep.subr.mxu0 0.0
    %2467 = vmatpush1.xpose.msra.mxu0 0.0
    %2468 = vmatprep.subr.mxu0 0.0
    %2469 = vmatpush1.xpose.msra.mxu0 0.0
    %2470 = vmatprep.subr.mxu0 0.0
    %2471 = vmatpush1.xpose.msra.mxu0 0.0
    %2472 = vmatprep.subr.mxu0 0.0
    %2473 = vmatpush1.xpose.msra.mxu0 0.0
    %2474 = vmatprep.subr.mxu0 0.0
    %2475 = vmatpush1.xpose.msra.mxu0 0.0
    %2476 = vmatprep.subr.mxu0 0.0
    %2477 = vmatpush1.xpose.msra.mxu0 0.0
    %2478 = vmatprep.subr.mxu0 0.0
    %2479 = vmatpush1.xpose.msra.mxu0 0.0
    %2480 = vmatprep.subr.mxu0 0.0
    %2481 = vmatpush1.xpose.msra.mxu0 0.0
    %2482 = vmatprep.subr.mxu0 0.0
    %2483 = vmatpush1.xpose.msra.mxu0 0.0
    %2484 = vmatprep.subr.mxu0 0.0
    %2485 = vmatpush1.xpose.msra.mxu0 %v2452
    %2486 = vmatprep.subr.mxu0 0.0
    %2487 = vmatpush2.xpose.msra.mxu0 0.0
    %2488 = vmatprep.subr.mxu0 0.0
    %2489 = vmatpush2.xpose.msra.mxu0 0.0
    %2490 = vmatprep.subr.mxu0 0.0
    %2491 = vmatpush2.xpose.msra.mxu0 0.0
    %2492 = vmatprep.subr.mxu0 0.0
    %2493 = vmatpush2.xpose.msra.mxu0 0.0
    %2494 = vmatprep.subr.mxu0 0.0
    %2495 = vmatpush2.xpose.msra.mxu0 0.0
    %2496 = vmatprep.subr.mxu0 0.0
    %2497 = vmatpush2.xpose.msra.mxu0 0.0
    %2498 = vmatprep.subr.mxu0 0.0
    %2499 = vmatpush2.xpose.msra.mxu0 0.0
    %2500 = vmatprep.subr.mxu0 0.0
    %2501 = vmatpush2.xpose.msra.mxu0 0.0
    %2502 = vmatprep.subr.mxu0 0.0
    %2503 = vmatpush2.xpose.msra.mxu0 0.0
    %2504 = vmatprep.subr.mxu0 0.0
    %2505 = vmatpush2.xpose.msra.mxu0 0.0
    %2506 = vmatprep.subr.mxu0 0.0
    %2507 = vmatpush2.xpose.msra.mxu0 0.0
    %2508 = vmatprep.subr.mxu0 0.0
    %2509 = vmatpush2.xpose.msra.mxu0 0.0
    %2510 = vmatprep.subr.mxu0 0.0
    %2511 = vmatpush2.xpose.msra.mxu0 0.0
    %2512 = vmatprep.subr.mxu0 0.0
    %2513 = vmatpush2.xpose.msra.mxu0 0.0
    %2514 = vmatprep.subr.mxu0 0.0
    %2515 = vmatpush2.xpose.msra.mxu0 0.0
    %2516 = vmatprep.subr.mxu0 0.0
    %2517 = vmatpush2.xpose.msra.mxu0 0.0
    %2518 = vmatprep.mubr.f32.mxu0 0.0
    %2519 = vmatmul.mubr.f32.gmra.mxu0 %v2450
    %v2520 = vpop.f32.mrf.mxu0
    %v2521 = vadd.f32 0.0, %v2520
    %v2522 = vpop.f32.mrf.mxu0
    %2523 = vdwg.mxu0
    %2524 = vrot.lane.b32.xlu0 %v251, 32
    %v2525 = vpop.permute.xlu0 %2524
    %2526 = vrot.lane.b32.xlu0 %v359, 32
    %v2527 = vpop.permute.xlu0 %2526
    %v2528 = vsel %vm480, %v2525, 0
    %v2530 = vsel %vm480, %v2527, 0
    %2532 = vmatprep.subr.mxu0 0.0
    %2533 = vmatpush1.xpose.msra.mxu0 0.0
    %2534 = vmatprep.subr.mxu0 0.0
    %2535 = vmatpush1.xpose.msra.mxu0 0.0
    %2536 = vmatprep.subr.mxu0 0.0
    %2537 = vmatpush1.xpose.msra.mxu0 0.0
    %2538 = vmatprep.subr.mxu0 0.0
    %2539 = vmatpush1.xpose.msra.mxu0 0.0
    %2540 = vmatprep.subr.mxu0 0.0
    %2541 = vmatpush1.xpose.msra.mxu0 0.0
    %2542 = vmatprep.subr.mxu0 0.0
    %2543 = vmatpush1.xpose.msra.mxu0 0.0
    %2544 = vmatprep.subr.mxu0 0.0
    %2545 = vmatpush1.xpose.msra.mxu0 0.0
    %2546 = vmatprep.subr.mxu0 0.0
    %2547 = vmatpush1.xpose.msra.mxu0 0.0
    %2548 = vmatprep.subr.mxu0 0.0
    %2549 = vmatpush1.xpose.msra.mxu0 0.0
    %2550 = vmatprep.subr.mxu0 0.0
    %2551 = vmatpush1.xpose.msra.mxu0 0.0
    %2552 = vmatprep.subr.mxu0 0.0
    %2553 = vmatpush1.xpose.msra.mxu0 0.0
    %2554 = vmatprep.subr.mxu0 0.0
    %2555 = vmatpush1.xpose.msra.mxu0 0.0
    %2556 = vmatprep.subr.mxu0 0.0
    %2557 = vmatpush1.xpose.msra.mxu0 0.0
    %2558 = vmatprep.subr.mxu0 0.0
    %2559 = vmatpush1.xpose.msra.mxu0 0.0
    %2560 = vmatprep.subr.mxu0 0.0
    %2561 = vmatpush1.xpose.msra.mxu0 0.0
    %2562 = vmatprep.subr.mxu0 0.0
    %2563 = vmatpush1.xpose.msra.mxu0 %v2530
    %2564 = vmatprep.subr.mxu0 0.0
    %2565 = vmatpush2.xpose.msra.mxu0 0.0
    %2566 = vmatprep.subr.mxu0 0.0
    %2567 = vmatpush2.xpose.msra.mxu0 0.0
    %2568 = vmatprep.subr.mxu0 0.0
    %2569 = vmatpush2.xpose.msra.mxu0 0.0
    %2570 = vmatprep.subr.mxu0 0.0
    %2571 = vmatpush2.xpose.msra.mxu0 0.0
    %2572 = vmatprep.subr.mxu0 0.0
    %2573 = vmatpush2.xpose.msra.mxu0 0.0
    %2574 = vmatprep.subr.mxu0 0.0
    %2575 = vmatpush2.xpose.msra.mxu0 0.0
    %2576 = vmatprep.subr.mxu0 0.0
    %2577 = vmatpush2.xpose.msra.mxu0 0.0
    %2578 = vmatprep.subr.mxu0 0.0
    %2579 = vmatpush2.xpose.msra.mxu0 0.0
    %2580 = vmatprep.subr.mxu0 0.0
    %2581 = vmatpush2.xpose.msra.mxu0 0.0
    %2582 = vmatprep.subr.mxu0 0.0
    %2583 = vmatpush2.xpose.msra.mxu0 0.0
    %2584 = vmatprep.subr.mxu0 0.0
    %2585 = vmatpush2.xpose.msra.mxu0 0.0
    %2586 = vmatprep.subr.mxu0 0.0
    %2587 = vmatpush2.xpose.msra.mxu0 0.0
    %2588 = vmatprep.subr.mxu0 0.0
    %2589 = vmatpush2.xpose.msra.mxu0 0.0
    %2590 = vmatprep.subr.mxu0 0.0
    %2591 = vmatpush2.xpose.msra.mxu0 0.0
    %2592 = vmatprep.subr.mxu0 0.0
    %2593 = vmatpush2.xpose.msra.mxu0 0.0
    %2594 = vmatprep.subr.mxu0 0.0
    %2595 = vmatpush2.xpose.msra.mxu0 0.0
    %2596 = vmatprep.mubr.f32.mxu0 0.0
    %2597 = vmatmul.mubr.f32.gmra.mxu0 %v2528
    %v2598 = vpop.f32.mrf.mxu0
    %v2599 = vadd.f32 0.0, %v2598
    %v2600 = vpop.f32.mrf.mxu0
    %2601 = vdwg.mxu0
    %2602 = vrot.lane.b32.xlu0 %v256, 32
    %v2603 = vpop.permute.xlu0 %2602
    %2604 = vrot.lane.b32.xlu0 %v364, 32
    %v2605 = vpop.permute.xlu0 %2604
    %v2606 = vsel %vm480, %v2603, 0
    %v2608 = vsel %vm480, %v2605, 0
    %2610 = vmatprep.subr.mxu0 0.0
    %2611 = vmatpush1.xpose.msra.mxu0 0.0
    %2612 = vmatprep.subr.mxu0 0.0
    %2613 = vmatpush1.xpose.msra.mxu0 0.0
    %2614 = vmatprep.subr.mxu0 0.0
    %2615 = vmatpush1.xpose.msra.mxu0 0.0
    %2616 = vmatprep.subr.mxu0 0.0
    %2617 = vmatpush1.xpose.msra.mxu0 0.0
    %2618 = vmatprep.subr.mxu0 0.0
    %2619 = vmatpush1.xpose.msra.mxu0 0.0
    %2620 = vmatprep.subr.mxu0 0.0
    %2621 = vmatpush1.xpose.msra.mxu0 0.0
    %2622 = vmatprep.subr.mxu0 0.0
    %2623 = vmatpush1.xpose.msra.mxu0 0.0
    %2624 = vmatprep.subr.mxu0 0.0
    %2625 = vmatpush1.xpose.msra.mxu0 0.0
    %2626 = vmatprep.subr.mxu0 0.0
    %2627 = vmatpush1.xpose.msra.mxu0 0.0
    %2628 = vmatprep.subr.mxu0 0.0
    %2629 = vmatpush1.xpose.msra.mxu0 0.0
    %2630 = vmatprep.subr.mxu0 0.0
    %2631 = vmatpush1.xpose.msra.mxu0 0.0
    %2632 = vmatprep.subr.mxu0 0.0
    %2633 = vmatpush1.xpose.msra.mxu0 0.0
    %2634 = vmatprep.subr.mxu0 0.0
    %2635 = vmatpush1.xpose.msra.mxu0 0.0
    %2636 = vmatprep.subr.mxu0 0.0
    %2637 = vmatpush1.xpose.msra.mxu0 0.0
    %2638 = vmatprep.subr.mxu0 0.0
    %2639 = vmatpush1.xpose.msra.mxu0 0.0
    %2640 = vmatprep.subr.mxu0 0.0
    %2641 = vmatpush1.xpose.msra.mxu0 %v2608
    %2642 = vmatprep.subr.mxu0 0.0
    %2643 = vmatpush2.xpose.msra.mxu0 0.0
    %2644 = vmatprep.subr.mxu0 0.0
    %2645 = vmatpush2.xpose.msra.mxu0 0.0
    %2646 = vmatprep.subr.mxu0 0.0
    %2647 = vmatpush2.xpose.msra.mxu0 0.0
    %2648 = vmatprep.subr.mxu0 0.0
    %2649 = vmatpush2.xpose.msra.mxu0 0.0
    %2650 = vmatprep.subr.mxu0 0.0
    %2651 = vmatpush2.xpose.msra.mxu0 0.0
    %2652 = vmatprep.subr.mxu0 0.0
    %2653 = vmatpush2.xpose.msra.mxu0 0.0
    %2654 = vmatprep.subr.mxu0 0.0
    %2655 = vmatpush2.xpose.msra.mxu0 0.0
    %2656 = vmatprep.subr.mxu0 0.0
    %2657 = vmatpush2.xpose.msra.mxu0 0.0
    %2658 = vmatprep.subr.mxu0 0.0
    %2659 = vmatpush2.xpose.msra.mxu0 0.0
    %2660 = vmatprep.subr.mxu0 0.0
    %2661 = vmatpush2.xpose.msra.mxu0 0.0
    %2662 = vmatprep.subr.mxu0 0.0
    %2663 = vmatpush2.xpose.msra.mxu0 0.0
    %2664 = vmatprep.subr.mxu0 0.0
    %2665 = vmatpush2.xpose.msra.mxu0 0.0
    %2666 = vmatprep.subr.mxu0 0.0
    %2667 = vmatpush2.xpose.msra.mxu0 0.0
    %2668 = vmatprep.subr.mxu0 0.0
    %2669 = vmatpush2.xpose.msra.mxu0 0.0
    %2670 = vmatprep.subr.mxu0 0.0
    %2671 = vmatpush2.xpose.msra.mxu0 0.0
    %2672 = vmatprep.subr.mxu0 0.0
    %2673 = vmatpush2.xpose.msra.mxu0 0.0
    %2674 = vmatprep.mubr.f32.mxu0 0.0
    %2675 = vmatmul.mubr.f32.gmra.mxu0 %v2606
    %v2676 = vpop.f32.mrf.mxu0
    %v2677 = vadd.f32 0.0, %v2676
    %v2678 = vpop.f32.mrf.mxu0
    %2679 = vdwg.mxu0
    %2680 = vrot.lane.b32.xlu0 %v261, 32
    %v2681 = vpop.permute.xlu0 %2680
    %2682 = vrot.lane.b32.xlu0 %v369, 32
    %v2683 = vpop.permute.xlu0 %2682
    %v2684 = vsel %vm480, %v2681, 0
    %v2686 = vsel %vm480, %v2683, 0
    %2688 = vmatprep.subr.mxu0 0.0
    %2689 = vmatpush1.xpose.msra.mxu0 0.0
    %2690 = vmatprep.subr.mxu0 0.0
    %2691 = vmatpush1.xpose.msra.mxu0 0.0
    %2692 = vmatprep.subr.mxu0 0.0
    %2693 = vmatpush1.xpose.msra.mxu0 0.0
    %2694 = vmatprep.subr.mxu0 0.0
    %2695 = vmatpush1.xpose.msra.mxu0 0.0
    %2696 = vmatprep.subr.mxu0 0.0
    %2697 = vmatpush1.xpose.msra.mxu0 0.0
    %2698 = vmatprep.subr.mxu0 0.0
    %2699 = vmatpush1.xpose.msra.mxu0 0.0
    %2700 = vmatprep.subr.mxu0 0.0
    %2701 = vmatpush1.xpose.msra.mxu0 0.0
    %2702 = vmatprep.subr.mxu0 0.0
    %2703 = vmatpush1.xpose.msra.mxu0 0.0
    %2704 = vmatprep.subr.mxu0 0.0
    %2705 = vmatpush1.xpose.msra.mxu0 0.0
    %2706 = vmatprep.subr.mxu0 0.0
    %2707 = vmatpush1.xpose.msra.mxu0 0.0
    %2708 = vmatprep.subr.mxu0 0.0
    %2709 = vmatpush1.xpose.msra.mxu0 0.0
    %2710 = vmatprep.subr.mxu0 0.0
    %2711 = vmatpush1.xpose.msra.mxu0 0.0
    %2712 = vmatprep.subr.mxu0 0.0
    %2713 = vmatpush1.xpose.msra.mxu0 0.0
    %2714 = vmatprep.subr.mxu0 0.0
    %2715 = vmatpush1.xpose.msra.mxu0 0.0
    %2716 = vmatprep.subr.mxu0 0.0
    %2717 = vmatpush1.xpose.msra.mxu0 0.0
    %2718 = vmatprep.subr.mxu0 0.0
    %2719 = vmatpush1.xpose.msra.mxu0 %v2686
    %2720 = vmatprep.subr.mxu0 0.0
    %2721 = vmatpush2.xpose.msra.mxu0 0.0
    %2722 = vmatprep.subr.mxu0 0.0
    %2723 = vmatpush2.xpose.msra.mxu0 0.0
    %2724 = vmatprep.subr.mxu0 0.0
    %2725 = vmatpush2.xpose.msra.mxu0 0.0
    %2726 = vmatprep.subr.mxu0 0.0
    %2727 = vmatpush2.xpose.msra.mxu0 0.0
    %2728 = vmatprep.subr.mxu0 0.0
    %2729 = vmatpush2.xpose.msra.mxu0 0.0
    %2730 = vmatprep.subr.mxu0 0.0
    %2731 = vmatpush2.xpose.msra.mxu0 0.0
    %2732 = vmatprep.subr.mxu0 0.0
    %2733 = vmatpush2.xpose.msra.mxu0 0.0
    %2734 = vmatprep.subr.mxu0 0.0
    %2735 = vmatpush2.xpose.msra.mxu0 0.0
    %2736 = vmatprep.subr.mxu0 0.0
    %2737 = vmatpush2.xpose.msra.mxu0 0.0
    %2738 = vmatprep.subr.mxu0 0.0
    %2739 = vmatpush2.xpose.msra.mxu0 0.0
    %2740 = vmatprep.subr.mxu0 0.0
    %2741 = vmatpush2.xpose.msra.mxu0 0.0
    %2742 = vmatprep.subr.mxu0 0.0
    %2743 = vmatpush2.xpose.msra.mxu0 0.0
    %2744 = vmatprep.subr.mxu0 0.0
    %2745 = vmatpush2.xpose.msra.mxu0 0.0
    %2746 = vmatprep.subr.mxu0 0.0
    %2747 = vmatpush2.xpose.msra.mxu0 0.0
    %2748 = vmatprep.subr.mxu0 0.0
    %2749 = vmatpush2.xpose.msra.mxu0 0.0
    %2750 = vmatprep.subr.mxu0 0.0
    %2751 = vmatpush2.xpose.msra.mxu0 0.0
    %2752 = vmatprep.mubr.f32.mxu0 0.0
    %2753 = vmatmul.mubr.f32.gmra.mxu0 %v2684
    %v2754 = vpop.f32.mrf.mxu0
    %v2755 = vadd.f32 0.0, %v2754
    %v2756 = vpop.f32.mrf.mxu0
    %2757 = vdwg.mxu0
    %v2758 = vsel %vm785, %v2521, -inf
    %2759 = vmax.xlane.f32.xlu0 %v2758
    %v2760 = vpop.xlane.xlu0 %2759
    %v2761 = vsel %vm785, %v2599, -inf
    %2762 = vmax.xlane.f32.xlu0 %v2761
    %v2763 = vpop.xlane.xlu0 %2762
    %v2764 = vsel %vm785, %v2677, -inf
    %2765 = vmax.xlane.f32.xlu0 %v2764
    %v2766 = vpop.xlane.xlu0 %2765
    %v2767 = vsel %vm785, %v2755, -inf
    %2768 = vmax.xlane.f32.xlu0 %v2767
    %v2769 = vpop.xlane.xlu0 %2768
    %v2770 = vsub.f32 %v2521, %v2760
    %v2771 = vsub.f32 %v2599, %v2763
    %v2772 = vsub.f32 %v2677, %v2766
    %v2773 = vsub.f32 %v2755, %v2769
    %v2774 = vmul.f32 %v2770, 1.442695
    %v2775 = vpow.pop %v2774
    %v2776 = vmul.f32 %v2771, 1.442695
    %v2777 = vpow.pop %v2776
    %v2778 = vmul.f32 %v2772, 1.442695
    %v2779 = vpow.pop %v2778
    %v2780 = vmul.f32 %v2773, 1.442695
    %v2781 = vpow.pop %v2780
    %v2782 = vsel %vm785, %v2775, 0.0
    %2783 = vadd.xlane.f32.xlu0 %v2782
    %v2784 = vpop.xlane.xlu0 %2783
    %v2785 = vsel %vm785, %v2777, 0.0
    %2786 = vadd.xlane.f32.xlu0 %v2785
    %v2787 = vpop.xlane.xlu0 %2786
    %v2788 = vsel %vm785, %v2779, 0.0
    %2789 = vadd.xlane.f32.xlu0 %v2788
    %v2790 = vpop.xlane.xlu0 %2789
    %v2791 = vsel %vm785, %v2781, 0.0
    %2792 = vadd.xlane.f32.xlu0 %v2791
    %v2793 = vpop.xlane.xlu0 %2792
    %v2794 = vrcp.pop %v2784
    %v2795 = vrcp.pop %v2787
    %v2796 = vrcp.pop %v2790
    %v2797 = vrcp.pop %v2793
    %v2798 = vmul.f32 %v2775, %v2794
    %v2799 = vmul.f32 %v2777, %v2795
    %v2800 = vmul.f32 %v2779, %v2796
    %v2801 = vmul.f32 %v2781, %v2797
    %2802 = vrot.lane.b32.xlu0 %v462, 32
    %v2803 = vpop.permute.xlu0 %2802
    %v2806 = vsel %vm785, %v2798, 0
    %2808 = vmatprep.subr.mxu0 0.0
    %2809 = vmatpush1.msra.mxu0 0.0
    %2810 = vmatprep.subr.mxu0 0.0
    %2811 = vmatpush1.msra.mxu0 0.0
    %2812 = vmatprep.subr.mxu0 0.0
    %2813 = vmatpush1.msra.mxu0 0.0
    %2814 = vmatprep.subr.mxu0 0.0
    %2815 = vmatpush1.msra.mxu0 0.0
    %2816 = vmatprep.subr.mxu0 0.0
    %2817 = vmatpush1.msra.mxu0 0.0
    %2818 = vmatprep.subr.mxu0 0.0
    %2819 = vmatpush1.msra.mxu0 0.0
    %2820 = vmatprep.subr.mxu0 0.0
    %2821 = vmatpush1.msra.mxu0 0.0
    %2822 = vmatprep.subr.mxu0 0.0
    %2823 = vmatpush1.msra.mxu0 0.0
    %2824 = vmatprep.subr.mxu0 0.0
    %2825 = vmatpush1.msra.mxu0 0.0
    %2826 = vmatprep.subr.mxu0 0.0
    %2827 = vmatpush1.msra.mxu0 0.0
    %2828 = vmatprep.subr.mxu0 0.0
    %2829 = vmatpush1.msra.mxu0 0.0
    %2830 = vmatprep.subr.mxu0 0.0
    %2831 = vmatpush1.msra.mxu0 0.0
    %2832 = vmatprep.subr.mxu0 0.0
    %2833 = vmatpush1.msra.mxu0 0.0
    %2834 = vmatprep.subr.mxu0 0.0
    %2835 = vmatpush1.msra.mxu0 0.0
    %2836 = vmatprep.subr.mxu0 0.0
    %2837 = vmatpush1.msra.mxu0 0.0
    %2838 = vmatprep.subr.mxu0 0.0
    %2839 = vmatpush1.msra.mxu0 %v2803
    %2840 = vmatprep.subr.mxu0 0.0
    %2841 = vmatpush2.msra.mxu0 0.0
    %2842 = vmatprep.subr.mxu0 0.0
    %2843 = vmatpush2.msra.mxu0 0.0
    %2844 = vmatprep.subr.mxu0 0.0
    %2845 = vmatpush2.msra.mxu0 0.0
    %2846 = vmatprep.subr.mxu0 0.0
    %2847 = vmatpush2.msra.mxu0 0.0
    %2848 = vmatprep.subr.mxu0 0.0
    %2849 = vmatpush2.msra.mxu0 0.0
    %2850 = vmatprep.subr.mxu0 0.0
    %2851 = vmatpush2.msra.mxu0 0.0
    %2852 = vmatprep.subr.mxu0 0.0
    %2853 = vmatpush2.msra.mxu0 0.0
    %2854 = vmatprep.subr.mxu0 0.0
    %2855 = vmatpush2.msra.mxu0 0.0
    %2856 = vmatprep.subr.mxu0 0.0
    %2857 = vmatpush2.msra.mxu0 0.0
    %2858 = vmatprep.subr.mxu0 0.0
    %2859 = vmatpush2.msra.mxu0 0.0
    %2860 = vmatprep.subr.mxu0 0.0
    %2861 = vmatpush2.msra.mxu0 0.0
    %2862 = vmatprep.subr.mxu0 0.0
    %2863 = vmatpush2.msra.mxu0 0.0
    %2864 = vmatprep.subr.mxu0 0.0
    %2865 = vmatpush2.msra.mxu0 0.0
    %2866 = vmatprep.subr.mxu0 0.0
    %2867 = vmatpush2.msra.mxu0 0.0
    %2868 = vmatprep.subr.mxu0 0.0
    %2869 = vmatpush2.msra.mxu0 0.0
    %2870 = vmatprep.subr.mxu0 0.0
    %2871 = vmatpush2.msra.mxu0 0.0
    %2872 = vmatprep.mubr.f32.mxu0 0.0
    %2873 = vmatmul.mubr.f32.gmra.mxu0 %v2806
    %v2874 = vpop.f32.mrf.mxu0
    %v2875 = vadd.f32 0.0, %v2874
    %v2876 = vpop.f32.mrf.mxu0
    %2877 = vdwg.mxu0
    %2878 = vrot.lane.b32.xlu0 %v467, 32
    %v2879 = vpop.permute.xlu0 %2878
    %v2882 = vsel %vm785, %v2799, 0
    %2884 = vmatprep.subr.mxu0 0.0
    %2885 = vmatpush1.msra.mxu0 0.0
    %2886 = vmatprep.subr.mxu0 0.0
    %2887 = vmatpush1.msra.mxu0 0.0
    %2888 = vmatprep.subr.mxu0 0.0
    %2889 = vmatpush1.msra.mxu0 0.0
    %2890 = vmatprep.subr.mxu0 0.0
    %2891 = vmatpush1.msra.mxu0 0.0
    %2892 = vmatprep.subr.mxu0 0.0
    %2893 = vmatpush1.msra.mxu0 0.0
    %2894 = vmatprep.subr.mxu0 0.0
    %2895 = vmatpush1.msra.mxu0 0.0
    %2896 = vmatprep.subr.mxu0 0.0
    %2897 = vmatpush1.msra.mxu0 0.0
    %2898 = vmatprep.subr.mxu0 0.0
    %2899 = vmatpush1.msra.mxu0 0.0
    %2900 = vmatprep.subr.mxu0 0.0
    %2901 = vmatpush1.msra.mxu0 0.0
    %2902 = vmatprep.subr.mxu0 0.0
    %2903 = vmatpush1.msra.mxu0 0.0
    %2904 = vmatprep.subr.mxu0 0.0
    %2905 = vmatpush1.msra.mxu0 0.0
    %2906 = vmatprep.subr.mxu0 0.0
    %2907 = vmatpush1.msra.mxu0 0.0
    %2908 = vmatprep.subr.mxu0 0.0
    %2909 = vmatpush1.msra.mxu0 0.0
    %2910 = vmatprep.subr.mxu0 0.0
    %2911 = vmatpush1.msra.mxu0 0.0
    %2912 = vmatprep.subr.mxu0 0.0
    %2913 = vmatpush1.msra.mxu0 0.0
    %2914 = vmatprep.subr.mxu0 0.0
    %2915 = vmatpush1.msra.mxu0 %v2879
    %2916 = vmatprep.subr.mxu0 0.0
    %2917 = vmatpush2.msra.mxu0 0.0
    %2918 = vmatprep.subr.mxu0 0.0
    %2919 = vmatpush2.msra.mxu0 0.0
    %2920 = vmatprep.subr.mxu0 0.0
    %2921 = vmatpush2.msra.mxu0 0.0
    %2922 = vmatprep.subr.mxu0 0.0
    %2923 = vmatpush2.msra.mxu0 0.0
    %2924 = vmatprep.subr.mxu0 0.0
    %2925 = vmatpush2.msra.mxu0 0.0
    %2926 = vmatprep.subr.mxu0 0.0
    %2927 = vmatpush2.msra.mxu0 0.0
    %2928 = vmatprep.subr.mxu0 0.0
    %2929 = vmatpush2.msra.mxu0 0.0
    %2930 = vmatprep.subr.mxu0 0.0
    %2931 = vmatpush2.msra.mxu0 0.0
    %2932 = vmatprep.subr.mxu0 0.0
    %2933 = vmatpush2.msra.mxu0 0.0
    %2934 = vmatprep.subr.mxu0 0.0
    %2935 = vmatpush2.msra.mxu0 0.0
    %2936 = vmatprep.subr.mxu0 0.0
    %2937 = vmatpush2.msra.mxu0 0.0
    %2938 = vmatprep.subr.mxu0 0.0
    %2939 = vmatpush2.msra.mxu0 0.0
    %2940 = vmatprep.subr.mxu0 0.0
    %2941 = vmatpush2.msra.mxu0 0.0
    %2942 = vmatprep.subr.mxu0 0.0
    %2943 = vmatpush2.msra.mxu0 0.0
    %2944 = vmatprep.subr.mxu0 0.0
    %2945 = vmatpush2.msra.mxu0 0.0
    %2946 = vmatprep.subr.mxu0 0.0
    %2947 = vmatpush2.msra.mxu0 0.0
    %2948 = vmatprep.mubr.f32.mxu0 0.0
    %2949 = vmatmul.mubr.f32.gmra.mxu0 %v2882
    %v2950 = vpop.f32.mrf.mxu0
    %v2951 = vadd.f32 0.0, %v2950
    %v2952 = vpop.f32.mrf.mxu0
    %2953 = vdwg.mxu0
    %2954 = vrot.lane.b32.xlu0 %v472, 32
    %v2955 = vpop.permute.xlu0 %2954
    %v2958 = vsel %vm785, %v2800, 0
    %2960 = vmatprep.subr.mxu0 0.0
    %2961 = vmatpush1.msra.mxu0 0.0
    %2962 = vmatprep.subr.mxu0 0.0
    %2963 = vmatpush1.msra.mxu0 0.0
    %2964 = vmatprep.subr.mxu0 0.0
    %2965 = vmatpush1.msra.mxu0 0.0
    %2966 = vmatprep.subr.mxu0 0.0
    %2967 = vmatpush1.msra.mxu0 0.0
    %2968 = vmatprep.subr.mxu0 0.0
    %2969 = vmatpush1.msra.mxu0 0.0
    %2970 = vmatprep.subr.mxu0 0.0
    %2971 = vmatpush1.msra.mxu0 0.0
    %2972 = vmatprep.subr.mxu0 0.0
    %2973 = vmatpush1.msra.mxu0 0.0
    %2974 = vmatprep.subr.mxu0 0.0
    %2975 = vmatpush1.msra.mxu0 0.0
    %2976 = vmatprep.subr.mxu0 0.0
    %2977 = vmatpush1.msra.mxu0 0.0
    %2978 = vmatprep.subr.mxu0 0.0
    %2979 = vmatpush1.msra.mxu0 0.0
    %2980 = vmatprep.subr.mxu0 0.0
    %2981 = vmatpush1.msra.mxu0 0.0
    %2982 = vmatprep.subr.mxu0 0.0
    %2983 = vmatpush1.msra.mxu0 0.0
    %2984 = vmatprep.subr.mxu0 0.0
    %2985 = vmatpush1.msra.mxu0 0.0
    %2986 = vmatprep.subr.mxu0 0.0
    %2987 = vmatpush1.msra.mxu0 0.0
    %2988 = vmatprep.subr.mxu0 0.0
    %2989 = vmatpush1.msra.mxu0 0.0
    %2990 = vmatprep.subr.mxu0 0.0
    %2991 = vmatpush1.msra.mxu0 %v2955
    %2992 = vmatprep.subr.mxu0 0.0
    %2993 = vmatpush2.msra.mxu0 0.0
    %2994 = vmatprep.subr.mxu0 0.0
    %2995 = vmatpush2.msra.mxu0 0.0
    %2996 = vmatprep.subr.mxu0 0.0
    %2997 = vmatpush2.msra.mxu0 0.0
    %2998 = vmatprep.subr.mxu0 0.0
    %2999 = vmatpush2.msra.mxu0 0.0
    %3000 = vmatprep.subr.mxu0 0.0
    %3001 = vmatpush2.msra.mxu0 0.0
    %3002 = vmatprep.subr.mxu0 0.0
    %3003 = vmatpush2.msra.mxu0 0.0
    %3004 = vmatprep.subr.mxu0 0.0
    %3005 = vmatpush2.msra.mxu0 0.0
    %3006 = vmatprep.subr.mxu0 0.0
    %3007 = vmatpush2.msra.mxu0 0.0
    %3008 = vmatprep.subr.mxu0 0.0
    %3009 = vmatpush2.msra.mxu0 0.0
    %3010 = vmatprep.subr.mxu0 0.0
    %3011 = vmatpush2.msra.mxu0 0.0
    %3012 = vmatprep.subr.mxu0 0.0
    %3013 = vmatpush2.msra.mxu0 0.0
    %3014 = vmatprep.subr.mxu0 0.0
    %3015 = vmatpush2.msra.mxu0 0.0
    %3016 = vmatprep.subr.mxu0 0.0
    %3017 = vmatpush2.msra.mxu0 0.0
    %3018 = vmatprep.subr.mxu0 0.0
    %3019 = vmatpush2.msra.mxu0 0.0
    %3020 = vmatprep.subr.mxu0 0.0
    %3021 = vmatpush2.msra.mxu0 0.0
    %3022 = vmatprep.subr.mxu0 0.0
    %3023 = vmatpush2.msra.mxu0 0.0
    %3024 = vmatprep.mubr.f32.mxu0 0.0
    %3025 = vmatmul.mubr.f32.gmra.mxu0 %v2958
    %v3026 = vpop.f32.mrf.mxu0
    %v3027 = vadd.f32 0.0, %v3026
    %v3028 = vpop.f32.mrf.mxu0
    %3029 = vdwg.mxu0
    %3030 = vrot.lane.b32.xlu0 %v477, 32
    %v3031 = vpop.permute.xlu0 %3030
    %v3034 = vsel %vm785, %v2801, 0
    %3036 = vmatprep.subr.mxu0 0.0
    %3037 = vmatpush1.msra.mxu0 0.0
    %3038 = vmatprep.subr.mxu0 0.0
    %3039 = vmatpush1.msra.mxu0 0.0
    %3040 = vmatprep.subr.mxu0 0.0
    %3041 = vmatpush1.msra.mxu0 0.0
    %3042 = vmatprep.subr.mxu0 0.0
    %3043 = vmatpush1.msra.mxu0 0.0
    %3044 = vmatprep.subr.mxu0 0.0
    %3045 = vmatpush1.msra.mxu0 0.0
    %3046 = vmatprep.subr.mxu0 0.0
    %3047 = vmatpush1.msra.mxu0 0.0
    %3048 = vmatprep.subr.mxu0 0.0
    %3049 = vmatpush1.msra.mxu0 0.0
    %3050 = vmatprep.subr.mxu0 0.0
    %3051 = vmatpush1.msra.mxu0 0.0
    %3052 = vmatprep.subr.mxu0 0.0
    %3053 = vmatpush1.msra.mxu0 0.0
    %3054 = vmatprep.subr.mxu0 0.0
    %3055 = vmatpush1.msra.mxu0 0.0
    %3056 = vmatprep.subr.mxu0 0.0
    %3057 = vmatpush1.msra.mxu0 0.0
    %3058 = vmatprep.subr.mxu0 0.0
    %3059 = vmatpush1.msra.mxu0 0.0
    %3060 = vmatprep.subr.mxu0 0.0
    %3061 = vmatpush1.msra.mxu0 0.0
    %3062 = vmatprep.subr.mxu0 0.0
    %3063 = vmatpush1.msra.mxu0 0.0
    %3064 = vmatprep.subr.mxu0 0.0
    %3065 = vmatpush1.msra.mxu0 0.0
    %3066 = vmatprep.subr.mxu0 0.0
    %3067 = vmatpush1.msra.mxu0 %v3031
    %3068 = vmatprep.subr.mxu0 0.0
    %3069 = vmatpush2.msra.mxu0 0.0
    %3070 = vmatprep.subr.mxu0 0.0
    %3071 = vmatpush2.msra.mxu0 0.0
    %3072 = vmatprep.subr.mxu0 0.0
    %3073 = vmatpush2.msra.mxu0 0.0
    %3074 = vmatprep.subr.mxu0 0.0
    %3075 = vmatpush2.msra.mxu0 0.0
    %3076 = vmatprep.subr.mxu0 0.0
    %3077 = vmatpush2.msra.mxu0 0.0
    %3078 = vmatprep.subr.mxu0 0.0
    %3079 = vmatpush2.msra.mxu0 0.0
    %3080 = vmatprep.subr.mxu0 0.0
    %3081 = vmatpush2.msra.mxu0 0.0
    %3082 = vmatprep.subr.mxu0 0.0
    %3083 = vmatpush2.msra.mxu0 0.0
    %3084 = vmatprep.subr.mxu0 0.0
    %3085 = vmatpush2.msra.mxu0 0.0
    %3086 = vmatprep.subr.mxu0 0.0
    %3087 = vmatpush2.msra.mxu0 0.0
    %3088 = vmatprep.subr.mxu0 0.0
    %3089 = vmatpush2.msra.mxu0 0.0
    %3090 = vmatprep.subr.mxu0 0.0
    %3091 = vmatpush2.msra.mxu0 0.0
    %3092 = vmatprep.subr.mxu0 0.0
    %3093 = vmatpush2.msra.mxu0 0.0
    %3094 = vmatprep.subr.mxu0 0.0
    %3095 = vmatpush2.msra.mxu0 0.0
    %3096 = vmatprep.subr.mxu0 0.0
    %3097 = vmatpush2.msra.mxu0 0.0
    %3098 = vmatprep.subr.mxu0 0.0
    %3099 = vmatpush2.msra.mxu0 0.0
    %3100 = vmatprep.mubr.f32.mxu0 0.0
    %3101 = vmatmul.mubr.f32.gmra.mxu0 %v3034
    %v3102 = vpop.f32.mrf.mxu0
    %v3103 = vadd.f32 0.0, %v3102
    %v3104 = vpop.f32.mrf.mxu0
    %3105 = vdwg.mxu0
    %3110 = vrot.lane.b32.xlu0 %v1552, 32
    %v3111 = vpop.permute.xlu0 %3110
    %3112 = vrot.lane.b32.xlu0 %v1629, 32
    %v3113 = vpop.permute.xlu0 %3112
    %3114 = vrot.lane.b32.xlu0 %v1706, 32
    %v3115 = vpop.permute.xlu0 %3114
    %3116 = vrot.lane.b32.xlu0 %v1783, 32
    %v3117 = vpop.permute.xlu0 %3116
    %3126 = vrot.lane.b32.xlu0 %v2215, 64
    %v3127 = vpop.permute.xlu0 %3126
    %3128 = vrot.lane.b32.xlu0 %v2291, 64
    %v3129 = vpop.permute.xlu0 %3128
    %3130 = vrot.lane.b32.xlu0 %v2367, 64
    %v3131 = vpop.permute.xlu0 %3130
    %3132 = vrot.lane.b32.xlu0 %v2443, 64
    %v3133 = vpop.permute.xlu0 %3132
    %3142 = vrot.lane.b32.xlu0 %v2875, 96
    %v3143 = vpop.permute.xlu0 %3142
    %3144 = vrot.lane.b32.xlu0 %v2951, 96
    %v3145 = vpop.permute.xlu0 %3144
    %3146 = vrot.lane.b32.xlu0 %v3027, 96
    %v3147 = vpop.permute.xlu0 %3146
    %3148 = vrot.lane.b32.xlu0 %v3103, 96
    %v3149 = vpop.permute.xlu0 %3148
    %v3154 = vsel %vm480, %v900, %v3111
    %v3155 = vsel %vm480, %v973, %v3113
    %v3156 = vsel %vm480, %v1046, %v3115
    %v3157 = vsel %vm480, %v1119, %v3117
    %vm3158 = vcmask 523264
    %v3159 = vsel %vm3158, %v3154, %v3127
    %v3160 = vsel %vm3158, %v3155, %v3129
    %v3161 = vsel %vm3158, %v3156, %v3131
    %v3162 = vsel %vm3158, %v3157, %v3133
    %vm3163 = vcmask 785408
    %v3164 = vsel %vm3163, %v3159, %v3143
    %v3165 = vsel %vm3163, %v3160, %v3145
    %v3166 = vsel %vm3163, %v3161, %v3147
    %v3167 = vsel %vm3163, %v3162, %v3149
    %v3168 = vld [vmem:[#allocation10] sm:$0xff]
    %v3169 = vld [vmem:[#allocation10 + $0x8] sm:$0xff]
    %v3170 = vld [vmem:[#allocation10 + $0x10] sm:$0xff]
    %v3171 = vld [vmem:[#allocation10 + $0x18] sm:$0xff]
    %v3172 = vld [vmem:[#allocation10 + $0x20] sm:$0xff]
    %v3173 = vld [vmem:[#allocation10 + $0x28] sm:$0xff]
    %v3174 = vld [vmem:[#allocation10 + $0x30] sm:$0xff]
    %v3175 = vld [vmem:[#allocation10 + $0x38] sm:$0xff]
    %v3176 = vld [vmem:[#allocation10 + $0x40] sm:$0xff]
    %v3177 = vld [vmem:[#allocation10 + $0x48] sm:$0xff]
    %v3178 = vld [vmem:[#allocation10 + $0x50] sm:$0xff]
    %v3179 = vld [vmem:[#allocation10 + $0x58] sm:$0xff]
    %v3180 = vld [vmem:[#allocation10 + $0x60] sm:$0xff]
    %v3181 = vld [vmem:[#allocation10 + $0x68] sm:$0xff]
    %v3182 = vld [vmem:[#allocation10 + $0x70] sm:$0xff]
    %v3183 = vld [vmem:[#allocation10 + $0x78] sm:$0xff]
    %v3184 = vld [vmem:[%s8] sm:$0x1]
    %v3186 = vlaneseq
    %v3187 = vshrl.u32 %v3186, 7
    %v3188 = vsub.s32 0, %v3187
    %v3189 = vrot.slane %v3184, %v3188
    %3191 = vmatprep.subr.mxu0 0.0
    %3192 = vmatpush1.msra.mxu0 %v3183
    %3193 = vmatprep.subr.mxu0 0.0
    %3194 = vmatpush1.msra.mxu0 %v3182
    %3195 = vmatprep.subr.mxu0 0.0
    %3196 = vmatpush1.msra.mxu0 %v3181
    %3197 = vmatprep.subr.mxu0 0.0
    %3198 = vmatpush1.msra.mxu0 %v3180
    %3199 = vmatprep.subr.mxu0 0.0
    %3200 = vmatpush1.msra.mxu0 %v3179
    %3201 = vmatprep.subr.mxu0 0.0
    %3202 = vmatpush1.msra.mxu0 %v3178
    %3203 = vmatprep.subr.mxu0 0.0
    %3204 = vmatpush1.msra.mxu0 %v3177
    %3205 = vmatprep.subr.mxu0 0.0
    %3206 = vmatpush1.msra.mxu0 %v3176
    %3207 = vmatprep.subr.mxu0 0.0
    %3208 = vmatpush1.msra.mxu0 %v3175
    %3209 = vmatprep.subr.mxu0 0.0
    %3210 = vmatpush1.msra.mxu0 %v3174
    %3211 = vmatprep.subr.mxu0 0.0
    %3212 = vmatpush1.msra.mxu0 %v3173
    %3213 = vmatprep.subr.mxu0 0.0
    %3214 = vmatpush1.msra.mxu0 %v3172
    %3215 = vmatprep.subr.mxu0 0.0
    %3216 = vmatpush1.msra.mxu0 %v3171
    %3217 = vmatprep.subr.mxu0 0.0
    %3218 = vmatpush1.msra.mxu0 %v3170
    %3219 = vmatprep.subr.mxu0 0.0
    %3220 = vmatpush1.msra.mxu0 %v3169
    %3221 = vmatprep.subr.mxu0 0.0
    %3222 = vmatpush1.msra.mxu0 %v3168
    %3223 = vmatprep.subr.mxu0 0.0
    %3224 = vmatpush2.msra.mxu0 0.0
    %3225 = vmatprep.subr.mxu0 0.0
    %3226 = vmatpush2.msra.mxu0 0.0
    %3227 = vmatprep.subr.mxu0 0.0
    %3228 = vmatpush2.msra.mxu0 0.0
    %3229 = vmatprep.subr.mxu0 0.0
    %3230 = vmatpush2.msra.mxu0 0.0
    %3231 = vmatprep.subr.mxu0 0.0
    %3232 = vmatpush2.msra.mxu0 0.0
    %3233 = vmatprep.subr.mxu0 0.0
    %3234 = vmatpush2.msra.mxu0 0.0
    %3235 = vmatprep.subr.mxu0 0.0
    %3236 = vmatpush2.msra.mxu0 0.0
    %3237 = vmatprep.subr.mxu0 0.0
    %3238 = vmatpush2.msra.mxu0 0.0
    %3239 = vmatprep.subr.mxu0 0.0
    %3240 = vmatpush2.msra.mxu0 0.0
    %3241 = vmatprep.subr.mxu0 0.0
    %3242 = vmatpush2.msra.mxu0 0.0
    %3243 = vmatprep.subr.mxu0 0.0
    %3244 = vmatpush2.msra.mxu0 0.0
    %3245 = vmatprep.subr.mxu0 0.0
    %3246 = vmatpush2.msra.mxu0 0.0
    %3247 = vmatprep.subr.mxu0 0.0
    %3248 = vmatpush2.msra.mxu0 0.0
    %3249 = vmatprep.subr.mxu0 0.0
    %3250 = vmatpush2.msra.mxu0 0.0
    %3251 = vmatprep.subr.mxu0 0.0
    %3252 = vmatpush2.msra.mxu0 0.0
    %3253 = vmatprep.subr.mxu0 0.0
    %3254 = vmatpush2.msra.mxu0 0.0
    %3255 = vmatprep.mubr.f32.mxu0 0.0
    %3256 = vmatmul.mubr.f32.gmra.mxu0 %v3164
    %v3257 = vpop.f32.mrf.mxu0
    %v3258 = vadd.f32 %v3189, %v3257
    %v3259 = vpop.f32.mrf.mxu0
    %3260 = vmatprep.mubr.f32.mxu0 0.0
    %3261 = vmatmul.mubr.f32.gmra.mxu0 %v3165
    %v3262 = vpop.f32.mrf.mxu0
    %v3263 = vadd.f32 %v3189, %v3262
    %v3264 = vpop.f32.mrf.mxu0
    %3265 = vmatprep.mubr.f32.mxu0 0.0
    %3266 = vmatmul.mubr.f32.gmra.mxu0 %v3166
    %v3267 = vpop.f32.mrf.mxu0
    %v3268 = vadd.f32 %v3189, %v3267
    %v3269 = vpop.f32.mrf.mxu0
    %3270 = vmatprep.mubr.f32.mxu0 0.0
    %3271 = vmatmul.mubr.f32.gmra.mxu0 %v3167
    %v3272 = vpop.f32.mrf.mxu0
    %v3273 = vadd.f32 %v3189, %v3272
    %v3274 = vpop.f32.mrf.mxu0
    %3275 = vdwg.mxu0
    %v3276 = vadd.f32 %v152, %v3258
    %v3277 = vadd.f32 %v153, %v3263
    %v3278 = vadd.f32 %v154, %v3268
    %v3279 = vadd.f32 %v155, %v3273
    %3280 = vadd.xlane.f32.xlu0 %v3276
    %v3281 = vpop.xlane.xlu0 %3280
    %3282 = vadd.xlane.f32.xlu0 %v3277
    %v3283 = vpop.xlane.xlu0 %3282
    %3284 = vadd.xlane.f32.xlu0 %v3278
    %v3285 = vpop.xlane.xlu0 %3284
    %3286 = vadd.xlane.f32.xlu0 %v3279
    %v3287 = vpop.xlane.xlu0 %3286
    %v3288 = vrcp.pop 128.0
    %v3289 = vmul.f32 %v3281, %v3288
    %v3290 = vmul.f32 %v3283, %v3288
    %v3291 = vmul.f32 %v3285, %v3288
    %v3292 = vmul.f32 %v3287, %v3288
    %v3293 = vsub.f32 %v3276, %v3289
    %v3294 = vsub.f32 %v3277, %v3290
    %v3295 = vsub.f32 %v3278, %v3291
    %v3296 = vsub.f32 %v3279, %v3292
    %v3297 = vmul.f32 %v3293, %v3293
    %v3298 = vmul.f32 %v3294, %v3294
    %v3299 = vmul.f32 %v3295, %v3295
    %v3300 = vmul.f32 %v3296, %v3296
    %3301 = vadd.xlane.f32.xlu0 %v3297
    %v3302 = vpop.xlane.xlu0 %3301
    %3303 = vadd.xlane.f32.xlu0 %v3298
    %v3304 = vpop.xlane.xlu0 %3303
    %3305 = vadd.xlane.f32.xlu0 %v3299
    %v3306 = vpop.xlane.xlu0 %3305
    %3307 = vadd.xlane.f32.xlu0 %v3300
    %v3308 = vpop.xlane.xlu0 %3307
    %v3309 = vmul.f32 %v3302, %v3288
    %v3310 = vmul.f32 %v3304, %v3288
    %v3311 = vmul.f32 %v3306, %v3288
    %v3312 = vmul.f32 %v3308, %v3288
    %v3313 = vadd.f32 %v3309, 1e-05
    %v3314 = vadd.f32 %v3310, 1e-05
    %v3315 = vadd.f32 %v3311, 1e-05
    %v3316 = vadd.f32 %v3312, 1e-05
    %v3317 = vrsqrt.pop %v3313
    %v3318 = vrsqrt.pop %v3314
    %v3319 = vrsqrt.pop %v3315
    %v3320 = vrsqrt.pop %v3316
    %v3321 = vmul.f32 %v3293, %v3317
    %v3322 = vmul.f32 %v3294, %v3318
    %v3323 = vmul.f32 %v3295, %v3319
    %v3324 = vmul.f32 %v3296, %v3320
    %v3325 = vld [vmem:[%s9] sm:$0x1]
    %v3327 = vlaneseq
    %v3328 = vshrl.u32 %v3327, 7
    %v3329 = vsub.s32 0, %v3328
    %v3330 = vrot.slane %v3325, %v3329
    %v3332 = vmul.f32 %v3321, %v3330
    %v3333 = vmul.f32 %v3322, %v3330
    %v3334 = vmul.f32 %v3323, %v3330
    %v3335 = vmul.f32 %v3324, %v3330
    %v3336 = vld [vmem:[%s10] sm:$0x1]
    %v3338 = vlaneseq
    %v3339 = vshrl.u32 %v3338, 7
    %v3340 = vsub.s32 0, %v3339
    %v3341 = vrot.slane %v3336, %v3340
    %v3343 = vadd.f32 %v3332, %v3341
    %v3344 = vadd.f32 %v3333, %v3341
    %v3345 = vadd.f32 %v3334, %v3341
    %v3346 = vadd.f32 %v3335, %v3341
    %v3347 = vld [vmem:[#allocation11] sm:$0xff]
    %v3348 = vld [vmem:[#allocation11 + $0x8] sm:$0xff]
    %v3349 = vld [vmem:[#allocation11 + $0x10] sm:$0xff]
    %v3350 = vld [vmem:[#allocation11 + $0x18] sm:$0xff]
    %v3351 = vld [vmem:[#allocation11 + $0x20] sm:$0xff]
    %v3352 = vld [vmem:[#allocation11 + $0x28] sm:$0xff]
    %v3353 = vld [vmem:[#allocation11 + $0x30] sm:$0xff]
    %v3354 = vld [vmem:[#allocation11 + $0x38] sm:$0xff]
    %v3355 = vld [vmem:[#allocation11 + $0x40] sm:$0xff]
    %v3356 = vld [vmem:[#allocation11 + $0x48] sm:$0xff]
    %v3357 = vld [vmem:[#allocation11 + $0x50] sm:$0xff]
    %v3358 = vld [vmem:[#allocation11 + $0x58] sm:$0xff]
    %v3359 = vld [vmem:[#allocation11 + $0x60] sm:$0xff]
    %v3360 = vld [vmem:[#allocation11 + $0x68] sm:$0xff]
    %v3361 = vld [vmem:[#allocation11 + $0x70] sm:$0xff]
    %v3362 = vld [vmem:[#allocation11 + $0x78] sm:$0xff]
    %v3363 = vld [vmem:[#allocation11 + $0x80] sm:$0xff]
    %v3364 = vld [vmem:[#allocation11 + $0x88] sm:$0xff]
    %v3365 = vld [vmem:[#allocation11 + $0x90] sm:$0xff]
    %v3366 = vld [vmem:[#allocation11 + $0x98] sm:$0xff]
    %v3367 = vld [vmem:[#allocation11 + $0xa0] sm:$0xff]
    %v3368 = vld [vmem:[#allocation11 + $0xa8] sm:$0xff]
    %v3369 = vld [vmem:[#allocation11 + $0xb0] sm:$0xff]
    %v3370 = vld [vmem:[#allocation11 + $0xb8] sm:$0xff]
    %v3371 = vld [vmem:[#allocation11 + $0xc0] sm:$0xff]
    %v3372 = vld [vmem:[#allocation11 + $0xc8] sm:$0xff]
    %v3373 = vld [vmem:[#allocation11 + $0xd0] sm:$0xff]
    %v3374 = vld [vmem:[#allocation11 + $0xd8] sm:$0xff]
    %v3375 = vld [vmem:[#allocation11 + $0xe0] sm:$0xff]
    %v3376 = vld [vmem:[#allocation11 + $0xe8] sm:$0xff]
    %v3377 = vld [vmem:[#allocation11 + $0xf0] sm:$0xff]
    %v3378 = vld [vmem:[#allocation11 + $0xf8] sm:$0xff]
    %v3379 = vld [vmem:[#allocation11 + $0x100] sm:$0xff]
    %v3380 = vld [vmem:[#allocation11 + $0x108] sm:$0xff]
    %v3381 = vld [vmem:[#allocation11 + $0x110] sm:$0xff]
    %v3382 = vld [vmem:[#allocation11 + $0x118] sm:$0xff]
    %v3383 = vld [vmem:[#allocation11 + $0x120] sm:$0xff]
    %v3384 = vld [vmem:[#allocation11 + $0x128] sm:$0xff]
    %v3385 = vld [vmem:[#allocation11 + $0x130] sm:$0xff]
    %v3386 = vld [vmem:[#allocation11 + $0x138] sm:$0xff]
    %v3387 = vld [vmem:[#allocation11 + $0x140] sm:$0xff]
    %v3388 = vld [vmem:[#allocation11 + $0x148] sm:$0xff]
    %v3389 = vld [vmem:[#allocation11 + $0x150] sm:$0xff]
    %v3390 = vld [vmem:[#allocation11 + $0x158] sm:$0xff]
    %v3391 = vld [vmem:[#allocation11 + $0x160] sm:$0xff]
    %v3392 = vld [vmem:[#allocation11 + $0x168] sm:$0xff]
    %v3393 = vld [vmem:[#allocation11 + $0x170] sm:$0xff]
    %v3394 = vld [vmem:[#allocation11 + $0x178] sm:$0xff]
    %v3395 = vld [vmem:[#allocation11 + $0x180] sm:$0xff]
    %v3396 = vld [vmem:[#allocation11 + $0x188] sm:$0xff]
    %v3397 = vld [vmem:[#allocation11 + $0x190] sm:$0xff]
    %v3398 = vld [vmem:[#allocation11 + $0x198] sm:$0xff]
    %v3399 = vld [vmem:[#allocation11 + $0x1a0] sm:$0xff]
    %v3400 = vld [vmem:[#allocation11 + $0x1a8] sm:$0xff]
    %v3401 = vld [vmem:[#allocation11 + $0x1b0] sm:$0xff]
    %v3402 = vld [vmem:[#allocation11 + $0x1b8] sm:$0xff]
    %v3403 = vld [vmem:[#allocation11 + $0x1c0] sm:$0xff]
    %v3404 = vld [vmem:[#allocation11 + $0x1c8] sm:$0xff]
    %v3405 = vld [vmem:[#allocation11 + $0x1d0] sm:$0xff]
    %v3406 = vld [vmem:[#allocation11 + $0x1d8] sm:$0xff]
    %v3407 = vld [vmem:[#allocation11 + $0x1e0] sm:$0xff]
    %v3408 = vld [vmem:[#allocation11 + $0x1e8] sm:$0xff]
    %v3409 = vld [vmem:[#allocation11 + $0x1f0] sm:$0xff]
    %v3410 = vld [vmem:[#allocation11 + $0x1f8] sm:$0xff]
    %v3411 = vld [vmem:[%s12] sm:$0xf]
    %v3413 = vlaneseq
    %v3414 = vshrl.u32 %v3413, 7
    %v3415 = vsub.s32 0, %v3414
    %v3416 = vrot.slane %v3411, %v3415
    %v3417 = vlaneseq
    %v3418 = vshrl.u32 %v3417, 7
    %v3419 = vsub.s32 1, %v3418
    %v3420 = vrot.slane %v3411, %v3419
    %v3421 = vlaneseq
    %v3422 = vshrl.u32 %v3421, 7
    %v3423 = vsub.s32 2, %v3422
    %v3424 = vrot.slane %v3411, %v3423
    %v3425 = vlaneseq
    %v3426 = vshrl.u32 %v3425, 7
    %v3427 = vsub.s32 3, %v3426
    %v3428 = vrot.slane %v3411, %v3427
    %3433 = vmatprep.subr.mxu0 %v3408
    %3434 = vmatpush1.msra.mxu0 %v3407
    %3435 = vmatprep.subr.mxu0 %v3404
    %3436 = vmatpush1.msra.mxu0 %v3403
    %3437 = vmatprep.subr.mxu0 %v3400
    %3438 = vmatpush1.msra.mxu0 %v3399
    %3439 = vmatprep.subr.mxu0 %v3396
    %3440 = vmatpush1.msra.mxu0 %v3395
    %3441 = vmatprep.subr.mxu0 %v3392
    %3442 = vmatpush1.msra.mxu0 %v3391
    %3443 = vmatprep.subr.mxu0 %v3388
    %3444 = vmatpush1.msra.mxu0 %v3387
    %3445 = vmatprep.subr.mxu0 %v3384
    %3446 = vmatpush1.msra.mxu0 %v3383
    %3447 = vmatprep.subr.mxu0 %v3380
    %3448 = vmatpush1.msra.mxu0 %v3379
    %3449 = vmatprep.subr.mxu0 %v3376
    %3450 = vmatpush1.msra.mxu0 %v3375
    %3451 = vmatprep.subr.mxu0 %v3372
    %3452 = vmatpush1.msra.mxu0 %v3371
    %3453 = vmatprep.subr.mxu0 %v3368
    %3454 = vmatpush1.msra.mxu0 %v3367
    %3455 = vmatprep.subr.mxu0 %v3364
    %3456 = vmatpush1.msra.mxu0 %v3363
    %3457 = vmatprep.subr.mxu0 %v3360
    %3458 = vmatpush1.msra.mxu0 %v3359
    %3459 = vmatprep.subr.mxu0 %v3356
    %3460 = vmatpush1.msra.mxu0 %v3355
    %3461 = vmatprep.subr.mxu0 %v3352
    %3462 = vmatpush1.msra.mxu0 %v3351
    %3463 = vmatprep.subr.mxu0 %v3348
    %3464 = vmatpush1.msra.mxu0 %v3347
    %3465 = vmatprep.subr.mxu0 0.0
    %3466 = vmatpush2.msra.mxu0 0.0
    %3467 = vmatprep.subr.mxu0 0.0
    %3468 = vmatpush2.msra.mxu0 0.0
    %3469 = vmatprep.subr.mxu0 0.0
    %3470 = vmatpush2.msra.mxu0 0.0
    %3471 = vmatprep.subr.mxu0 0.0
    %3472 = vmatpush2.msra.mxu0 0.0
    %3473 = vmatprep.subr.mxu0 0.0
    %3474 = vmatpush2.msra.mxu0 0.0
    %3475 = vmatprep.subr.mxu0 0.0
    %3476 = vmatpush2.msra.mxu0 0.0
    %3477 = vmatprep.subr.mxu0 0.0
    %3478 = vmatpush2.msra.mxu0 0.0
    %3479 = vmatprep.subr.mxu0 0.0
    %3480 = vmatpush2.msra.mxu0 0.0
    %3481 = vmatprep.subr.mxu0 0.0
    %3482 = vmatpush2.msra.mxu0 0.0
    %3483 = vmatprep.subr.mxu0 0.0
    %3484 = vmatpush2.msra.mxu0 0.0
    %3485 = vmatprep.subr.mxu0 0.0
    %3486 = vmatpush2.msra.mxu0 0.0
    %3487 = vmatprep.subr.mxu0 0.0
    %3488 = vmatpush2.msra.mxu0 0.0
    %3489 = vmatprep.subr.mxu0 0.0
    %3490 = vmatpush2.msra.mxu0 0.0
    %3491 = vmatprep.subr.mxu0 0.0
    %3492 = vmatpush2.msra.mxu0 0.0
    %3493 = vmatprep.subr.mxu0 0.0
    %3494 = vmatpush2.msra.mxu0 0.0
    %3495 = vmatprep.subr.mxu0 0.0
    %3496 = vmatpush2.msra.mxu0 0.0
    %3497 = vmatprep.mubr.f32.mxu0 0.0
    %3498 = vmatmul.mubr.f32.gmra.mxu0 %v3343
    %v3499 = vpop.f32.mrf.mxu0
    %v3500 = vadd.f32 %v3416, %v3499
    %v3501 = vpop.f32.mrf.mxu0
    %v3502 = vadd.f32 %v3420, %v3501
    %3503 = vmatprep.mubr.f32.mxu0 0.0
    %3504 = vmatmul.mubr.f32.gmra.mxu0 %v3344
    %v3505 = vpop.f32.mrf.mxu0
    %v3506 = vadd.f32 %v3416, %v3505
    %v3507 = vpop.f32.mrf.mxu0
    %v3508 = vadd.f32 %v3420, %v3507
    %3509 = vmatprep.mubr.f32.mxu0 0.0
    %3510 = vmatmul.mubr.f32.gmra.mxu0 %v3345
    %v3511 = vpop.f32.mrf.mxu0
    %v3512 = vadd.f32 %v3416, %v3511
    %v3513 = vpop.f32.mrf.mxu0
    %v3514 = vadd.f32 %v3420, %v3513
    %3515 = vmatprep.mubr.f32.mxu0 0.0
    %3516 = vmatmul.mubr.f32.gmra.mxu0 %v3346
    %v3517 = vpop.f32.mrf.mxu0
    %v3518 = vadd.f32 %v3416, %v3517
    %v3519 = vpop.f32.mrf.mxu0
    %v3520 = vadd.f32 %v3420, %v3519
    %3521 = vdwg.mxu0
    %3522 = vmatprep.subr.mxu0 %v3410
    %3523 = vmatpush1.msra.mxu0 %v3409
    %3524 = vmatprep.subr.mxu0 %v3406
    %3525 = vmatpush1.msra.mxu0 %v3405
    %3526 = vmatprep.subr.mxu0 %v3402
    %3527 = vmatpush1.msra.mxu0 %v3401
    %3528 = vmatprep.subr.mxu0 %v3398
    %3529 = vmatpush1.msra.mxu0 %v3397
    %3530 = vmatprep.subr.mxu0 %v3394
    %3531 = vmatpush1.msra.mxu0 %v3393
    %3532 = vmatprep.subr.mxu0 %v3390
    %3533 = vmatpush1.msra.mxu0 %v3389
    %3534 = vmatprep.subr.mxu0 %v3386
    %3535 = vmatpush1.msra.mxu0 %v3385
    %3536 = vmatprep.subr.mxu0 %v3382
    %3537 = vmatpush1.msra.mxu0 %v3381
    %3538 = vmatprep.subr.mxu0 %v3378
    %3539 = vmatpush1.msra.mxu0 %v3377
    %3540 = vmatprep.subr.mxu0 %v3374
    %3541 = vmatpush1.msra.mxu0 %v3373
    %3542 = vmatprep.subr.mxu0 %v3370
    %3543 = vmatpush1.msra.mxu0 %v3369
    %3544 = vmatprep.subr.mxu0 %v3366
    %3545 = vmatpush1.msra.mxu0 %v3365
    %3546 = vmatprep.subr.mxu0 %v3362
    %3547 = vmatpush1.msra.mxu0 %v3361
    %3548 = vmatprep.subr.mxu0 %v3358
    %3549 = vmatpush1.msra.mxu0 %v3357
    %3550 = vmatprep.subr.mxu0 %v3354
    %3551 = vmatpush1.msra.mxu0 %v3353
    %3552 = vmatprep.subr.mxu0 %v3350
    %3553 = vmatpush1.msra.mxu0 %v3349
    %3554 = vmatprep.subr.mxu0 0.0
    %3555 = vmatpush2.msra.mxu0 0.0
    %3556 = vmatprep.subr.mxu0 0.0
    %3557 = vmatpush2.msra.mxu0 0.0
    %3558 = vmatprep.subr.mxu0 0.0
    %3559 = vmatpush2.msra.mxu0 0.0
    %3560 = vmatprep.subr.mxu0 0.0
    %3561 = vmatpush2.msra.mxu0 0.0
    %3562 = vmatprep.subr.mxu0 0.0
    %3563 = vmatpush2.msra.mxu0 0.0
    %3564 = vmatprep.subr.mxu0 0.0
    %3565 = vmatpush2.msra.mxu0 0.0
    %3566 = vmatprep.subr.mxu0 0.0
    %3567 = vmatpush2.msra.mxu0 0.0
    %3568 = vmatprep.subr.mxu0 0.0
    %3569 = vmatpush2.msra.mxu0 0.0
    %3570 = vmatprep.subr.mxu0 0.0
    %3571 = vmatpush2.msra.mxu0 0.0
    %3572 = vmatprep.subr.mxu0 0.0
    %3573 = vmatpush2.msra.mxu0 0.0
    %3574 = vmatprep.subr.mxu0 0.0
    %3575 = vmatpush2.msra.mxu0 0.0
    %3576 = vmatprep.subr.mxu0 0.0
    %3577 = vmatpush2.msra.mxu0 0.0
    %3578 = vmatprep.subr.mxu0 0.0
    %3579 = vmatpush2.msra.mxu0 0.0
    %3580 = vmatprep.subr.mxu0 0.0
    %3581 = vmatpush2.msra.mxu0 0.0
    %3582 = vmatprep.subr.mxu0 0.0
    %3583 = vmatpush2.msra.mxu0 0.0
    %3584 = vmatprep.subr.mxu0 0.0
    %3585 = vmatpush2.msra.mxu0 0.0
    %3586 = vmatprep.mubr.f32.mxu0 0.0
    %3587 = vmatmul.mubr.f32.gmra.mxu0 %v3343
    %v3588 = vpop.f32.mrf.mxu0
    %v3589 = vadd.f32 %v3424, %v3588
    %v3590 = vpop.f32.mrf.mxu0
    %v3591 = vadd.f32 %v3428, %v3590
    %3592 = vmatprep.mubr.f32.mxu0 0.0
    %3593 = vmatmul.mubr.f32.gmra.mxu0 %v3344
    %v3594 = vpop.f32.mrf.mxu0
    %v3595 = vadd.f32 %v3424, %v3594
    %v3596 = vpop.f32.mrf.mxu0
    %v3597 = vadd.f32 %v3428, %v3596
    %3598 = vmatprep.mubr.f32.mxu0 0.0
    %3599 = vmatmul.mubr.f32.gmra.mxu0 %v3345
    %v3600 = vpop.f32.mrf.mxu0
    %v3601 = vadd.f32 %v3424, %v3600
    %v3602 = vpop.f32.mrf.mxu0
    %v3603 = vadd.f32 %v3428, %v3602
    %3604 = vmatprep.mubr.f32.mxu0 0.0
    %3605 = vmatmul.mubr.f32.gmra.mxu0 %v3346
    %v3606 = vpop.f32.mrf.mxu0
    %v3607 = vadd.f32 %v3424, %v3606
    %v3608 = vpop.f32.mrf.mxu0
    %v3609 = vadd.f32 %v3428, %v3608
    %3610 = vdwg.mxu0
    %v3611 = vmax.f32 %v3500, 0.0
    %v3612 = vmax.f32 %v3502, 0.0
    %v3613 = vmax.f32 %v3589, 0.0
    %v3614 = vmax.f32 %v3591, 0.0
    %v3615 = vmax.f32 %v3506, 0.0
    %v3616 = vmax.f32 %v3508, 0.0
    %v3617 = vmax.f32 %v3595, 0.0
    %v3618 = vmax.f32 %v3597, 0.0
    %v3619 = vmax.f32 %v3512, 0.0
    %v3620 = vmax.f32 %v3514, 0.0
    %v3621 = vmax.f32 %v3601, 0.0
    %v3622 = vmax.f32 %v3603, 0.0
    %v3623 = vmax.f32 %v3518, 0.0
    %v3624 = vmax.f32 %v3520, 0.0
    %v3625 = vmax.f32 %v3607, 0.0
    %v3626 = vmax.f32 %v3609, 0.0
    %v3627 = vld [vmem:[#allocation13] sm:$0xff]
    %v3628 = vld [vmem:[#allocation13 + $0x8] sm:$0xff]
    %v3629 = vld [vmem:[#allocation13 + $0x10] sm:$0xff]
    %v3630 = vld [vmem:[#allocation13 + $0x18] sm:$0xff]
    %v3631 = vld [vmem:[#allocation13 + $0x20] sm:$0xff]
    %v3632 = vld [vmem:[#allocation13 + $0x28] sm:$0xff]
    %v3633 = vld [vmem:[#allocation13 + $0x30] sm:$0xff]
    %v3634 = vld [vmem:[#allocation13 + $0x38] sm:$0xff]
    %v3635 = vld [vmem:[#allocation13 + $0x40] sm:$0xff]
    %v3636 = vld [vmem:[#allocation13 + $0x48] sm:$0xff]
    %v3637 = vld [vmem:[#allocation13 + $0x50] sm:$0xff]
    %v3638 = vld [vmem:[#allocation13 + $0x58] sm:$0xff]
    %v3639 = vld [vmem:[#allocation13 + $0x60] sm:$0xff]
    %v3640 = vld [vmem:[#allocation13 + $0x68] sm:$0xff]
    %v3641 = vld [vmem:[#allocation13 + $0x70] sm:$0xff]
    %v3642 = vld [vmem:[#allocation13 + $0x78] sm:$0xff]
    %v3643 = vld [vmem:[#allocation13 + $0x80] sm:$0xff]
    %v3644 = vld [vmem:[#allocation13 + $0x88] sm:$0xff]
    %v3645 = vld [vmem:[#allocation13 + $0x90] sm:$0xff]
    %v3646 = vld [vmem:[#allocation13 + $0x98] sm:$0xff]
    %v3647 = vld [vmem:[#allocation13 + $0xa0] sm:$0xff]
    %v3648 = vld [vmem:[#allocation13 + $0xa8] sm:$0xff]
    %v3649 = vld [vmem:[#allocation13 + $0xb0] sm:$0xff]
    %v3650 = vld [vmem:[#allocation13 + $0xb8] sm:$0xff]
    %v3651 = vld [vmem:[#allocation13 + $0xc0] sm:$0xff]
    %v3652 = vld [vmem:[#allocation13 + $0xc8] sm:$0xff]
    %v3653 = vld [vmem:[#allocation13 + $0xd0] sm:$0xff]
    %v3654 = vld [vmem:[#allocation13 + $0xd8] sm:$0xff]
    %v3655 = vld [vmem:[#allocation13 + $0xe0] sm:$0xff]
    %v3656 = vld [vmem:[#allocation13 + $0xe8] sm:$0xff]
    %v3657 = vld [vmem:[#allocation13 + $0xf0] sm:$0xff]
    %v3658 = vld [vmem:[#allocation13 + $0xf8] sm:$0xff]
    %v3659 = vld [vmem:[#allocation13 + $0x100] sm:$0xff]
    %v3660 = vld [vmem:[#allocation13 + $0x108] sm:$0xff]
    %v3661 = vld [vmem:[#allocation13 + $0x110] sm:$0xff]
    %v3662 = vld [vmem:[#allocation13 + $0x118] sm:$0xff]
    %v3663 = vld [vmem:[#allocation13 + $0x120] sm:$0xff]
    %v3664 = vld [vmem:[#allocation13 + $0x128] sm:$0xff]
    %v3665 = vld [vmem:[#allocation13 + $0x130] sm:$0xff]
    %v3666 = vld [vmem:[#allocation13 + $0x138] sm:$0xff]
    %v3667 = vld [vmem:[#allocation13 + $0x140] sm:$0xff]
    %v3668 = vld [vmem:[#allocation13 + $0x148] sm:$0xff]
    %v3669 = vld [vmem:[#allocation13 + $0x150] sm:$0xff]
    %v3670 = vld [vmem:[#allocation13 + $0x158] sm:$0xff]
    %v3671 = vld [vmem:[#allocation13 + $0x160] sm:$0xff]
    %v3672 = vld [vmem:[#allocation13 + $0x168] sm:$0xff]
    %v3673 = vld [vmem:[#allocation13 + $0x170] sm:$0xff]
    %v3674 = vld [vmem:[#allocation13 + $0x178] sm:$0xff]
    %v3675 = vld [vmem:[#allocation13 + $0x180] sm:$0xff]
    %v3676 = vld [vmem:[#allocation13 + $0x188] sm:$0xff]
    %v3677 = vld [vmem:[#allocation13 + $0x190] sm:$0xff]
    %v3678 = vld [vmem:[#allocation13 + $0x198] sm:$0xff]
    %v3679 = vld [vmem:[#allocation13 + $0x1a0] sm:$0xff]
    %v3680 = vld [vmem:[#allocation13 + $0x1a8] sm:$0xff]
    %v3681 = vld [vmem:[#allocation13 + $0x1b0] sm:$0xff]
    %v3682 = vld [vmem:[#allocation13 + $0x1b8] sm:$0xff]
    %v3683 = vld [vmem:[#allocation13 + $0x1c0] sm:$0xff]
    %v3684 = vld [vmem:[#allocation13 + $0x1c8] sm:$0xff]
    %v3685 = vld [vmem:[#allocation13 + $0x1d0] sm:$0xff]
    %v3686 = vld [vmem:[#allocation13 + $0x1d8] sm:$0xff]
    %v3687 = vld [vmem:[#allocation13 + $0x1e0] sm:$0xff]
    %v3688 = vld [vmem:[#allocation13 + $0x1e8] sm:$0xff]
    %v3689 = vld [vmem:[#allocation13 + $0x1f0] sm:$0xff]
    %v3690 = vld [vmem:[#allocation13 + $0x1f8] sm:$0xff]
    %v3691 = vld [vmem:[%s14] sm:$0x1]
    %v3693 = vlaneseq
    %v3694 = vshrl.u32 %v3693, 7
    %v3695 = vsub.s32 0, %v3694
    %v3696 = vrot.slane %v3691, %v3695
    %3698 = vmatprep.subr.mxu0 0.0
    %3699 = vmatpush1.msra.mxu0 %v3642
    %3700 = vmatprep.subr.mxu0 0.0
    %3701 = vmatpush1.msra.mxu0 %v3641
    %3702 = vmatprep.subr.mxu0 0.0
    %3703 = vmatpush1.msra.mxu0 %v3640
    %3704 = vmatprep.subr.mxu0 0.0
    %3705 = vmatpush1.msra.mxu0 %v3639
    %3706 = vmatprep.subr.mxu0 0.0
    %3707 = vmatpush1.msra.mxu0 %v3638
    %3708 = vmatprep.subr.mxu0 0.0
    %3709 = vmatpush1.msra.mxu0 %v3637
    %3710 = vmatprep.subr.mxu0 0.0
    %3711 = vmatpush1.msra.mxu0 %v3636
    %3712 = vmatprep.subr.mxu0 0.0
    %3713 = vmatpush1.msra.mxu0 %v3635
    %3714 = vmatprep.subr.mxu0 0.0
    %3715 = vmatpush1.msra.mxu0 %v3634
    %3716 = vmatprep.subr.mxu0 0.0
    %3717 = vmatpush1.msra.mxu0 %v3633
    %3718 = vmatprep.subr.mxu0 0.0
    %3719 = vmatpush1.msra.mxu0 %v3632
    %3720 = vmatprep.subr.mxu0 0.0
    %3721 = vmatpush1.msra.mxu0 %v3631
    %3722 = vmatprep.subr.mxu0 0.0
    %3723 = vmatpush1.msra.mxu0 %v3630
    %3724 = vmatprep.subr.mxu0 0.0
    %3725 = vmatpush1.msra.mxu0 %v3629
    %3726 = vmatprep.subr.mxu0 0.0
    %3727 = vmatpush1.msra.mxu0 %v3628
    %3728 = vmatprep.subr.mxu0 0.0
    %3729 = vmatpush1.msra.mxu0 %v3627
    %3730 = vmatprep.subr.mxu0 0.0
    %3731 = vmatpush2.msra.mxu0 %v3658
    %3732 = vmatprep.subr.mxu0 0.0
    %3733 = vmatpush2.msra.mxu0 %v3657
    %3734 = vmatprep.subr.mxu0 0.0
    %3735 = vmatpush2.msra.mxu0 %v3656
    %3736 = vmatprep.subr.mxu0 0.0
    %3737 = vmatpush2.msra.mxu0 %v3655
    %3738 = vmatprep.subr.mxu0 0.0
    %3739 = vmatpush2.msra.mxu0 %v3654
    %3740 = vmatprep.subr.mxu0 0.0
    %3741 = vmatpush2.msra.mxu0 %v3653
    %3742 = vmatprep.subr.mxu0 0.0
    %3743 = vmatpush2.msra.mxu0 %v3652
    %3744 = vmatprep.subr.mxu0 0.0
    %3745 = vmatpush2.msra.mxu0 %v3651
    %3746 = vmatprep.subr.mxu0 0.0
    %3747 = vmatpush2.msra.mxu0 %v3650
    %3748 = vmatprep.subr.mxu0 0.0
    %3749 = vmatpush2.msra.mxu0 %v3649
    %3750 = vmatprep.subr.mxu0 0.0
    %3751 = vmatpush2.msra.mxu0 %v3648
    %3752 = vmatprep.subr.mxu0 0.0
    %3753 = vmatpush2.msra.mxu0 %v3647
    %3754 = vmatprep.subr.mxu0 0.0
    %3755 = vmatpush2.msra.mxu0 %v3646
    %3756 = vmatprep.subr.mxu0 0.0
    %3757 = vmatpush2.msra.mxu0 %v3645
    %3758 = vmatprep.subr.mxu0 0.0
    %3759 = vmatpush2.msra.mxu0 %v3644
    %3760 = vmatprep.subr.mxu0 0.0
    %3761 = vmatpush2.msra.mxu0 %v3643
    %3762 = vmatprep.mubr.f32.mxu0 %v3612
    %3763 = vmatmul.mubr.f32.gmra.mxu0 %v3611
    %v3764 = vpop.f32.mrf.mxu0
    %v3765 = vadd.f32 %v3696, %v3764
    %v3766 = vpop.f32.mrf.mxu0
    %3767 = vmatprep.mubr.f32.mxu0 %v3616
    %3768 = vmatmul.mubr.f32.gmra.mxu0 %v3615
    %v3769 = vpop.f32.mrf.mxu0
    %v3770 = vadd.f32 %v3696, %v3769
    %v3771 = vpop.f32.mrf.mxu0
    %3772 = vmatprep.mubr.f32.mxu0 %v3620
    %3773 = vmatmul.mubr.f32.gmra.mxu0 %v3619
    %v3774 = vpop.f32.mrf.mxu0
    %v3775 = vadd.f32 %v3696, %v3774
    %v3776 = vpop.f32.mrf.mxu0
    %3777 = vmatprep.mubr.f32.mxu0 %v3624
    %3778 = vmatmul.mubr.f32.gmra.mxu0 %v3623
    %v3779 = vpop.f32.mrf.mxu0
    %v3780 = vadd.f32 %v3696, %v3779
    %v3781 = vpop.f32.mrf.mxu0
    %3782 = vdwg.mxu0
    %3783 = vmatprep.subr.mxu0 0.0
    %3784 = vmatpush1.msra.mxu0 %v3674
    %3785 = vmatprep.subr.mxu0 0.0
    %3786 = vmatpush1.msra.mxu0 %v3673
    %3787 = vmatprep.subr.mxu0 0.0
    %3788 = vmatpush1.msra.mxu0 %v3672
    %3789 = vmatprep.subr.mxu0 0.0
    %3790 = vmatpush1.msra.mxu0 %v3671
    %3791 = vmatprep.subr.mxu0 0.0
    %3792 = vmatpush1.msra.mxu0 %v3670
    %3793 = vmatprep.subr.mxu0 0.0
    %3794 = vmatpush1.msra.mxu0 %v3669
    %3795 = vmatprep.subr.mxu0 0.0
    %3796 = vmatpush1.msra.mxu0 %v3668
    %3797 = vmatprep.subr.mxu0 0.0
    %3798 = vmatpush1.msra.mxu0 %v3667
    %3799 = vmatprep.subr.mxu0 0.0
    %3800 = vmatpush1.msra.mxu0 %v3666
    %3801 = vmatprep.subr.mxu0 0.0
    %3802 = vmatpush1.msra.mxu0 %v3665
    %3803 = vmatprep.subr.mxu0 0.0
    %3804 = vmatpush1.msra.mxu0 %v3664
    %3805 = vmatprep.subr.mxu0 0.0
    %3806 = vmatpush1.msra.mxu0 %v3663
    %3807 = vmatprep.subr.mxu0 0.0
    %3808 = vmatpush1.msra.mxu0 %v3662
    %3809 = vmatprep.subr.mxu0 0.0
    %3810 = vmatpush1.msra.mxu0 %v3661
    %3811 = vmatprep.subr.mxu0 0.0
    %3812 = vmatpush1.msra.mxu0 %v3660
    %3813 = vmatprep.subr.mxu0 0.0
    %3814 = vmatpush1.msra.mxu0 %v3659
    %3815 = vmatprep.subr.mxu0 0.0
    %3816 = vmatpush2.msra.mxu0 %v3690
    %3817 = vmatprep.subr.mxu0 0.0
    %3818 = vmatpush2.msra.mxu0 %v3689
    %3819 = vmatprep.subr.mxu0 0.0
    %3820 = vmatpush2.msra.mxu0 %v3688
    %3821 = vmatprep.subr.mxu0 0.0
    %3822 = vmatpush2.msra.mxu0 %v3687
    %3823 = vmatprep.subr.mxu0 0.0
    %3824 = vmatpush2.msra.mxu0 %v3686
    %3825 = vmatprep.subr.mxu0 0.0
    %3826 = vmatpush2.msra.mxu0 %v3685
    %3827 = vmatprep.subr.mxu0 0.0
    %3828 = vmatpush2.msra.mxu0 %v3684
    %3829 = vmatprep.subr.mxu0 0.0
    %3830 = vmatpush2.msra.mxu0 %v3683
    %3831 = vmatprep.subr.mxu0 0.0
    %3832 = vmatpush2.msra.mxu0 %v3682
    %3833 = vmatprep.subr.mxu0 0.0
    %3834 = vmatpush2.msra.mxu0 %v3681
    %3835 = vmatprep.subr.mxu0 0.0
    %3836 = vmatpush2.msra.mxu0 %v3680
    %3837 = vmatprep.subr.mxu0 0.0
    %3838 = vmatpush2.msra.mxu0 %v3679
    %3839 = vmatprep.subr.mxu0 0.0
    %3840 = vmatpush2.msra.mxu0 %v3678
    %3841 = vmatprep.subr.mxu0 0.0
    %3842 = vmatpush2.msra.mxu0 %v3677
    %3843 = vmatprep.subr.mxu0 0.0
    %3844 = vmatpush2.msra.mxu0 %v3676
    %3845 = vmatprep.subr.mxu0 0.0
    %3846 = vmatpush2.msra.mxu0 %v3675
    %3847 = vmatprep.mubr.f32.mxu0 %v3614
    %3848 = vmatmul.mubr.f32.gmra.mxu0 %v3613
    %v3849 = vpop.f32.mrf.mxu0
    %v3850 = vadd.f32 %v3765, %v3849
    %v3851 = vpop.f32.mrf.mxu0
    %3852 = vmatprep.mubr.f32.mxu0 %v3618
    %3853 = vmatmul.mubr.f32.gmra.mxu0 %v3617
    %v3854 = vpop.f32.mrf.mxu0
    %v3855 = vadd.f32 %v3770, %v3854
    %v3856 = vpop.f32.mrf.mxu0
    %3857 = vmatprep.mubr.f32.mxu0 %v3622
    %3858 = vmatmul.mubr.f32.gmra.mxu0 %v3621
    %v3859 = vpop.f32.mrf.mxu0
    %v3860 = vadd.f32 %v3775, %v3859
    %v3861 = vpop.f32.mrf.mxu0
    %3862 = vmatprep.mubr.f32.mxu0 %v3626
    %3863 = vmatmul.mubr.f32.gmra.mxu0 %v3625
    %v3864 = vpop.f32.mrf.mxu0
    %v3865 = vadd.f32 %v3780, %v3864
    %v3866 = vpop.f32.mrf.mxu0
    %3867 = vdwg.mxu0
    %v3868 = vadd.f32 %v3343, %v3850
    %v3869 = vadd.f32 %v3344, %v3855
    %v3870 = vadd.f32 %v3345, %v3860
    %v3871 = vadd.f32 %v3346, %v3865
    %3872 = vadd.xlane.f32.xlu0 %v3868
    %v3873 = vpop.xlane.xlu0 %3872
    %3874 = vadd.xlane.f32.xlu0 %v3869
    %v3875 = vpop.xlane.xlu0 %3874
    %3876 = vadd.xlane.f32.xlu0 %v3870
    %v3877 = vpop.xlane.xlu0 %3876
    %3878 = vadd.xlane.f32.xlu0 %v3871
    %v3879 = vpop.xlane.xlu0 %3878
    %v3880 = vmul.f32 %v3873, %v3288
    %v3881 = vmul.f32 %v3875, %v3288
    %v3882 = vmul.f32 %v3877, %v3288
    %v3883 = vmul.f32 %v3879, %v3288
    %v3884 = vsub.f32 %v3868, %v3880
    %v3885 = vsub.f32 %v3869, %v3881
    %v3886 = vsub.f32 %v3870, %v3882
    %v3887 = vsub.f32 %v3871, %v3883
    %v3888 = vmul.f32 %v3884, %v3884
    %v3889 = vmul.f32 %v3885, %v3885
    %v3890 = vmul.f32 %v3886, %v3886
    %v3891 = vmul.f32 %v3887, %v3887
    %3892 = vadd.xlane.f32.xlu0 %v3888
    %v3893 = vpop.xlane.xlu0 %3892
    %3894 = vadd.xlane.f32.xlu0 %v3889
    %v3895 = vpop.xlane.xlu0 %3894
    %3896 = vadd.xlane.f32.xlu0 %v3890
    %v3897 = vpop.xlane.xlu0 %3896
    %3898 = vadd.xlane.f32.xlu0 %v3891
    %v3899 = vpop.xlane.xlu0 %3898
    %v3900 = vmul.f32 %v3893, %v3288
    %v3901 = vmul.f32 %v3895, %v3288
    %v3902 = vmul.f32 %v3897, %v3288
    %v3903 = vmul.f32 %v3899, %v3288
    %v3904 = vadd.f32 %v3900, 1e-05
    %v3905 = vadd.f32 %v3901, 1e-05
    %v3906 = vadd.f32 %v3902, 1e-05
    %v3907 = vadd.f32 %v3903, 1e-05
    %v3908 = vrsqrt.pop %v3904
    %v3909 = vrsqrt.pop %v3905
    %v3910 = vrsqrt.pop %v3906
    %v3911 = vrsqrt.pop %v3907
    %v3912 = vmul.f32 %v3884, %v3908
    %v3913 = vmul.f32 %v3885, %v3909
    %v3914 = vmul.f32 %v3886, %v3910
    %v3915 = vmul.f32 %v3887, %v3911
    %v3916 = vld [vmem:[%s15] sm:$0x1]
    %v3918 = vlaneseq
    %v3919 = vshrl.u32 %v3918, 7
    %v3920 = vsub.s32 0, %v3919
    %v3921 = vrot.slane %v3916, %v3920
    %v3923 = vmul.f32 %v3912, %v3921
    %v3924 = vmul.f32 %v3913, %v3921
    %v3925 = vmul.f32 %v3914, %v3921
    %v3926 = vmul.f32 %v3915, %v3921
    %v3927 = vld [vmem:[%s16] sm:$0x1]
    %v3929 = vlaneseq
    %v3930 = vshrl.u32 %v3929, 7
    %v3931 = vsub.s32 0, %v3930
    %v3932 = vrot.slane %v3927, %v3931
    %v3934 = vadd.f32 %v3923, %v3932
    %v3935 = vadd.f32 %v3924, %v3932
    %v3936 = vadd.f32 %v3925, %v3932
    %v3937 = vadd.f32 %v3926, %v3932
    %3938 = vst [vmem:[#allocation14] sm:$0xff] %v3934
    %3939 = vst [vmem:[#allocation14 + $0x8] sm:$0xff] %v3935
    %3940 = vst [vmem:[#allocation14 + $0x10] sm:$0xff] %v3936
    %3941 = vst [vmem:[#allocation14 + $0x18] sm:$0xff] %v3937
    // Predicated region
    $region98: #{tpu_custom_call.1} parent=1 // pred_check
      _
    $region99: #{tpu_custom_call.1} parent=1 // pred_check_branch
      %3943 = sbr.rel (0) target = $region101
    $region100: #{tpu_custom_call.1} parent=1 // pred_region
      %s3945 = ssub.s32 512, 512
      %3946 = vsyncadd [#allocation4], %s3945
      %s3947 = sshll.u32 [#allocation14], 4
      %s3948 = int_to_ptr.vmem [resolvable:$true] %s3947
      %3953 = dma.vmem_to_hbm [thread:$0]  %s3948, 512, %s17, [#allocation4], 128, 128, 8
    $region101: #{tpu_custom_call.1} parent=1 // pred_fallthru
      _
    // Predicated region
    $region102: #{tpu_custom_call.1} parent=1 // pred_check
      _
    $region103: #{tpu_custom_call.1} parent=1 // pred_check_branch
      %3955 = sbr.rel (0) target = $region105
    $region104: #{tpu_custom_call.1} parent=1 // pred_region
      %3956 = dma.done [#allocation4], 512
    $region105: #{tpu_custom_call.1} parent=1 // pred_fallthru
      _
    %3957 = vsyncpa [#allocation3], 1
    %3958 = vsyncpa [#allocation6], 1
    %3959 = vsyncpa [#allocation9], 1
    %3960 = vsyncpa [#allocation12], 1
    %3961 = vsyncpa [#allocation4], 1

</llo_original>
